<compile_context>
chip_gen: v5e
topology: v5e:2x2
jax: 0.10.0
libtpu: 0.0.40
codegen_flags: <defaults>
</compile_context>

<pallas_src>
import jax
import jax.numpy as jnp
import numpy as np
from jax import lax
from jax.experimental import pallas as pl
from jax.experimental.pallas import tpu as pltpu


# ---------------------------------------------------------------------------
# Fused kernel (one program per batch tile of `bt` images)
# ---------------------------------------------------------------------------
def _make_kernel(bt):
    f32, bf16 = jnp.float32, jnp.bfloat16
    C1W, C1P = 28, 14          # conv1 output width / pooled width
    C2W, C2P = 10, 5           # conv2 output width / pooled width

    def kernel(x_ref,                              # (bt, 32, 32) bf16
               w1_ref, b1_ref, s1e_ref, s1o_ref,   # (6,25) (6,1) (28bt,14bt)x2
               w2_ref, b2_ref, s2e_ref, s2o_ref,   # (16,150) (16,1) (10bt,5bt)x2
               w3_ref, b3_ref,                     # (5,120,80) (120,1)
               w4_ref, b4_ref,                     # (120,84) (1,84)
               w5_ref, b5_ref,                     # (84,128) (1,128)
               out_ref,                            # (1, bt, 128) f32
               a1_ref,                             # (84, 14*bt) bf16 scratch
               a2_ref):                            # (80, 5*bt)  bf16 scratch
        w1 = w1_ref[...]                           # resident bf16 MXU operands
        w2 = w2_ref[...]
        s1e, s1o = s1e_ref[...], s1o_ref[...]
        s2e, s2o = s2e_ref[...], s2o_ref[...]
        # Hoisted bias broadcasts (JAX does not CSE broadcast_in_dim).
        b1w = jnp.broadcast_to(b1_ref[...], (6, C1P * bt))
        b2w = jnp.broadcast_to(b2_ref[...], (16, C2P * bt))

        # --- c1: Conv(1->6,k=5) + 2x2 maxpool + ReLU, row-pair fused ---------
        # Patch lanes ordered (row in {2p,2p+1}, image, column); sublane
        # k = kw*5 + kh matches the host-packed w1.
        for pp in range(14):
            slabs = []
            for kw in range(5):
                pieces = [x_ref[b, 2 * pp + r:2 * pp + r + 5, kw:kw + C1W]
                          for r in range(2) for b in range(bt)]
                slabs.append(jnp.concatenate(pieces, axis=1))     # (5, 2*bt*28)
            patch = jnp.concatenate(slabs, axis=0)                # (25, 2*bt*28)
            y = jnp.dot(w1, patch, preferred_element_type=f32)    # (6, 2*bt*28)
            m = jnp.maximum(y[:, :bt * C1W], y[:, bt * C1W:])     # H-pool (f32)
            mb = m.astype(bf16)
            pooled = jnp.maximum(                                  # exact 0/1 W-pool
                jnp.dot(mb, s1e, preferred_element_type=f32),
                jnp.dot(mb, s1o, preferred_element_type=f32))     # (6, 14*bt)
            pooled = jnp.maximum(pooled + b1w, 0.0)               # bias + ReLU (f32)
            a1_ref[pp * 6:(pp + 1) * 6, :] = pooled.astype(bf16)

        # --- c2: Conv(6->16,k=5) + 2x2 maxpool + ReLU, row-pair fused --------
        # a1 layout: sublane = h*6 + cin, lane = image*14 + w  ->  per-kw slab
        # slices give sublane order (kh, cin); k = kw*30 + kh*6 + cin.
        for pp in range(5):
            slabs = []
            for kw in range(5):
                pieces = [a1_ref[(2 * pp + r) * 6:(2 * pp + r) * 6 + 30,
                                 b * C1P + kw:b * C1P + kw + C2W]
                          for r in range(2) for b in range(bt)]
                slabs.append(jnp.concatenate(pieces, axis=1))     # (30, 2*bt*10)
            patch = jnp.concatenate(slabs, axis=0)                # (150, 2*bt*10)
            y = jnp.dot(w2, patch, preferred_element_type=f32)    # (16, 2*bt*10)
            m = jnp.maximum(y[:, :bt * C2W], y[:, bt * C2W:])     # H-pool
            mb = m.astype(bf16)
            pooled = jnp.maximum(                                  # W-pool, lanes
                jnp.dot(mb, s2e, preferred_element_type=f32),      # reordered to
                jnp.dot(mb, s2o, preferred_element_type=f32))      # (kw-major, b)
            pooled = jnp.maximum(pooled + b2w, 0.0)               # (16, 5*bt)
            a2_ref[pp * 16:(pp + 1) * 16, :] = pooled.astype(bf16)

        # --- c3: Conv(16->120,k=5) + ReLU as 5 accumulating matmuls ----------
        # a2 layout: sublane = kh*16 + cin, lane = kw*bt + image -> contiguous
        # (80, bt) lane slabs; accumulation maps to v7x MRB nicely.
        h = jnp.dot(w3_ref[0], a2_ref[:, 0:bt], preferred_element_type=f32)
        for kw in range(1, 5):
            h = h + jnp.dot(w3_ref[kw], a2_ref[:, kw * bt:(kw + 1) * bt],
                            preferred_element_type=f32)
        h = jnp.maximum(h + b3_ref[...], 0.0)                     # (120, bt)

        # --- classifier: batched row-major FC stack, lane-dense output -------
        hr = jnp.transpose(h).astype(bf16)                        # (bt, 120)
        h2 = jnp.dot(hr, w4_ref[...], preferred_element_type=f32) + b4_ref[...]
        h2 = jnp.maximum(h2, 0.0).astype(bf16)                    # (bt, 84)
        logits = jnp.dot(h2, w5_ref[...],
                         preferred_element_type=f32) + b5_ref[...]  # (bt, 128)
        out_ref[0] = logits

    return kernel


# ---------------------------------------------------------------------------
# Host-side packing / wrappers
# ---------------------------------------------------------------------------
def init_params(key):
    """PyTorch-layout LeNet-5 parameters (deterministic)."""
    ks = jax.random.split(key, 10)

    def w(k, shape, fan_in):
        return jax.random.normal(k, shape, jnp.float32) / jnp.sqrt(fan_in)

    return {
        "c1_w": w(ks[0], (6, 1, 5, 5), 25), "c1_b": w(ks[1], (6,), 25),
        "c2_w": w(ks[2], (16, 6, 5, 5), 150), "c2_b": w(ks[3], (16,), 150),
        "c3_w": w(ks[4], (120, 16, 5, 5), 400), "c3_b": w(ks[5], (120,), 400),
        "fc1_w": w(ks[6], (84, 120), 120), "fc1_b": w(ks[7], (84,), 120),
        "fc2_w": w(ks[8], (10, 84), 84), "fc2_b": w(ks[9], (10,), 84),
    }


def pack_params(p):
    """One-time repack into kernel layouts.

    Conv weights are reordered to the in-kernel slab-im2col ordering
    (kw-major, then kh, then cin) and cast to bf16; biases stay f32; fc2 is
    padded to 128 output lanes."""
    f32, bf16 = jnp.float32, jnp.bfloat16
    w1 = p["c1_w"].reshape(6, 5, 5).transpose(0, 2, 1).reshape(6, 25)   # kw*5+kh
    w2 = p["c2_w"].transpose(0, 3, 2, 1).reshape(16, 150)               # kw*30+kh*6+cin
    w3 = p["c3_w"].transpose(3, 0, 2, 1).reshape(5, 120, 80)            # [kw, o, kh*16+cin]
    w5 = jnp.pad(jnp.transpose(p["fc2_w"]), ((0, 0), (0, 118)))         # (84, 128)
    b5 = jnp.pad(p["fc2_b"].reshape(1, 10), ((0, 0), (0, 118)))
    return {
        "w1": w1.astype(bf16), "b1": p["c1_b"].reshape(6, 1).astype(f32),
        "w2": w2.astype(bf16), "b2": p["c2_b"].reshape(16, 1).astype(f32),
        "w3": w3.astype(bf16), "b3": p["c3_b"].reshape(120, 1).astype(f32),
        "w4": jnp.transpose(p["fc1_w"]).astype(bf16),
        "b4": p["fc1_b"].reshape(1, 84).astype(f32),
        "w5": w5.astype(bf16), "b5": b5.astype(f32),
    }


def _pool_selectors(width, bt, kw_major_out):
    """Exact 0/1 even/odd lane selectors for the 2x2 maxpool W-reduction,
    also encoding the lane permutation of the pooled result."""
    half = width // 2
    e = np.zeros((bt * width, bt * half), np.float32)
    o = np.zeros_like(e)
    for b in range(bt):
        for c in range(half):
            out = c * bt + b if kw_major_out else b * half + c
            e[b * width + 2 * c, out] = 1.0
            o[b * width + 2 * c + 1, out] = 1.0
    return jnp.asarray(e, jnp.bfloat16), jnp.asarray(o, jnp.bfloat16)


def lenet5_forward(packed, x, batch_tile=None):
    """x: (N, 1, 32, 32) NCHW f32 -> logits (N, 10)."""
    n = x.shape[0]
    assert x.shape[1:] == (1, 32, 32)
    bt = batch_tile if batch_tile is not None else min(8, n)
    n_pad = -(-n // bt) * bt
    steps = n_pad // bt

    # bf16 input: halves the per-image DMA and removes in-kernel patch casts.
    x2 = x.reshape(n, 32, 32).astype(jnp.bfloat16)
    if n_pad != n:
        x2 = jnp.concatenate(
            [x2, jnp.zeros((n_pad - n, 32, 32), x2.dtype)], axis=0)

    s1e, s1o = _pool_selectors(28, bt, kw_major_out=False)
    s2e, s2o = _pool_selectors(10, bt, kw_major_out=True)

    operands = (x2, packed["w1"], packed["b1"], s1e, s1o,
                packed["w2"], packed["b2"], s2e, s2o,
                packed["w3"], packed["b3"], packed["w4"], packed["b4"],
                packed["w5"], packed["b5"])

    def _resident(shape):
        return pl.BlockSpec(shape, lambda i, _z=(0,) * len(shape): _z)

    in_specs = [pl.BlockSpec((bt, 32, 32), lambda i: (i, 0, 0))]
    in_specs += [_resident(a.shape) for a in operands[1:]]

    flops = 2 * n_pad * (
        6 * 25 * 28 * 28            # conv1
        + 2 * 6 * 28 * 14 * 14      # conv1 W-pool selection matmuls
        + 16 * 150 * 10 * 10        # conv2
        + 2 * 16 * 10 * 5 * 5       # conv2 W-pool selection matmuls
        + 120 * 400                 # conv3
        + 120 * 84 + 84 * 128)      # fc1 + padded fc2
    bytes_accessed = int(x2.size * 2 + n_pad * 128 * 4
                         + sum(int(a.size) * a.dtype.itemsize
                               for a in operands[1:]))

    grid_spec = pltpu.PrefetchScalarGridSpec(
        num_scalar_prefetch=0,
        grid=(steps,),
        in_specs=in_specs,
        out_specs=pl.BlockSpec((1, bt, 128), lambda i: (i, 0, 0)),
        scratch_shapes=[
            pltpu.VMEM((84, 14 * bt), jnp.bfloat16),   # pooled conv1 (h*6+cin, b*14+w)
            pltpu.VMEM((80, 5 * bt), jnp.bfloat16),    # pooled conv2 (kh*16+cin, kw*bt+b)
        ],
    )
    out = pl.pallas_call(
        _make_kernel(bt),
        out_shape=jax.ShapeDtypeStruct((steps, bt, 128), jnp.float32),
        grid_spec=grid_spec,
        compiler_params=pltpu.CompilerParams(
            dimension_semantics=("parallel",)),
        cost_estimate=pl.CostEstimate(
            flops=flops, transcendentals=0, bytes_accessed=bytes_accessed),
    )(*operands)
    return out.reshape(n_pad, 128)[:n, :10]


def _reference_forward(params, x):
    """Pure-JAX/XLA reference mirroring the PyTorch module (f32)."""
    def conv(h, w, b):
        y = lax.conv_general_dilated(h, w, (1, 1), "VALID",
                                     dimension_numbers=("NCHW", "OIHW", "NCHW"))
        return jax.nn.relu(y + b.reshape(1, -1, 1, 1))

    def pool(h):
        return lax.reduce_window(h, -jnp.inf, lax.max,
                                 (1, 1, 2, 2), (1, 1, 2, 2), "VALID")

    h = pool(conv(x, params["c1_w"], params["c1_b"]))
    h = pool(conv(h, params["c2_w"], params["c2_b"]))
    h = conv(h, params["c3_w"], params["c3_b"])
    h = h.reshape(h.shape[0], -1)
    h = jax.nn.relu(h @ params["fc1_w"].T + params["fc1_b"])
    return h @ params["fc2_w"].T + params["fc2_b"]


if __name__ == "__main__":
    key = jax.random.PRNGKey(0)
    pkey, xkey = jax.random.split(key)
    params = init_params(pkey)
    packed = pack_params(params)          # weights repacked exactly once
    # LeNet-5 requires 32x32 spatial input for the 120-feature flatten to hold.
    x = jax.random.normal(xkey, (2, 1, 32, 32), jnp.float32)

    fwd = jax.jit(lenet5_forward)
    out = jax.block_until_ready(fwd(packed, x))

    assert out.shape == (2, 10) and out.dtype == jnp.float32
    assert bool(jnp.all(jnp.isfinite(out)))
    ref = _reference_forward(params, x)
    # bf16 MXU operands / bf16 activations (f32 accumulation) -> loose tolerance.
    assert bool(jnp.allclose(out, ref, rtol=0.1, atol=0.1))
    print("KERNEL_OK")
</pallas_src>

<mosaic_0001>
module attributes {stable_mosaic.version = 11 : i64} {
  func.func @kernel(%arg0: i32, %arg1: memref<2x32x32xbf16, #tpu.memory_space<vmem>>, %arg2: memref<6x25xbf16, #tpu.memory_space<vmem>>, %arg3: memref<6x1xf32, #tpu.memory_space<vmem>>, %arg4: memref<56x28xbf16, #tpu.memory_space<vmem>>, %arg5: memref<56x28xbf16, #tpu.memory_space<vmem>>, %arg6: memref<16x150xbf16, #tpu.memory_space<vmem>>, %arg7: memref<16x1xf32, #tpu.memory_space<vmem>>, %arg8: memref<20x10xbf16, #tpu.memory_space<vmem>>, %arg9: memref<20x10xbf16, #tpu.memory_space<vmem>>, %arg10: memref<5x120x80xbf16, #tpu.memory_space<vmem>>, %arg11: memref<120x1xf32, #tpu.memory_space<vmem>>, %arg12: memref<120x84xbf16, #tpu.memory_space<vmem>>, %arg13: memref<1x84xf32, #tpu.memory_space<vmem>>, %arg14: memref<84x128xbf16, #tpu.memory_space<vmem>>, %arg15: memref<1x128xf32, #tpu.memory_space<vmem>>, %arg16: memref<1x2x128xf32, #tpu.memory_space<vmem>>, %arg17: memref<84x28xbf16, #tpu.memory_space<vmem>>, %arg18: memref<80x10xbf16, #tpu.memory_space<vmem>>) attributes {dimension_semantics = [#tpu.dimension_semantics<parallel>], iteration_bounds = array<i64: 1>, scalar_prefetch = 0 : i64, scratch_operands = 2 : i64, tpu.core_type = #tpu.core_type<tc>, window_params = [{transform_indices = @transform_0, window_bounds = array<i64: 2, 32, 32>}, {pipeline_mode = #tpu.pipeline_mode<synchronous>, transform_indices = @transform_1, window_bounds = array<i64: 6, 25>}, {pipeline_mode = #tpu.pipeline_mode<synchronous>, transform_indices = @transform_2, window_bounds = array<i64: 6, 1>}, {pipeline_mode = #tpu.pipeline_mode<synchronous>, transform_indices = @transform_3, window_bounds = array<i64: 56, 28>}, {pipeline_mode = #tpu.pipeline_mode<synchronous>, transform_indices = @transform_4, window_bounds = array<i64: 56, 28>}, {pipeline_mode = #tpu.pipeline_mode<synchronous>, transform_indices = @transform_5, window_bounds = array<i64: 16, 150>}, {pipeline_mode = #tpu.pipeline_mode<synchronous>, transform_indices = @transform_6, window_bounds = array<i64: 16, 1>}, {pipeline_mode = #tpu.pipeline_mode<synchronous>, transform_indices = @transform_7, window_bounds = array<i64: 20, 10>}, {pipeline_mode = #tpu.pipeline_mode<synchronous>, transform_indices = @transform_8, window_bounds = array<i64: 20, 10>}, {pipeline_mode = #tpu.pipeline_mode<synchronous>, transform_indices = @transform_9, window_bounds = array<i64: 5, 120, 80>}, {pipeline_mode = #tpu.pipeline_mode<synchronous>, transform_indices = @transform_10, window_bounds = array<i64: 120, 1>}, {pipeline_mode = #tpu.pipeline_mode<synchronous>, transform_indices = @transform_11, window_bounds = array<i64: 120, 84>}, {pipeline_mode = #tpu.pipeline_mode<synchronous>, transform_indices = @transform_12, window_bounds = array<i64: 1, 84>}, {pipeline_mode = #tpu.pipeline_mode<synchronous>, transform_indices = @transform_13, window_bounds = array<i64: 84, 128>}, {pipeline_mode = #tpu.pipeline_mode<synchronous>, transform_indices = @transform_14, window_bounds = array<i64: 1, 128>}, {transform_indices = @transform_15, window_bounds = array<i64: 1, 2, 128>}]} {
    %c0 = arith.constant 0 : index
    %c0_0 = arith.constant 0 : index
    %0 = vector.load %arg2[%c0, %c0_0] : memref<6x25xbf16, #tpu.memory_space<vmem>>, vector<6x25xbf16>
    %c0_1 = arith.constant 0 : index
    %c0_2 = arith.constant 0 : index
    %1 = vector.load %arg6[%c0_1, %c0_2] : memref<16x150xbf16, #tpu.memory_space<vmem>>, vector<16x150xbf16>
    %c0_3 = arith.constant 0 : index
    %c0_4 = arith.constant 0 : index
    %2 = vector.load %arg4[%c0_3, %c0_4] : memref<56x28xbf16, #tpu.memory_space<vmem>>, vector<56x28xbf16>
    %c0_5 = arith.constant 0 : index
    %c0_6 = arith.constant 0 : index
    %3 = vector.load %arg5[%c0_5, %c0_6] : memref<56x28xbf16, #tpu.memory_space<vmem>>, vector<56x28xbf16>
    %c0_7 = arith.constant 0 : index
    %c0_8 = arith.constant 0 : index
    %4 = vector.load %arg8[%c0_7, %c0_8] : memref<20x10xbf16, #tpu.memory_space<vmem>>, vector<20x10xbf16>
    %c0_9 = arith.constant 0 : index
    %c0_10 = arith.constant 0 : index
    %5 = vector.load %arg9[%c0_9, %c0_10] : memref<20x10xbf16, #tpu.memory_space<vmem>>, vector<20x10xbf16>
    %c0_11 = arith.constant 0 : index
    %c0_12 = arith.constant 0 : index
    %6 = vector.load %arg3[%c0_11, %c0_12] : memref<6x1xf32, #tpu.memory_space<vmem>>, vector<6x1xf32>
    %7 = vector.shape_cast %6 : vector<6x1xf32> to vector<6x1xf32>
    %8 = vector.broadcast %7 : vector<6x1xf32> to vector<6x28xf32>
    %c0_13 = arith.constant 0 : index
    %c0_14 = arith.constant 0 : index
    %9 = vector.load %arg7[%c0_13, %c0_14] : memref<16x1xf32, #tpu.memory_space<vmem>>, vector<16x1xf32>
    %10 = vector.shape_cast %9 : vector<16x1xf32> to vector<16x1xf32>
    %11 = vector.broadcast %10 : vector<16x1xf32> to vector<16x10xf32>
    %c0_15 = arith.constant 0 : index
    %c0_16 = arith.constant 0 : index
    %c0_17 = arith.constant 0 : index
    %12 = vector.load %arg1[%c0_15, %c0_16, %c0_17] : memref<2x32x32xbf16, #tpu.memory_space<vmem>>, vector<1x5x28xbf16>
    %13 = vector.shape_cast %12 : vector<1x5x28xbf16> to vector<5x28xbf16>
    %c1 = arith.constant 1 : index
    %c0_18 = arith.constant 0 : index
    %c0_19 = arith.constant 0 : index
    %14 = vector.load %arg1[%c1, %c0_18, %c0_19] : memref<2x32x32xbf16, #tpu.memory_space<vmem>>, vector<1x5x28xbf16>
    %15 = vector.shape_cast %14 : vector<1x5x28xbf16> to vector<5x28xbf16>
    %c0_20 = arith.constant 0 : index
    %c1_21 = arith.constant 1 : index
    %c0_22 = arith.constant 0 : index
    %16 = vector.load %arg1[%c0_20, %c1_21, %c0_22] : memref<2x32x32xbf16, #tpu.memory_space<vmem>>, vector<1x5x28xbf16>
    %17 = vector.shape_cast %16 : vector<1x5x28xbf16> to vector<5x28xbf16>
    %c1_23 = arith.constant 1 : index
    %c1_24 = arith.constant 1 : index
    %c0_25 = arith.constant 0 : index
    %18 = vector.load %arg1[%c1_23, %c1_24, %c0_25] : memref<2x32x32xbf16, #tpu.memory_space<vmem>>, vector<1x5x28xbf16>
    %19 = vector.shape_cast %18 : vector<1x5x28xbf16> to vector<5x28xbf16>
    %20 = tpu.concatenate %13, %15, %17, %19 in 1 : vector<5x28xbf16>, vector<5x28xbf16>, vector<5x28xbf16>, vector<5x28xbf16> -> vector<5x112xbf16>
    %c0_26 = arith.constant 0 : index
    %c0_27 = arith.constant 0 : index
    %c1_28 = arith.constant 1 : index
    %21 = vector.load %arg1[%c0_26, %c0_27, %c1_28] : memref<2x32x32xbf16, #tpu.memory_space<vmem>>, vector<1x5x28xbf16>
    %22 = vector.shape_cast %21 : vector<1x5x28xbf16> to vector<5x28xbf16>
    %c1_29 = arith.constant 1 : index
    %c0_30 = arith.constant 0 : index
    %c1_31 = arith.constant 1 : index
    %23 = vector.load %arg1[%c1_29, %c0_30, %c1_31] : memref<2x32x32xbf16, #tpu.memory_space<vmem>>, vector<1x5x28xbf16>
    %24 = vector.shape_cast %23 : vector<1x5x28xbf16> to vector<5x28xbf16>
    %c0_32 = arith.constant 0 : index
    %c1_33 = arith.constant 1 : index
    %c1_34 = arith.constant 1 : index
    %25 = vector.load %arg1[%c0_32, %c1_33, %c1_34] : memref<2x32x32xbf16, #tpu.memory_space<vmem>>, vector<1x5x28xbf16>
    %26 = vector.shape_cast %25 : vector<1x5x28xbf16> to vector<5x28xbf16>
    %c1_35 = arith.constant 1 : index
    %c1_36 = arith.constant 1 : index
    %c1_37 = arith.constant 1 : index
    %27 = vector.load %arg1[%c1_35, %c1_36, %c1_37] : memref<2x32x32xbf16, #tpu.memory_space<vmem>>, vector<1x5x28xbf16>
    %28 = vector.shape_cast %27 : vector<1x5x28xbf16> to vector<5x28xbf16>
    %29 = tpu.concatenate %22, %24, %26, %28 in 1 : vector<5x28xbf16>, vector<5x28xbf16>, vector<5x28xbf16>, vector<5x28xbf16> -> vector<5x112xbf16>
    %c0_38 = arith.constant 0 : index
    %c0_39 = arith.constant 0 : index
    %c2 = arith.constant 2 : index
    %30 = vector.load %arg1[%c0_38, %c0_39, %c2] : memref<2x32x32xbf16, #tpu.memory_space<vmem>>, vector<1x5x28xbf16>
    %31 = vector.shape_cast %30 : vector<1x5x28xbf16> to vector<5x28xbf16>
    %c1_40 = arith.constant 1 : index
    %c0_41 = arith.constant 0 : index
    %c2_42 = arith.constant 2 : index
    %32 = vector.load %arg1[%c1_40, %c0_41, %c2_42] : memref<2x32x32xbf16, #tpu.memory_space<vmem>>, vector<1x5x28xbf16>
    %33 = vector.shape_cast %32 : vector<1x5x28xbf16> to vector<5x28xbf16>
    %c0_43 = arith.constant 0 : index
    %c1_44 = arith.constant 1 : index
    %c2_45 = arith.constant 2 : index
    %34 = vector.load %arg1[%c0_43, %c1_44, %c2_45] : memref<2x32x32xbf16, #tpu.memory_space<vmem>>, vector<1x5x28xbf16>
    %35 = vector.shape_cast %34 : vector<1x5x28xbf16> to vector<5x28xbf16>
    %c1_46 = arith.constant 1 : index
    %c1_47 = arith.constant 1 : index
    %c2_48 = arith.constant 2 : index
    %36 = vector.load %arg1[%c1_46, %c1_47, %c2_48] : memref<2x32x32xbf16, #tpu.memory_space<vmem>>, vector<1x5x28xbf16>
    %37 = vector.shape_cast %36 : vector<1x5x28xbf16> to vector<5x28xbf16>
    %38 = tpu.concatenate %31, %33, %35, %37 in 1 : vector<5x28xbf16>, vector<5x28xbf16>, vector<5x28xbf16>, vector<5x28xbf16> -> vector<5x112xbf16>
    %c0_49 = arith.constant 0 : index
    %c0_50 = arith.constant 0 : index
    %c3 = arith.constant 3 : index
    %39 = vector.load %arg1[%c0_49, %c0_50, %c3] : memref<2x32x32xbf16, #tpu.memory_space<vmem>>, vector<1x5x28xbf16>
    %40 = vector.shape_cast %39 : vector<1x5x28xbf16> to vector<5x28xbf16>
    %c1_51 = arith.constant 1 : index
    %c0_52 = arith.constant 0 : index
    %c3_53 = arith.constant 3 : index
    %41 = vector.load %arg1[%c1_51, %c0_52, %c3_53] : memref<2x32x32xbf16, #tpu.memory_space<vmem>>, vector<1x5x28xbf16>
    %42 = vector.shape_cast %41 : vector<1x5x28xbf16> to vector<5x28xbf16>
    %c0_54 = arith.constant 0 : index
    %c1_55 = arith.constant 1 : index
    %c3_56 = arith.constant 3 : index
    %43 = vector.load %arg1[%c0_54, %c1_55, %c3_56] : memref<2x32x32xbf16, #tpu.memory_space<vmem>>, vector<1x5x28xbf16>
    %44 = vector.shape_cast %43 : vector<1x5x28xbf16> to vector<5x28xbf16>
    %c1_57 = arith.constant 1 : index
    %c1_58 = arith.constant 1 : index
    %c3_59 = arith.constant 3 : index
    %45 = vector.load %arg1[%c1_57, %c1_58, %c3_59] : memref<2x32x32xbf16, #tpu.memory_space<vmem>>, vector<1x5x28xbf16>
    %46 = vector.shape_cast %45 : vector<1x5x28xbf16> to vector<5x28xbf16>
    %47 = tpu.concatenate %40, %42, %44, %46 in 1 : vector<5x28xbf16>, vector<5x28xbf16>, vector<5x28xbf16>, vector<5x28xbf16> -> vector<5x112xbf16>
    %c0_60 = arith.constant 0 : index
    %c0_61 = arith.constant 0 : index
    %c4 = arith.constant 4 : index
    %48 = vector.load %arg1[%c0_60, %c0_61, %c4] : memref<2x32x32xbf16, #tpu.memory_space<vmem>>, vector<1x5x28xbf16>
    %49 = vector.shape_cast %48 : vector<1x5x28xbf16> to vector<5x28xbf16>
    %c1_62 = arith.constant 1 : index
    %c0_63 = arith.constant 0 : index
    %c4_64 = arith.constant 4 : index
    %50 = vector.load %arg1[%c1_62, %c0_63, %c4_64] : memref<2x32x32xbf16, #tpu.memory_space<vmem>>, vector<1x5x28xbf16>
    %51 = vector.shape_cast %50 : vector<1x5x28xbf16> to vector<5x28xbf16>
    %c0_65 = arith.constant 0 : index
    %c1_66 = arith.constant 1 : index
    %c4_67 = arith.constant 4 : index
    %52 = vector.load %arg1[%c0_65, %c1_66, %c4_67] : memref<2x32x32xbf16, #tpu.memory_space<vmem>>, vector<1x5x28xbf16>
    %53 = vector.shape_cast %52 : vector<1x5x28xbf16> to vector<5x28xbf16>
    %c1_68 = arith.constant 1 : index
    %c1_69 = arith.constant 1 : index
    %c4_70 = arith.constant 4 : index
    %54 = vector.load %arg1[%c1_68, %c1_69, %c4_70] : memref<2x32x32xbf16, #tpu.memory_space<vmem>>, vector<1x5x28xbf16>
    %55 = vector.shape_cast %54 : vector<1x5x28xbf16> to vector<5x28xbf16>
    %56 = tpu.concatenate %49, %51, %53, %55 in 1 : vector<5x28xbf16>, vector<5x28xbf16>, vector<5x28xbf16>, vector<5x28xbf16> -> vector<5x112xbf16>
    %57 = tpu.concatenate %20, %29, %38, %47, %56 in 0 : vector<5x112xbf16>, vector<5x112xbf16>, vector<5x112xbf16>, vector<5x112xbf16>, vector<5x112xbf16> -> vector<25x112xbf16>
    %cst = arith.constant dense<0.000000e+00> : vector<6x112xf32>
    %58 = tpu.matmul %0, %57, %cst {dimension_numbers = #tpu.dot_dimension_numbers<[1], [0], [0], [1], [0, 0, 1, 1], [], []>} : vector<6x25xbf16>, vector<25x112xbf16>, vector<6x112xf32> -> vector<6x112xf32>
    %59 = vector.extract_strided_slice %58 {offsets = [0, 0], sizes = [6, 56], strides = [1, 1]} : vector<6x112xf32> to vector<6x56xf32>
    %60 = vector.extract_strided_slice %58 {offsets = [0, 56], sizes = [6, 56], strides = [1, 1]} : vector<6x112xf32> to vector<6x56xf32>
    %61 = arith.maximumf %59, %60 : vector<6x56xf32>
    %62 = arith.truncf %61 : vector<6x56xf32> to vector<6x56xbf16>
    %cst_71 = arith.constant dense<0.000000e+00> : vector<6x28xf32>
    %63 = tpu.matmul %62, %2, %cst_71 {dimension_numbers = #tpu.dot_dimension_numbers<[1], [0], [0], [1], [0, 0, 1, 1], [], []>} : vector<6x56xbf16>, vector<56x28xbf16>, vector<6x28xf32> -> vector<6x28xf32>
    %cst_72 = arith.constant dense<0.000000e+00> : vector<6x28xf32>
    %64 = tpu.matmul %62, %3, %cst_72 {dimension_numbers = #tpu.dot_dimension_numbers<[1], [0], [0], [1], [0, 0, 1, 1], [], []>} : vector<6x56xbf16>, vector<56x28xbf16>, vector<6x28xf32> -> vector<6x28xf32>
    %65 = arith.maximumf %63, %64 : vector<6x28xf32>
    %66 = arith.addf %65, %8 : vector<6x28xf32>
    %cst_73 = arith.constant 0.000000e+00 : f32
    %67 = vector.broadcast %cst_73 : f32 to vector<6x28xf32>
    %68 = arith.maximumf %66, %67 : vector<6x28xf32>
    %69 = arith.truncf %68 : vector<6x28xf32> to vector<6x28xbf16>
    %c0_74 = arith.constant 0 : index
    %c0_75 = arith.constant 0 : index
    %70 = vector.load %arg17[%c0_74, %c0_75] : memref<84x28xbf16, #tpu.memory_space<vmem>>, vector<6x28xbf16>
    tpu.vector_store %arg17[%c0_74, %c0_75], %69 {strides = array<i32>} : memref<84x28xbf16, #tpu.memory_space<vmem>>, vector<6x28xbf16>,
    %c0_76 = arith.constant 0 : index
    %c2_77 = arith.constant 2 : index
    %c0_78 = arith.constant 0 : index
    %71 = vector.load %arg1[%c0_76, %c2_77, %c0_78] : memref<2x32x32xbf16, #tpu.memory_space<vmem>>, vector<1x5x28xbf16>
    %72 = vector.shape_cast %71 : vector<1x5x28xbf16> to vector<5x28xbf16>
    %c1_79 = arith.constant 1 : index
    %c2_80 = arith.constant 2 : index
    %c0_81 = arith.constant 0 : index
    %73 = vector.load %arg1[%c1_79, %c2_80, %c0_81] : memref<2x32x32xbf16, #tpu.memory_space<vmem>>, vector<1x5x28xbf16>
    %74 = vector.shape_cast %73 : vector<1x5x28xbf16> to vector<5x28xbf16>
    %c0_82 = arith.constant 0 : index
    %c3_83 = arith.constant 3 : index
    %c0_84 = arith.constant 0 : index
    %75 = vector.load %arg1[%c0_82, %c3_83, %c0_84] : memref<2x32x32xbf16, #tpu.memory_space<vmem>>, vector<1x5x28xbf16>
    %76 = vector.shape_cast %75 : vector<1x5x28xbf16> to vector<5x28xbf16>
    %c1_85 = arith.constant 1 : index
    %c3_86 = arith.constant 3 : index
    %c0_87 = arith.constant 0 : index
    %77 = vector.load %arg1[%c1_85, %c3_86, %c0_87] : memref<2x32x32xbf16, #tpu.memory_space<vmem>>, vector<1x5x28xbf16>
    %78 = vector.shape_cast %77 : vector<1x5x28xbf16> to vector<5x28xbf16>
    %79 = tpu.concatenate %72, %74, %76, %78 in 1 : vector<5x28xbf16>, vector<5x28xbf16>, vector<5x28xbf16>, vector<5x28xbf16> -> vector<5x112xbf16>
    %c0_88 = arith.constant 0 : index
    %c2_89 = arith.constant 2 : index
    %c1_90 = arith.constant 1 : index
    %80 = vector.load %arg1[%c0_88, %c2_89, %c1_90] : memref<2x32x32xbf16, #tpu.memory_space<vmem>>, vector<1x5x28xbf16>
    %81 = vector.shape_cast %80 : vector<1x5x28xbf16> to vector<5x28xbf16>
    %c1_91 = arith.constant 1 : index
    %c2_92 = arith.constant 2 : index
    %c1_93 = arith.constant 1 : index
    %82 = vector.load %arg1[%c1_91, %c2_92, %c1_93] : memref<2x32x32xbf16, #tpu.memory_space<vmem>>, vector<1x5x28xbf16>
    %83 = vector.shape_cast %82 : vector<1x5x28xbf16> to vector<5x28xbf16>
    %c0_94 = arith.constant 0 : index
    %c3_95 = arith.constant 3 : index
    %c1_96 = arith.constant 1 : index
    %84 = vector.load %arg1[%c0_94, %c3_95, %c1_96] : memref<2x32x32xbf16, #tpu.memory_space<vmem>>, vector<1x5x28xbf16>
    %85 = vector.shape_cast %84 : vector<1x5x28xbf16> to vector<5x28xbf16>
    %c1_97 = arith.constant 1 : index
    %c3_98 = arith.constant 3 : index
    %c1_99 = arith.constant 1 : index
    %86 = vector.load %arg1[%c1_97, %c3_98, %c1_99] : memref<2x32x32xbf16, #tpu.memory_space<vmem>>, vector<1x5x28xbf16>
    %87 = vector.shape_cast %86 : vector<1x5x28xbf16> to vector<5x28xbf16>
    %88 = tpu.concatenate %81, %83, %85, %87 in 1 : vector<5x28xbf16>, vector<5x28xbf16>, vector<5x28xbf16>, vector<5x28xbf16> -> vector<5x112xbf16>
    %c0_100 = arith.constant 0 : index
    %c2_101 = arith.constant 2 : index
    %c2_102 = arith.constant 2 : index
    %89 = vector.load %arg1[%c0_100, %c2_101, %c2_102] : memref<2x32x32xbf16, #tpu.memory_space<vmem>>, vector<1x5x28xbf16>
    %90 = vector.shape_cast %89 : vector<1x5x28xbf16> to vector<5x28xbf16>
    %c1_103 = arith.constant 1 : index
    %c2_104 = arith.constant 2 : index
    %c2_105 = arith.constant 2 : index
    %91 = vector.load %arg1[%c1_103, %c2_104, %c2_105] : memref<2x32x32xbf16, #tpu.memory_space<vmem>>, vector<1x5x28xbf16>
    %92 = vector.shape_cast %91 : vector<1x5x28xbf16> to vector<5x28xbf16>
    %c0_106 = arith.constant 0 : index
    %c3_107 = arith.constant 3 : index
    %c2_108 = arith.constant 2 : index
    %93 = vector.load %arg1[%c0_106, %c3_107, %c2_108] : memref<2x32x32xbf16, #tpu.memory_space<vmem>>, vector<1x5x28xbf16>
    %94 = vector.shape_cast %93 : vector<1x5x28xbf16> to vector<5x28xbf16>
    %c1_109 = arith.constant 1 : index
    %c3_110 = arith.constant 3 : index
    %c2_111 = arith.constant 2 : index
    %95 = vector.load %arg1[%c1_109, %c3_110, %c2_111] : memref<2x32x32xbf16, #tpu.memory_space<vmem>>, vector<1x5x28xbf16>
    %96 = vector.shape_cast %95 : vector<1x5x28xbf16> to vector<5x28xbf16>
    %97 = tpu.concatenate %90, %92, %94, %96 in 1 : vector<5x28xbf16>, vector<5x28xbf16>, vector<5x28xbf16>, vector<5x28xbf16> -> vector<5x112xbf16>
    %c0_112 = arith.constant 0 : index
    %c2_113 = arith.constant 2 : index
    %c3_114 = arith.constant 3 : index
    %98 = vector.load %arg1[%c0_112, %c2_113, %c3_114] : memref<2x32x32xbf16, #tpu.memory_space<vmem>>, vector<1x5x28xbf16>
    %99 = vector.shape_cast %98 : vector<1x5x28xbf16> to vector<5x28xbf16>
    %c1_115 = arith.constant 1 : index
    %c2_116 = arith.constant 2 : index
    %c3_117 = arith.constant 3 : index
    %100 = vector.load %arg1[%c1_115, %c2_116, %c3_117] : memref<2x32x32xbf16, #tpu.memory_space<vmem>>, vector<1x5x28xbf16>
    %101 = vector.shape_cast %100 : vector<1x5x28xbf16> to vector<5x28xbf16>
    %c0_118 = arith.constant 0 : index
    %c3_119 = arith.constant 3 : index
    %c3_120 = arith.constant 3 : index
    %102 = vector.load %arg1[%c0_118, %c3_119, %c3_120] : memref<2x32x32xbf16, #tpu.memory_space<vmem>>, vector<1x5x28xbf16>
    %103 = vector.shape_cast %102 : vector<1x5x28xbf16> to vector<5x28xbf16>
    %c1_121 = arith.constant 1 : index
    %c3_122 = arith.constant 3 : index
    %c3_123 = arith.constant 3 : index
    %104 = vector.load %arg1[%c1_121, %c3_122, %c3_123] : memref<2x32x32xbf16, #tpu.memory_space<vmem>>, vector<1x5x28xbf16>
    %105 = vector.shape_cast %104 : vector<1x5x28xbf16> to vector<5x28xbf16>
    %106 = tpu.concatenate %99, %101, %103, %105 in 1 : vector<5x28xbf16>, vector<5x28xbf16>, vector<5x28xbf16>, vector<5x28xbf16> -> vector<5x112xbf16>
    %c0_124 = arith.constant 0 : index
    %c2_125 = arith.constant 2 : index
    %c4_126 = arith.constant 4 : index
    %107 = vector.load %arg1[%c0_124, %c2_125, %c4_126] : memref<2x32x32xbf16, #tpu.memory_space<vmem>>, vector<1x5x28xbf16>
    %108 = vector.shape_cast %107 : vector<1x5x28xbf16> to vector<5x28xbf16>
    %c1_127 = arith.constant 1 : index
    %c2_128 = arith.constant 2 : index
    %c4_129 = arith.constant 4 : index
    %109 = vector.load %arg1[%c1_127, %c2_128, %c4_129] : memref<2x32x32xbf16, #tpu.memory_space<vmem>>, vector<1x5x28xbf16>
    %110 = vector.shape_cast %109 : vector<1x5x28xbf16> to vector<5x28xbf16>
    %c0_130 = arith.constant 0 : index
    %c3_131 = arith.constant 3 : index
    %c4_132 = arith.constant 4 : index
    %111 = vector.load %arg1[%c0_130, %c3_131, %c4_132] : memref<2x32x32xbf16, #tpu.memory_space<vmem>>, vector<1x5x28xbf16>
    %112 = vector.shape_cast %111 : vector<1x5x28xbf16> to vector<5x28xbf16>
    %c1_133 = arith.constant 1 : index
    %c3_134 = arith.constant 3 : index
    %c4_135 = arith.constant 4 : index
    %113 = vector.load %arg1[%c1_133, %c3_134, %c4_135] : memref<2x32x32xbf16, #tpu.memory_space<vmem>>, vector<1x5x28xbf16>
    %114 = vector.shape_cast %113 : vector<1x5x28xbf16> to vector<5x28xbf16>
    %115 = tpu.concatenate %108, %110, %112, %114 in 1 : vector<5x28xbf16>, vector<5x28xbf16>, vector<5x28xbf16>, vector<5x28xbf16> -> vector<5x112xbf16>
    %116 = tpu.concatenate %79, %88, %97, %106, %115 in 0 : vector<5x112xbf16>, vector<5x112xbf16>, vector<5x112xbf16>, vector<5x112xbf16>, vector<5x112xbf16> -> vector<25x112xbf16>
    %cst_136 = arith.constant dense<0.000000e+00> : vector<6x112xf32>
    %117 = tpu.matmul %0, %116, %cst_136 {dimension_numbers = #tpu.dot_dimension_numbers<[1], [0], [0], [1], [0, 0, 1, 1], [], []>} : vector<6x25xbf16>, vector<25x112xbf16>, vector<6x112xf32> -> vector<6x112xf32>
    %118 = vector.extract_strided_slice %117 {offsets = [0, 0], sizes = [6, 56], strides = [1, 1]} : vector<6x112xf32> to vector<6x56xf32>
    %119 = vector.extract_strided_slice %117 {offsets = [0, 56], sizes = [6, 56], strides = [1, 1]} : vector<6x112xf32> to vector<6x56xf32>
    %120 = arith.maximumf %118, %119 : vector<6x56xf32>
    %121 = arith.truncf %120 : vector<6x56xf32> to vector<6x56xbf16>
    %cst_137 = arith.constant dense<0.000000e+00> : vector<6x28xf32>
    %122 = tpu.matmul %121, %2, %cst_137 {dimension_numbers = #tpu.dot_dimension_numbers<[1], [0], [0], [1], [0, 0, 1, 1], [], []>} : vector<6x56xbf16>, vector<56x28xbf16>, vector<6x28xf32> -> vector<6x28xf32>
    %cst_138 = arith.constant dense<0.000000e+00> : vector<6x28xf32>
    %123 = tpu.matmul %121, %3, %cst_138 {dimension_numbers = #tpu.dot_dimension_numbers<[1], [0], [0], [1], [0, 0, 1, 1], [], []>} : vector<6x56xbf16>, vector<56x28xbf16>, vector<6x28xf32> -> vector<6x28xf32>
    %124 = arith.maximumf %122, %123 : vector<6x28xf32>
    %125 = arith.addf %124, %8 : vector<6x28xf32>
    %cst_139 = arith.constant 0.000000e+00 : f32
    %126 = vector.broadcast %cst_139 : f32 to vector<6x28xf32>
    %127 = arith.maximumf %125, %126 : vector<6x28xf32>
    %128 = arith.truncf %127 : vector<6x28xf32> to vector<6x28xbf16>
    %c6 = arith.constant 6 : index
    %c0_140 = arith.constant 0 : index
    %129 = vector.load %arg17[%c6, %c0_140] : memref<84x28xbf16, #tpu.memory_space<vmem>>, vector<6x28xbf16>
    tpu.vector_store %arg17[%c6, %c0_140], %128 {strides = array<i32>} : memref<84x28xbf16, #tpu.memory_space<vmem>>, vector<6x28xbf16>,
    %c0_141 = arith.constant 0 : index
    %c4_142 = arith.constant 4 : index
    %c0_143 = arith.constant 0 : index
    %130 = vector.load %arg1[%c0_141, %c4_142, %c0_143] : memref<2x32x32xbf16, #tpu.memory_space<vmem>>, vector<1x5x28xbf16>
    %131 = vector.shape_cast %130 : vector<1x5x28xbf16> to vector<5x28xbf16>
    %c1_144 = arith.constant 1 : index
    %c4_145 = arith.constant 4 : index
    %c0_146 = arith.constant 0 : index
    %132 = vector.load %arg1[%c1_144, %c4_145, %c0_146] : memref<2x32x32xbf16, #tpu.memory_space<vmem>>, vector<1x5x28xbf16>
    %133 = vector.shape_cast %132 : vector<1x5x28xbf16> to vector<5x28xbf16>
    %c0_147 = arith.constant 0 : index
    %c5 = arith.constant 5 : index
    %c0_148 = arith.constant 0 : index
    %134 = vector.load %arg1[%c0_147, %c5, %c0_148] : memref<2x32x32xbf16, #tpu.memory_space<vmem>>, vector<1x5x28xbf16>
    %135 = vector.shape_cast %134 : vector<1x5x28xbf16> to vector<5x28xbf16>
    %c1_149 = arith.constant 1 : index
    %c5_150 = arith.constant 5 : index
    %c0_151 = arith.constant 0 : index
    %136 = vector.load %arg1[%c1_149, %c5_150, %c0_151] : memref<2x32x32xbf16, #tpu.memory_space<vmem>>, vector<1x5x28xbf16>
    %137 = vector.shape_cast %136 : vector<1x5x28xbf16> to vector<5x28xbf16>
    %138 = tpu.concatenate %131, %133, %135, %137 in 1 : vector<5x28xbf16>, vector<5x28xbf16>, vector<5x28xbf16>, vector<5x28xbf16> -> vector<5x112xbf16>
    %c0_152 = arith.constant 0 : index
    %c4_153 = arith.constant 4 : index
    %c1_154 = arith.constant 1 : index
    %139 = vector.load %arg1[%c0_152, %c4_153, %c1_154] : memref<2x32x32xbf16, #tpu.memory_space<vmem>>, vector<1x5x28xbf16>
    %140 = vector.shape_cast %139 : vector<1x5x28xbf16> to vector<5x28xbf16>
    %c1_155 = arith.constant 1 : index
    %c4_156 = arith.constant 4 : index
    %c1_157 = arith.constant 1 : index
    %141 = vector.load %arg1[%c1_155, %c4_156, %c1_157] : memref<2x32x32xbf16, #tpu.memory_space<vmem>>, vector<1x5x28xbf16>
    %142 = vector.shape_cast %141 : vector<1x5x28xbf16> to vector<5x28xbf16>
    %c0_158 = arith.constant 0 : index
    %c5_159 = arith.constant 5 : index
    %c1_160 = arith.constant 1 : index
    %143 = vector.load %arg1[%c0_158, %c5_159, %c1_160] : memref<2x32x32xbf16, #tpu.memory_space<vmem>>, vector<1x5x28xbf16>
    %144 = vector.shape_cast %143 : vector<1x5x28xbf16> to vector<5x28xbf16>
    %c1_161 = arith.constant 1 : index
    %c5_162 = arith.constant 5 : index
    %c1_163 = arith.constant 1 : index
    %145 = vector.load %arg1[%c1_161, %c5_162, %c1_163] : memref<2x32x32xbf16, #tpu.memory_space<vmem>>, vector<1x5x28xbf16>
    %146 = vector.shape_cast %145 : vector<1x5x28xbf16> to vector<5x28xbf16>
    %147 = tpu.concatenate %140, %142, %144, %146 in 1 : vector<5x28xbf16>, vector<5x28xbf16>, vector<5x28xbf16>, vector<5x28xbf16> -> vector<5x112xbf16>
    %c0_164 = arith.constant 0 : index
    %c4_165 = arith.constant 4 : index
    %c2_166 = arith.constant 2 : index
    %148 = vector.load %arg1[%c0_164, %c4_165, %c2_166] : memref<2x32x32xbf16, #tpu.memory_space<vmem>>, vector<1x5x28xbf16>
    %149 = vector.shape_cast %148 : vector<1x5x28xbf16> to vector<5x28xbf16>
    %c1_167 = arith.constant 1 : index
    %c4_168 = arith.constant 4 : index
    %c2_169 = arith.constant 2 : index
    %150 = vector.load %arg1[%c1_167, %c4_168, %c2_169] : memref<2x32x32xbf16, #tpu.memory_space<vmem>>, vector<1x5x28xbf16>
    %151 = vector.shape_cast %150 : vector<1x5x28xbf16> to vector<5x28xbf16>
    %c0_170 = arith.constant 0 : index
    %c5_171 = arith.constant 5 : index
    %c2_172 = arith.constant 2 : index
    %152 = vector.load %arg1[%c0_170, %c5_171, %c2_172] : memref<2x32x32xbf16, #tpu.memory_space<vmem>>, vector<1x5x28xbf16>
    %153 = vector.shape_cast %152 : vector<1x5x28xbf16> to vector<5x28xbf16>
    %c1_173 = arith.constant 1 : index
    %c5_174 = arith.constant 5 : index
    %c2_175 = arith.constant 2 : index
    %154 = vector.load %arg1[%c1_173, %c5_174, %c2_175] : memref<2x32x32xbf16, #tpu.memory_space<vmem>>, vector<1x5x28xbf16>
    %155 = vector.shape_cast %154 : vector<1x5x28xbf16> to vector<5x28xbf16>
    %156 = tpu.concatenate %149, %151, %153, %155 in 1 : vector<5x28xbf16>, vector<5x28xbf16>, vector<5x28xbf16>, vector<5x28xbf16> -> vector<5x112xbf16>
    %c0_176 = arith.constant 0 : index
    %c4_177 = arith.constant 4 : index
    %c3_178 = arith.constant 3 : index
    %157 = vector.load %arg1[%c0_176, %c4_177, %c3_178] : memref<2x32x32xbf16, #tpu.memory_space<vmem>>, vector<1x5x28xbf16>
    %158 = vector.shape_cast %157 : vector<1x5x28xbf16> to vector<5x28xbf16>
    %c1_179 = arith.constant 1 : index
    %c4_180 = arith.constant 4 : index
    %c3_181 = arith.constant 3 : index
    %159 = vector.load %arg1[%c1_179, %c4_180, %c3_181] : memref<2x32x32xbf16, #tpu.memory_space<vmem>>, vector<1x5x28xbf16>
    %160 = vector.shape_cast %159 : vector<1x5x28xbf16> to vector<5x28xbf16>
    %c0_182 = arith.constant 0 : index
    %c5_183 = arith.constant 5 : index
    %c3_184 = arith.constant 3 : index
    %161 = vector.load %arg1[%c0_182, %c5_183, %c3_184] : memref<2x32x32xbf16, #tpu.memory_space<vmem>>, vector<1x5x28xbf16>
    %162 = vector.shape_cast %161 : vector<1x5x28xbf16> to vector<5x28xbf16>
    %c1_185 = arith.constant 1 : index
    %c5_186 = arith.constant 5 : index
    %c3_187 = arith.constant 3 : index
    %163 = vector.load %arg1[%c1_185, %c5_186, %c3_187] : memref<2x32x32xbf16, #tpu.memory_space<vmem>>, vector<1x5x28xbf16>
    %164 = vector.shape_cast %163 : vector<1x5x28xbf16> to vector<5x28xbf16>
    %165 = tpu.concatenate %158, %160, %162, %164 in 1 : vector<5x28xbf16>, vector<5x28xbf16>, vector<5x28xbf16>, vector<5x28xbf16> -> vector<5x112xbf16>
    %c0_188 = arith.constant 0 : index
    %c4_189 = arith.constant 4 : index
    %c4_190 = arith.constant 4 : index
    %166 = vector.load %arg1[%c0_188, %c4_189, %c4_190] : memref<2x32x32xbf16, #tpu.memory_space<vmem>>, vector<1x5x28xbf16>
    %167 = vector.shape_cast %166 : vector<1x5x28xbf16> to vector<5x28xbf16>
    %c1_191 = arith.constant 1 : index
    %c4_192 = arith.constant 4 : index
    %c4_193 = arith.constant 4 : index
    %168 = vector.load %arg1[%c1_191, %c4_192, %c4_193] : memref<2x32x32xbf16, #tpu.memory_space<vmem>>, vector<1x5x28xbf16>
    %169 = vector.shape_cast %168 : vector<1x5x28xbf16> to vector<5x28xbf16>
    %c0_194 = arith.constant 0 : index
    %c5_195 = arith.constant 5 : index
    %c4_196 = arith.constant 4 : index
    %170 = vector.load %arg1[%c0_194, %c5_195, %c4_196] : memref<2x32x32xbf16, #tpu.memory_space<vmem>>, vector<1x5x28xbf16>
    %171 = vector.shape_cast %170 : vector<1x5x28xbf16> to vector<5x28xbf16>
    %c1_197 = arith.constant 1 : index
    %c5_198 = arith.constant 5 : index
    %c4_199 = arith.constant 4 : index
    %172 = vector.load %arg1[%c1_197, %c5_198, %c4_199] : memref<2x32x32xbf16, #tpu.memory_space<vmem>>, vector<1x5x28xbf16>
    %173 = vector.shape_cast %172 : vector<1x5x28xbf16> to vector<5x28xbf16>
    %174 = tpu.concatenate %167, %169, %171, %173 in 1 : vector<5x28xbf16>, vector<5x28xbf16>, vector<5x28xbf16>, vector<5x28xbf16> -> vector<5x112xbf16>
    %175 = tpu.concatenate %138, %147, %156, %165, %174 in 0 : vector<5x112xbf16>, vector<5x112xbf16>, vector<5x112xbf16>, vector<5x112xbf16>, vector<5x112xbf16> -> vector<25x112xbf16>
    %cst_200 = arith.constant dense<0.000000e+00> : vector<6x112xf32>
    %176 = tpu.matmul %0, %175, %cst_200 {dimension_numbers = #tpu.dot_dimension_numbers<[1], [0], [0], [1], [0, 0, 1, 1], [], []>} : vector<6x25xbf16>, vector<25x112xbf16>, vector<6x112xf32> -> vector<6x112xf32>
    %177 = vector.extract_strided_slice %176 {offsets = [0, 0], sizes = [6, 56], strides = [1, 1]} : vector<6x112xf32> to vector<6x56xf32>
    %178 = vector.extract_strided_slice %176 {offsets = [0, 56], sizes = [6, 56], strides = [1, 1]} : vector<6x112xf32> to vector<6x56xf32>
    %179 = arith.maximumf %177, %178 : vector<6x56xf32>
    %180 = arith.truncf %179 : vector<6x56xf32> to vector<6x56xbf16>
    %cst_201 = arith.constant dense<0.000000e+00> : vector<6x28xf32>
    %181 = tpu.matmul %180, %2, %cst_201 {dimension_numbers = #tpu.dot_dimension_numbers<[1], [0], [0], [1], [0, 0, 1, 1], [], []>} : vector<6x56xbf16>, vector<56x28xbf16>, vector<6x28xf32> -> vector<6x28xf32>
    %cst_202 = arith.constant dense<0.000000e+00> : vector<6x28xf32>
    %182 = tpu.matmul %180, %3, %cst_202 {dimension_numbers = #tpu.dot_dimension_numbers<[1], [0], [0], [1], [0, 0, 1, 1], [], []>} : vector<6x56xbf16>, vector<56x28xbf16>, vector<6x28xf32> -> vector<6x28xf32>
    %183 = arith.maximumf %181, %182 : vector<6x28xf32>
    %184 = arith.addf %183, %8 : vector<6x28xf32>
    %cst_203 = arith.constant 0.000000e+00 : f32
    %185 = vector.broadcast %cst_203 : f32 to vector<6x28xf32>
    %186 = arith.maximumf %184, %185 : vector<6x28xf32>
    %187 = arith.truncf %186 : vector<6x28xf32> to vector<6x28xbf16>
    %c12 = arith.constant 12 : index
    %c0_204 = arith.constant 0 : index
    %188 = vector.load %arg17[%c12, %c0_204] : memref<84x28xbf16, #tpu.memory_space<vmem>>, vector<6x28xbf16>
    tpu.vector_store %arg17[%c12, %c0_204], %187 {strides = array<i32>} : memref<84x28xbf16, #tpu.memory_space<vmem>>, vector<6x28xbf16>,
    %c0_205 = arith.constant 0 : index
    %c6_206 = arith.constant 6 : index
    %c0_207 = arith.constant 0 : index
    %189 = vector.load %arg1[%c0_205, %c6_206, %c0_207] : memref<2x32x32xbf16, #tpu.memory_space<vmem>>, vector<1x5x28xbf16>
    %190 = vector.shape_cast %189 : vector<1x5x28xbf16> to vector<5x28xbf16>
    %c1_208 = arith.constant 1 : index
    %c6_209 = arith.constant 6 : index
    %c0_210 = arith.constant 0 : index
    %191 = vector.load %arg1[%c1_208, %c6_209, %c0_210] : memref<2x32x32xbf16, #tpu.memory_space<vmem>>, vector<1x5x28xbf16>
    %192 = vector.shape_cast %191 : vector<1x5x28xbf16> to vector<5x28xbf16>
    %c0_211 = arith.constant 0 : index
    %c7 = arith.constant 7 : index
    %c0_212 = arith.constant 0 : index
    %193 = vector.load %arg1[%c0_211, %c7, %c0_212] : memref<2x32x32xbf16, #tpu.memory_space<vmem>>, vector<1x5x28xbf16>
    %194 = vector.shape_cast %193 : vector<1x5x28xbf16> to vector<5x28xbf16>
    %c1_213 = arith.constant 1 : index
    %c7_214 = arith.constant 7 : index
    %c0_215 = arith.constant 0 : index
    %195 = vector.load %arg1[%c1_213, %c7_214, %c0_215] : memref<2x32x32xbf16, #tpu.memory_space<vmem>>, vector<1x5x28xbf16>
    %196 = vector.shape_cast %195 : vector<1x5x28xbf16> to vector<5x28xbf16>
    %197 = tpu.concatenate %190, %192, %194, %196 in 1 : vector<5x28xbf16>, vector<5x28xbf16>, vector<5x28xbf16>, vector<5x28xbf16> -> vector<5x112xbf16>
    %c0_216 = arith.constant 0 : index
    %c6_217 = arith.constant 6 : index
    %c1_218 = arith.constant 1 : index
    %198 = vector.load %arg1[%c0_216, %c6_217, %c1_218] : memref<2x32x32xbf16, #tpu.memory_space<vmem>>, vector<1x5x28xbf16>
    %199 = vector.shape_cast %198 : vector<1x5x28xbf16> to vector<5x28xbf16>
    %c1_219 = arith.constant 1 : index
    %c6_220 = arith.constant 6 : index
    %c1_221 = arith.constant 1 : index
    %200 = vector.load %arg1[%c1_219, %c6_220, %c1_221] : memref<2x32x32xbf16, #tpu.memory_space<vmem>>, vector<1x5x28xbf16>
    %201 = vector.shape_cast %200 : vector<1x5x28xbf16> to vector<5x28xbf16>
    %c0_222 = arith.constant 0 : index
    %c7_223 = arith.constant 7 : index
    %c1_224 = arith.constant 1 : index
    %202 = vector.load %arg1[%c0_222, %c7_223, %c1_224] : memref<2x32x32xbf16, #tpu.memory_space<vmem>>, vector<1x5x28xbf16>
    %203 = vector.shape_cast %202 : vector<1x5x28xbf16> to vector<5x28xbf16>
    %c1_225 = arith.constant 1 : index
    %c7_226 = arith.constant 7 : index
    %c1_227 = arith.constant 1 : index
    %204 = vector.load %arg1[%c1_225, %c7_226, %c1_227] : memref<2x32x32xbf16, #tpu.memory_space<vmem>>, vector<1x5x28xbf16>
    %205 = vector.shape_cast %204 : vector<1x5x28xbf16> to vector<5x28xbf16>
    %206 = tpu.concatenate %199, %201, %203, %205 in 1 : vector<5x28xbf16>, vector<5x28xbf16>, vector<5x28xbf16>, vector<5x28xbf16> -> vector<5x112xbf16>
    %c0_228 = arith.constant 0 : index
    %c6_229 = arith.constant 6 : index
    %c2_230 = arith.constant 2 : index
    %207 = vector.load %arg1[%c0_228, %c6_229, %c2_230] : memref<2x32x32xbf16, #tpu.memory_space<vmem>>, vector<1x5x28xbf16>
    %208 = vector.shape_cast %207 : vector<1x5x28xbf16> to vector<5x28xbf16>
    %c1_231 = arith.constant 1 : index
    %c6_232 = arith.constant 6 : index
    %c2_233 = arith.constant 2 : index
    %209 = vector.load %arg1[%c1_231, %c6_232, %c2_233] : memref<2x32x32xbf16, #tpu.memory_space<vmem>>, vector<1x5x28xbf16>
    %210 = vector.shape_cast %209 : vector<1x5x28xbf16> to vector<5x28xbf16>
    %c0_234 = arith.constant 0 : index
    %c7_235 = arith.constant 7 : index
    %c2_236 = arith.constant 2 : index
    %211 = vector.load %arg1[%c0_234, %c7_235, %c2_236] : memref<2x32x32xbf16, #tpu.memory_space<vmem>>, vector<1x5x28xbf16>
    %212 = vector.shape_cast %211 : vector<1x5x28xbf16> to vector<5x28xbf16>
    %c1_237 = arith.constant 1 : index
    %c7_238 = arith.constant 7 : index
    %c2_239 = arith.constant 2 : index
    %213 = vector.load %arg1[%c1_237, %c7_238, %c2_239] : memref<2x32x32xbf16, #tpu.memory_space<vmem>>, vector<1x5x28xbf16>
    %214 = vector.shape_cast %213 : vector<1x5x28xbf16> to vector<5x28xbf16>
    %215 = tpu.concatenate %208, %210, %212, %214 in 1 : vector<5x28xbf16>, vector<5x28xbf16>, vector<5x28xbf16>, vector<5x28xbf16> -> vector<5x112xbf16>
    %c0_240 = arith.constant 0 : index
    %c6_241 = arith.constant 6 : index
    %c3_242 = arith.constant 3 : index
    %216 = vector.load %arg1[%c0_240, %c6_241, %c3_242] : memref<2x32x32xbf16, #tpu.memory_space<vmem>>, vector<1x5x28xbf16>
    %217 = vector.shape_cast %216 : vector<1x5x28xbf16> to vector<5x28xbf16>
    %c1_243 = arith.constant 1 : index
    %c6_244 = arith.constant 6 : index
    %c3_245 = arith.constant 3 : index
    %218 = vector.load %arg1[%c1_243, %c6_244, %c3_245] : memref<2x32x32xbf16, #tpu.memory_space<vmem>>, vector<1x5x28xbf16>
    %219 = vector.shape_cast %218 : vector<1x5x28xbf16> to vector<5x28xbf16>
    %c0_246 = arith.constant 0 : index
    %c7_247 = arith.constant 7 : index
    %c3_248 = arith.constant 3 : index
    %220 = vector.load %arg1[%c0_246, %c7_247, %c3_248] : memref<2x32x32xbf16, #tpu.memory_space<vmem>>, vector<1x5x28xbf16>
    %221 = vector.shape_cast %220 : vector<1x5x28xbf16> to vector<5x28xbf16>
    %c1_249 = arith.constant 1 : index
    %c7_250 = arith.constant 7 : index
    %c3_251 = arith.constant 3 : index
    %222 = vector.load %arg1[%c1_249, %c7_250, %c3_251] : memref<2x32x32xbf16, #tpu.memory_space<vmem>>, vector<1x5x28xbf16>
    %223 = vector.shape_cast %222 : vector<1x5x28xbf16> to vector<5x28xbf16>
    %224 = tpu.concatenate %217, %219, %221, %223 in 1 : vector<5x28xbf16>, vector<5x28xbf16>, vector<5x28xbf16>, vector<5x28xbf16> -> vector<5x112xbf16>
    %c0_252 = arith.constant 0 : index
    %c6_253 = arith.constant 6 : index
    %c4_254 = arith.constant 4 : index
    %225 = vector.load %arg1[%c0_252, %c6_253, %c4_254] : memref<2x32x32xbf16, #tpu.memory_space<vmem>>, vector<1x5x28xbf16>
    %226 = vector.shape_cast %225 : vector<1x5x28xbf16> to vector<5x28xbf16>
    %c1_255 = arith.constant 1 : index
    %c6_256 = arith.constant 6 : index
    %c4_257 = arith.constant 4 : index
    %227 = vector.load %arg1[%c1_255, %c6_256, %c4_257] : memref<2x32x32xbf16, #tpu.memory_space<vmem>>, vector<1x5x28xbf16>
    %228 = vector.shape_cast %227 : vector<1x5x28xbf16> to vector<5x28xbf16>
    %c0_258 = arith.constant 0 : index
    %c7_259 = arith.constant 7 : index
    %c4_260 = arith.constant 4 : index
    %229 = vector.load %arg1[%c0_258, %c7_259, %c4_260] : memref<2x32x32xbf16, #tpu.memory_space<vmem>>, vector<1x5x28xbf16>
    %230 = vector.shape_cast %229 : vector<1x5x28xbf16> to vector<5x28xbf16>
    %c1_261 = arith.constant 1 : index
    %c7_262 = arith.constant 7 : index
    %c4_263 = arith.constant 4 : index
    %231 = vector.load %arg1[%c1_261, %c7_262, %c4_263] : memref<2x32x32xbf16, #tpu.memory_space<vmem>>, vector<1x5x28xbf16>
    %232 = vector.shape_cast %231 : vector<1x5x28xbf16> to vector<5x28xbf16>
    %233 = tpu.concatenate %226, %228, %230, %232 in 1 : vector<5x28xbf16>, vector<5x28xbf16>, vector<5x28xbf16>, vector<5x28xbf16> -> vector<5x112xbf16>
    %234 = tpu.concatenate %197, %206, %215, %224, %233 in 0 : vector<5x112xbf16>, vector<5x112xbf16>, vector<5x112xbf16>, vector<5x112xbf16>, vector<5x112xbf16> -> vector<25x112xbf16>
    %cst_264 = arith.constant dense<0.000000e+00> : vector<6x112xf32>
    %235 = tpu.matmul %0, %234, %cst_264 {dimension_numbers = #tpu.dot_dimension_numbers<[1], [0], [0], [1], [0, 0, 1, 1], [], []>} : vector<6x25xbf16>, vector<25x112xbf16>, vector<6x112xf32> -> vector<6x112xf32>
    %236 = vector.extract_strided_slice %235 {offsets = [0, 0], sizes = [6, 56], strides = [1, 1]} : vector<6x112xf32> to vector<6x56xf32>
    %237 = vector.extract_strided_slice %235 {offsets = [0, 56], sizes = [6, 56], strides = [1, 1]} : vector<6x112xf32> to vector<6x56xf32>
    %238 = arith.maximumf %236, %237 : vector<6x56xf32>
    %239 = arith.truncf %238 : vector<6x56xf32> to vector<6x56xbf16>
    %cst_265 = arith.constant dense<0.000000e+00> : vector<6x28xf32>
    %240 = tpu.matmul %239, %2, %cst_265 {dimension_numbers = #tpu.dot_dimension_numbers<[1], [0], [0], [1], [0, 0, 1, 1], [], []>} : vector<6x56xbf16>, vector<56x28xbf16>, vector<6x28xf32> -> vector<6x28xf32>
    %cst_266 = arith.constant dense<0.000000e+00> : vector<6x28xf32>
    %241 = tpu.matmul %239, %3, %cst_266 {dimension_numbers = #tpu.dot_dimension_numbers<[1], [0], [0], [1], [0, 0, 1, 1], [], []>} : vector<6x56xbf16>, vector<56x28xbf16>, vector<6x28xf32> -> vector<6x28xf32>
    %242 = arith.maximumf %240, %241 : vector<6x28xf32>
    %243 = arith.addf %242, %8 : vector<6x28xf32>
    %cst_267 = arith.constant 0.000000e+00 : f32
    %244 = vector.broadcast %cst_267 : f32 to vector<6x28xf32>
    %245 = arith.maximumf %243, %244 : vector<6x28xf32>
    %246 = arith.truncf %245 : vector<6x28xf32> to vector<6x28xbf16>
    %c18 = arith.constant 18 : index
    %c0_268 = arith.constant 0 : index
    %247 = vector.load %arg17[%c18, %c0_268] : memref<84x28xbf16, #tpu.memory_space<vmem>>, vector<6x28xbf16>
    tpu.vector_store %arg17[%c18, %c0_268], %246 {strides = array<i32>} : memref<84x28xbf16, #tpu.memory_space<vmem>>, vector<6x28xbf16>,
    %c0_269 = arith.constant 0 : index
    %c8 = arith.constant 8 : index
    %c0_270 = arith.constant 0 : index
    %248 = vector.load %arg1[%c0_269, %c8, %c0_270] : memref<2x32x32xbf16, #tpu.memory_space<vmem>>, vector<1x5x28xbf16>
    %249 = vector.shape_cast %248 : vector<1x5x28xbf16> to vector<5x28xbf16>
    %c1_271 = arith.constant 1 : index
    %c8_272 = arith.constant 8 : index
    %c0_273 = arith.constant 0 : index
    %250 = vector.load %arg1[%c1_271, %c8_272, %c0_273] : memref<2x32x32xbf16, #tpu.memory_space<vmem>>, vector<1x5x28xbf16>
    %251 = vector.shape_cast %250 : vector<1x5x28xbf16> to vector<5x28xbf16>
    %c0_274 = arith.constant 0 : index
    %c9 = arith.constant 9 : index
    %c0_275 = arith.constant 0 : index
    %252 = vector.load %arg1[%c0_274, %c9, %c0_275] : memref<2x32x32xbf16, #tpu.memory_space<vmem>>, vector<1x5x28xbf16>
    %253 = vector.shape_cast %252 : vector<1x5x28xbf16> to vector<5x28xbf16>
    %c1_276 = arith.constant 1 : index
    %c9_277 = arith.constant 9 : index
    %c0_278 = arith.constant 0 : index
    %254 = vector.load %arg1[%c1_276, %c9_277, %c0_278] : memref<2x32x32xbf16, #tpu.memory_space<vmem>>, vector<1x5x28xbf16>
    %255 = vector.shape_cast %254 : vector<1x5x28xbf16> to vector<5x28xbf16>
    %256 = tpu.concatenate %249, %251, %253, %255 in 1 : vector<5x28xbf16>, vector<5x28xbf16>, vector<5x28xbf16>, vector<5x28xbf16> -> vector<5x112xbf16>
    %c0_279 = arith.constant 0 : index
    %c8_280 = arith.constant 8 : index
    %c1_281 = arith.constant 1 : index
    %257 = vector.load %arg1[%c0_279, %c8_280, %c1_281] : memref<2x32x32xbf16, #tpu.memory_space<vmem>>, vector<1x5x28xbf16>
    %258 = vector.shape_cast %257 : vector<1x5x28xbf16> to vector<5x28xbf16>
    %c1_282 = arith.constant 1 : index
    %c8_283 = arith.constant 8 : index
    %c1_284 = arith.constant 1 : index
    %259 = vector.load %arg1[%c1_282, %c8_283, %c1_284] : memref<2x32x32xbf16, #tpu.memory_space<vmem>>, vector<1x5x28xbf16>
    %260 = vector.shape_cast %259 : vector<1x5x28xbf16> to vector<5x28xbf16>
    %c0_285 = arith.constant 0 : index
    %c9_286 = arith.constant 9 : index
    %c1_287 = arith.constant 1 : index
    %261 = vector.load %arg1[%c0_285, %c9_286, %c1_287] : memref<2x32x32xbf16, #tpu.memory_space<vmem>>, vector<1x5x28xbf16>
    %262 = vector.shape_cast %261 : vector<1x5x28xbf16> to vector<5x28xbf16>
    %c1_288 = arith.constant 1 : index
    %c9_289 = arith.constant 9 : index
    %c1_290 = arith.constant 1 : index
    %263 = vector.load %arg1[%c1_288, %c9_289, %c1_290] : memref<2x32x32xbf16, #tpu.memory_space<vmem>>, vector<1x5x28xbf16>
    %264 = vector.shape_cast %263 : vector<1x5x28xbf16> to vector<5x28xbf16>
    %265 = tpu.concatenate %258, %260, %262, %264 in 1 : vector<5x28xbf16>, vector<5x28xbf16>, vector<5x28xbf16>, vector<5x28xbf16> -> vector<5x112xbf16>
    %c0_291 = arith.constant 0 : index
    %c8_292 = arith.constant 8 : index
    %c2_293 = arith.constant 2 : index
    %266 = vector.load %arg1[%c0_291, %c8_292, %c2_293] : memref<2x32x32xbf16, #tpu.memory_space<vmem>>, vector<1x5x28xbf16>
    %267 = vector.shape_cast %266 : vector<1x5x28xbf16> to vector<5x28xbf16>
    %c1_294 = arith.constant 1 : index
    %c8_295 = arith.constant 8 : index
    %c2_296 = arith.constant 2 : index
    %268 = vector.load %arg1[%c1_294, %c8_295, %c2_296] : memref<2x32x32xbf16, #tpu.memory_space<vmem>>, vector<1x5x28xbf16>
    %269 = vector.shape_cast %268 : vector<1x5x28xbf16> to vector<5x28xbf16>
    %c0_297 = arith.constant 0 : index
    %c9_298 = arith.constant 9 : index
    %c2_299 = arith.constant 2 : index
    %270 = vector.load %arg1[%c0_297, %c9_298, %c2_299] : memref<2x32x32xbf16, #tpu.memory_space<vmem>>, vector<1x5x28xbf16>
    %271 = vector.shape_cast %270 : vector<1x5x28xbf16> to vector<5x28xbf16>
    %c1_300 = arith.constant 1 : index
    %c9_301 = arith.constant 9 : index
    %c2_302 = arith.constant 2 : index
    %272 = vector.load %arg1[%c1_300, %c9_301, %c2_302] : memref<2x32x32xbf16, #tpu.memory_space<vmem>>, vector<1x5x28xbf16>
    %273 = vector.shape_cast %272 : vector<1x5x28xbf16> to vector<5x28xbf16>
    %274 = tpu.concatenate %267, %269, %271, %273 in 1 : vector<5x28xbf16>, vector<5x28xbf16>, vector<5x28xbf16>, vector<5x28xbf16> -> vector<5x112xbf16>
    %c0_303 = arith.constant 0 : index
    %c8_304 = arith.constant 8 : index
    %c3_305 = arith.constant 3 : index
    %275 = vector.load %arg1[%c0_303, %c8_304, %c3_305] : memref<2x32x32xbf16, #tpu.memory_space<vmem>>, vector<1x5x28xbf16>
    %276 = vector.shape_cast %275 : vector<1x5x28xbf16> to vector<5x28xbf16>
    %c1_306 = arith.constant 1 : index
    %c8_307 = arith.constant 8 : index
    %c3_308 = arith.constant 3 : index
    %277 = vector.load %arg1[%c1_306, %c8_307, %c3_308] : memref<2x32x32xbf16, #tpu.memory_space<vmem>>, vector<1x5x28xbf16>
    %278 = vector.shape_cast %277 : vector<1x5x28xbf16> to vector<5x28xbf16>
    %c0_309 = arith.constant 0 : index
    %c9_310 = arith.constant 9 : index
    %c3_311 = arith.constant 3 : index
    %279 = vector.load %arg1[%c0_309, %c9_310, %c3_311] : memref<2x32x32xbf16, #tpu.memory_space<vmem>>, vector<1x5x28xbf16>
    %280 = vector.shape_cast %279 : vector<1x5x28xbf16> to vector<5x28xbf16>
    %c1_312 = arith.constant 1 : index
    %c9_313 = arith.constant 9 : index
    %c3_314 = arith.constant 3 : index
    %281 = vector.load %arg1[%c1_312, %c9_313, %c3_314] : memref<2x32x32xbf16, #tpu.memory_space<vmem>>, vector<1x5x28xbf16>
    %282 = vector.shape_cast %281 : vector<1x5x28xbf16> to vector<5x28xbf16>
    %283 = tpu.concatenate %276, %278, %280, %282 in 1 : vector<5x28xbf16>, vector<5x28xbf16>, vector<5x28xbf16>, vector<5x28xbf16> -> vector<5x112xbf16>
    %c0_315 = arith.constant 0 : index
    %c8_316 = arith.constant 8 : index
    %c4_317 = arith.constant 4 : index
    %284 = vector.load %arg1[%c0_315, %c8_316, %c4_317] : memref<2x32x32xbf16, #tpu.memory_space<vmem>>, vector<1x5x28xbf16>
    %285 = vector.shape_cast %284 : vector<1x5x28xbf16> to vector<5x28xbf16>
    %c1_318 = arith.constant 1 : index
    %c8_319 = arith.constant 8 : index
    %c4_320 = arith.constant 4 : index
    %286 = vector.load %arg1[%c1_318, %c8_319, %c4_320] : memref<2x32x32xbf16, #tpu.memory_space<vmem>>, vector<1x5x28xbf16>
    %287 = vector.shape_cast %286 : vector<1x5x28xbf16> to vector<5x28xbf16>
    %c0_321 = arith.constant 0 : index
    %c9_322 = arith.constant 9 : index
    %c4_323 = arith.constant 4 : index
    %288 = vector.load %arg1[%c0_321, %c9_322, %c4_323] : memref<2x32x32xbf16, #tpu.memory_space<vmem>>, vector<1x5x28xbf16>
    %289 = vector.shape_cast %288 : vector<1x5x28xbf16> to vector<5x28xbf16>
    %c1_324 = arith.constant 1 : index
    %c9_325 = arith.constant 9 : index
    %c4_326 = arith.constant 4 : index
    %290 = vector.load %arg1[%c1_324, %c9_325, %c4_326] : memref<2x32x32xbf16, #tpu.memory_space<vmem>>, vector<1x5x28xbf16>
    %291 = vector.shape_cast %290 : vector<1x5x28xbf16> to vector<5x28xbf16>
    %292 = tpu.concatenate %285, %287, %289, %291 in 1 : vector<5x28xbf16>, vector<5x28xbf16>, vector<5x28xbf16>, vector<5x28xbf16> -> vector<5x112xbf16>
    %293 = tpu.concatenate %256, %265, %274, %283, %292 in 0 : vector<5x112xbf16>, vector<5x112xbf16>, vector<5x112xbf16>, vector<5x112xbf16>, vector<5x112xbf16> -> vector<25x112xbf16>
    %cst_327 = arith.constant dense<0.000000e+00> : vector<6x112xf32>
    %294 = tpu.matmul %0, %293, %cst_327 {dimension_numbers = #tpu.dot_dimension_numbers<[1], [0], [0], [1], [0, 0, 1, 1], [], []>} : vector<6x25xbf16>, vector<25x112xbf16>, vector<6x112xf32> -> vector<6x112xf32>
    %295 = vector.extract_strided_slice %294 {offsets = [0, 0], sizes = [6, 56], strides = [1, 1]} : vector<6x112xf32> to vector<6x56xf32>
    %296 = vector.extract_strided_slice %294 {offsets = [0, 56], sizes = [6, 56], strides = [1, 1]} : vector<6x112xf32> to vector<6x56xf32>
    %297 = arith.maximumf %295, %296 : vector<6x56xf32>
    %298 = arith.truncf %297 : vector<6x56xf32> to vector<6x56xbf16>
    %cst_328 = arith.constant dense<0.000000e+00> : vector<6x28xf32>
    %299 = tpu.matmul %298, %2, %cst_328 {dimension_numbers = #tpu.dot_dimension_numbers<[1], [0], [0], [1], [0, 0, 1, 1], [], []>} : vector<6x56xbf16>, vector<56x28xbf16>, vector<6x28xf32> -> vector<6x28xf32>
    %cst_329 = arith.constant dense<0.000000e+00> : vector<6x28xf32>
    %300 = tpu.matmul %298, %3, %cst_329 {dimension_numbers = #tpu.dot_dimension_numbers<[1], [0], [0], [1], [0, 0, 1, 1], [], []>} : vector<6x56xbf16>, vector<56x28xbf16>, vector<6x28xf32> -> vector<6x28xf32>
    %301 = arith.maximumf %299, %300 : vector<6x28xf32>
    %302 = arith.addf %301, %8 : vector<6x28xf32>
    %cst_330 = arith.constant 0.000000e+00 : f32
    %303 = vector.broadcast %cst_330 : f32 to vector<6x28xf32>
    %304 = arith.maximumf %302, %303 : vector<6x28xf32>
    %305 = arith.truncf %304 : vector<6x28xf32> to vector<6x28xbf16>
    %c24 = arith.constant 24 : index
    %c0_331 = arith.constant 0 : index
    %306 = vector.load %arg17[%c24, %c0_331] : memref<84x28xbf16, #tpu.memory_space<vmem>>, vector<6x28xbf16>
    tpu.vector_store %arg17[%c24, %c0_331], %305 {strides = array<i32>} : memref<84x28xbf16, #tpu.memory_space<vmem>>, vector<6x28xbf16>,
    %c0_332 = arith.constant 0 : index
    %c10 = arith.constant 10 : index
    %c0_333 = arith.constant 0 : index
    %307 = vector.load %arg1[%c0_332, %c10, %c0_333] : memref<2x32x32xbf16, #tpu.memory_space<vmem>>, vector<1x5x28xbf16>
    %308 = vector.shape_cast %307 : vector<1x5x28xbf16> to vector<5x28xbf16>
    %c1_334 = arith.constant 1 : index
    %c10_335 = arith.constant 10 : index
    %c0_336 = arith.constant 0 : index
    %309 = vector.load %arg1[%c1_334, %c10_335, %c0_336] : memref<2x32x32xbf16, #tpu.memory_space<vmem>>, vector<1x5x28xbf16>
    %310 = vector.shape_cast %309 : vector<1x5x28xbf16> to vector<5x28xbf16>
    %c0_337 = arith.constant 0 : index
    %c11 = arith.constant 11 : index
    %c0_338 = arith.constant 0 : index
    %311 = vector.load %arg1[%c0_337, %c11, %c0_338] : memref<2x32x32xbf16, #tpu.memory_space<vmem>>, vector<1x5x28xbf16>
    %312 = vector.shape_cast %311 : vector<1x5x28xbf16> to vector<5x28xbf16>
    %c1_339 = arith.constant 1 : index
    %c11_340 = arith.constant 11 : index
    %c0_341 = arith.constant 0 : index
    %313 = vector.load %arg1[%c1_339, %c11_340, %c0_341] : memref<2x32x32xbf16, #tpu.memory_space<vmem>>, vector<1x5x28xbf16>
    %314 = vector.shape_cast %313 : vector<1x5x28xbf16> to vector<5x28xbf16>
    %315 = tpu.concatenate %308, %310, %312, %314 in 1 : vector<5x28xbf16>, vector<5x28xbf16>, vector<5x28xbf16>, vector<5x28xbf16> -> vector<5x112xbf16>
    %c0_342 = arith.constant 0 : index
    %c10_343 = arith.constant 10 : index
    %c1_344 = arith.constant 1 : index
    %316 = vector.load %arg1[%c0_342, %c10_343, %c1_344] : memref<2x32x32xbf16, #tpu.memory_space<vmem>>, vector<1x5x28xbf16>
    %317 = vector.shape_cast %316 : vector<1x5x28xbf16> to vector<5x28xbf16>
    %c1_345 = arith.constant 1 : index
    %c10_346 = arith.constant 10 : index
    %c1_347 = arith.constant 1 : index
    %318 = vector.load %arg1[%c1_345, %c10_346, %c1_347] : memref<2x32x32xbf16, #tpu.memory_space<vmem>>, vector<1x5x28xbf16>
    %319 = vector.shape_cast %318 : vector<1x5x28xbf16> to vector<5x28xbf16>
    %c0_348 = arith.constant 0 : index
    %c11_349 = arith.constant 11 : index
    %c1_350 = arith.constant 1 : index
    %320 = vector.load %arg1[%c0_348, %c11_349, %c1_350] : memref<2x32x32xbf16, #tpu.memory_space<vmem>>, vector<1x5x28xbf16>
    %321 = vector.shape_cast %320 : vector<1x5x28xbf16> to vector<5x28xbf16>
    %c1_351 = arith.constant 1 : index
    %c11_352 = arith.constant 11 : index
    %c1_353 = arith.constant 1 : index
    %322 = vector.load %arg1[%c1_351, %c11_352, %c1_353] : memref<2x32x32xbf16, #tpu.memory_space<vmem>>, vector<1x5x28xbf16>
    %323 = vector.shape_cast %322 : vector<1x5x28xbf16> to vector<5x28xbf16>
    %324 = tpu.concatenate %317, %319, %321, %323 in 1 : vector<5x28xbf16>, vector<5x28xbf16>, vector<5x28xbf16>, vector<5x28xbf16> -> vector<5x112xbf16>
    %c0_354 = arith.constant 0 : index
    %c10_355 = arith.constant 10 : index
    %c2_356 = arith.constant 2 : index
    %325 = vector.load %arg1[%c0_354, %c10_355, %c2_356] : memref<2x32x32xbf16, #tpu.memory_space<vmem>>, vector<1x5x28xbf16>
    %326 = vector.shape_cast %325 : vector<1x5x28xbf16> to vector<5x28xbf16>
    %c1_357 = arith.constant 1 : index
    %c10_358 = arith.constant 10 : index
    %c2_359 = arith.constant 2 : index
    %327 = vector.load %arg1[%c1_357, %c10_358, %c2_359] : memref<2x32x32xbf16, #tpu.memory_space<vmem>>, vector<1x5x28xbf16>
    %328 = vector.shape_cast %327 : vector<1x5x28xbf16> to vector<5x28xbf16>
    %c0_360 = arith.constant 0 : index
    %c11_361 = arith.constant 11 : index
    %c2_362 = arith.constant 2 : index
    %329 = vector.load %arg1[%c0_360, %c11_361, %c2_362] : memref<2x32x32xbf16, #tpu.memory_space<vmem>>, vector<1x5x28xbf16>
    %330 = vector.shape_cast %329 : vector<1x5x28xbf16> to vector<5x28xbf16>
    %c1_363 = arith.constant 1 : index
    %c11_364 = arith.constant 11 : index
    %c2_365 = arith.constant 2 : index
    %331 = vector.load %arg1[%c1_363, %c11_364, %c2_365] : memref<2x32x32xbf16, #tpu.memory_space<vmem>>, vector<1x5x28xbf16>
    %332 = vector.shape_cast %331 : vector<1x5x28xbf16> to vector<5x28xbf16>
    %333 = tpu.concatenate %326, %328, %330, %332 in 1 : vector<5x28xbf16>, vector<5x28xbf16>, vector<5x28xbf16>, vector<5x28xbf16> -> vector<5x112xbf16>
    %c0_366 = arith.constant 0 : index
    %c10_367 = arith.constant 10 : index
    %c3_368 = arith.constant 3 : index
    %334 = vector.load %arg1[%c0_366, %c10_367, %c3_368] : memref<2x32x32xbf16, #tpu.memory_space<vmem>>, vector<1x5x28xbf16>
    %335 = vector.shape_cast %334 : vector<1x5x28xbf16> to vector<5x28xbf16>
    %c1_369 = arith.constant 1 : index
    %c10_370 = arith.constant 10 : index
    %c3_371 = arith.constant 3 : index
    %336 = vector.load %arg1[%c1_369, %c10_370, %c3_371] : memref<2x32x32xbf16, #tpu.memory_space<vmem>>, vector<1x5x28xbf16>
    %337 = vector.shape_cast %336 : vector<1x5x28xbf16> to vector<5x28xbf16>
    %c0_372 = arith.constant 0 : index
    %c11_373 = arith.constant 11 : index
    %c3_374 = arith.constant 3 : index
    %338 = vector.load %arg1[%c0_372, %c11_373, %c3_374] : memref<2x32x32xbf16, #tpu.memory_space<vmem>>, vector<1x5x28xbf16>
    %339 = vector.shape_cast %338 : vector<1x5x28xbf16> to vector<5x28xbf16>
    %c1_375 = arith.constant 1 : index
    %c11_376 = arith.constant 11 : index
    %c3_377 = arith.constant 3 : index
    %340 = vector.load %arg1[%c1_375, %c11_376, %c3_377] : memref<2x32x32xbf16, #tpu.memory_space<vmem>>, vector<1x5x28xbf16>
    %341 = vector.shape_cast %340 : vector<1x5x28xbf16> to vector<5x28xbf16>
    %342 = tpu.concatenate %335, %337, %339, %341 in 1 : vector<5x28xbf16>, vector<5x28xbf16>, vector<5x28xbf16>, vector<5x28xbf16> -> vector<5x112xbf16>
    %c0_378 = arith.constant 0 : index
    %c10_379 = arith.constant 10 : index
    %c4_380 = arith.constant 4 : index
    %343 = vector.load %arg1[%c0_378, %c10_379, %c4_380] : memref<2x32x32xbf16, #tpu.memory_space<vmem>>, vector<1x5x28xbf16>
    %344 = vector.shape_cast %343 : vector<1x5x28xbf16> to vector<5x28xbf16>
    %c1_381 = arith.constant 1 : index
    %c10_382 = arith.constant 10 : index
    %c4_383 = arith.constant 4 : index
    %345 = vector.load %arg1[%c1_381, %c10_382, %c4_383] : memref<2x32x32xbf16, #tpu.memory_space<vmem>>, vector<1x5x28xbf16>
    %346 = vector.shape_cast %345 : vector<1x5x28xbf16> to vector<5x28xbf16>
    %c0_384 = arith.constant 0 : index
    %c11_385 = arith.constant 11 : index
    %c4_386 = arith.constant 4 : index
    %347 = vector.load %arg1[%c0_384, %c11_385, %c4_386] : memref<2x32x32xbf16, #tpu.memory_space<vmem>>, vector<1x5x28xbf16>
    %348 = vector.shape_cast %347 : vector<1x5x28xbf16> to vector<5x28xbf16>
    %c1_387 = arith.constant 1 : index
    %c11_388 = arith.constant 11 : index
    %c4_389 = arith.constant 4 : index
    %349 = vector.load %arg1[%c1_387, %c11_388, %c4_389] : memref<2x32x32xbf16, #tpu.memory_space<vmem>>, vector<1x5x28xbf16>
    %350 = vector.shape_cast %349 : vector<1x5x28xbf16> to vector<5x28xbf16>
    %351 = tpu.concatenate %344, %346, %348, %350 in 1 : vector<5x28xbf16>, vector<5x28xbf16>, vector<5x28xbf16>, vector<5x28xbf16> -> vector<5x112xbf16>
    %352 = tpu.concatenate %315, %324, %333, %342, %351 in 0 : vector<5x112xbf16>, vector<5x112xbf16>, vector<5x112xbf16>, vector<5x112xbf16>, vector<5x112xbf16> -> vector<25x112xbf16>
    %cst_390 = arith.constant dense<0.000000e+00> : vector<6x112xf32>
    %353 = tpu.matmul %0, %352, %cst_390 {dimension_numbers = #tpu.dot_dimension_numbers<[1], [0], [0], [1], [0, 0, 1, 1], [], []>} : vector<6x25xbf16>, vector<25x112xbf16>, vector<6x112xf32> -> vector<6x112xf32>
    %354 = vector.extract_strided_slice %353 {offsets = [0, 0], sizes = [6, 56], strides = [1, 1]} : vector<6x112xf32> to vector<6x56xf32>
    %355 = vector.extract_strided_slice %353 {offsets = [0, 56], sizes = [6, 56], strides = [1, 1]} : vector<6x112xf32> to vector<6x56xf32>
    %356 = arith.maximumf %354, %355 : vector<6x56xf32>
    %357 = arith.truncf %356 : vector<6x56xf32> to vector<6x56xbf16>
    %cst_391 = arith.constant dense<0.000000e+00> : vector<6x28xf32>
    %358 = tpu.matmul %357, %2, %cst_391 {dimension_numbers = #tpu.dot_dimension_numbers<[1], [0], [0], [1], [0, 0, 1, 1], [], []>} : vector<6x56xbf16>, vector<56x28xbf16>, vector<6x28xf32> -> vector<6x28xf32>
    %cst_392 = arith.constant dense<0.000000e+00> : vector<6x28xf32>
    %359 = tpu.matmul %357, %3, %cst_392 {dimension_numbers = #tpu.dot_dimension_numbers<[1], [0], [0], [1], [0, 0, 1, 1], [], []>} : vector<6x56xbf16>, vector<56x28xbf16>, vector<6x28xf32> -> vector<6x28xf32>
    %360 = arith.maximumf %358, %359 : vector<6x28xf32>
    %361 = arith.addf %360, %8 : vector<6x28xf32>
    %cst_393 = arith.constant 0.000000e+00 : f32
    %362 = vector.broadcast %cst_393 : f32 to vector<6x28xf32>
    %363 = arith.maximumf %361, %362 : vector<6x28xf32>
    %364 = arith.truncf %363 : vector<6x28xf32> to vector<6x28xbf16>
    %c30 = arith.constant 30 : index
    %c0_394 = arith.constant 0 : index
    %365 = vector.load %arg17[%c30, %c0_394] : memref<84x28xbf16, #tpu.memory_space<vmem>>, vector<6x28xbf16>
    tpu.vector_store %arg17[%c30, %c0_394], %364 {strides = array<i32>} : memref<84x28xbf16, #tpu.memory_space<vmem>>, vector<6x28xbf16>,
    %c0_395 = arith.constant 0 : index
    %c12_396 = arith.constant 12 : index
    %c0_397 = arith.constant 0 : index
    %366 = vector.load %arg1[%c0_395, %c12_396, %c0_397] : memref<2x32x32xbf16, #tpu.memory_space<vmem>>, vector<1x5x28xbf16>
    %367 = vector.shape_cast %366 : vector<1x5x28xbf16> to vector<5x28xbf16>
    %c1_398 = arith.constant 1 : index
    %c12_399 = arith.constant 12 : index
    %c0_400 = arith.constant 0 : index
    %368 = vector.load %arg1[%c1_398, %c12_399, %c0_400] : memref<2x32x32xbf16, #tpu.memory_space<vmem>>, vector<1x5x28xbf16>
    %369 = vector.shape_cast %368 : vector<1x5x28xbf16> to vector<5x28xbf16>
    %c0_401 = arith.constant 0 : index
    %c13 = arith.constant 13 : index
    %c0_402 = arith.constant 0 : index
    %370 = vector.load %arg1[%c0_401, %c13, %c0_402] : memref<2x32x32xbf16, #tpu.memory_space<vmem>>, vector<1x5x28xbf16>
    %371 = vector.shape_cast %370 : vector<1x5x28xbf16> to vector<5x28xbf16>
    %c1_403 = arith.constant 1 : index
    %c13_404 = arith.constant 13 : index
    %c0_405 = arith.constant 0 : index
    %372 = vector.load %arg1[%c1_403, %c13_404, %c0_405] : memref<2x32x32xbf16, #tpu.memory_space<vmem>>, vector<1x5x28xbf16>
    %373 = vector.shape_cast %372 : vector<1x5x28xbf16> to vector<5x28xbf16>
    %374 = tpu.concatenate %367, %369, %371, %373 in 1 : vector<5x28xbf16>, vector<5x28xbf16>, vector<5x28xbf16>, vector<5x28xbf16> -> vector<5x112xbf16>
    %c0_406 = arith.constant 0 : index
    %c12_407 = arith.constant 12 : index
    %c1_408 = arith.constant 1 : index
    %375 = vector.load %arg1[%c0_406, %c12_407, %c1_408] : memref<2x32x32xbf16, #tpu.memory_space<vmem>>, vector<1x5x28xbf16>
    %376 = vector.shape_cast %375 : vector<1x5x28xbf16> to vector<5x28xbf16>
    %c1_409 = arith.constant 1 : index
    %c12_410 = arith.constant 12 : index
    %c1_411 = arith.constant 1 : index
    %377 = vector.load %arg1[%c1_409, %c12_410, %c1_411] : memref<2x32x32xbf16, #tpu.memory_space<vmem>>, vector<1x5x28xbf16>
    %378 = vector.shape_cast %377 : vector<1x5x28xbf16> to vector<5x28xbf16>
    %c0_412 = arith.constant 0 : index
    %c13_413 = arith.constant 13 : index
    %c1_414 = arith.constant 1 : index
    %379 = vector.load %arg1[%c0_412, %c13_413, %c1_414] : memref<2x32x32xbf16, #tpu.memory_space<vmem>>, vector<1x5x28xbf16>
    %380 = vector.shape_cast %379 : vector<1x5x28xbf16> to vector<5x28xbf16>
    %c1_415 = arith.constant 1 : index
    %c13_416 = arith.constant 13 : index
    %c1_417 = arith.constant 1 : index
    %381 = vector.load %arg1[%c1_415, %c13_416, %c1_417] : memref<2x32x32xbf16, #tpu.memory_space<vmem>>, vector<1x5x28xbf16>
    %382 = vector.shape_cast %381 : vector<1x5x28xbf16> to vector<5x28xbf16>
    %383 = tpu.concatenate %376, %378, %380, %382 in 1 : vector<5x28xbf16>, vector<5x28xbf16>, vector<5x28xbf16>, vector<5x28xbf16> -> vector<5x112xbf16>
    %c0_418 = arith.constant 0 : index
    %c12_419 = arith.constant 12 : index
    %c2_420 = arith.constant 2 : index
    %384 = vector.load %arg1[%c0_418, %c12_419, %c2_420] : memref<2x32x32xbf16, #tpu.memory_space<vmem>>, vector<1x5x28xbf16>
    %385 = vector.shape_cast %384 : vector<1x5x28xbf16> to vector<5x28xbf16>
    %c1_421 = arith.constant 1 : index
    %c12_422 = arith.constant 12 : index
    %c2_423 = arith.constant 2 : index
    %386 = vector.load %arg1[%c1_421, %c12_422, %c2_423] : memref<2x32x32xbf16, #tpu.memory_space<vmem>>, vector<1x5x28xbf16>
    %387 = vector.shape_cast %386 : vector<1x5x28xbf16> to vector<5x28xbf16>
    %c0_424 = arith.constant 0 : index
    %c13_425 = arith.constant 13 : index
    %c2_426 = arith.constant 2 : index
    %388 = vector.load %arg1[%c0_424, %c13_425, %c2_426] : memref<2x32x32xbf16, #tpu.memory_space<vmem>>, vector<1x5x28xbf16>
    %389 = vector.shape_cast %388 : vector<1x5x28xbf16> to vector<5x28xbf16>
    %c1_427 = arith.constant 1 : index
    %c13_428 = arith.constant 13 : index
    %c2_429 = arith.constant 2 : index
    %390 = vector.load %arg1[%c1_427, %c13_428, %c2_429] : memref<2x32x32xbf16, #tpu.memory_space<vmem>>, vector<1x5x28xbf16>
    %391 = vector.shape_cast %390 : vector<1x5x28xbf16> to vector<5x28xbf16>
    %392 = tpu.concatenate %385, %387, %389, %391 in 1 : vector<5x28xbf16>, vector<5x28xbf16>, vector<5x28xbf16>, vector<5x28xbf16> -> vector<5x112xbf16>
    %c0_430 = arith.constant 0 : index
    %c12_431 = arith.constant 12 : index
    %c3_432 = arith.constant 3 : index
    %393 = vector.load %arg1[%c0_430, %c12_431, %c3_432] : memref<2x32x32xbf16, #tpu.memory_space<vmem>>, vector<1x5x28xbf16>
    %394 = vector.shape_cast %393 : vector<1x5x28xbf16> to vector<5x28xbf16>
    %c1_433 = arith.constant 1 : index
    %c12_434 = arith.constant 12 : index
    %c3_435 = arith.constant 3 : index
    %395 = vector.load %arg1[%c1_433, %c12_434, %c3_435] : memref<2x32x32xbf16, #tpu.memory_space<vmem>>, vector<1x5x28xbf16>
    %396 = vector.shape_cast %395 : vector<1x5x28xbf16> to vector<5x28xbf16>
    %c0_436 = arith.constant 0 : index
    %c13_437 = arith.constant 13 : index
    %c3_438 = arith.constant 3 : index
    %397 = vector.load %arg1[%c0_436, %c13_437, %c3_438] : memref<2x32x32xbf16, #tpu.memory_space<vmem>>, vector<1x5x28xbf16>
    %398 = vector.shape_cast %397 : vector<1x5x28xbf16> to vector<5x28xbf16>
    %c1_439 = arith.constant 1 : index
    %c13_440 = arith.constant 13 : index
    %c3_441 = arith.constant 3 : index
    %399 = vector.load %arg1[%c1_439, %c13_440, %c3_441] : memref<2x32x32xbf16, #tpu.memory_space<vmem>>, vector<1x5x28xbf16>
    %400 = vector.shape_cast %399 : vector<1x5x28xbf16> to vector<5x28xbf16>
    %401 = tpu.concatenate %394, %396, %398, %400 in 1 : vector<5x28xbf16>, vector<5x28xbf16>, vector<5x28xbf16>, vector<5x28xbf16> -> vector<5x112xbf16>
    %c0_442 = arith.constant 0 : index
    %c12_443 = arith.constant 12 : index
    %c4_444 = arith.constant 4 : index
    %402 = vector.load %arg1[%c0_442, %c12_443, %c4_444] : memref<2x32x32xbf16, #tpu.memory_space<vmem>>, vector<1x5x28xbf16>
    %403 = vector.shape_cast %402 : vector<1x5x28xbf16> to vector<5x28xbf16>
    %c1_445 = arith.constant 1 : index
    %c12_446 = arith.constant 12 : index
    %c4_447 = arith.constant 4 : index
    %404 = vector.load %arg1[%c1_445, %c12_446, %c4_447] : memref<2x32x32xbf16, #tpu.memory_space<vmem>>, vector<1x5x28xbf16>
    %405 = vector.shape_cast %404 : vector<1x5x28xbf16> to vector<5x28xbf16>
    %c0_448 = arith.constant 0 : index
    %c13_449 = arith.constant 13 : index
    %c4_450 = arith.constant 4 : index
    %406 = vector.load %arg1[%c0_448, %c13_449, %c4_450] : memref<2x32x32xbf16, #tpu.memory_space<vmem>>, vector<1x5x28xbf16>
    %407 = vector.shape_cast %406 : vector<1x5x28xbf16> to vector<5x28xbf16>
    %c1_451 = arith.constant 1 : index
    %c13_452 = arith.constant 13 : index
    %c4_453 = arith.constant 4 : index
    %408 = vector.load %arg1[%c1_451, %c13_452, %c4_453] : memref<2x32x32xbf16, #tpu.memory_space<vmem>>, vector<1x5x28xbf16>
    %409 = vector.shape_cast %408 : vector<1x5x28xbf16> to vector<5x28xbf16>
    %410 = tpu.concatenate %403, %405, %407, %409 in 1 : vector<5x28xbf16>, vector<5x28xbf16>, vector<5x28xbf16>, vector<5x28xbf16> -> vector<5x112xbf16>
    %411 = tpu.concatenate %374, %383, %392, %401, %410 in 0 : vector<5x112xbf16>, vector<5x112xbf16>, vector<5x112xbf16>, vector<5x112xbf16>, vector<5x112xbf16> -> vector<25x112xbf16>
    %cst_454 = arith.constant dense<0.000000e+00> : vector<6x112xf32>
    %412 = tpu.matmul %0, %411, %cst_454 {dimension_numbers = #tpu.dot_dimension_numbers<[1], [0], [0], [1], [0, 0, 1, 1], [], []>} : vector<6x25xbf16>, vector<25x112xbf16>, vector<6x112xf32> -> vector<6x112xf32>
    %413 = vector.extract_strided_slice %412 {offsets = [0, 0], sizes = [6, 56], strides = [1, 1]} : vector<6x112xf32> to vector<6x56xf32>
    %414 = vector.extract_strided_slice %412 {offsets = [0, 56], sizes = [6, 56], strides = [1, 1]} : vector<6x112xf32> to vector<6x56xf32>
    %415 = arith.maximumf %413, %414 : vector<6x56xf32>
    %416 = arith.truncf %415 : vector<6x56xf32> to vector<6x56xbf16>
    %cst_455 = arith.constant dense<0.000000e+00> : vector<6x28xf32>
    %417 = tpu.matmul %416, %2, %cst_455 {dimension_numbers = #tpu.dot_dimension_numbers<[1], [0], [0], [1], [0, 0, 1, 1], [], []>} : vector<6x56xbf16>, vector<56x28xbf16>, vector<6x28xf32> -> vector<6x28xf32>
    %cst_456 = arith.constant dense<0.000000e+00> : vector<6x28xf32>
    %418 = tpu.matmul %416, %3, %cst_456 {dimension_numbers = #tpu.dot_dimension_numbers<[1], [0], [0], [1], [0, 0, 1, 1], [], []>} : vector<6x56xbf16>, vector<56x28xbf16>, vector<6x28xf32> -> vector<6x28xf32>
    %419 = arith.maximumf %417, %418 : vector<6x28xf32>
    %420 = arith.addf %419, %8 : vector<6x28xf32>
    %cst_457 = arith.constant 0.000000e+00 : f32
    %421 = vector.broadcast %cst_457 : f32 to vector<6x28xf32>
    %422 = arith.maximumf %420, %421 : vector<6x28xf32>
    %423 = arith.truncf %422 : vector<6x28xf32> to vector<6x28xbf16>
    %c36 = arith.constant 36 : index
    %c0_458 = arith.constant 0 : index
    %424 = vector.load %arg17[%c36, %c0_458] : memref<84x28xbf16, #tpu.memory_space<vmem>>, vector<6x28xbf16>
    tpu.vector_store %arg17[%c36, %c0_458], %423 {strides = array<i32>} : memref<84x28xbf16, #tpu.memory_space<vmem>>, vector<6x28xbf16>,
    %c0_459 = arith.constant 0 : index
    %c14 = arith.constant 14 : index
    %c0_460 = arith.constant 0 : index
    %425 = vector.load %arg1[%c0_459, %c14, %c0_460] : memref<2x32x32xbf16, #tpu.memory_space<vmem>>, vector<1x5x28xbf16>
    %426 = vector.shape_cast %425 : vector<1x5x28xbf16> to vector<5x28xbf16>
    %c1_461 = arith.constant 1 : index
    %c14_462 = arith.constant 14 : index
    %c0_463 = arith.constant 0 : index
    %427 = vector.load %arg1[%c1_461, %c14_462, %c0_463] : memref<2x32x32xbf16, #tpu.memory_space<vmem>>, vector<1x5x28xbf16>
    %428 = vector.shape_cast %427 : vector<1x5x28xbf16> to vector<5x28xbf16>
    %c0_464 = arith.constant 0 : index
    %c15 = arith.constant 15 : index
    %c0_465 = arith.constant 0 : index
    %429 = vector.load %arg1[%c0_464, %c15, %c0_465] : memref<2x32x32xbf16, #tpu.memory_space<vmem>>, vector<1x5x28xbf16>
    %430 = vector.shape_cast %429 : vector<1x5x28xbf16> to vector<5x28xbf16>
    %c1_466 = arith.constant 1 : index
    %c15_467 = arith.constant 15 : index
    %c0_468 = arith.constant 0 : index
    %431 = vector.load %arg1[%c1_466, %c15_467, %c0_468] : memref<2x32x32xbf16, #tpu.memory_space<vmem>>, vector<1x5x28xbf16>
    %432 = vector.shape_cast %431 : vector<1x5x28xbf16> to vector<5x28xbf16>
    %433 = tpu.concatenate %426, %428, %430, %432 in 1 : vector<5x28xbf16>, vector<5x28xbf16>, vector<5x28xbf16>, vector<5x28xbf16> -> vector<5x112xbf16>
    %c0_469 = arith.constant 0 : index
    %c14_470 = arith.constant 14 : index
    %c1_471 = arith.constant 1 : index
    %434 = vector.load %arg1[%c0_469, %c14_470, %c1_471] : memref<2x32x32xbf16, #tpu.memory_space<vmem>>, vector<1x5x28xbf16>
    %435 = vector.shape_cast %434 : vector<1x5x28xbf16> to vector<5x28xbf16>
    %c1_472 = arith.constant 1 : index
    %c14_473 = arith.constant 14 : index
    %c1_474 = arith.constant 1 : index
    %436 = vector.load %arg1[%c1_472, %c14_473, %c1_474] : memref<2x32x32xbf16, #tpu.memory_space<vmem>>, vector<1x5x28xbf16>
    %437 = vector.shape_cast %436 : vector<1x5x28xbf16> to vector<5x28xbf16>
    %c0_475 = arith.constant 0 : index
    %c15_476 = arith.constant 15 : index
    %c1_477 = arith.constant 1 : index
    %438 = vector.load %arg1[%c0_475, %c15_476, %c1_477] : memref<2x32x32xbf16, #tpu.memory_space<vmem>>, vector<1x5x28xbf16>
    %439 = vector.shape_cast %438 : vector<1x5x28xbf16> to vector<5x28xbf16>
    %c1_478 = arith.constant 1 : index
    %c15_479 = arith.constant 15 : index
    %c1_480 = arith.constant 1 : index
    %440 = vector.load %arg1[%c1_478, %c15_479, %c1_480] : memref<2x32x32xbf16, #tpu.memory_space<vmem>>, vector<1x5x28xbf16>
    %441 = vector.shape_cast %440 : vector<1x5x28xbf16> to vector<5x28xbf16>
    %442 = tpu.concatenate %435, %437, %439, %441 in 1 : vector<5x28xbf16>, vector<5x28xbf16>, vector<5x28xbf16>, vector<5x28xbf16> -> vector<5x112xbf16>
    %c0_481 = arith.constant 0 : index
    %c14_482 = arith.constant 14 : index
    %c2_483 = arith.constant 2 : index
    %443 = vector.load %arg1[%c0_481, %c14_482, %c2_483] : memref<2x32x32xbf16, #tpu.memory_space<vmem>>, vector<1x5x28xbf16>
    %444 = vector.shape_cast %443 : vector<1x5x28xbf16> to vector<5x28xbf16>
    %c1_484 = arith.constant 1 : index
    %c14_485 = arith.constant 14 : index
    %c2_486 = arith.constant 2 : index
    %445 = vector.load %arg1[%c1_484, %c14_485, %c2_486] : memref<2x32x32xbf16, #tpu.memory_space<vmem>>, vector<1x5x28xbf16>
    %446 = vector.shape_cast %445 : vector<1x5x28xbf16> to vector<5x28xbf16>
    %c0_487 = arith.constant 0 : index
    %c15_488 = arith.constant 15 : index
    %c2_489 = arith.constant 2 : index
    %447 = vector.load %arg1[%c0_487, %c15_488, %c2_489] : memref<2x32x32xbf16, #tpu.memory_space<vmem>>, vector<1x5x28xbf16>
    %448 = vector.shape_cast %447 : vector<1x5x28xbf16> to vector<5x28xbf16>
    %c1_490 = arith.constant 1 : index
    %c15_491 = arith.constant 15 : index
    %c2_492 = arith.constant 2 : index
    %449 = vector.load %arg1[%c1_490, %c15_491, %c2_492] : memref<2x32x32xbf16, #tpu.memory_space<vmem>>, vector<1x5x28xbf16>
    %450 = vector.shape_cast %449 : vector<1x5x28xbf16> to vector<5x28xbf16>
    %451 = tpu.concatenate %444, %446, %448, %450 in 1 : vector<5x28xbf16>, vector<5x28xbf16>, vector<5x28xbf16>, vector<5x28xbf16> -> vector<5x112xbf16>
    %c0_493 = arith.constant 0 : index
    %c14_494 = arith.constant 14 : index
    %c3_495 = arith.constant 3 : index
    %452 = vector.load %arg1[%c0_493, %c14_494, %c3_495] : memref<2x32x32xbf16, #tpu.memory_space<vmem>>, vector<1x5x28xbf16>
    %453 = vector.shape_cast %452 : vector<1x5x28xbf16> to vector<5x28xbf16>
    %c1_496 = arith.constant 1 : index
    %c14_497 = arith.constant 14 : index
    %c3_498 = arith.constant 3 : index
    %454 = vector.load %arg1[%c1_496, %c14_497, %c3_498] : memref<2x32x32xbf16, #tpu.memory_space<vmem>>, vector<1x5x28xbf16>
    %455 = vector.shape_cast %454 : vector<1x5x28xbf16> to vector<5x28xbf16>
    %c0_499 = arith.constant 0 : index
    %c15_500 = arith.constant 15 : index
    %c3_501 = arith.constant 3 : index
    %456 = vector.load %arg1[%c0_499, %c15_500, %c3_501] : memref<2x32x32xbf16, #tpu.memory_space<vmem>>, vector<1x5x28xbf16>
    %457 = vector.shape_cast %456 : vector<1x5x28xbf16> to vector<5x28xbf16>
    %c1_502 = arith.constant 1 : index
    %c15_503 = arith.constant 15 : index
    %c3_504 = arith.constant 3 : index
    %458 = vector.load %arg1[%c1_502, %c15_503, %c3_504] : memref<2x32x32xbf16, #tpu.memory_space<vmem>>, vector<1x5x28xbf16>
    %459 = vector.shape_cast %458 : vector<1x5x28xbf16> to vector<5x28xbf16>
    %460 = tpu.concatenate %453, %455, %457, %459 in 1 : vector<5x28xbf16>, vector<5x28xbf16>, vector<5x28xbf16>, vector<5x28xbf16> -> vector<5x112xbf16>
    %c0_505 = arith.constant 0 : index
    %c14_506 = arith.constant 14 : index
    %c4_507 = arith.constant 4 : index
    %461 = vector.load %arg1[%c0_505, %c14_506, %c4_507] : memref<2x32x32xbf16, #tpu.memory_space<vmem>>, vector<1x5x28xbf16>
    %462 = vector.shape_cast %461 : vector<1x5x28xbf16> to vector<5x28xbf16>
    %c1_508 = arith.constant 1 : index
    %c14_509 = arith.constant 14 : index
    %c4_510 = arith.constant 4 : index
    %463 = vector.load %arg1[%c1_508, %c14_509, %c4_510] : memref<2x32x32xbf16, #tpu.memory_space<vmem>>, vector<1x5x28xbf16>
    %464 = vector.shape_cast %463 : vector<1x5x28xbf16> to vector<5x28xbf16>
    %c0_511 = arith.constant 0 : index
    %c15_512 = arith.constant 15 : index
    %c4_513 = arith.constant 4 : index
    %465 = vector.load %arg1[%c0_511, %c15_512, %c4_513] : memref<2x32x32xbf16, #tpu.memory_space<vmem>>, vector<1x5x28xbf16>
    %466 = vector.shape_cast %465 : vector<1x5x28xbf16> to vector<5x28xbf16>
    %c1_514 = arith.constant 1 : index
    %c15_515 = arith.constant 15 : index
    %c4_516 = arith.constant 4 : index
    %467 = vector.load %arg1[%c1_514, %c15_515, %c4_516] : memref<2x32x32xbf16, #tpu.memory_space<vmem>>, vector<1x5x28xbf16>
    %468 = vector.shape_cast %467 : vector<1x5x28xbf16> to vector<5x28xbf16>
    %469 = tpu.concatenate %462, %464, %466, %468 in 1 : vector<5x28xbf16>, vector<5x28xbf16>, vector<5x28xbf16>, vector<5x28xbf16> -> vector<5x112xbf16>
    %470 = tpu.concatenate %433, %442, %451, %460, %469 in 0 : vector<5x112xbf16>, vector<5x112xbf16>, vector<5x112xbf16>, vector<5x112xbf16>, vector<5x112xbf16> -> vector<25x112xbf16>
    %cst_517 = arith.constant dense<0.000000e+00> : vector<6x112xf32>
    %471 = tpu.matmul %0, %470, %cst_517 {dimension_numbers = #tpu.dot_dimension_numbers<[1], [0], [0], [1], [0, 0, 1, 1], [], []>} : vector<6x25xbf16>, vector<25x112xbf16>, vector<6x112xf32> -> vector<6x112xf32>
    %472 = vector.extract_strided_slice %471 {offsets = [0, 0], sizes = [6, 56], strides = [1, 1]} : vector<6x112xf32> to vector<6x56xf32>
    %473 = vector.extract_strided_slice %471 {offsets = [0, 56], sizes = [6, 56], strides = [1, 1]} : vector<6x112xf32> to vector<6x56xf32>
    %474 = arith.maximumf %472, %473 : vector<6x56xf32>
    %475 = arith.truncf %474 : vector<6x56xf32> to vector<6x56xbf16>
    %cst_518 = arith.constant dense<0.000000e+00> : vector<6x28xf32>
    %476 = tpu.matmul %475, %2, %cst_518 {dimension_numbers = #tpu.dot_dimension_numbers<[1], [0], [0], [1], [0, 0, 1, 1], [], []>} : vector<6x56xbf16>, vector<56x28xbf16>, vector<6x28xf32> -> vector<6x28xf32>
    %cst_519 = arith.constant dense<0.000000e+00> : vector<6x28xf32>
    %477 = tpu.matmul %475, %3, %cst_519 {dimension_numbers = #tpu.dot_dimension_numbers<[1], [0], [0], [1], [0, 0, 1, 1], [], []>} : vector<6x56xbf16>, vector<56x28xbf16>, vector<6x28xf32> -> vector<6x28xf32>
    %478 = arith.maximumf %476, %477 : vector<6x28xf32>
    %479 = arith.addf %478, %8 : vector<6x28xf32>
    %cst_520 = arith.constant 0.000000e+00 : f32
    %480 = vector.broadcast %cst_520 : f32 to vector<6x28xf32>
    %481 = arith.maximumf %479, %480 : vector<6x28xf32>
    %482 = arith.truncf %481 : vector<6x28xf32> to vector<6x28xbf16>
    %c42 = arith.constant 42 : index
    %c0_521 = arith.constant 0 : index
    %483 = vector.load %arg17[%c42, %c0_521] : memref<84x28xbf16, #tpu.memory_space<vmem>>, vector<6x28xbf16>
    tpu.vector_store %arg17[%c42, %c0_521], %482 {strides = array<i32>} : memref<84x28xbf16, #tpu.memory_space<vmem>>, vector<6x28xbf16>,
    %c0_522 = arith.constant 0 : index
    %c16 = arith.constant 16 : index
    %c0_523 = arith.constant 0 : index
    %484 = vector.load %arg1[%c0_522, %c16, %c0_523] : memref<2x32x32xbf16, #tpu.memory_space<vmem>>, vector<1x5x28xbf16>
    %485 = vector.shape_cast %484 : vector<1x5x28xbf16> to vector<5x28xbf16>
    %c1_524 = arith.constant 1 : index
    %c16_525 = arith.constant 16 : index
    %c0_526 = arith.constant 0 : index
    %486 = vector.load %arg1[%c1_524, %c16_525, %c0_526] : memref<2x32x32xbf16, #tpu.memory_space<vmem>>, vector<1x5x28xbf16>
    %487 = vector.shape_cast %486 : vector<1x5x28xbf16> to vector<5x28xbf16>
    %c0_527 = arith.constant 0 : index
    %c17 = arith.constant 17 : index
    %c0_528 = arith.constant 0 : index
    %488 = vector.load %arg1[%c0_527, %c17, %c0_528] : memref<2x32x32xbf16, #tpu.memory_space<vmem>>, vector<1x5x28xbf16>
    %489 = vector.shape_cast %488 : vector<1x5x28xbf16> to vector<5x28xbf16>
    %c1_529 = arith.constant 1 : index
    %c17_530 = arith.constant 17 : index
    %c0_531 = arith.constant 0 : index
    %490 = vector.load %arg1[%c1_529, %c17_530, %c0_531] : memref<2x32x32xbf16, #tpu.memory_space<vmem>>, vector<1x5x28xbf16>
    %491 = vector.shape_cast %490 : vector<1x5x28xbf16> to vector<5x28xbf16>
    %492 = tpu.concatenate %485, %487, %489, %491 in 1 : vector<5x28xbf16>, vector<5x28xbf16>, vector<5x28xbf16>, vector<5x28xbf16> -> vector<5x112xbf16>
    %c0_532 = arith.constant 0 : index
    %c16_533 = arith.constant 16 : index
    %c1_534 = arith.constant 1 : index
    %493 = vector.load %arg1[%c0_532, %c16_533, %c1_534] : memref<2x32x32xbf16, #tpu.memory_space<vmem>>, vector<1x5x28xbf16>
    %494 = vector.shape_cast %493 : vector<1x5x28xbf16> to vector<5x28xbf16>
    %c1_535 = arith.constant 1 : index
    %c16_536 = arith.constant 16 : index
    %c1_537 = arith.constant 1 : index
    %495 = vector.load %arg1[%c1_535, %c16_536, %c1_537] : memref<2x32x32xbf16, #tpu.memory_space<vmem>>, vector<1x5x28xbf16>
    %496 = vector.shape_cast %495 : vector<1x5x28xbf16> to vector<5x28xbf16>
    %c0_538 = arith.constant 0 : index
    %c17_539 = arith.constant 17 : index
    %c1_540 = arith.constant 1 : index
    %497 = vector.load %arg1[%c0_538, %c17_539, %c1_540] : memref<2x32x32xbf16, #tpu.memory_space<vmem>>, vector<1x5x28xbf16>
    %498 = vector.shape_cast %497 : vector<1x5x28xbf16> to vector<5x28xbf16>
    %c1_541 = arith.constant 1 : index
    %c17_542 = arith.constant 17 : index
    %c1_543 = arith.constant 1 : index
    %499 = vector.load %arg1[%c1_541, %c17_542, %c1_543] : memref<2x32x32xbf16, #tpu.memory_space<vmem>>, vector<1x5x28xbf16>
    %500 = vector.shape_cast %499 : vector<1x5x28xbf16> to vector<5x28xbf16>
    %501 = tpu.concatenate %494, %496, %498, %500 in 1 : vector<5x28xbf16>, vector<5x28xbf16>, vector<5x28xbf16>, vector<5x28xbf16> -> vector<5x112xbf16>
    %c0_544 = arith.constant 0 : index
    %c16_545 = arith.constant 16 : index
    %c2_546 = arith.constant 2 : index
    %502 = vector.load %arg1[%c0_544, %c16_545, %c2_546] : memref<2x32x32xbf16, #tpu.memory_space<vmem>>, vector<1x5x28xbf16>
    %503 = vector.shape_cast %502 : vector<1x5x28xbf16> to vector<5x28xbf16>
    %c1_547 = arith.constant 1 : index
    %c16_548 = arith.constant 16 : index
    %c2_549 = arith.constant 2 : index
    %504 = vector.load %arg1[%c1_547, %c16_548, %c2_549] : memref<2x32x32xbf16, #tpu.memory_space<vmem>>, vector<1x5x28xbf16>
    %505 = vector.shape_cast %504 : vector<1x5x28xbf16> to vector<5x28xbf16>
    %c0_550 = arith.constant 0 : index
    %c17_551 = arith.constant 17 : index
    %c2_552 = arith.constant 2 : index
    %506 = vector.load %arg1[%c0_550, %c17_551, %c2_552] : memref<2x32x32xbf16, #tpu.memory_space<vmem>>, vector<1x5x28xbf16>
    %507 = vector.shape_cast %506 : vector<1x5x28xbf16> to vector<5x28xbf16>
    %c1_553 = arith.constant 1 : index
    %c17_554 = arith.constant 17 : index
    %c2_555 = arith.constant 2 : index
    %508 = vector.load %arg1[%c1_553, %c17_554, %c2_555] : memref<2x32x32xbf16, #tpu.memory_space<vmem>>, vector<1x5x28xbf16>
    %509 = vector.shape_cast %508 : vector<1x5x28xbf16> to vector<5x28xbf16>
    %510 = tpu.concatenate %503, %505, %507, %509 in 1 : vector<5x28xbf16>, vector<5x28xbf16>, vector<5x28xbf16>, vector<5x28xbf16> -> vector<5x112xbf16>
    %c0_556 = arith.constant 0 : index
    %c16_557 = arith.constant 16 : index
    %c3_558 = arith.constant 3 : index
    %511 = vector.load %arg1[%c0_556, %c16_557, %c3_558] : memref<2x32x32xbf16, #tpu.memory_space<vmem>>, vector<1x5x28xbf16>
    %512 = vector.shape_cast %511 : vector<1x5x28xbf16> to vector<5x28xbf16>
    %c1_559 = arith.constant 1 : index
    %c16_560 = arith.constant 16 : index
    %c3_561 = arith.constant 3 : index
    %513 = vector.load %arg1[%c1_559, %c16_560, %c3_561] : memref<2x32x32xbf16, #tpu.memory_space<vmem>>, vector<1x5x28xbf16>
    %514 = vector.shape_cast %513 : vector<1x5x28xbf16> to vector<5x28xbf16>
    %c0_562 = arith.constant 0 : index
    %c17_563 = arith.constant 17 : index
    %c3_564 = arith.constant 3 : index
    %515 = vector.load %arg1[%c0_562, %c17_563, %c3_564] : memref<2x32x32xbf16, #tpu.memory_space<vmem>>, vector<1x5x28xbf16>
    %516 = vector.shape_cast %515 : vector<1x5x28xbf16> to vector<5x28xbf16>
    %c1_565 = arith.constant 1 : index
    %c17_566 = arith.constant 17 : index
    %c3_567 = arith.constant 3 : index
    %517 = vector.load %arg1[%c1_565, %c17_566, %c3_567] : memref<2x32x32xbf16, #tpu.memory_space<vmem>>, vector<1x5x28xbf16>
    %518 = vector.shape_cast %517 : vector<1x5x28xbf16> to vector<5x28xbf16>
    %519 = tpu.concatenate %512, %514, %516, %518 in 1 : vector<5x28xbf16>, vector<5x28xbf16>, vector<5x28xbf16>, vector<5x28xbf16> -> vector<5x112xbf16>
    %c0_568 = arith.constant 0 : index
    %c16_569 = arith.constant 16 : index
    %c4_570 = arith.constant 4 : index
    %520 = vector.load %arg1[%c0_568, %c16_569, %c4_570] : memref<2x32x32xbf16, #tpu.memory_space<vmem>>, vector<1x5x28xbf16>
    %521 = vector.shape_cast %520 : vector<1x5x28xbf16> to vector<5x28xbf16>
    %c1_571 = arith.constant 1 : index
    %c16_572 = arith.constant 16 : index
    %c4_573 = arith.constant 4 : index
    %522 = vector.load %arg1[%c1_571, %c16_572, %c4_573] : memref<2x32x32xbf16, #tpu.memory_space<vmem>>, vector<1x5x28xbf16>
    %523 = vector.shape_cast %522 : vector<1x5x28xbf16> to vector<5x28xbf16>
    %c0_574 = arith.constant 0 : index
    %c17_575 = arith.constant 17 : index
    %c4_576 = arith.constant 4 : index
    %524 = vector.load %arg1[%c0_574, %c17_575, %c4_576] : memref<2x32x32xbf16, #tpu.memory_space<vmem>>, vector<1x5x28xbf16>
    %525 = vector.shape_cast %524 : vector<1x5x28xbf16> to vector<5x28xbf16>
    %c1_577 = arith.constant 1 : index
    %c17_578 = arith.constant 17 : index
    %c4_579 = arith.constant 4 : index
    %526 = vector.load %arg1[%c1_577, %c17_578, %c4_579] : memref<2x32x32xbf16, #tpu.memory_space<vmem>>, vector<1x5x28xbf16>
    %527 = vector.shape_cast %526 : vector<1x5x28xbf16> to vector<5x28xbf16>
    %528 = tpu.concatenate %521, %523, %525, %527 in 1 : vector<5x28xbf16>, vector<5x28xbf16>, vector<5x28xbf16>, vector<5x28xbf16> -> vector<5x112xbf16>
    %529 = tpu.concatenate %492, %501, %510, %519, %528 in 0 : vector<5x112xbf16>, vector<5x112xbf16>, vector<5x112xbf16>, vector<5x112xbf16>, vector<5x112xbf16> -> vector<25x112xbf16>
    %cst_580 = arith.constant dense<0.000000e+00> : vector<6x112xf32>
    %530 = tpu.matmul %0, %529, %cst_580 {dimension_numbers = #tpu.dot_dimension_numbers<[1], [0], [0], [1], [0, 0, 1, 1], [], []>} : vector<6x25xbf16>, vector<25x112xbf16>, vector<6x112xf32> -> vector<6x112xf32>
    %531 = vector.extract_strided_slice %530 {offsets = [0, 0], sizes = [6, 56], strides = [1, 1]} : vector<6x112xf32> to vector<6x56xf32>
    %532 = vector.extract_strided_slice %530 {offsets = [0, 56], sizes = [6, 56], strides = [1, 1]} : vector<6x112xf32> to vector<6x56xf32>
    %533 = arith.maximumf %531, %532 : vector<6x56xf32>
    %534 = arith.truncf %533 : vector<6x56xf32> to vector<6x56xbf16>
    %cst_581 = arith.constant dense<0.000000e+00> : vector<6x28xf32>
    %535 = tpu.matmul %534, %2, %cst_581 {dimension_numbers = #tpu.dot_dimension_numbers<[1], [0], [0], [1], [0, 0, 1, 1], [], []>} : vector<6x56xbf16>, vector<56x28xbf16>, vector<6x28xf32> -> vector<6x28xf32>
    %cst_582 = arith.constant dense<0.000000e+00> : vector<6x28xf32>
    %536 = tpu.matmul %534, %3, %cst_582 {dimension_numbers = #tpu.dot_dimension_numbers<[1], [0], [0], [1], [0, 0, 1, 1], [], []>} : vector<6x56xbf16>, vector<56x28xbf16>, vector<6x28xf32> -> vector<6x28xf32>
    %537 = arith.maximumf %535, %536 : vector<6x28xf32>
    %538 = arith.addf %537, %8 : vector<6x28xf32>
    %cst_583 = arith.constant 0.000000e+00 : f32
    %539 = vector.broadcast %cst_583 : f32 to vector<6x28xf32>
    %540 = arith.maximumf %538, %539 : vector<6x28xf32>
    %541 = arith.truncf %540 : vector<6x28xf32> to vector<6x28xbf16>
    %c48 = arith.constant 48 : index
    %c0_584 = arith.constant 0 : index
    %542 = vector.load %arg17[%c48, %c0_584] : memref<84x28xbf16, #tpu.memory_space<vmem>>, vector<6x28xbf16>
    tpu.vector_store %arg17[%c48, %c0_584], %541 {strides = array<i32>} : memref<84x28xbf16, #tpu.memory_space<vmem>>, vector<6x28xbf16>,
    %c0_585 = arith.constant 0 : index
    %c18_586 = arith.constant 18 : index
    %c0_587 = arith.constant 0 : index
    %543 = vector.load %arg1[%c0_585, %c18_586, %c0_587] : memref<2x32x32xbf16, #tpu.memory_space<vmem>>, vector<1x5x28xbf16>
    %544 = vector.shape_cast %543 : vector<1x5x28xbf16> to vector<5x28xbf16>
    %c1_588 = arith.constant 1 : index
    %c18_589 = arith.constant 18 : index
    %c0_590 = arith.constant 0 : index
    %545 = vector.load %arg1[%c1_588, %c18_589, %c0_590] : memref<2x32x32xbf16, #tpu.memory_space<vmem>>, vector<1x5x28xbf16>
    %546 = vector.shape_cast %545 : vector<1x5x28xbf16> to vector<5x28xbf16>
    %c0_591 = arith.constant 0 : index
    %c19 = arith.constant 19 : index
    %c0_592 = arith.constant 0 : index
    %547 = vector.load %arg1[%c0_591, %c19, %c0_592] : memref<2x32x32xbf16, #tpu.memory_space<vmem>>, vector<1x5x28xbf16>
    %548 = vector.shape_cast %547 : vector<1x5x28xbf16> to vector<5x28xbf16>
    %c1_593 = arith.constant 1 : index
    %c19_594 = arith.constant 19 : index
    %c0_595 = arith.constant 0 : index
    %549 = vector.load %arg1[%c1_593, %c19_594, %c0_595] : memref<2x32x32xbf16, #tpu.memory_space<vmem>>, vector<1x5x28xbf16>
    %550 = vector.shape_cast %549 : vector<1x5x28xbf16> to vector<5x28xbf16>
    %551 = tpu.concatenate %544, %546, %548, %550 in 1 : vector<5x28xbf16>, vector<5x28xbf16>, vector<5x28xbf16>, vector<5x28xbf16> -> vector<5x112xbf16>
    %c0_596 = arith.constant 0 : index
    %c18_597 = arith.constant 18 : index
    %c1_598 = arith.constant 1 : index
    %552 = vector.load %arg1[%c0_596, %c18_597, %c1_598] : memref<2x32x32xbf16, #tpu.memory_space<vmem>>, vector<1x5x28xbf16>
    %553 = vector.shape_cast %552 : vector<1x5x28xbf16> to vector<5x28xbf16>
    %c1_599 = arith.constant 1 : index
    %c18_600 = arith.constant 18 : index
    %c1_601 = arith.constant 1 : index
    %554 = vector.load %arg1[%c1_599, %c18_600, %c1_601] : memref<2x32x32xbf16, #tpu.memory_space<vmem>>, vector<1x5x28xbf16>
    %555 = vector.shape_cast %554 : vector<1x5x28xbf16> to vector<5x28xbf16>
    %c0_602 = arith.constant 0 : index
    %c19_603 = arith.constant 19 : index
    %c1_604 = arith.constant 1 : index
    %556 = vector.load %arg1[%c0_602, %c19_603, %c1_604] : memref<2x32x32xbf16, #tpu.memory_space<vmem>>, vector<1x5x28xbf16>
    %557 = vector.shape_cast %556 : vector<1x5x28xbf16> to vector<5x28xbf16>
    %c1_605 = arith.constant 1 : index
    %c19_606 = arith.constant 19 : index
    %c1_607 = arith.constant 1 : index
    %558 = vector.load %arg1[%c1_605, %c19_606, %c1_607] : memref<2x32x32xbf16, #tpu.memory_space<vmem>>, vector<1x5x28xbf16>
    %559 = vector.shape_cast %558 : vector<1x5x28xbf16> to vector<5x28xbf16>
    %560 = tpu.concatenate %553, %555, %557, %559 in 1 : vector<5x28xbf16>, vector<5x28xbf16>, vector<5x28xbf16>, vector<5x28xbf16> -> vector<5x112xbf16>
    %c0_608 = arith.constant 0 : index
    %c18_609 = arith.constant 18 : index
    %c2_610 = arith.constant 2 : index
    %561 = vector.load %arg1[%c0_608, %c18_609, %c2_610] : memref<2x32x32xbf16, #tpu.memory_space<vmem>>, vector<1x5x28xbf16>
    %562 = vector.shape_cast %561 : vector<1x5x28xbf16> to vector<5x28xbf16>
    %c1_611 = arith.constant 1 : index
    %c18_612 = arith.constant 18 : index
    %c2_613 = arith.constant 2 : index
    %563 = vector.load %arg1[%c1_611, %c18_612, %c2_613] : memref<2x32x32xbf16, #tpu.memory_space<vmem>>, vector<1x5x28xbf16>
    %564 = vector.shape_cast %563 : vector<1x5x28xbf16> to vector<5x28xbf16>
    %c0_614 = arith.constant 0 : index
    %c19_615 = arith.constant 19 : index
    %c2_616 = arith.constant 2 : index
    %565 = vector.load %arg1[%c0_614, %c19_615, %c2_616] : memref<2x32x32xbf16, #tpu.memory_space<vmem>>, vector<1x5x28xbf16>
    %566 = vector.shape_cast %565 : vector<1x5x28xbf16> to vector<5x28xbf16>
    %c1_617 = arith.constant 1 : index
    %c19_618 = arith.constant 19 : index
    %c2_619 = arith.constant 2 : index
    %567 = vector.load %arg1[%c1_617, %c19_618, %c2_619] : memref<2x32x32xbf16, #tpu.memory_space<vmem>>, vector<1x5x28xbf16>
    %568 = vector.shape_cast %567 : vector<1x5x28xbf16> to vector<5x28xbf16>
    %569 = tpu.concatenate %562, %564, %566, %568 in 1 : vector<5x28xbf16>, vector<5x28xbf16>, vector<5x28xbf16>, vector<5x28xbf16> -> vector<5x112xbf16>
    %c0_620 = arith.constant 0 : index
    %c18_621 = arith.constant 18 : index
    %c3_622 = arith.constant 3 : index
    %570 = vector.load %arg1[%c0_620, %c18_621, %c3_622] : memref<2x32x32xbf16, #tpu.memory_space<vmem>>, vector<1x5x28xbf16>
    %571 = vector.shape_cast %570 : vector<1x5x28xbf16> to vector<5x28xbf16>
    %c1_623 = arith.constant 1 : index
    %c18_624 = arith.constant 18 : index
    %c3_625 = arith.constant 3 : index
    %572 = vector.load %arg1[%c1_623, %c18_624, %c3_625] : memref<2x32x32xbf16, #tpu.memory_space<vmem>>, vector<1x5x28xbf16>
    %573 = vector.shape_cast %572 : vector<1x5x28xbf16> to vector<5x28xbf16>
    %c0_626 = arith.constant 0 : index
    %c19_627 = arith.constant 19 : index
    %c3_628 = arith.constant 3 : index
    %574 = vector.load %arg1[%c0_626, %c19_627, %c3_628] : memref<2x32x32xbf16, #tpu.memory_space<vmem>>, vector<1x5x28xbf16>
    %575 = vector.shape_cast %574 : vector<1x5x28xbf16> to vector<5x28xbf16>
    %c1_629 = arith.constant 1 : index
    %c19_630 = arith.constant 19 : index
    %c3_631 = arith.constant 3 : index
    %576 = vector.load %arg1[%c1_629, %c19_630, %c3_631] : memref<2x32x32xbf16, #tpu.memory_space<vmem>>, vector<1x5x28xbf16>
    %577 = vector.shape_cast %576 : vector<1x5x28xbf16> to vector<5x28xbf16>
    %578 = tpu.concatenate %571, %573, %575, %577 in 1 : vector<5x28xbf16>, vector<5x28xbf16>, vector<5x28xbf16>, vector<5x28xbf16> -> vector<5x112xbf16>
    %c0_632 = arith.constant 0 : index
    %c18_633 = arith.constant 18 : index
    %c4_634 = arith.constant 4 : index
    %579 = vector.load %arg1[%c0_632, %c18_633, %c4_634] : memref<2x32x32xbf16, #tpu.memory_space<vmem>>, vector<1x5x28xbf16>
    %580 = vector.shape_cast %579 : vector<1x5x28xbf16> to vector<5x28xbf16>
    %c1_635 = arith.constant 1 : index
    %c18_636 = arith.constant 18 : index
    %c4_637 = arith.constant 4 : index
    %581 = vector.load %arg1[%c1_635, %c18_636, %c4_637] : memref<2x32x32xbf16, #tpu.memory_space<vmem>>, vector<1x5x28xbf16>
    %582 = vector.shape_cast %581 : vector<1x5x28xbf16> to vector<5x28xbf16>
    %c0_638 = arith.constant 0 : index
    %c19_639 = arith.constant 19 : index
    %c4_640 = arith.constant 4 : index
    %583 = vector.load %arg1[%c0_638, %c19_639, %c4_640] : memref<2x32x32xbf16, #tpu.memory_space<vmem>>, vector<1x5x28xbf16>
    %584 = vector.shape_cast %583 : vector<1x5x28xbf16> to vector<5x28xbf16>
    %c1_641 = arith.constant 1 : index
    %c19_642 = arith.constant 19 : index
    %c4_643 = arith.constant 4 : index
    %585 = vector.load %arg1[%c1_641, %c19_642, %c4_643] : memref<2x32x32xbf16, #tpu.memory_space<vmem>>, vector<1x5x28xbf16>
    %586 = vector.shape_cast %585 : vector<1x5x28xbf16> to vector<5x28xbf16>
    %587 = tpu.concatenate %580, %582, %584, %586 in 1 : vector<5x28xbf16>, vector<5x28xbf16>, vector<5x28xbf16>, vector<5x28xbf16> -> vector<5x112xbf16>
    %588 = tpu.concatenate %551, %560, %569, %578, %587 in 0 : vector<5x112xbf16>, vector<5x112xbf16>, vector<5x112xbf16>, vector<5x112xbf16>, vector<5x112xbf16> -> vector<25x112xbf16>
    %cst_644 = arith.constant dense<0.000000e+00> : vector<6x112xf32>
    %589 = tpu.matmul %0, %588, %cst_644 {dimension_numbers = #tpu.dot_dimension_numbers<[1], [0], [0], [1], [0, 0, 1, 1], [], []>} : vector<6x25xbf16>, vector<25x112xbf16>, vector<6x112xf32> -> vector<6x112xf32>
    %590 = vector.extract_strided_slice %589 {offsets = [0, 0], sizes = [6, 56], strides = [1, 1]} : vector<6x112xf32> to vector<6x56xf32>
    %591 = vector.extract_strided_slice %589 {offsets = [0, 56], sizes = [6, 56], strides = [1, 1]} : vector<6x112xf32> to vector<6x56xf32>
    %592 = arith.maximumf %590, %591 : vector<6x56xf32>
    %593 = arith.truncf %592 : vector<6x56xf32> to vector<6x56xbf16>
    %cst_645 = arith.constant dense<0.000000e+00> : vector<6x28xf32>
    %594 = tpu.matmul %593, %2, %cst_645 {dimension_numbers = #tpu.dot_dimension_numbers<[1], [0], [0], [1], [0, 0, 1, 1], [], []>} : vector<6x56xbf16>, vector<56x28xbf16>, vector<6x28xf32> -> vector<6x28xf32>
    %cst_646 = arith.constant dense<0.000000e+00> : vector<6x28xf32>
    %595 = tpu.matmul %593, %3, %cst_646 {dimension_numbers = #tpu.dot_dimension_numbers<[1], [0], [0], [1], [0, 0, 1, 1], [], []>} : vector<6x56xbf16>, vector<56x28xbf16>, vector<6x28xf32> -> vector<6x28xf32>
    %596 = arith.maximumf %594, %595 : vector<6x28xf32>
    %597 = arith.addf %596, %8 : vector<6x28xf32>
    %cst_647 = arith.constant 0.000000e+00 : f32
    %598 = vector.broadcast %cst_647 : f32 to vector<6x28xf32>
    %599 = arith.maximumf %597, %598 : vector<6x28xf32>
    %600 = arith.truncf %599 : vector<6x28xf32> to vector<6x28xbf16>
    %c54 = arith.constant 54 : index
    %c0_648 = arith.constant 0 : index
    %601 = vector.load %arg17[%c54, %c0_648] : memref<84x28xbf16, #tpu.memory_space<vmem>>, vector<6x28xbf16>
    tpu.vector_store %arg17[%c54, %c0_648], %600 {strides = array<i32>} : memref<84x28xbf16, #tpu.memory_space<vmem>>, vector<6x28xbf16>,
    %c0_649 = arith.constant 0 : index
    %c20 = arith.constant 20 : index
    %c0_650 = arith.constant 0 : index
    %602 = vector.load %arg1[%c0_649, %c20, %c0_650] : memref<2x32x32xbf16, #tpu.memory_space<vmem>>, vector<1x5x28xbf16>
    %603 = vector.shape_cast %602 : vector<1x5x28xbf16> to vector<5x28xbf16>
    %c1_651 = arith.constant 1 : index
    %c20_652 = arith.constant 20 : index
    %c0_653 = arith.constant 0 : index
    %604 = vector.load %arg1[%c1_651, %c20_652, %c0_653] : memref<2x32x32xbf16, #tpu.memory_space<vmem>>, vector<1x5x28xbf16>
    %605 = vector.shape_cast %604 : vector<1x5x28xbf16> to vector<5x28xbf16>
    %c0_654 = arith.constant 0 : index
    %c21 = arith.constant 21 : index
    %c0_655 = arith.constant 0 : index
    %606 = vector.load %arg1[%c0_654, %c21, %c0_655] : memref<2x32x32xbf16, #tpu.memory_space<vmem>>, vector<1x5x28xbf16>
    %607 = vector.shape_cast %606 : vector<1x5x28xbf16> to vector<5x28xbf16>
    %c1_656 = arith.constant 1 : index
    %c21_657 = arith.constant 21 : index
    %c0_658 = arith.constant 0 : index
    %608 = vector.load %arg1[%c1_656, %c21_657, %c0_658] : memref<2x32x32xbf16, #tpu.memory_space<vmem>>, vector<1x5x28xbf16>
    %609 = vector.shape_cast %608 : vector<1x5x28xbf16> to vector<5x28xbf16>
    %610 = tpu.concatenate %603, %605, %607, %609 in 1 : vector<5x28xbf16>, vector<5x28xbf16>, vector<5x28xbf16>, vector<5x28xbf16> -> vector<5x112xbf16>
    %c0_659 = arith.constant 0 : index
    %c20_660 = arith.constant 20 : index
    %c1_661 = arith.constant 1 : index
    %611 = vector.load %arg1[%c0_659, %c20_660, %c1_661] : memref<2x32x32xbf16, #tpu.memory_space<vmem>>, vector<1x5x28xbf16>
    %612 = vector.shape_cast %611 : vector<1x5x28xbf16> to vector<5x28xbf16>
    %c1_662 = arith.constant 1 : index
    %c20_663 = arith.constant 20 : index
    %c1_664 = arith.constant 1 : index
    %613 = vector.load %arg1[%c1_662, %c20_663, %c1_664] : memref<2x32x32xbf16, #tpu.memory_space<vmem>>, vector<1x5x28xbf16>
    %614 = vector.shape_cast %613 : vector<1x5x28xbf16> to vector<5x28xbf16>
    %c0_665 = arith.constant 0 : index
    %c21_666 = arith.constant 21 : index
    %c1_667 = arith.constant 1 : index
    %615 = vector.load %arg1[%c0_665, %c21_666, %c1_667] : memref<2x32x32xbf16, #tpu.memory_space<vmem>>, vector<1x5x28xbf16>
    %616 = vector.shape_cast %615 : vector<1x5x28xbf16> to vector<5x28xbf16>
    %c1_668 = arith.constant 1 : index
    %c21_669 = arith.constant 21 : index
    %c1_670 = arith.constant 1 : index
    %617 = vector.load %arg1[%c1_668, %c21_669, %c1_670] : memref<2x32x32xbf16, #tpu.memory_space<vmem>>, vector<1x5x28xbf16>
    %618 = vector.shape_cast %617 : vector<1x5x28xbf16> to vector<5x28xbf16>
    %619 = tpu.concatenate %612, %614, %616, %618 in 1 : vector<5x28xbf16>, vector<5x28xbf16>, vector<5x28xbf16>, vector<5x28xbf16> -> vector<5x112xbf16>
    %c0_671 = arith.constant 0 : index
    %c20_672 = arith.constant 20 : index
    %c2_673 = arith.constant 2 : index
    %620 = vector.load %arg1[%c0_671, %c20_672, %c2_673] : memref<2x32x32xbf16, #tpu.memory_space<vmem>>, vector<1x5x28xbf16>
    %621 = vector.shape_cast %620 : vector<1x5x28xbf16> to vector<5x28xbf16>
    %c1_674 = arith.constant 1 : index
    %c20_675 = arith.constant 20 : index
    %c2_676 = arith.constant 2 : index
    %622 = vector.load %arg1[%c1_674, %c20_675, %c2_676] : memref<2x32x32xbf16, #tpu.memory_space<vmem>>, vector<1x5x28xbf16>
    %623 = vector.shape_cast %622 : vector<1x5x28xbf16> to vector<5x28xbf16>
    %c0_677 = arith.constant 0 : index
    %c21_678 = arith.constant 21 : index
    %c2_679 = arith.constant 2 : index
    %624 = vector.load %arg1[%c0_677, %c21_678, %c2_679] : memref<2x32x32xbf16, #tpu.memory_space<vmem>>, vector<1x5x28xbf16>
    %625 = vector.shape_cast %624 : vector<1x5x28xbf16> to vector<5x28xbf16>
    %c1_680 = arith.constant 1 : index
    %c21_681 = arith.constant 21 : index
    %c2_682 = arith.constant 2 : index
    %626 = vector.load %arg1[%c1_680, %c21_681, %c2_682] : memref<2x32x32xbf16, #tpu.memory_space<vmem>>, vector<1x5x28xbf16>
    %627 = vector.shape_cast %626 : vector<1x5x28xbf16> to vector<5x28xbf16>
    %628 = tpu.concatenate %621, %623, %625, %627 in 1 : vector<5x28xbf16>, vector<5x28xbf16>, vector<5x28xbf16>, vector<5x28xbf16> -> vector<5x112xbf16>
    %c0_683 = arith.constant 0 : index
    %c20_684 = arith.constant 20 : index
    %c3_685 = arith.constant 3 : index
    %629 = vector.load %arg1[%c0_683, %c20_684, %c3_685] : memref<2x32x32xbf16, #tpu.memory_space<vmem>>, vector<1x5x28xbf16>
    %630 = vector.shape_cast %629 : vector<1x5x28xbf16> to vector<5x28xbf16>
    %c1_686 = arith.constant 1 : index
    %c20_687 = arith.constant 20 : index
    %c3_688 = arith.constant 3 : index
    %631 = vector.load %arg1[%c1_686, %c20_687, %c3_688] : memref<2x32x32xbf16, #tpu.memory_space<vmem>>, vector<1x5x28xbf16>
    %632 = vector.shape_cast %631 : vector<1x5x28xbf16> to vector<5x28xbf16>
    %c0_689 = arith.constant 0 : index
    %c21_690 = arith.constant 21 : index
    %c3_691 = arith.constant 3 : index
    %633 = vector.load %arg1[%c0_689, %c21_690, %c3_691] : memref<2x32x32xbf16, #tpu.memory_space<vmem>>, vector<1x5x28xbf16>
    %634 = vector.shape_cast %633 : vector<1x5x28xbf16> to vector<5x28xbf16>
    %c1_692 = arith.constant 1 : index
    %c21_693 = arith.constant 21 : index
    %c3_694 = arith.constant 3 : index
    %635 = vector.load %arg1[%c1_692, %c21_693, %c3_694] : memref<2x32x32xbf16, #tpu.memory_space<vmem>>, vector<1x5x28xbf16>
    %636 = vector.shape_cast %635 : vector<1x5x28xbf16> to vector<5x28xbf16>
    %637 = tpu.concatenate %630, %632, %634, %636 in 1 : vector<5x28xbf16>, vector<5x28xbf16>, vector<5x28xbf16>, vector<5x28xbf16> -> vector<5x112xbf16>
    %c0_695 = arith.constant 0 : index
    %c20_696 = arith.constant 20 : index
    %c4_697 = arith.constant 4 : index
    %638 = vector.load %arg1[%c0_695, %c20_696, %c4_697] : memref<2x32x32xbf16, #tpu.memory_space<vmem>>, vector<1x5x28xbf16>
    %639 = vector.shape_cast %638 : vector<1x5x28xbf16> to vector<5x28xbf16>
    %c1_698 = arith.constant 1 : index
    %c20_699 = arith.constant 20 : index
    %c4_700 = arith.constant 4 : index
    %640 = vector.load %arg1[%c1_698, %c20_699, %c4_700] : memref<2x32x32xbf16, #tpu.memory_space<vmem>>, vector<1x5x28xbf16>
    %641 = vector.shape_cast %640 : vector<1x5x28xbf16> to vector<5x28xbf16>
    %c0_701 = arith.constant 0 : index
    %c21_702 = arith.constant 21 : index
    %c4_703 = arith.constant 4 : index
    %642 = vector.load %arg1[%c0_701, %c21_702, %c4_703] : memref<2x32x32xbf16, #tpu.memory_space<vmem>>, vector<1x5x28xbf16>
    %643 = vector.shape_cast %642 : vector<1x5x28xbf16> to vector<5x28xbf16>
    %c1_704 = arith.constant 1 : index
    %c21_705 = arith.constant 21 : index
    %c4_706 = arith.constant 4 : index
    %644 = vector.load %arg1[%c1_704, %c21_705, %c4_706] : memref<2x32x32xbf16, #tpu.memory_space<vmem>>, vector<1x5x28xbf16>
    %645 = vector.shape_cast %644 : vector<1x5x28xbf16> to vector<5x28xbf16>
    %646 = tpu.concatenate %639, %641, %643, %645 in 1 : vector<5x28xbf16>, vector<5x28xbf16>, vector<5x28xbf16>, vector<5x28xbf16> -> vector<5x112xbf16>
    %647 = tpu.concatenate %610, %619, %628, %637, %646 in 0 : vector<5x112xbf16>, vector<5x112xbf16>, vector<5x112xbf16>, vector<5x112xbf16>, vector<5x112xbf16> -> vector<25x112xbf16>
    %cst_707 = arith.constant dense<0.000000e+00> : vector<6x112xf32>
    %648 = tpu.matmul %0, %647, %cst_707 {dimension_numbers = #tpu.dot_dimension_numbers<[1], [0], [0], [1], [0, 0, 1, 1], [], []>} : vector<6x25xbf16>, vector<25x112xbf16>, vector<6x112xf32> -> vector<6x112xf32>
    %649 = vector.extract_strided_slice %648 {offsets = [0, 0], sizes = [6, 56], strides = [1, 1]} : vector<6x112xf32> to vector<6x56xf32>
    %650 = vector.extract_strided_slice %648 {offsets = [0, 56], sizes = [6, 56], strides = [1, 1]} : vector<6x112xf32> to vector<6x56xf32>
    %651 = arith.maximumf %649, %650 : vector<6x56xf32>
    %652 = arith.truncf %651 : vector<6x56xf32> to vector<6x56xbf16>
    %cst_708 = arith.constant dense<0.000000e+00> : vector<6x28xf32>
    %653 = tpu.matmul %652, %2, %cst_708 {dimension_numbers = #tpu.dot_dimension_numbers<[1], [0], [0], [1], [0, 0, 1, 1], [], []>} : vector<6x56xbf16>, vector<56x28xbf16>, vector<6x28xf32> -> vector<6x28xf32>
    %cst_709 = arith.constant dense<0.000000e+00> : vector<6x28xf32>
    %654 = tpu.matmul %652, %3, %cst_709 {dimension_numbers = #tpu.dot_dimension_numbers<[1], [0], [0], [1], [0, 0, 1, 1], [], []>} : vector<6x56xbf16>, vector<56x28xbf16>, vector<6x28xf32> -> vector<6x28xf32>
    %655 = arith.maximumf %653, %654 : vector<6x28xf32>
    %656 = arith.addf %655, %8 : vector<6x28xf32>
    %cst_710 = arith.constant 0.000000e+00 : f32
    %657 = vector.broadcast %cst_710 : f32 to vector<6x28xf32>
    %658 = arith.maximumf %656, %657 : vector<6x28xf32>
    %659 = arith.truncf %658 : vector<6x28xf32> to vector<6x28xbf16>
    %c60 = arith.constant 60 : index
    %c0_711 = arith.constant 0 : index
    %660 = vector.load %arg17[%c60, %c0_711] : memref<84x28xbf16, #tpu.memory_space<vmem>>, vector<6x28xbf16>
    tpu.vector_store %arg17[%c60, %c0_711], %659 {strides = array<i32>} : memref<84x28xbf16, #tpu.memory_space<vmem>>, vector<6x28xbf16>,
    %c0_712 = arith.constant 0 : index
    %c22 = arith.constant 22 : index
    %c0_713 = arith.constant 0 : index
    %661 = vector.load %arg1[%c0_712, %c22, %c0_713] : memref<2x32x32xbf16, #tpu.memory_space<vmem>>, vector<1x5x28xbf16>
    %662 = vector.shape_cast %661 : vector<1x5x28xbf16> to vector<5x28xbf16>
    %c1_714 = arith.constant 1 : index
    %c22_715 = arith.constant 22 : index
    %c0_716 = arith.constant 0 : index
    %663 = vector.load %arg1[%c1_714, %c22_715, %c0_716] : memref<2x32x32xbf16, #tpu.memory_space<vmem>>, vector<1x5x28xbf16>
    %664 = vector.shape_cast %663 : vector<1x5x28xbf16> to vector<5x28xbf16>
    %c0_717 = arith.constant 0 : index
    %c23 = arith.constant 23 : index
    %c0_718 = arith.constant 0 : index
    %665 = vector.load %arg1[%c0_717, %c23, %c0_718] : memref<2x32x32xbf16, #tpu.memory_space<vmem>>, vector<1x5x28xbf16>
    %666 = vector.shape_cast %665 : vector<1x5x28xbf16> to vector<5x28xbf16>
    %c1_719 = arith.constant 1 : index
    %c23_720 = arith.constant 23 : index
    %c0_721 = arith.constant 0 : index
    %667 = vector.load %arg1[%c1_719, %c23_720, %c0_721] : memref<2x32x32xbf16, #tpu.memory_space<vmem>>, vector<1x5x28xbf16>
    %668 = vector.shape_cast %667 : vector<1x5x28xbf16> to vector<5x28xbf16>
    %669 = tpu.concatenate %662, %664, %666, %668 in 1 : vector<5x28xbf16>, vector<5x28xbf16>, vector<5x28xbf16>, vector<5x28xbf16> -> vector<5x112xbf16>
    %c0_722 = arith.constant 0 : index
    %c22_723 = arith.constant 22 : index
    %c1_724 = arith.constant 1 : index
    %670 = vector.load %arg1[%c0_722, %c22_723, %c1_724] : memref<2x32x32xbf16, #tpu.memory_space<vmem>>, vector<1x5x28xbf16>
    %671 = vector.shape_cast %670 : vector<1x5x28xbf16> to vector<5x28xbf16>
    %c1_725 = arith.constant 1 : index
    %c22_726 = arith.constant 22 : index
    %c1_727 = arith.constant 1 : index
    %672 = vector.load %arg1[%c1_725, %c22_726, %c1_727] : memref<2x32x32xbf16, #tpu.memory_space<vmem>>, vector<1x5x28xbf16>
    %673 = vector.shape_cast %672 : vector<1x5x28xbf16> to vector<5x28xbf16>
    %c0_728 = arith.constant 0 : index
    %c23_729 = arith.constant 23 : index
    %c1_730 = arith.constant 1 : index
    %674 = vector.load %arg1[%c0_728, %c23_729, %c1_730] : memref<2x32x32xbf16, #tpu.memory_space<vmem>>, vector<1x5x28xbf16>
    %675 = vector.shape_cast %674 : vector<1x5x28xbf16> to vector<5x28xbf16>
    %c1_731 = arith.constant 1 : index
    %c23_732 = arith.constant 23 : index
    %c1_733 = arith.constant 1 : index
    %676 = vector.load %arg1[%c1_731, %c23_732, %c1_733] : memref<2x32x32xbf16, #tpu.memory_space<vmem>>, vector<1x5x28xbf16>
    %677 = vector.shape_cast %676 : vector<1x5x28xbf16> to vector<5x28xbf16>
    %678 = tpu.concatenate %671, %673, %675, %677 in 1 : vector<5x28xbf16>, vector<5x28xbf16>, vector<5x28xbf16>, vector<5x28xbf16> -> vector<5x112xbf16>
    %c0_734 = arith.constant 0 : index
    %c22_735 = arith.constant 22 : index
    %c2_736 = arith.constant 2 : index
    %679 = vector.load %arg1[%c0_734, %c22_735, %c2_736] : memref<2x32x32xbf16, #tpu.memory_space<vmem>>, vector<1x5x28xbf16>
    %680 = vector.shape_cast %679 : vector<1x5x28xbf16> to vector<5x28xbf16>
    %c1_737 = arith.constant 1 : index
    %c22_738 = arith.constant 22 : index
    %c2_739 = arith.constant 2 : index
    %681 = vector.load %arg1[%c1_737, %c22_738, %c2_739] : memref<2x32x32xbf16, #tpu.memory_space<vmem>>, vector<1x5x28xbf16>
    %682 = vector.shape_cast %681 : vector<1x5x28xbf16> to vector<5x28xbf16>
    %c0_740 = arith.constant 0 : index
    %c23_741 = arith.constant 23 : index
    %c2_742 = arith.constant 2 : index
    %683 = vector.load %arg1[%c0_740, %c23_741, %c2_742] : memref<2x32x32xbf16, #tpu.memory_space<vmem>>, vector<1x5x28xbf16>
    %684 = vector.shape_cast %683 : vector<1x5x28xbf16> to vector<5x28xbf16>
    %c1_743 = arith.constant 1 : index
    %c23_744 = arith.constant 23 : index
    %c2_745 = arith.constant 2 : index
    %685 = vector.load %arg1[%c1_743, %c23_744, %c2_745] : memref<2x32x32xbf16, #tpu.memory_space<vmem>>, vector<1x5x28xbf16>
    %686 = vector.shape_cast %685 : vector<1x5x28xbf16> to vector<5x28xbf16>
    %687 = tpu.concatenate %680, %682, %684, %686 in 1 : vector<5x28xbf16>, vector<5x28xbf16>, vector<5x28xbf16>, vector<5x28xbf16> -> vector<5x112xbf16>
    %c0_746 = arith.constant 0 : index
    %c22_747 = arith.constant 22 : index
    %c3_748 = arith.constant 3 : index
    %688 = vector.load %arg1[%c0_746, %c22_747, %c3_748] : memref<2x32x32xbf16, #tpu.memory_space<vmem>>, vector<1x5x28xbf16>
    %689 = vector.shape_cast %688 : vector<1x5x28xbf16> to vector<5x28xbf16>
    %c1_749 = arith.constant 1 : index
    %c22_750 = arith.constant 22 : index
    %c3_751 = arith.constant 3 : index
    %690 = vector.load %arg1[%c1_749, %c22_750, %c3_751] : memref<2x32x32xbf16, #tpu.memory_space<vmem>>, vector<1x5x28xbf16>
    %691 = vector.shape_cast %690 : vector<1x5x28xbf16> to vector<5x28xbf16>
    %c0_752 = arith.constant 0 : index
    %c23_753 = arith.constant 23 : index
    %c3_754 = arith.constant 3 : index
    %692 = vector.load %arg1[%c0_752, %c23_753, %c3_754] : memref<2x32x32xbf16, #tpu.memory_space<vmem>>, vector<1x5x28xbf16>
    %693 = vector.shape_cast %692 : vector<1x5x28xbf16> to vector<5x28xbf16>
    %c1_755 = arith.constant 1 : index
    %c23_756 = arith.constant 23 : index
    %c3_757 = arith.constant 3 : index
    %694 = vector.load %arg1[%c1_755, %c23_756, %c3_757] : memref<2x32x32xbf16, #tpu.memory_space<vmem>>, vector<1x5x28xbf16>
    %695 = vector.shape_cast %694 : vector<1x5x28xbf16> to vector<5x28xbf16>
    %696 = tpu.concatenate %689, %691, %693, %695 in 1 : vector<5x28xbf16>, vector<5x28xbf16>, vector<5x28xbf16>, vector<5x28xbf16> -> vector<5x112xbf16>
    %c0_758 = arith.constant 0 : index
    %c22_759 = arith.constant 22 : index
    %c4_760 = arith.constant 4 : index
    %697 = vector.load %arg1[%c0_758, %c22_759, %c4_760] : memref<2x32x32xbf16, #tpu.memory_space<vmem>>, vector<1x5x28xbf16>
    %698 = vector.shape_cast %697 : vector<1x5x28xbf16> to vector<5x28xbf16>
    %c1_761 = arith.constant 1 : index
    %c22_762 = arith.constant 22 : index
    %c4_763 = arith.constant 4 : index
    %699 = vector.load %arg1[%c1_761, %c22_762, %c4_763] : memref<2x32x32xbf16, #tpu.memory_space<vmem>>, vector<1x5x28xbf16>
    %700 = vector.shape_cast %699 : vector<1x5x28xbf16> to vector<5x28xbf16>
    %c0_764 = arith.constant 0 : index
    %c23_765 = arith.constant 23 : index
    %c4_766 = arith.constant 4 : index
    %701 = vector.load %arg1[%c0_764, %c23_765, %c4_766] : memref<2x32x32xbf16, #tpu.memory_space<vmem>>, vector<1x5x28xbf16>
    %702 = vector.shape_cast %701 : vector<1x5x28xbf16> to vector<5x28xbf16>
    %c1_767 = arith.constant 1 : index
    %c23_768 = arith.constant 23 : index
    %c4_769 = arith.constant 4 : index
    %703 = vector.load %arg1[%c1_767, %c23_768, %c4_769] : memref<2x32x32xbf16, #tpu.memory_space<vmem>>, vector<1x5x28xbf16>
    %704 = vector.shape_cast %703 : vector<1x5x28xbf16> to vector<5x28xbf16>
    %705 = tpu.concatenate %698, %700, %702, %704 in 1 : vector<5x28xbf16>, vector<5x28xbf16>, vector<5x28xbf16>, vector<5x28xbf16> -> vector<5x112xbf16>
    %706 = tpu.concatenate %669, %678, %687, %696, %705 in 0 : vector<5x112xbf16>, vector<5x112xbf16>, vector<5x112xbf16>, vector<5x112xbf16>, vector<5x112xbf16> -> vector<25x112xbf16>
    %cst_770 = arith.constant dense<0.000000e+00> : vector<6x112xf32>
    %707 = tpu.matmul %0, %706, %cst_770 {dimension_numbers = #tpu.dot_dimension_numbers<[1], [0], [0], [1], [0, 0, 1, 1], [], []>} : vector<6x25xbf16>, vector<25x112xbf16>, vector<6x112xf32> -> vector<6x112xf32>
    %708 = vector.extract_strided_slice %707 {offsets = [0, 0], sizes = [6, 56], strides = [1, 1]} : vector<6x112xf32> to vector<6x56xf32>
    %709 = vector.extract_strided_slice %707 {offsets = [0, 56], sizes = [6, 56], strides = [1, 1]} : vector<6x112xf32> to vector<6x56xf32>
    %710 = arith.maximumf %708, %709 : vector<6x56xf32>
    %711 = arith.truncf %710 : vector<6x56xf32> to vector<6x56xbf16>
    %cst_771 = arith.constant dense<0.000000e+00> : vector<6x28xf32>
    %712 = tpu.matmul %711, %2, %cst_771 {dimension_numbers = #tpu.dot_dimension_numbers<[1], [0], [0], [1], [0, 0, 1, 1], [], []>} : vector<6x56xbf16>, vector<56x28xbf16>, vector<6x28xf32> -> vector<6x28xf32>
    %cst_772 = arith.constant dense<0.000000e+00> : vector<6x28xf32>
    %713 = tpu.matmul %711, %3, %cst_772 {dimension_numbers = #tpu.dot_dimension_numbers<[1], [0], [0], [1], [0, 0, 1, 1], [], []>} : vector<6x56xbf16>, vector<56x28xbf16>, vector<6x28xf32> -> vector<6x28xf32>
    %714 = arith.maximumf %712, %713 : vector<6x28xf32>
    %715 = arith.addf %714, %8 : vector<6x28xf32>
    %cst_773 = arith.constant 0.000000e+00 : f32
    %716 = vector.broadcast %cst_773 : f32 to vector<6x28xf32>
    %717 = arith.maximumf %715, %716 : vector<6x28xf32>
    %718 = arith.truncf %717 : vector<6x28xf32> to vector<6x28xbf16>
    %c66 = arith.constant 66 : index
    %c0_774 = arith.constant 0 : index
    %719 = vector.load %arg17[%c66, %c0_774] : memref<84x28xbf16, #tpu.memory_space<vmem>>, vector<6x28xbf16>
    tpu.vector_store %arg17[%c66, %c0_774], %718 {strides = array<i32>} : memref<84x28xbf16, #tpu.memory_space<vmem>>, vector<6x28xbf16>,
    %c0_775 = arith.constant 0 : index
    %c24_776 = arith.constant 24 : index
    %c0_777 = arith.constant 0 : index
    %720 = vector.load %arg1[%c0_775, %c24_776, %c0_777] : memref<2x32x32xbf16, #tpu.memory_space<vmem>>, vector<1x5x28xbf16>
    %721 = vector.shape_cast %720 : vector<1x5x28xbf16> to vector<5x28xbf16>
    %c1_778 = arith.constant 1 : index
    %c24_779 = arith.constant 24 : index
    %c0_780 = arith.constant 0 : index
    %722 = vector.load %arg1[%c1_778, %c24_779, %c0_780] : memref<2x32x32xbf16, #tpu.memory_space<vmem>>, vector<1x5x28xbf16>
    %723 = vector.shape_cast %722 : vector<1x5x28xbf16> to vector<5x28xbf16>
    %c0_781 = arith.constant 0 : index
    %c25 = arith.constant 25 : index
    %c0_782 = arith.constant 0 : index
    %724 = vector.load %arg1[%c0_781, %c25, %c0_782] : memref<2x32x32xbf16, #tpu.memory_space<vmem>>, vector<1x5x28xbf16>
    %725 = vector.shape_cast %724 : vector<1x5x28xbf16> to vector<5x28xbf16>
    %c1_783 = arith.constant 1 : index
    %c25_784 = arith.constant 25 : index
    %c0_785 = arith.constant 0 : index
    %726 = vector.load %arg1[%c1_783, %c25_784, %c0_785] : memref<2x32x32xbf16, #tpu.memory_space<vmem>>, vector<1x5x28xbf16>
    %727 = vector.shape_cast %726 : vector<1x5x28xbf16> to vector<5x28xbf16>
    %728 = tpu.concatenate %721, %723, %725, %727 in 1 : vector<5x28xbf16>, vector<5x28xbf16>, vector<5x28xbf16>, vector<5x28xbf16> -> vector<5x112xbf16>
    %c0_786 = arith.constant 0 : index
    %c24_787 = arith.constant 24 : index
    %c1_788 = arith.constant 1 : index
    %729 = vector.load %arg1[%c0_786, %c24_787, %c1_788] : memref<2x32x32xbf16, #tpu.memory_space<vmem>>, vector<1x5x28xbf16>
    %730 = vector.shape_cast %729 : vector<1x5x28xbf16> to vector<5x28xbf16>
    %c1_789 = arith.constant 1 : index
    %c24_790 = arith.constant 24 : index
    %c1_791 = arith.constant 1 : index
    %731 = vector.load %arg1[%c1_789, %c24_790, %c1_791] : memref<2x32x32xbf16, #tpu.memory_space<vmem>>, vector<1x5x28xbf16>
    %732 = vector.shape_cast %731 : vector<1x5x28xbf16> to vector<5x28xbf16>
    %c0_792 = arith.constant 0 : index
    %c25_793 = arith.constant 25 : index
    %c1_794 = arith.constant 1 : index
    %733 = vector.load %arg1[%c0_792, %c25_793, %c1_794] : memref<2x32x32xbf16, #tpu.memory_space<vmem>>, vector<1x5x28xbf16>
    %734 = vector.shape_cast %733 : vector<1x5x28xbf16> to vector<5x28xbf16>
    %c1_795 = arith.constant 1 : index
    %c25_796 = arith.constant 25 : index
    %c1_797 = arith.constant 1 : index
    %735 = vector.load %arg1[%c1_795, %c25_796, %c1_797] : memref<2x32x32xbf16, #tpu.memory_space<vmem>>, vector<1x5x28xbf16>
    %736 = vector.shape_cast %735 : vector<1x5x28xbf16> to vector<5x28xbf16>
    %737 = tpu.concatenate %730, %732, %734, %736 in 1 : vector<5x28xbf16>, vector<5x28xbf16>, vector<5x28xbf16>, vector<5x28xbf16> -> vector<5x112xbf16>
    %c0_798 = arith.constant 0 : index
    %c24_799 = arith.constant 24 : index
    %c2_800 = arith.constant 2 : index
    %738 = vector.load %arg1[%c0_798, %c24_799, %c2_800] : memref<2x32x32xbf16, #tpu.memory_space<vmem>>, vector<1x5x28xbf16>
    %739 = vector.shape_cast %738 : vector<1x5x28xbf16> to vector<5x28xbf16>
    %c1_801 = arith.constant 1 : index
    %c24_802 = arith.constant 24 : index
    %c2_803 = arith.constant 2 : index
    %740 = vector.load %arg1[%c1_801, %c24_802, %c2_803] : memref<2x32x32xbf16, #tpu.memory_space<vmem>>, vector<1x5x28xbf16>
    %741 = vector.shape_cast %740 : vector<1x5x28xbf16> to vector<5x28xbf16>
    %c0_804 = arith.constant 0 : index
    %c25_805 = arith.constant 25 : index
    %c2_806 = arith.constant 2 : index
    %742 = vector.load %arg1[%c0_804, %c25_805, %c2_806] : memref<2x32x32xbf16, #tpu.memory_space<vmem>>, vector<1x5x28xbf16>
    %743 = vector.shape_cast %742 : vector<1x5x28xbf16> to vector<5x28xbf16>
    %c1_807 = arith.constant 1 : index
    %c25_808 = arith.constant 25 : index
    %c2_809 = arith.constant 2 : index
    %744 = vector.load %arg1[%c1_807, %c25_808, %c2_809] : memref<2x32x32xbf16, #tpu.memory_space<vmem>>, vector<1x5x28xbf16>
    %745 = vector.shape_cast %744 : vector<1x5x28xbf16> to vector<5x28xbf16>
    %746 = tpu.concatenate %739, %741, %743, %745 in 1 : vector<5x28xbf16>, vector<5x28xbf16>, vector<5x28xbf16>, vector<5x28xbf16> -> vector<5x112xbf16>
    %c0_810 = arith.constant 0 : index
    %c24_811 = arith.constant 24 : index
    %c3_812 = arith.constant 3 : index
    %747 = vector.load %arg1[%c0_810, %c24_811, %c3_812] : memref<2x32x32xbf16, #tpu.memory_space<vmem>>, vector<1x5x28xbf16>
    %748 = vector.shape_cast %747 : vector<1x5x28xbf16> to vector<5x28xbf16>
    %c1_813 = arith.constant 1 : index
    %c24_814 = arith.constant 24 : index
    %c3_815 = arith.constant 3 : index
    %749 = vector.load %arg1[%c1_813, %c24_814, %c3_815] : memref<2x32x32xbf16, #tpu.memory_space<vmem>>, vector<1x5x28xbf16>
    %750 = vector.shape_cast %749 : vector<1x5x28xbf16> to vector<5x28xbf16>
    %c0_816 = arith.constant 0 : index
    %c25_817 = arith.constant 25 : index
    %c3_818 = arith.constant 3 : index
    %751 = vector.load %arg1[%c0_816, %c25_817, %c3_818] : memref<2x32x32xbf16, #tpu.memory_space<vmem>>, vector<1x5x28xbf16>
    %752 = vector.shape_cast %751 : vector<1x5x28xbf16> to vector<5x28xbf16>
    %c1_819 = arith.constant 1 : index
    %c25_820 = arith.constant 25 : index
    %c3_821 = arith.constant 3 : index
    %753 = vector.load %arg1[%c1_819, %c25_820, %c3_821] : memref<2x32x32xbf16, #tpu.memory_space<vmem>>, vector<1x5x28xbf16>
    %754 = vector.shape_cast %753 : vector<1x5x28xbf16> to vector<5x28xbf16>
    %755 = tpu.concatenate %748, %750, %752, %754 in 1 : vector<5x28xbf16>, vector<5x28xbf16>, vector<5x28xbf16>, vector<5x28xbf16> -> vector<5x112xbf16>
    %c0_822 = arith.constant 0 : index
    %c24_823 = arith.constant 24 : index
    %c4_824 = arith.constant 4 : index
    %756 = vector.load %arg1[%c0_822, %c24_823, %c4_824] : memref<2x32x32xbf16, #tpu.memory_space<vmem>>, vector<1x5x28xbf16>
    %757 = vector.shape_cast %756 : vector<1x5x28xbf16> to vector<5x28xbf16>
    %c1_825 = arith.constant 1 : index
    %c24_826 = arith.constant 24 : index
    %c4_827 = arith.constant 4 : index
    %758 = vector.load %arg1[%c1_825, %c24_826, %c4_827] : memref<2x32x32xbf16, #tpu.memory_space<vmem>>, vector<1x5x28xbf16>
    %759 = vector.shape_cast %758 : vector<1x5x28xbf16> to vector<5x28xbf16>
    %c0_828 = arith.constant 0 : index
    %c25_829 = arith.constant 25 : index
    %c4_830 = arith.constant 4 : index
    %760 = vector.load %arg1[%c0_828, %c25_829, %c4_830] : memref<2x32x32xbf16, #tpu.memory_space<vmem>>, vector<1x5x28xbf16>
    %761 = vector.shape_cast %760 : vector<1x5x28xbf16> to vector<5x28xbf16>
    %c1_831 = arith.constant 1 : index
    %c25_832 = arith.constant 25 : index
    %c4_833 = arith.constant 4 : index
    %762 = vector.load %arg1[%c1_831, %c25_832, %c4_833] : memref<2x32x32xbf16, #tpu.memory_space<vmem>>, vector<1x5x28xbf16>
    %763 = vector.shape_cast %762 : vector<1x5x28xbf16> to vector<5x28xbf16>
    %764 = tpu.concatenate %757, %759, %761, %763 in 1 : vector<5x28xbf16>, vector<5x28xbf16>, vector<5x28xbf16>, vector<5x28xbf16> -> vector<5x112xbf16>
    %765 = tpu.concatenate %728, %737, %746, %755, %764 in 0 : vector<5x112xbf16>, vector<5x112xbf16>, vector<5x112xbf16>, vector<5x112xbf16>, vector<5x112xbf16> -> vector<25x112xbf16>
    %cst_834 = arith.constant dense<0.000000e+00> : vector<6x112xf32>
    %766 = tpu.matmul %0, %765, %cst_834 {dimension_numbers = #tpu.dot_dimension_numbers<[1], [0], [0], [1], [0, 0, 1, 1], [], []>} : vector<6x25xbf16>, vector<25x112xbf16>, vector<6x112xf32> -> vector<6x112xf32>
    %767 = vector.extract_strided_slice %766 {offsets = [0, 0], sizes = [6, 56], strides = [1, 1]} : vector<6x112xf32> to vector<6x56xf32>
    %768 = vector.extract_strided_slice %766 {offsets = [0, 56], sizes = [6, 56], strides = [1, 1]} : vector<6x112xf32> to vector<6x56xf32>
    %769 = arith.maximumf %767, %768 : vector<6x56xf32>
    %770 = arith.truncf %769 : vector<6x56xf32> to vector<6x56xbf16>
    %cst_835 = arith.constant dense<0.000000e+00> : vector<6x28xf32>
    %771 = tpu.matmul %770, %2, %cst_835 {dimension_numbers = #tpu.dot_dimension_numbers<[1], [0], [0], [1], [0, 0, 1, 1], [], []>} : vector<6x56xbf16>, vector<56x28xbf16>, vector<6x28xf32> -> vector<6x28xf32>
    %cst_836 = arith.constant dense<0.000000e+00> : vector<6x28xf32>
    %772 = tpu.matmul %770, %3, %cst_836 {dimension_numbers = #tpu.dot_dimension_numbers<[1], [0], [0], [1], [0, 0, 1, 1], [], []>} : vector<6x56xbf16>, vector<56x28xbf16>, vector<6x28xf32> -> vector<6x28xf32>
    %773 = arith.maximumf %771, %772 : vector<6x28xf32>
    %774 = arith.addf %773, %8 : vector<6x28xf32>
    %cst_837 = arith.constant 0.000000e+00 : f32
    %775 = vector.broadcast %cst_837 : f32 to vector<6x28xf32>
    %776 = arith.maximumf %774, %775 : vector<6x28xf32>
    %777 = arith.truncf %776 : vector<6x28xf32> to vector<6x28xbf16>
    %c72 = arith.constant 72 : index
    %c0_838 = arith.constant 0 : index
    %778 = vector.load %arg17[%c72, %c0_838] : memref<84x28xbf16, #tpu.memory_space<vmem>>, vector<6x28xbf16>
    tpu.vector_store %arg17[%c72, %c0_838], %777 {strides = array<i32>} : memref<84x28xbf16, #tpu.memory_space<vmem>>, vector<6x28xbf16>,
    %c0_839 = arith.constant 0 : index
    %c26 = arith.constant 26 : index
    %c0_840 = arith.constant 0 : index
    %779 = vector.load %arg1[%c0_839, %c26, %c0_840] : memref<2x32x32xbf16, #tpu.memory_space<vmem>>, vector<1x5x28xbf16>
    %780 = vector.shape_cast %779 : vector<1x5x28xbf16> to vector<5x28xbf16>
    %c1_841 = arith.constant 1 : index
    %c26_842 = arith.constant 26 : index
    %c0_843 = arith.constant 0 : index
    %781 = vector.load %arg1[%c1_841, %c26_842, %c0_843] : memref<2x32x32xbf16, #tpu.memory_space<vmem>>, vector<1x5x28xbf16>
    %782 = vector.shape_cast %781 : vector<1x5x28xbf16> to vector<5x28xbf16>
    %c0_844 = arith.constant 0 : index
    %c27 = arith.constant 27 : index
    %c0_845 = arith.constant 0 : index
    %783 = vector.load %arg1[%c0_844, %c27, %c0_845] : memref<2x32x32xbf16, #tpu.memory_space<vmem>>, vector<1x5x28xbf16>
    %784 = vector.shape_cast %783 : vector<1x5x28xbf16> to vector<5x28xbf16>
    %c1_846 = arith.constant 1 : index
    %c27_847 = arith.constant 27 : index
    %c0_848 = arith.constant 0 : index
    %785 = vector.load %arg1[%c1_846, %c27_847, %c0_848] : memref<2x32x32xbf16, #tpu.memory_space<vmem>>, vector<1x5x28xbf16>
    %786 = vector.shape_cast %785 : vector<1x5x28xbf16> to vector<5x28xbf16>
    %787 = tpu.concatenate %780, %782, %784, %786 in 1 : vector<5x28xbf16>, vector<5x28xbf16>, vector<5x28xbf16>, vector<5x28xbf16> -> vector<5x112xbf16>
    %c0_849 = arith.constant 0 : index
    %c26_850 = arith.constant 26 : index
    %c1_851 = arith.constant 1 : index
    %788 = vector.load %arg1[%c0_849, %c26_850, %c1_851] : memref<2x32x32xbf16, #tpu.memory_space<vmem>>, vector<1x5x28xbf16>
    %789 = vector.shape_cast %788 : vector<1x5x28xbf16> to vector<5x28xbf16>
    %c1_852 = arith.constant 1 : index
    %c26_853 = arith.constant 26 : index
    %c1_854 = arith.constant 1 : index
    %790 = vector.load %arg1[%c1_852, %c26_853, %c1_854] : memref<2x32x32xbf16, #tpu.memory_space<vmem>>, vector<1x5x28xbf16>
    %791 = vector.shape_cast %790 : vector<1x5x28xbf16> to vector<5x28xbf16>
    %c0_855 = arith.constant 0 : index
    %c27_856 = arith.constant 27 : index
    %c1_857 = arith.constant 1 : index
    %792 = vector.load %arg1[%c0_855, %c27_856, %c1_857] : memref<2x32x32xbf16, #tpu.memory_space<vmem>>, vector<1x5x28xbf16>
    %793 = vector.shape_cast %792 : vector<1x5x28xbf16> to vector<5x28xbf16>
    %c1_858 = arith.constant 1 : index
    %c27_859 = arith.constant 27 : index
    %c1_860 = arith.constant 1 : index
    %794 = vector.load %arg1[%c1_858, %c27_859, %c1_860] : memref<2x32x32xbf16, #tpu.memory_space<vmem>>, vector<1x5x28xbf16>
    %795 = vector.shape_cast %794 : vector<1x5x28xbf16> to vector<5x28xbf16>
    %796 = tpu.concatenate %789, %791, %793, %795 in 1 : vector<5x28xbf16>, vector<5x28xbf16>, vector<5x28xbf16>, vector<5x28xbf16> -> vector<5x112xbf16>
    %c0_861 = arith.constant 0 : index
    %c26_862 = arith.constant 26 : index
    %c2_863 = arith.constant 2 : index
    %797 = vector.load %arg1[%c0_861, %c26_862, %c2_863] : memref<2x32x32xbf16, #tpu.memory_space<vmem>>, vector<1x5x28xbf16>
    %798 = vector.shape_cast %797 : vector<1x5x28xbf16> to vector<5x28xbf16>
    %c1_864 = arith.constant 1 : index
    %c26_865 = arith.constant 26 : index
    %c2_866 = arith.constant 2 : index
    %799 = vector.load %arg1[%c1_864, %c26_865, %c2_866] : memref<2x32x32xbf16, #tpu.memory_space<vmem>>, vector<1x5x28xbf16>
    %800 = vector.shape_cast %799 : vector<1x5x28xbf16> to vector<5x28xbf16>
    %c0_867 = arith.constant 0 : index
    %c27_868 = arith.constant 27 : index
    %c2_869 = arith.constant 2 : index
    %801 = vector.load %arg1[%c0_867, %c27_868, %c2_869] : memref<2x32x32xbf16, #tpu.memory_space<vmem>>, vector<1x5x28xbf16>
    %802 = vector.shape_cast %801 : vector<1x5x28xbf16> to vector<5x28xbf16>
    %c1_870 = arith.constant 1 : index
    %c27_871 = arith.constant 27 : index
    %c2_872 = arith.constant 2 : index
    %803 = vector.load %arg1[%c1_870, %c27_871, %c2_872] : memref<2x32x32xbf16, #tpu.memory_space<vmem>>, vector<1x5x28xbf16>
    %804 = vector.shape_cast %803 : vector<1x5x28xbf16> to vector<5x28xbf16>
    %805 = tpu.concatenate %798, %800, %802, %804 in 1 : vector<5x28xbf16>, vector<5x28xbf16>, vector<5x28xbf16>, vector<5x28xbf16> -> vector<5x112xbf16>
    %c0_873 = arith.constant 0 : index
    %c26_874 = arith.constant 26 : index
    %c3_875 = arith.constant 3 : index
    %806 = vector.load %arg1[%c0_873, %c26_874, %c3_875] : memref<2x32x32xbf16, #tpu.memory_space<vmem>>, vector<1x5x28xbf16>
    %807 = vector.shape_cast %806 : vector<1x5x28xbf16> to vector<5x28xbf16>
    %c1_876 = arith.constant 1 : index
    %c26_877 = arith.constant 26 : index
    %c3_878 = arith.constant 3 : index
    %808 = vector.load %arg1[%c1_876, %c26_877, %c3_878] : memref<2x32x32xbf16, #tpu.memory_space<vmem>>, vector<1x5x28xbf16>
    %809 = vector.shape_cast %808 : vector<1x5x28xbf16> to vector<5x28xbf16>
    %c0_879 = arith.constant 0 : index
    %c27_880 = arith.constant 27 : index
    %c3_881 = arith.constant 3 : index
    %810 = vector.load %arg1[%c0_879, %c27_880, %c3_881] : memref<2x32x32xbf16, #tpu.memory_space<vmem>>, vector<1x5x28xbf16>
    %811 = vector.shape_cast %810 : vector<1x5x28xbf16> to vector<5x28xbf16>
    %c1_882 = arith.constant 1 : index
    %c27_883 = arith.constant 27 : index
    %c3_884 = arith.constant 3 : index
    %812 = vector.load %arg1[%c1_882, %c27_883, %c3_884] : memref<2x32x32xbf16, #tpu.memory_space<vmem>>, vector<1x5x28xbf16>
    %813 = vector.shape_cast %812 : vector<1x5x28xbf16> to vector<5x28xbf16>
    %814 = tpu.concatenate %807, %809, %811, %813 in 1 : vector<5x28xbf16>, vector<5x28xbf16>, vector<5x28xbf16>, vector<5x28xbf16> -> vector<5x112xbf16>
    %c0_885 = arith.constant 0 : index
    %c26_886 = arith.constant 26 : index
    %c4_887 = arith.constant 4 : index
    %815 = vector.load %arg1[%c0_885, %c26_886, %c4_887] : memref<2x32x32xbf16, #tpu.memory_space<vmem>>, vector<1x5x28xbf16>
    %816 = vector.shape_cast %815 : vector<1x5x28xbf16> to vector<5x28xbf16>
    %c1_888 = arith.constant 1 : index
    %c26_889 = arith.constant 26 : index
    %c4_890 = arith.constant 4 : index
    %817 = vector.load %arg1[%c1_888, %c26_889, %c4_890] : memref<2x32x32xbf16, #tpu.memory_space<vmem>>, vector<1x5x28xbf16>
    %818 = vector.shape_cast %817 : vector<1x5x28xbf16> to vector<5x28xbf16>
    %c0_891 = arith.constant 0 : index
    %c27_892 = arith.constant 27 : index
    %c4_893 = arith.constant 4 : index
    %819 = vector.load %arg1[%c0_891, %c27_892, %c4_893] : memref<2x32x32xbf16, #tpu.memory_space<vmem>>, vector<1x5x28xbf16>
    %820 = vector.shape_cast %819 : vector<1x5x28xbf16> to vector<5x28xbf16>
    %c1_894 = arith.constant 1 : index
    %c27_895 = arith.constant 27 : index
    %c4_896 = arith.constant 4 : index
    %821 = vector.load %arg1[%c1_894, %c27_895, %c4_896] : memref<2x32x32xbf16, #tpu.memory_space<vmem>>, vector<1x5x28xbf16>
    %822 = vector.shape_cast %821 : vector<1x5x28xbf16> to vector<5x28xbf16>
    %823 = tpu.concatenate %816, %818, %820, %822 in 1 : vector<5x28xbf16>, vector<5x28xbf16>, vector<5x28xbf16>, vector<5x28xbf16> -> vector<5x112xbf16>
    %824 = tpu.concatenate %787, %796, %805, %814, %823 in 0 : vector<5x112xbf16>, vector<5x112xbf16>, vector<5x112xbf16>, vector<5x112xbf16>, vector<5x112xbf16> -> vector<25x112xbf16>
    %cst_897 = arith.constant dense<0.000000e+00> : vector<6x112xf32>
    %825 = tpu.matmul %0, %824, %cst_897 {dimension_numbers = #tpu.dot_dimension_numbers<[1], [0], [0], [1], [0, 0, 1, 1], [], []>} : vector<6x25xbf16>, vector<25x112xbf16>, vector<6x112xf32> -> vector<6x112xf32>
    %826 = vector.extract_strided_slice %825 {offsets = [0, 0], sizes = [6, 56], strides = [1, 1]} : vector<6x112xf32> to vector<6x56xf32>
    %827 = vector.extract_strided_slice %825 {offsets = [0, 56], sizes = [6, 56], strides = [1, 1]} : vector<6x112xf32> to vector<6x56xf32>
    %828 = arith.maximumf %826, %827 : vector<6x56xf32>
    %829 = arith.truncf %828 : vector<6x56xf32> to vector<6x56xbf16>
    %cst_898 = arith.constant dense<0.000000e+00> : vector<6x28xf32>
    %830 = tpu.matmul %829, %2, %cst_898 {dimension_numbers = #tpu.dot_dimension_numbers<[1], [0], [0], [1], [0, 0, 1, 1], [], []>} : vector<6x56xbf16>, vector<56x28xbf16>, vector<6x28xf32> -> vector<6x28xf32>
    %cst_899 = arith.constant dense<0.000000e+00> : vector<6x28xf32>
    %831 = tpu.matmul %829, %3, %cst_899 {dimension_numbers = #tpu.dot_dimension_numbers<[1], [0], [0], [1], [0, 0, 1, 1], [], []>} : vector<6x56xbf16>, vector<56x28xbf16>, vector<6x28xf32> -> vector<6x28xf32>
    %832 = arith.maximumf %830, %831 : vector<6x28xf32>
    %833 = arith.addf %832, %8 : vector<6x28xf32>
    %cst_900 = arith.constant 0.000000e+00 : f32
    %834 = vector.broadcast %cst_900 : f32 to vector<6x28xf32>
    %835 = arith.maximumf %833, %834 : vector<6x28xf32>
    %836 = arith.truncf %835 : vector<6x28xf32> to vector<6x28xbf16>
    %c78 = arith.constant 78 : index
    %c0_901 = arith.constant 0 : index
    %837 = vector.load %arg17[%c78, %c0_901] : memref<84x28xbf16, #tpu.memory_space<vmem>>, vector<6x28xbf16>
    tpu.vector_store %arg17[%c78, %c0_901], %836 {strides = array<i32>} : memref<84x28xbf16, #tpu.memory_space<vmem>>, vector<6x28xbf16>,
    %c0_902 = arith.constant 0 : index
    %c0_903 = arith.constant 0 : index
    %838 = vector.load %arg17[%c0_902, %c0_903] : memref<84x28xbf16, #tpu.memory_space<vmem>>, vector<30x10xbf16>
    %c0_904 = arith.constant 0 : index
    %c14_905 = arith.constant 14 : index
    %839 = vector.load %arg17[%c0_904, %c14_905] : memref<84x28xbf16, #tpu.memory_space<vmem>>, vector<30x10xbf16>
    %c6_906 = arith.constant 6 : index
    %c0_907 = arith.constant 0 : index
    %840 = vector.load %arg17[%c6_906, %c0_907] : memref<84x28xbf16, #tpu.memory_space<vmem>>, vector<30x10xbf16>
    %c6_908 = arith.constant 6 : index
    %c14_909 = arith.constant 14 : index
    %841 = vector.load %arg17[%c6_908, %c14_909] : memref<84x28xbf16, #tpu.memory_space<vmem>>, vector<30x10xbf16>
    %842 = tpu.concatenate %838, %839, %840, %841 in 1 : vector<30x10xbf16>, vector<30x10xbf16>, vector<30x10xbf16>, vector<30x10xbf16> -> vector<30x40xbf16>
    %c0_910 = arith.constant 0 : index
    %c1_911 = arith.constant 1 : index
    %843 = vector.load %arg17[%c0_910, %c1_911] : memref<84x28xbf16, #tpu.memory_space<vmem>>, vector<30x10xbf16>
    %c0_912 = arith.constant 0 : index
    %c15_913 = arith.constant 15 : index
    %844 = vector.load %arg17[%c0_912, %c15_913] : memref<84x28xbf16, #tpu.memory_space<vmem>>, vector<30x10xbf16>
    %c6_914 = arith.constant 6 : index
    %c1_915 = arith.constant 1 : index
    %845 = vector.load %arg17[%c6_914, %c1_915] : memref<84x28xbf16, #tpu.memory_space<vmem>>, vector<30x10xbf16>
    %c6_916 = arith.constant 6 : index
    %c15_917 = arith.constant 15 : index
    %846 = vector.load %arg17[%c6_916, %c15_917] : memref<84x28xbf16, #tpu.memory_space<vmem>>, vector<30x10xbf16>
    %847 = tpu.concatenate %843, %844, %845, %846 in 1 : vector<30x10xbf16>, vector<30x10xbf16>, vector<30x10xbf16>, vector<30x10xbf16> -> vector<30x40xbf16>
    %c0_918 = arith.constant 0 : index
    %c2_919 = arith.constant 2 : index
    %848 = vector.load %arg17[%c0_918, %c2_919] : memref<84x28xbf16, #tpu.memory_space<vmem>>, vector<30x10xbf16>
    %c0_920 = arith.constant 0 : index
    %c16_921 = arith.constant 16 : index
    %849 = vector.load %arg17[%c0_920, %c16_921] : memref<84x28xbf16, #tpu.memory_space<vmem>>, vector<30x10xbf16>
    %c6_922 = arith.constant 6 : index
    %c2_923 = arith.constant 2 : index
    %850 = vector.load %arg17[%c6_922, %c2_923] : memref<84x28xbf16, #tpu.memory_space<vmem>>, vector<30x10xbf16>
    %c6_924 = arith.constant 6 : index
    %c16_925 = arith.constant 16 : index
    %851 = vector.load %arg17[%c6_924, %c16_925] : memref<84x28xbf16, #tpu.memory_space<vmem>>, vector<30x10xbf16>
    %852 = tpu.concatenate %848, %849, %850, %851 in 1 : vector<30x10xbf16>, vector<30x10xbf16>, vector<30x10xbf16>, vector<30x10xbf16> -> vector<30x40xbf16>
    %c0_926 = arith.constant 0 : index
    %c3_927 = arith.constant 3 : index
    %853 = vector.load %arg17[%c0_926, %c3_927] : memref<84x28xbf16, #tpu.memory_space<vmem>>, vector<30x10xbf16>
    %c0_928 = arith.constant 0 : index
    %c17_929 = arith.constant 17 : index
    %854 = vector.load %arg17[%c0_928, %c17_929] : memref<84x28xbf16, #tpu.memory_space<vmem>>, vector<30x10xbf16>
    %c6_930 = arith.constant 6 : index
    %c3_931 = arith.constant 3 : index
    %855 = vector.load %arg17[%c6_930, %c3_931] : memref<84x28xbf16, #tpu.memory_space<vmem>>, vector<30x10xbf16>
    %c6_932 = arith.constant 6 : index
    %c17_933 = arith.constant 17 : index
    %856 = vector.load %arg17[%c6_932, %c17_933] : memref<84x28xbf16, #tpu.memory_space<vmem>>, vector<30x10xbf16>
    %857 = tpu.concatenate %853, %854, %855, %856 in 1 : vector<30x10xbf16>, vector<30x10xbf16>, vector<30x10xbf16>, vector<30x10xbf16> -> vector<30x40xbf16>
    %c0_934 = arith.constant 0 : index
    %c4_935 = arith.constant 4 : index
    %858 = vector.load %arg17[%c0_934, %c4_935] : memref<84x28xbf16, #tpu.memory_space<vmem>>, vector<30x10xbf16>
    %c0_936 = arith.constant 0 : index
    %c18_937 = arith.constant 18 : index
    %859 = vector.load %arg17[%c0_936, %c18_937] : memref<84x28xbf16, #tpu.memory_space<vmem>>, vector<30x10xbf16>
    %c6_938 = arith.constant 6 : index
    %c4_939 = arith.constant 4 : index
    %860 = vector.load %arg17[%c6_938, %c4_939] : memref<84x28xbf16, #tpu.memory_space<vmem>>, vector<30x10xbf16>
    %c6_940 = arith.constant 6 : index
    %c18_941 = arith.constant 18 : index
    %861 = vector.load %arg17[%c6_940, %c18_941] : memref<84x28xbf16, #tpu.memory_space<vmem>>, vector<30x10xbf16>
    %862 = tpu.concatenate %858, %859, %860, %861 in 1 : vector<30x10xbf16>, vector<30x10xbf16>, vector<30x10xbf16>, vector<30x10xbf16> -> vector<30x40xbf16>
    %863 = tpu.concatenate %842, %847, %852, %857, %862 in 0 : vector<30x40xbf16>, vector<30x40xbf16>, vector<30x40xbf16>, vector<30x40xbf16>, vector<30x40xbf16> -> vector<150x40xbf16>
    %cst_942 = arith.constant dense<0.000000e+00> : vector<16x40xf32>
    %864 = tpu.matmul %1, %863, %cst_942 {dimension_numbers = #tpu.dot_dimension_numbers<[1], [0], [0], [1], [0, 0, 1, 1], [], []>} : vector<16x150xbf16>, vector<150x40xbf16>, vector<16x40xf32> -> vector<16x40xf32>
    %865 = vector.extract_strided_slice %864 {offsets = [0, 0], sizes = [16, 20], strides = [1, 1]} : vector<16x40xf32> to vector<16x20xf32>
    %866 = vector.extract_strided_slice %864 {offsets = [0, 20], sizes = [16, 20], strides = [1, 1]} : vector<16x40xf32> to vector<16x20xf32>
    %867 = arith.maximumf %865, %866 : vector<16x20xf32>
    %868 = arith.truncf %867 : vector<16x20xf32> to vector<16x20xbf16>
    %cst_943 = arith.constant dense<0.000000e+00> : vector<16x10xf32>
    %869 = tpu.matmul %868, %4, %cst_943 {dimension_numbers = #tpu.dot_dimension_numbers<[1], [0], [0], [1], [0, 0, 1, 1], [], []>} : vector<16x20xbf16>, vector<20x10xbf16>, vector<16x10xf32> -> vector<16x10xf32>
    %cst_944 = arith.constant dense<0.000000e+00> : vector<16x10xf32>
    %870 = tpu.matmul %868, %5, %cst_944 {dimension_numbers = #tpu.dot_dimension_numbers<[1], [0], [0], [1], [0, 0, 1, 1], [], []>} : vector<16x20xbf16>, vector<20x10xbf16>, vector<16x10xf32> -> vector<16x10xf32>
    %871 = arith.maximumf %869, %870 : vector<16x10xf32>
    %872 = arith.addf %871, %11 : vector<16x10xf32>
    %cst_945 = arith.constant 0.000000e+00 : f32
    %873 = vector.broadcast %cst_945 : f32 to vector<16x10xf32>
    %874 = arith.maximumf %872, %873 : vector<16x10xf32>
    %875 = arith.truncf %874 : vector<16x10xf32> to vector<16x10xbf16>
    %c0_946 = arith.constant 0 : index
    %c0_947 = arith.constant 0 : index
    %876 = vector.load %arg18[%c0_946, %c0_947] : memref<80x10xbf16, #tpu.memory_space<vmem>>, vector<16x10xbf16>
    tpu.vector_store %arg18[%c0_946, %c0_947], %875 {strides = array<i32>} : memref<80x10xbf16, #tpu.memory_space<vmem>>, vector<16x10xbf16>,
    %c12_948 = arith.constant 12 : index
    %c0_949 = arith.constant 0 : index
    %877 = vector.load %arg17[%c12_948, %c0_949] : memref<84x28xbf16, #tpu.memory_space<vmem>>, vector<30x10xbf16>
    %c12_950 = arith.constant 12 : index
    %c14_951 = arith.constant 14 : index
    %878 = vector.load %arg17[%c12_950, %c14_951] : memref<84x28xbf16, #tpu.memory_space<vmem>>, vector<30x10xbf16>
    %c18_952 = arith.constant 18 : index
    %c0_953 = arith.constant 0 : index
    %879 = vector.load %arg17[%c18_952, %c0_953] : memref<84x28xbf16, #tpu.memory_space<vmem>>, vector<30x10xbf16>
    %c18_954 = arith.constant 18 : index
    %c14_955 = arith.constant 14 : index
    %880 = vector.load %arg17[%c18_954, %c14_955] : memref<84x28xbf16, #tpu.memory_space<vmem>>, vector<30x10xbf16>
    %881 = tpu.concatenate %877, %878, %879, %880 in 1 : vector<30x10xbf16>, vector<30x10xbf16>, vector<30x10xbf16>, vector<30x10xbf16> -> vector<30x40xbf16>
    %c12_956 = arith.constant 12 : index
    %c1_957 = arith.constant 1 : index
    %882 = vector.load %arg17[%c12_956, %c1_957] : memref<84x28xbf16, #tpu.memory_space<vmem>>, vector<30x10xbf16>
    %c12_958 = arith.constant 12 : index
    %c15_959 = arith.constant 15 : index
    %883 = vector.load %arg17[%c12_958, %c15_959] : memref<84x28xbf16, #tpu.memory_space<vmem>>, vector<30x10xbf16>
    %c18_960 = arith.constant 18 : index
    %c1_961 = arith.constant 1 : index
    %884 = vector.load %arg17[%c18_960, %c1_961] : memref<84x28xbf16, #tpu.memory_space<vmem>>, vector<30x10xbf16>
    %c18_962 = arith.constant 18 : index
    %c15_963 = arith.constant 15 : index
    %885 = vector.load %arg17[%c18_962, %c15_963] : memref<84x28xbf16, #tpu.memory_space<vmem>>, vector<30x10xbf16>
    %886 = tpu.concatenate %882, %883, %884, %885 in 1 : vector<30x10xbf16>, vector<30x10xbf16>, vector<30x10xbf16>, vector<30x10xbf16> -> vector<30x40xbf16>
    %c12_964 = arith.constant 12 : index
    %c2_965 = arith.constant 2 : index
    %887 = vector.load %arg17[%c12_964, %c2_965] : memref<84x28xbf16, #tpu.memory_space<vmem>>, vector<30x10xbf16>
    %c12_966 = arith.constant 12 : index
    %c16_967 = arith.constant 16 : index
    %888 = vector.load %arg17[%c12_966, %c16_967] : memref<84x28xbf16, #tpu.memory_space<vmem>>, vector<30x10xbf16>
    %c18_968 = arith.constant 18 : index
    %c2_969 = arith.constant 2 : index
    %889 = vector.load %arg17[%c18_968, %c2_969] : memref<84x28xbf16, #tpu.memory_space<vmem>>, vector<30x10xbf16>
    %c18_970 = arith.constant 18 : index
    %c16_971 = arith.constant 16 : index
    %890 = vector.load %arg17[%c18_970, %c16_971] : memref<84x28xbf16, #tpu.memory_space<vmem>>, vector<30x10xbf16>
    %891 = tpu.concatenate %887, %888, %889, %890 in 1 : vector<30x10xbf16>, vector<30x10xbf16>, vector<30x10xbf16>, vector<30x10xbf16> -> vector<30x40xbf16>
    %c12_972 = arith.constant 12 : index
    %c3_973 = arith.constant 3 : index
    %892 = vector.load %arg17[%c12_972, %c3_973] : memref<84x28xbf16, #tpu.memory_space<vmem>>, vector<30x10xbf16>
    %c12_974 = arith.constant 12 : index
    %c17_975 = arith.constant 17 : index
    %893 = vector.load %arg17[%c12_974, %c17_975] : memref<84x28xbf16, #tpu.memory_space<vmem>>, vector<30x10xbf16>
    %c18_976 = arith.constant 18 : index
    %c3_977 = arith.constant 3 : index
    %894 = vector.load %arg17[%c18_976, %c3_977] : memref<84x28xbf16, #tpu.memory_space<vmem>>, vector<30x10xbf16>
    %c18_978 = arith.constant 18 : index
    %c17_979 = arith.constant 17 : index
    %895 = vector.load %arg17[%c18_978, %c17_979] : memref<84x28xbf16, #tpu.memory_space<vmem>>, vector<30x10xbf16>
    %896 = tpu.concatenate %892, %893, %894, %895 in 1 : vector<30x10xbf16>, vector<30x10xbf16>, vector<30x10xbf16>, vector<30x10xbf16> -> vector<30x40xbf16>
    %c12_980 = arith.constant 12 : index
    %c4_981 = arith.constant 4 : index
    %897 = vector.load %arg17[%c12_980, %c4_981] : memref<84x28xbf16, #tpu.memory_space<vmem>>, vector<30x10xbf16>
    %c12_982 = arith.constant 12 : index
    %c18_983 = arith.constant 18 : index
    %898 = vector.load %arg17[%c12_982, %c18_983] : memref<84x28xbf16, #tpu.memory_space<vmem>>, vector<30x10xbf16>
    %c18_984 = arith.constant 18 : index
    %c4_985 = arith.constant 4 : index
    %899 = vector.load %arg17[%c18_984, %c4_985] : memref<84x28xbf16, #tpu.memory_space<vmem>>, vector<30x10xbf16>
    %c18_986 = arith.constant 18 : index
    %c18_987 = arith.constant 18 : index
    %900 = vector.load %arg17[%c18_986, %c18_987] : memref<84x28xbf16, #tpu.memory_space<vmem>>, vector<30x10xbf16>
    %901 = tpu.concatenate %897, %898, %899, %900 in 1 : vector<30x10xbf16>, vector<30x10xbf16>, vector<30x10xbf16>, vector<30x10xbf16> -> vector<30x40xbf16>
    %902 = tpu.concatenate %881, %886, %891, %896, %901 in 0 : vector<30x40xbf16>, vector<30x40xbf16>, vector<30x40xbf16>, vector<30x40xbf16>, vector<30x40xbf16> -> vector<150x40xbf16>
    %cst_988 = arith.constant dense<0.000000e+00> : vector<16x40xf32>
    %903 = tpu.matmul %1, %902, %cst_988 {dimension_numbers = #tpu.dot_dimension_numbers<[1], [0], [0], [1], [0, 0, 1, 1], [], []>} : vector<16x150xbf16>, vector<150x40xbf16>, vector<16x40xf32> -> vector<16x40xf32>
    %904 = vector.extract_strided_slice %903 {offsets = [0, 0], sizes = [16, 20], strides = [1, 1]} : vector<16x40xf32> to vector<16x20xf32>
    %905 = vector.extract_strided_slice %903 {offsets = [0, 20], sizes = [16, 20], strides = [1, 1]} : vector<16x40xf32> to vector<16x20xf32>
    %906 = arith.maximumf %904, %905 : vector<16x20xf32>
    %907 = arith.truncf %906 : vector<16x20xf32> to vector<16x20xbf16>
    %cst_989 = arith.constant dense<0.000000e+00> : vector<16x10xf32>
    %908 = tpu.matmul %907, %4, %cst_989 {dimension_numbers = #tpu.dot_dimension_numbers<[1], [0], [0], [1], [0, 0, 1, 1], [], []>} : vector<16x20xbf16>, vector<20x10xbf16>, vector<16x10xf32> -> vector<16x10xf32>
    %cst_990 = arith.constant dense<0.000000e+00> : vector<16x10xf32>
    %909 = tpu.matmul %907, %5, %cst_990 {dimension_numbers = #tpu.dot_dimension_numbers<[1], [0], [0], [1], [0, 0, 1, 1], [], []>} : vector<16x20xbf16>, vector<20x10xbf16>, vector<16x10xf32> -> vector<16x10xf32>
    %910 = arith.maximumf %908, %909 : vector<16x10xf32>
    %911 = arith.addf %910, %11 : vector<16x10xf32>
    %cst_991 = arith.constant 0.000000e+00 : f32
    %912 = vector.broadcast %cst_991 : f32 to vector<16x10xf32>
    %913 = arith.maximumf %911, %912 : vector<16x10xf32>
    %914 = arith.truncf %913 : vector<16x10xf32> to vector<16x10xbf16>
    %c16_992 = arith.constant 16 : index
    %c0_993 = arith.constant 0 : index
    %915 = vector.load %arg18[%c16_992, %c0_993] : memref<80x10xbf16, #tpu.memory_space<vmem>>, vector<16x10xbf16>
    tpu.vector_store %arg18[%c16_992, %c0_993], %914 {strides = array<i32>} : memref<80x10xbf16, #tpu.memory_space<vmem>>, vector<16x10xbf16>,
    %c24_994 = arith.constant 24 : index
    %c0_995 = arith.constant 0 : index
    %916 = vector.load %arg17[%c24_994, %c0_995] : memref<84x28xbf16, #tpu.memory_space<vmem>>, vector<30x10xbf16>
    %c24_996 = arith.constant 24 : index
    %c14_997 = arith.constant 14 : index
    %917 = vector.load %arg17[%c24_996, %c14_997] : memref<84x28xbf16, #tpu.memory_space<vmem>>, vector<30x10xbf16>
    %c30_998 = arith.constant 30 : index
    %c0_999 = arith.constant 0 : index
    %918 = vector.load %arg17[%c30_998, %c0_999] : memref<84x28xbf16, #tpu.memory_space<vmem>>, vector<30x10xbf16>
    %c30_1000 = arith.constant 30 : index
    %c14_1001 = arith.constant 14 : index
    %919 = vector.load %arg17[%c30_1000, %c14_1001] : memref<84x28xbf16, #tpu.memory_space<vmem>>, vector<30x10xbf16>
    %920 = tpu.concatenate %916, %917, %918, %919 in 1 : vector<30x10xbf16>, vector<30x10xbf16>, vector<30x10xbf16>, vector<30x10xbf16> -> vector<30x40xbf16>
    %c24_1002 = arith.constant 24 : index
    %c1_1003 = arith.constant 1 : index
    %921 = vector.load %arg17[%c24_1002, %c1_1003] : memref<84x28xbf16, #tpu.memory_space<vmem>>, vector<30x10xbf16>
    %c24_1004 = arith.constant 24 : index
    %c15_1005 = arith.constant 15 : index
    %922 = vector.load %arg17[%c24_1004, %c15_1005] : memref<84x28xbf16, #tpu.memory_space<vmem>>, vector<30x10xbf16>
    %c30_1006 = arith.constant 30 : index
    %c1_1007 = arith.constant 1 : index
    %923 = vector.load %arg17[%c30_1006, %c1_1007] : memref<84x28xbf16, #tpu.memory_space<vmem>>, vector<30x10xbf16>
    %c30_1008 = arith.constant 30 : index
    %c15_1009 = arith.constant 15 : index
    %924 = vector.load %arg17[%c30_1008, %c15_1009] : memref<84x28xbf16, #tpu.memory_space<vmem>>, vector<30x10xbf16>
    %925 = tpu.concatenate %921, %922, %923, %924 in 1 : vector<30x10xbf16>, vector<30x10xbf16>, vector<30x10xbf16>, vector<30x10xbf16> -> vector<30x40xbf16>
    %c24_1010 = arith.constant 24 : index
    %c2_1011 = arith.constant 2 : index
    %926 = vector.load %arg17[%c24_1010, %c2_1011] : memref<84x28xbf16, #tpu.memory_space<vmem>>, vector<30x10xbf16>
    %c24_1012 = arith.constant 24 : index
    %c16_1013 = arith.constant 16 : index
    %927 = vector.load %arg17[%c24_1012, %c16_1013] : memref<84x28xbf16, #tpu.memory_space<vmem>>, vector<30x10xbf16>
    %c30_1014 = arith.constant 30 : index
    %c2_1015 = arith.constant 2 : index
    %928 = vector.load %arg17[%c30_1014, %c2_1015] : memref<84x28xbf16, #tpu.memory_space<vmem>>, vector<30x10xbf16>
    %c30_1016 = arith.constant 30 : index
    %c16_1017 = arith.constant 16 : index
    %929 = vector.load %arg17[%c30_1016, %c16_1017] : memref<84x28xbf16, #tpu.memory_space<vmem>>, vector<30x10xbf16>
    %930 = tpu.concatenate %926, %927, %928, %929 in 1 : vector<30x10xbf16>, vector<30x10xbf16>, vector<30x10xbf16>, vector<30x10xbf16> -> vector<30x40xbf16>
    %c24_1018 = arith.constant 24 : index
    %c3_1019 = arith.constant 3 : index
    %931 = vector.load %arg17[%c24_1018, %c3_1019] : memref<84x28xbf16, #tpu.memory_space<vmem>>, vector<30x10xbf16>
    %c24_1020 = arith.constant 24 : index
    %c17_1021 = arith.constant 17 : index
    %932 = vector.load %arg17[%c24_1020, %c17_1021] : memref<84x28xbf16, #tpu.memory_space<vmem>>, vector<30x10xbf16>
    %c30_1022 = arith.constant 30 : index
    %c3_1023 = arith.constant 3 : index
    %933 = vector.load %arg17[%c30_1022, %c3_1023] : memref<84x28xbf16, #tpu.memory_space<vmem>>, vector<30x10xbf16>
    %c30_1024 = arith.constant 30 : index
    %c17_1025 = arith.constant 17 : index
    %934 = vector.load %arg17[%c30_1024, %c17_1025] : memref<84x28xbf16, #tpu.memory_space<vmem>>, vector<30x10xbf16>
    %935 = tpu.concatenate %931, %932, %933, %934 in 1 : vector<30x10xbf16>, vector<30x10xbf16>, vector<30x10xbf16>, vector<30x10xbf16> -> vector<30x40xbf16>
    %c24_1026 = arith.constant 24 : index
    %c4_1027 = arith.constant 4 : index
    %936 = vector.load %arg17[%c24_1026, %c4_1027] : memref<84x28xbf16, #tpu.memory_space<vmem>>, vector<30x10xbf16>
    %c24_1028 = arith.constant 24 : index
    %c18_1029 = arith.constant 18 : index
    %937 = vector.load %arg17[%c24_1028, %c18_1029] : memref<84x28xbf16, #tpu.memory_space<vmem>>, vector<30x10xbf16>
    %c30_1030 = arith.constant 30 : index
    %c4_1031 = arith.constant 4 : index
    %938 = vector.load %arg17[%c30_1030, %c4_1031] : memref<84x28xbf16, #tpu.memory_space<vmem>>, vector<30x10xbf16>
    %c30_1032 = arith.constant 30 : index
    %c18_1033 = arith.constant 18 : index
    %939 = vector.load %arg17[%c30_1032, %c18_1033] : memref<84x28xbf16, #tpu.memory_space<vmem>>, vector<30x10xbf16>
    %940 = tpu.concatenate %936, %937, %938, %939 in 1 : vector<30x10xbf16>, vector<30x10xbf16>, vector<30x10xbf16>, vector<30x10xbf16> -> vector<30x40xbf16>
    %941 = tpu.concatenate %920, %925, %930, %935, %940 in 0 : vector<30x40xbf16>, vector<30x40xbf16>, vector<30x40xbf16>, vector<30x40xbf16>, vector<30x40xbf16> -> vector<150x40xbf16>
    %cst_1034 = arith.constant dense<0.000000e+00> : vector<16x40xf32>
    %942 = tpu.matmul %1, %941, %cst_1034 {dimension_numbers = #tpu.dot_dimension_numbers<[1], [0], [0], [1], [0, 0, 1, 1], [], []>} : vector<16x150xbf16>, vector<150x40xbf16>, vector<16x40xf32> -> vector<16x40xf32>
    %943 = vector.extract_strided_slice %942 {offsets = [0, 0], sizes = [16, 20], strides = [1, 1]} : vector<16x40xf32> to vector<16x20xf32>
    %944 = vector.extract_strided_slice %942 {offsets = [0, 20], sizes = [16, 20], strides = [1, 1]} : vector<16x40xf32> to vector<16x20xf32>
    %945 = arith.maximumf %943, %944 : vector<16x20xf32>
    %946 = arith.truncf %945 : vector<16x20xf32> to vector<16x20xbf16>
    %cst_1035 = arith.constant dense<0.000000e+00> : vector<16x10xf32>
    %947 = tpu.matmul %946, %4, %cst_1035 {dimension_numbers = #tpu.dot_dimension_numbers<[1], [0], [0], [1], [0, 0, 1, 1], [], []>} : vector<16x20xbf16>, vector<20x10xbf16>, vector<16x10xf32> -> vector<16x10xf32>
    %cst_1036 = arith.constant dense<0.000000e+00> : vector<16x10xf32>
    %948 = tpu.matmul %946, %5, %cst_1036 {dimension_numbers = #tpu.dot_dimension_numbers<[1], [0], [0], [1], [0, 0, 1, 1], [], []>} : vector<16x20xbf16>, vector<20x10xbf16>, vector<16x10xf32> -> vector<16x10xf32>
    %949 = arith.maximumf %947, %948 : vector<16x10xf32>
    %950 = arith.addf %949, %11 : vector<16x10xf32>
    %cst_1037 = arith.constant 0.000000e+00 : f32
    %951 = vector.broadcast %cst_1037 : f32 to vector<16x10xf32>
    %952 = arith.maximumf %950, %951 : vector<16x10xf32>
    %953 = arith.truncf %952 : vector<16x10xf32> to vector<16x10xbf16>
    %c32 = arith.constant 32 : index
    %c0_1038 = arith.constant 0 : index
    %954 = vector.load %arg18[%c32, %c0_1038] : memref<80x10xbf16, #tpu.memory_space<vmem>>, vector<16x10xbf16>
    tpu.vector_store %arg18[%c32, %c0_1038], %953 {strides = array<i32>} : memref<80x10xbf16, #tpu.memory_space<vmem>>, vector<16x10xbf16>,
    %c36_1039 = arith.constant 36 : index
    %c0_1040 = arith.constant 0 : index
    %955 = vector.load %arg17[%c36_1039, %c0_1040] : memref<84x28xbf16, #tpu.memory_space<vmem>>, vector<30x10xbf16>
    %c36_1041 = arith.constant 36 : index
    %c14_1042 = arith.constant 14 : index
    %956 = vector.load %arg17[%c36_1041, %c14_1042] : memref<84x28xbf16, #tpu.memory_space<vmem>>, vector<30x10xbf16>
    %c42_1043 = arith.constant 42 : index
    %c0_1044 = arith.constant 0 : index
    %957 = vector.load %arg17[%c42_1043, %c0_1044] : memref<84x28xbf16, #tpu.memory_space<vmem>>, vector<30x10xbf16>
    %c42_1045 = arith.constant 42 : index
    %c14_1046 = arith.constant 14 : index
    %958 = vector.load %arg17[%c42_1045, %c14_1046] : memref<84x28xbf16, #tpu.memory_space<vmem>>, vector<30x10xbf16>
    %959 = tpu.concatenate %955, %956, %957, %958 in 1 : vector<30x10xbf16>, vector<30x10xbf16>, vector<30x10xbf16>, vector<30x10xbf16> -> vector<30x40xbf16>
    %c36_1047 = arith.constant 36 : index
    %c1_1048 = arith.constant 1 : index
    %960 = vector.load %arg17[%c36_1047, %c1_1048] : memref<84x28xbf16, #tpu.memory_space<vmem>>, vector<30x10xbf16>
    %c36_1049 = arith.constant 36 : index
    %c15_1050 = arith.constant 15 : index
    %961 = vector.load %arg17[%c36_1049, %c15_1050] : memref<84x28xbf16, #tpu.memory_space<vmem>>, vector<30x10xbf16>
    %c42_1051 = arith.constant 42 : index
    %c1_1052 = arith.constant 1 : index
    %962 = vector.load %arg17[%c42_1051, %c1_1052] : memref<84x28xbf16, #tpu.memory_space<vmem>>, vector<30x10xbf16>
    %c42_1053 = arith.constant 42 : index
    %c15_1054 = arith.constant 15 : index
    %963 = vector.load %arg17[%c42_1053, %c15_1054] : memref<84x28xbf16, #tpu.memory_space<vmem>>, vector<30x10xbf16>
    %964 = tpu.concatenate %960, %961, %962, %963 in 1 : vector<30x10xbf16>, vector<30x10xbf16>, vector<30x10xbf16>, vector<30x10xbf16> -> vector<30x40xbf16>
    %c36_1055 = arith.constant 36 : index
    %c2_1056 = arith.constant 2 : index
    %965 = vector.load %arg17[%c36_1055, %c2_1056] : memref<84x28xbf16, #tpu.memory_space<vmem>>, vector<30x10xbf16>
    %c36_1057 = arith.constant 36 : index
    %c16_1058 = arith.constant 16 : index
    %966 = vector.load %arg17[%c36_1057, %c16_1058] : memref<84x28xbf16, #tpu.memory_space<vmem>>, vector<30x10xbf16>
    %c42_1059 = arith.constant 42 : index
    %c2_1060 = arith.constant 2 : index
    %967 = vector.load %arg17[%c42_1059, %c2_1060] : memref<84x28xbf16, #tpu.memory_space<vmem>>, vector<30x10xbf16>
    %c42_1061 = arith.constant 42 : index
    %c16_1062 = arith.constant 16 : index
    %968 = vector.load %arg17[%c42_1061, %c16_1062] : memref<84x28xbf16, #tpu.memory_space<vmem>>, vector<30x10xbf16>
    %969 = tpu.concatenate %965, %966, %967, %968 in 1 : vector<30x10xbf16>, vector<30x10xbf16>, vector<30x10xbf16>, vector<30x10xbf16> -> vector<30x40xbf16>
    %c36_1063 = arith.constant 36 : index
    %c3_1064 = arith.constant 3 : index
    %970 = vector.load %arg17[%c36_1063, %c3_1064] : memref<84x28xbf16, #tpu.memory_space<vmem>>, vector<30x10xbf16>
    %c36_1065 = arith.constant 36 : index
    %c17_1066 = arith.constant 17 : index
    %971 = vector.load %arg17[%c36_1065, %c17_1066] : memref<84x28xbf16, #tpu.memory_space<vmem>>, vector<30x10xbf16>
    %c42_1067 = arith.constant 42 : index
    %c3_1068 = arith.constant 3 : index
    %972 = vector.load %arg17[%c42_1067, %c3_1068] : memref<84x28xbf16, #tpu.memory_space<vmem>>, vector<30x10xbf16>
    %c42_1069 = arith.constant 42 : index
    %c17_1070 = arith.constant 17 : index
    %973 = vector.load %arg17[%c42_1069, %c17_1070] : memref<84x28xbf16, #tpu.memory_space<vmem>>, vector<30x10xbf16>
    %974 = tpu.concatenate %970, %971, %972, %973 in 1 : vector<30x10xbf16>, vector<30x10xbf16>, vector<30x10xbf16>, vector<30x10xbf16> -> vector<30x40xbf16>
    %c36_1071 = arith.constant 36 : index
    %c4_1072 = arith.constant 4 : index
    %975 = vector.load %arg17[%c36_1071, %c4_1072] : memref<84x28xbf16, #tpu.memory_space<vmem>>, vector<30x10xbf16>
    %c36_1073 = arith.constant 36 : index
    %c18_1074 = arith.constant 18 : index
    %976 = vector.load %arg17[%c36_1073, %c18_1074] : memref<84x28xbf16, #tpu.memory_space<vmem>>, vector<30x10xbf16>
    %c42_1075 = arith.constant 42 : index
    %c4_1076 = arith.constant 4 : index
    %977 = vector.load %arg17[%c42_1075, %c4_1076] : memref<84x28xbf16, #tpu.memory_space<vmem>>, vector<30x10xbf16>
    %c42_1077 = arith.constant 42 : index
    %c18_1078 = arith.constant 18 : index
    %978 = vector.load %arg17[%c42_1077, %c18_1078] : memref<84x28xbf16, #tpu.memory_space<vmem>>, vector<30x10xbf16>
    %979 = tpu.concatenate %975, %976, %977, %978 in 1 : vector<30x10xbf16>, vector<30x10xbf16>, vector<30x10xbf16>, vector<30x10xbf16> -> vector<30x40xbf16>
    %980 = tpu.concatenate %959, %964, %969, %974, %979 in 0 : vector<30x40xbf16>, vector<30x40xbf16>, vector<30x40xbf16>, vector<30x40xbf16>, vector<30x40xbf16> -> vector<150x40xbf16>
    %cst_1079 = arith.constant dense<0.000000e+00> : vector<16x40xf32>
    %981 = tpu.matmul %1, %980, %cst_1079 {dimension_numbers = #tpu.dot_dimension_numbers<[1], [0], [0], [1], [0, 0, 1, 1], [], []>} : vector<16x150xbf16>, vector<150x40xbf16>, vector<16x40xf32> -> vector<16x40xf32>
    %982 = vector.extract_strided_slice %981 {offsets = [0, 0], sizes = [16, 20], strides = [1, 1]} : vector<16x40xf32> to vector<16x20xf32>
    %983 = vector.extract_strided_slice %981 {offsets = [0, 20], sizes = [16, 20], strides = [1, 1]} : vector<16x40xf32> to vector<16x20xf32>
    %984 = arith.maximumf %982, %983 : vector<16x20xf32>
    %985 = arith.truncf %984 : vector<16x20xf32> to vector<16x20xbf16>
    %cst_1080 = arith.constant dense<0.000000e+00> : vector<16x10xf32>
    %986 = tpu.matmul %985, %4, %cst_1080 {dimension_numbers = #tpu.dot_dimension_numbers<[1], [0], [0], [1], [0, 0, 1, 1], [], []>} : vector<16x20xbf16>, vector<20x10xbf16>, vector<16x10xf32> -> vector<16x10xf32>
    %cst_1081 = arith.constant dense<0.000000e+00> : vector<16x10xf32>
    %987 = tpu.matmul %985, %5, %cst_1081 {dimension_numbers = #tpu.dot_dimension_numbers<[1], [0], [0], [1], [0, 0, 1, 1], [], []>} : vector<16x20xbf16>, vector<20x10xbf16>, vector<16x10xf32> -> vector<16x10xf32>
    %988 = arith.maximumf %986, %987 : vector<16x10xf32>
    %989 = arith.addf %988, %11 : vector<16x10xf32>
    %cst_1082 = arith.constant 0.000000e+00 : f32
    %990 = vector.broadcast %cst_1082 : f32 to vector<16x10xf32>
    %991 = arith.maximumf %989, %990 : vector<16x10xf32>
    %992 = arith.truncf %991 : vector<16x10xf32> to vector<16x10xbf16>
    %c48_1083 = arith.constant 48 : index
    %c0_1084 = arith.constant 0 : index
    %993 = vector.load %arg18[%c48_1083, %c0_1084] : memref<80x10xbf16, #tpu.memory_space<vmem>>, vector<16x10xbf16>
    tpu.vector_store %arg18[%c48_1083, %c0_1084], %992 {strides = array<i32>} : memref<80x10xbf16, #tpu.memory_space<vmem>>, vector<16x10xbf16>,
    %c48_1085 = arith.constant 48 : index
    %c0_1086 = arith.constant 0 : index
    %994 = vector.load %arg17[%c48_1085, %c0_1086] : memref<84x28xbf16, #tpu.memory_space<vmem>>, vector<30x10xbf16>
    %c48_1087 = arith.constant 48 : index
    %c14_1088 = arith.constant 14 : index
    %995 = vector.load %arg17[%c48_1087, %c14_1088] : memref<84x28xbf16, #tpu.memory_space<vmem>>, vector<30x10xbf16>
    %c54_1089 = arith.constant 54 : index
    %c0_1090 = arith.constant 0 : index
    %996 = vector.load %arg17[%c54_1089, %c0_1090] : memref<84x28xbf16, #tpu.memory_space<vmem>>, vector<30x10xbf16>
    %c54_1091 = arith.constant 54 : index
    %c14_1092 = arith.constant 14 : index
    %997 = vector.load %arg17[%c54_1091, %c14_1092] : memref<84x28xbf16, #tpu.memory_space<vmem>>, vector<30x10xbf16>
    %998 = tpu.concatenate %994, %995, %996, %997 in 1 : vector<30x10xbf16>, vector<30x10xbf16>, vector<30x10xbf16>, vector<30x10xbf16> -> vector<30x40xbf16>
    %c48_1093 = arith.constant 48 : index
    %c1_1094 = arith.constant 1 : index
    %999 = vector.load %arg17[%c48_1093, %c1_1094] : memref<84x28xbf16, #tpu.memory_space<vmem>>, vector<30x10xbf16>
    %c48_1095 = arith.constant 48 : index
    %c15_1096 = arith.constant 15 : index
    %1000 = vector.load %arg17[%c48_1095, %c15_1096] : memref<84x28xbf16, #tpu.memory_space<vmem>>, vector<30x10xbf16>
    %c54_1097 = arith.constant 54 : index
    %c1_1098 = arith.constant 1 : index
    %1001 = vector.load %arg17[%c54_1097, %c1_1098] : memref<84x28xbf16, #tpu.memory_space<vmem>>, vector<30x10xbf16>
    %c54_1099 = arith.constant 54 : index
    %c15_1100 = arith.constant 15 : index
    %1002 = vector.load %arg17[%c54_1099, %c15_1100] : memref<84x28xbf16, #tpu.memory_space<vmem>>, vector<30x10xbf16>
    %1003 = tpu.concatenate %999, %1000, %1001, %1002 in 1 : vector<30x10xbf16>, vector<30x10xbf16>, vector<30x10xbf16>, vector<30x10xbf16> -> vector<30x40xbf16>
    %c48_1101 = arith.constant 48 : index
    %c2_1102 = arith.constant 2 : index
    %1004 = vector.load %arg17[%c48_1101, %c2_1102] : memref<84x28xbf16, #tpu.memory_space<vmem>>, vector<30x10xbf16>
    %c48_1103 = arith.constant 48 : index
    %c16_1104 = arith.constant 16 : index
    %1005 = vector.load %arg17[%c48_1103, %c16_1104] : memref<84x28xbf16, #tpu.memory_space<vmem>>, vector<30x10xbf16>
    %c54_1105 = arith.constant 54 : index
    %c2_1106 = arith.constant 2 : index
    %1006 = vector.load %arg17[%c54_1105, %c2_1106] : memref<84x28xbf16, #tpu.memory_space<vmem>>, vector<30x10xbf16>
    %c54_1107 = arith.constant 54 : index
    %c16_1108 = arith.constant 16 : index
    %1007 = vector.load %arg17[%c54_1107, %c16_1108] : memref<84x28xbf16, #tpu.memory_space<vmem>>, vector<30x10xbf16>
    %1008 = tpu.concatenate %1004, %1005, %1006, %1007 in 1 : vector<30x10xbf16>, vector<30x10xbf16>, vector<30x10xbf16>, vector<30x10xbf16> -> vector<30x40xbf16>
    %c48_1109 = arith.constant 48 : index
    %c3_1110 = arith.constant 3 : index
    %1009 = vector.load %arg17[%c48_1109, %c3_1110] : memref<84x28xbf16, #tpu.memory_space<vmem>>, vector<30x10xbf16>
    %c48_1111 = arith.constant 48 : index
    %c17_1112 = arith.constant 17 : index
    %1010 = vector.load %arg17[%c48_1111, %c17_1112] : memref<84x28xbf16, #tpu.memory_space<vmem>>, vector<30x10xbf16>
    %c54_1113 = arith.constant 54 : index
    %c3_1114 = arith.constant 3 : index
    %1011 = vector.load %arg17[%c54_1113, %c3_1114] : memref<84x28xbf16, #tpu.memory_space<vmem>>, vector<30x10xbf16>
    %c54_1115 = arith.constant 54 : index
    %c17_1116 = arith.constant 17 : index
    %1012 = vector.load %arg17[%c54_1115, %c17_1116] : memref<84x28xbf16, #tpu.memory_space<vmem>>, vector<30x10xbf16>
    %1013 = tpu.concatenate %1009, %1010, %1011, %1012 in 1 : vector<30x10xbf16>, vector<30x10xbf16>, vector<30x10xbf16>, vector<30x10xbf16> -> vector<30x40xbf16>
    %c48_1117 = arith.constant 48 : index
    %c4_1118 = arith.constant 4 : index
    %1014 = vector.load %arg17[%c48_1117, %c4_1118] : memref<84x28xbf16, #tpu.memory_space<vmem>>, vector<30x10xbf16>
    %c48_1119 = arith.constant 48 : index
    %c18_1120 = arith.constant 18 : index
    %1015 = vector.load %arg17[%c48_1119, %c18_1120] : memref<84x28xbf16, #tpu.memory_space<vmem>>, vector<30x10xbf16>
    %c54_1121 = arith.constant 54 : index
    %c4_1122 = arith.constant 4 : index
    %1016 = vector.load %arg17[%c54_1121, %c4_1122] : memref<84x28xbf16, #tpu.memory_space<vmem>>, vector<30x10xbf16>
    %c54_1123 = arith.constant 54 : index
    %c18_1124 = arith.constant 18 : index
    %1017 = vector.load %arg17[%c54_1123, %c18_1124] : memref<84x28xbf16, #tpu.memory_space<vmem>>, vector<30x10xbf16>
    %1018 = tpu.concatenate %1014, %1015, %1016, %1017 in 1 : vector<30x10xbf16>, vector<30x10xbf16>, vector<30x10xbf16>, vector<30x10xbf16> -> vector<30x40xbf16>
    %1019 = tpu.concatenate %998, %1003, %1008, %1013, %1018 in 0 : vector<30x40xbf16>, vector<30x40xbf16>, vector<30x40xbf16>, vector<30x40xbf16>, vector<30x40xbf16> -> vector<150x40xbf16>
    %cst_1125 = arith.constant dense<0.000000e+00> : vector<16x40xf32>
    %1020 = tpu.matmul %1, %1019, %cst_1125 {dimension_numbers = #tpu.dot_dimension_numbers<[1], [0], [0], [1], [0, 0, 1, 1], [], []>} : vector<16x150xbf16>, vector<150x40xbf16>, vector<16x40xf32> -> vector<16x40xf32>
    %1021 = vector.extract_strided_slice %1020 {offsets = [0, 0], sizes = [16, 20], strides = [1, 1]} : vector<16x40xf32> to vector<16x20xf32>
    %1022 = vector.extract_strided_slice %1020 {offsets = [0, 20], sizes = [16, 20], strides = [1, 1]} : vector<16x40xf32> to vector<16x20xf32>
    %1023 = arith.maximumf %1021, %1022 : vector<16x20xf32>
    %1024 = arith.truncf %1023 : vector<16x20xf32> to vector<16x20xbf16>
    %cst_1126 = arith.constant dense<0.000000e+00> : vector<16x10xf32>
    %1025 = tpu.matmul %1024, %4, %cst_1126 {dimension_numbers = #tpu.dot_dimension_numbers<[1], [0], [0], [1], [0, 0, 1, 1], [], []>} : vector<16x20xbf16>, vector<20x10xbf16>, vector<16x10xf32> -> vector<16x10xf32>
    %cst_1127 = arith.constant dense<0.000000e+00> : vector<16x10xf32>
    %1026 = tpu.matmul %1024, %5, %cst_1127 {dimension_numbers = #tpu.dot_dimension_numbers<[1], [0], [0], [1], [0, 0, 1, 1], [], []>} : vector<16x20xbf16>, vector<20x10xbf16>, vector<16x10xf32> -> vector<16x10xf32>
    %1027 = arith.maximumf %1025, %1026 : vector<16x10xf32>
    %1028 = arith.addf %1027, %11 : vector<16x10xf32>
    %cst_1128 = arith.constant 0.000000e+00 : f32
    %1029 = vector.broadcast %cst_1128 : f32 to vector<16x10xf32>
    %1030 = arith.maximumf %1028, %1029 : vector<16x10xf32>
    %1031 = arith.truncf %1030 : vector<16x10xf32> to vector<16x10xbf16>
    %c64 = arith.constant 64 : index
    %c0_1129 = arith.constant 0 : index
    %1032 = vector.load %arg18[%c64, %c0_1129] : memref<80x10xbf16, #tpu.memory_space<vmem>>, vector<16x10xbf16>
    tpu.vector_store %arg18[%c64, %c0_1129], %1031 {strides = array<i32>} : memref<80x10xbf16, #tpu.memory_space<vmem>>, vector<16x10xbf16>,
    %c0_1130 = arith.constant 0 : index
    %c0_1131 = arith.constant 0 : index
    %c0_1132 = arith.constant 0 : index
    %1033 = vector.load %arg10[%c0_1130, %c0_1131, %c0_1132] : memref<5x120x80xbf16, #tpu.memory_space<vmem>>, vector<1x120x80xbf16>
    %1034 = vector.shape_cast %1033 : vector<1x120x80xbf16> to vector<120x80xbf16>
    %c0_1133 = arith.constant 0 : index
    %c0_1134 = arith.constant 0 : index
    %1035 = vector.load %arg18[%c0_1133, %c0_1134] : memref<80x10xbf16, #tpu.memory_space<vmem>>, vector<80x2xbf16>
    %cst_1135 = arith.constant dense<0.000000e+00> : vector<120x2xf32>
    %1036 = tpu.matmul %1034, %1035, %cst_1135 {dimension_numbers = #tpu.dot_dimension_numbers<[1], [0], [0], [1], [0, 0, 1, 1], [], []>} : vector<120x80xbf16>, vector<80x2xbf16>, vector<120x2xf32> -> vector<120x2xf32>
    %c1_1136 = arith.constant 1 : index
    %c0_1137 = arith.constant 0 : index
    %c0_1138 = arith.constant 0 : index
    %1037 = vector.load %arg10[%c1_1136, %c0_1137, %c0_1138] : memref<5x120x80xbf16, #tpu.memory_space<vmem>>, vector<1x120x80xbf16>
    %1038 = vector.shape_cast %1037 : vector<1x120x80xbf16> to vector<120x80xbf16>
    %c0_1139 = arith.constant 0 : index
    %c2_1140 = arith.constant 2 : index
    %1039 = vector.load %arg18[%c0_1139, %c2_1140] : memref<80x10xbf16, #tpu.memory_space<vmem>>, vector<80x2xbf16>
    %cst_1141 = arith.constant dense<0.000000e+00> : vector<120x2xf32>
    %1040 = tpu.matmul %1038, %1039, %cst_1141 {dimension_numbers = #tpu.dot_dimension_numbers<[1], [0], [0], [1], [0, 0, 1, 1], [], []>} : vector<120x80xbf16>, vector<80x2xbf16>, vector<120x2xf32> -> vector<120x2xf32>
    %1041 = arith.addf %1036, %1040 : vector<120x2xf32>
    %c2_1142 = arith.constant 2 : index
    %c0_1143 = arith.constant 0 : index
    %c0_1144 = arith.constant 0 : index
    %1042 = vector.load %arg10[%c2_1142, %c0_1143, %c0_1144] : memref<5x120x80xbf16, #tpu.memory_space<vmem>>, vector<1x120x80xbf16>
    %1043 = vector.shape_cast %1042 : vector<1x120x80xbf16> to vector<120x80xbf16>
    %c0_1145 = arith.constant 0 : index
    %c4_1146 = arith.constant 4 : index
    %1044 = vector.load %arg18[%c0_1145, %c4_1146] : memref<80x10xbf16, #tpu.memory_space<vmem>>, vector<80x2xbf16>
    %cst_1147 = arith.constant dense<0.000000e+00> : vector<120x2xf32>
    %1045 = tpu.matmul %1043, %1044, %cst_1147 {dimension_numbers = #tpu.dot_dimension_numbers<[1], [0], [0], [1], [0, 0, 1, 1], [], []>} : vector<120x80xbf16>, vector<80x2xbf16>, vector<120x2xf32> -> vector<120x2xf32>
    %1046 = arith.addf %1041, %1045 : vector<120x2xf32>
    %c3_1148 = arith.constant 3 : index
    %c0_1149 = arith.constant 0 : index
    %c0_1150 = arith.constant 0 : index
    %1047 = vector.load %arg10[%c3_1148, %c0_1149, %c0_1150] : memref<5x120x80xbf16, #tpu.memory_space<vmem>>, vector<1x120x80xbf16>
    %1048 = vector.shape_cast %1047 : vector<1x120x80xbf16> to vector<120x80xbf16>
    %c0_1151 = arith.constant 0 : index
    %c6_1152 = arith.constant 6 : index
    %1049 = vector.load %arg18[%c0_1151, %c6_1152] : memref<80x10xbf16, #tpu.memory_space<vmem>>, vector<80x2xbf16>
    %cst_1153 = arith.constant dense<0.000000e+00> : vector<120x2xf32>
    %1050 = tpu.matmul %1048, %1049, %cst_1153 {dimension_numbers = #tpu.dot_dimension_numbers<[1], [0], [0], [1], [0, 0, 1, 1], [], []>} : vector<120x80xbf16>, vector<80x2xbf16>, vector<120x2xf32> -> vector<120x2xf32>
    %1051 = arith.addf %1046, %1050 : vector<120x2xf32>
    %c4_1154 = arith.constant 4 : index
    %c0_1155 = arith.constant 0 : index
    %c0_1156 = arith.constant 0 : index
    %1052 = vector.load %arg10[%c4_1154, %c0_1155, %c0_1156] : memref<5x120x80xbf16, #tpu.memory_space<vmem>>, vector<1x120x80xbf16>
    %1053 = vector.shape_cast %1052 : vector<1x120x80xbf16> to vector<120x80xbf16>
    %c0_1157 = arith.constant 0 : index
    %c8_1158 = arith.constant 8 : index
    %1054 = vector.load %arg18[%c0_1157, %c8_1158] : memref<80x10xbf16, #tpu.memory_space<vmem>>, vector<80x2xbf16>
    %cst_1159 = arith.constant dense<0.000000e+00> : vector<120x2xf32>
    %1055 = tpu.matmul %1053, %1054, %cst_1159 {dimension_numbers = #tpu.dot_dimension_numbers<[1], [0], [0], [1], [0, 0, 1, 1], [], []>} : vector<120x80xbf16>, vector<80x2xbf16>, vector<120x2xf32> -> vector<120x2xf32>
    %1056 = arith.addf %1051, %1055 : vector<120x2xf32>
    %c0_1160 = arith.constant 0 : index
    %c0_1161 = arith.constant 0 : index
    %1057 = vector.load %arg11[%c0_1160, %c0_1161] : memref<120x1xf32, #tpu.memory_space<vmem>>, vector<120x1xf32>
    %1058 = vector.broadcast %1057 : vector<120x1xf32> to vector<120x2xf32>
    %1059 = arith.addf %1056, %1058 : vector<120x2xf32>
    %cst_1162 = arith.constant 0.000000e+00 : f32
    %1060 = vector.broadcast %cst_1162 : f32 to vector<120x2xf32>
    %1061 = arith.maximumf %1059, %1060 : vector<120x2xf32>
    %1062 = tpu.transpose %1061, [1, 0] : vector<120x2xf32> -> vector<2x120xf32>
    %1063 = arith.truncf %1062 : vector<2x120xf32> to vector<2x120xbf16>
    %c0_1163 = arith.constant 0 : index
    %c0_1164 = arith.constant 0 : index
    %1064 = vector.load %arg12[%c0_1163, %c0_1164] : memref<120x84xbf16, #tpu.memory_space<vmem>>, vector<120x84xbf16>
    %cst_1165 = arith.constant dense<0.000000e+00> : vector<2x84xf32>
    %1065 = tpu.matmul %1063, %1064, %cst_1165 {dimension_numbers = #tpu.dot_dimension_numbers<[1], [0], [0], [1], [0, 0, 1, 1], [], []>} : vector<2x120xbf16>, vector<120x84xbf16>, vector<2x84xf32> -> vector<2x84xf32>
    %c0_1166 = arith.constant 0 : index
    %c0_1167 = arith.constant 0 : index
    %1066 = vector.load %arg13[%c0_1166, %c0_1167] : memref<1x84xf32, #tpu.memory_space<vmem>>, vector<1x84xf32>
    %1067 = vector.broadcast %1066 : vector<1x84xf32> to vector<2x84xf32>
    %1068 = arith.addf %1065, %1067 : vector<2x84xf32>
    %cst_1168 = arith.constant 0.000000e+00 : f32
    %1069 = vector.broadcast %cst_1168 : f32 to vector<2x84xf32>
    %1070 = arith.maximumf %1068, %1069 : vector<2x84xf32>
    %1071 = arith.truncf %1070 : vector<2x84xf32> to vector<2x84xbf16>
    %c0_1169 = arith.constant 0 : index
    %c0_1170 = arith.constant 0 : index
    %1072 = vector.load %arg14[%c0_1169, %c0_1170] : memref<84x128xbf16, #tpu.memory_space<vmem>>, vector<84x128xbf16>
    %cst_1171 = arith.constant dense<0.000000e+00> : vector<2x128xf32>
    %1073 = tpu.matmul %1071, %1072, %cst_1171 {dimension_numbers = #tpu.dot_dimension_numbers<[1], [0], [0], [1], [0, 0, 1, 1], [], []>} : vector<2x84xbf16>, vector<84x128xbf16>, vector<2x128xf32> -> vector<2x128xf32>
    %c0_1172 = arith.constant 0 : index
    %c0_1173 = arith.constant 0 : index
    %1074 = vector.load %arg15[%c0_1172, %c0_1173] : memref<1x128xf32, #tpu.memory_space<vmem>>, vector<1x128xf32>
    %1075 = vector.broadcast %1074 : vector<1x128xf32> to vector<2x128xf32>
    %1076 = arith.addf %1073, %1075 : vector<2x128xf32>
    %c0_1174 = arith.constant 0 : index
    %c0_1175 = arith.constant 0 : index
    %c0_1176 = arith.constant 0 : index
    %1077 = vector.load %arg16[%c0_1174, %c0_1175, %c0_1176] : memref<1x2x128xf32, #tpu.memory_space<vmem>>, vector<1x2x128xf32>
    %1078 = vector.shape_cast %1077 : vector<1x2x128xf32> to vector<2x128xf32>
    %1079 = vector.shape_cast %1076 : vector<2x128xf32> to vector<1x2x128xf32>
    tpu.vector_store %arg16[%c0_1174, %c0_1175, %c0_1176], %1079 {strides = array<i32>} : memref<1x2x128xf32, #tpu.memory_space<vmem>>, vector<1x2x128xf32>,
    return
  }
  func.func @transform_0(%arg0: i32) -> (i32, i32, i32) {
    %c0_i32 = arith.constant 0 : i32
    %c0_i32_0 = arith.constant 0 : i32
    %c0_i32_1 = arith.constant 0 : i32
    return %arg0, %c0_i32, %c0_i32_0 : i32, i32, i32
  }
  func.func @transform_1(%arg0: i32) -> (i32, i32) {
    %c0_i32 = arith.constant 0 : i32
    %c0_i32_0 = arith.constant 0 : i32
    %c0_i32_1 = arith.constant 0 : i32
    return %c0_i32, %c0_i32_0 : i32, i32
  }
  func.func @transform_2(%arg0: i32) -> (i32, i32) {
    %c0_i32 = arith.constant 0 : i32
    %c0_i32_0 = arith.constant 0 : i32
    %c0_i32_1 = arith.constant 0 : i32
    return %c0_i32, %c0_i32_0 : i32, i32
  }
  func.func @transform_3(%arg0: i32) -> (i32, i32) {
    %c0_i32 = arith.constant 0 : i32
    %c0_i32_0 = arith.constant 0 : i32
    %c0_i32_1 = arith.constant 0 : i32
    return %c0_i32, %c0_i32_0 : i32, i32
  }
  func.func @transform_4(%arg0: i32) -> (i32, i32) {
    %c0_i32 = arith.constant 0 : i32
    %c0_i32_0 = arith.constant 0 : i32
    %c0_i32_1 = arith.constant 0 : i32
    return %c0_i32, %c0_i32_0 : i32, i32
  }
  func.func @transform_5(%arg0: i32) -> (i32, i32) {
    %c0_i32 = arith.constant 0 : i32
    %c0_i32_0 = arith.constant 0 : i32
    %c0_i32_1 = arith.constant 0 : i32
    return %c0_i32, %c0_i32_0 : i32, i32
  }
  func.func @transform_6(%arg0: i32) -> (i32, i32) {
    %c0_i32 = arith.constant 0 : i32
    %c0_i32_0 = arith.constant 0 : i32
    %c0_i32_1 = arith.constant 0 : i32
    return %c0_i32, %c0_i32_0 : i32, i32
  }
  func.func @transform_7(%arg0: i32) -> (i32, i32) {
    %c0_i32 = arith.constant 0 : i32
    %c0_i32_0 = arith.constant 0 : i32
    %c0_i32_1 = arith.constant 0 : i32
    return %c0_i32, %c0_i32_0 : i32, i32
  }
  func.func @transform_8(%arg0: i32) -> (i32, i32) {
    %c0_i32 = arith.constant 0 : i32
    %c0_i32_0 = arith.constant 0 : i32
    %c0_i32_1 = arith.constant 0 : i32
    return %c0_i32, %c0_i32_0 : i32, i32
  }
  func.func @transform_9(%arg0: i32) -> (i32, i32, i32) {
    %c0_i32 = arith.constant 0 : i32
    %c0_i32_0 = arith.constant 0 : i32
    %c0_i32_1 = arith.constant 0 : i32
    %c0_i32_2 = arith.constant 0 : i32
    return %c0_i32, %c0_i32_0, %c0_i32_1 : i32, i32, i32
  }
  func.func @transform_10(%arg0: i32) -> (i32, i32) {
    %c0_i32 = arith.constant 0 : i32
    %c0_i32_0 = arith.constant 0 : i32
    %c0_i32_1 = arith.constant 0 : i32
    return %c0_i32, %c0_i32_0 : i32, i32
  }
  func.func @transform_11(%arg0: i32) -> (i32, i32) {
    %c0_i32 = arith.constant 0 : i32
    %c0_i32_0 = arith.constant 0 : i32
    %c0_i32_1 = arith.constant 0 : i32
    return %c0_i32, %c0_i32_0 : i32, i32
  }
  func.func @transform_12(%arg0: i32) -> (i32, i32) {
    %c0_i32 = arith.constant 0 : i32
    %c0_i32_0 = arith.constant 0 : i32
    %c0_i32_1 = arith.constant 0 : i32
    return %c0_i32, %c0_i32_0 : i32, i32
  }
  func.func @transform_13(%arg0: i32) -> (i32, i32) {
    %c0_i32 = arith.constant 0 : i32
    %c0_i32_0 = arith.constant 0 : i32
    %c0_i32_1 = arith.constant 0 : i32
    return %c0_i32, %c0_i32_0 : i32, i32
  }
  func.func @transform_14(%arg0: i32) -> (i32, i32) {
    %c0_i32 = arith.constant 0 : i32
    %c0_i32_0 = arith.constant 0 : i32
    %c0_i32_1 = arith.constant 0 : i32
    return %c0_i32, %c0_i32_0 : i32, i32
  }
  func.func @transform_15(%arg0: i32) -> (i32, i32, i32) {
    %c0_i32 = arith.constant 0 : i32
    %c0_i32_0 = arith.constant 0 : i32
    %c0_i32_1 = arith.constant 0 : i32
    return %arg0, %c0_i32, %c0_i32_0 : i32, i32, i32
  }
}

</mosaic_0001>

<llo_original>
// kernel: lenet5_forward.1
$region0: #{lenet5_forward.1}
  #allocation0 [shape = 'u32[]', space=smem, size = 0x4, offset = 0x4, fixed_abs, tag = 'smem constant byte address 0x4 - core index']
  #allocation1 [shape = 'u32[72,128]{1,0:T(1,128)}', space=vmem, size = 0x9000, scoped, tag = 'internal scratch']
  #allocation2 [shape = 'bf16[84,28]{1,0:T(8,128)(2,1)}', space=vmem, size = 0x5800, scoped, tag = 'scratch operand']
  #allocation3 [shape = 'bf16[80,10]{1,0:T(8,128)(2,1)}', space=vmem, size = 0x5000, scoped, tag = 'scratch operand']
  %s0 = inlined_call_operand.vmem [shape: bf16[2,32,32], index: 0, kind: input, shape index: {}]
  %s1 = inlined_call_operand.vmem [shape: bf16[6,25], index: 1, kind: input, shape index: {}]
  %s2 = inlined_call_operand.vmem [shape: f32[6,1], index: 2, kind: input, shape index: {}]
  %s3 = inlined_call_operand.vmem [shape: bf16[56,28], index: 3, kind: input, shape index: {}]
  %s4 = inlined_call_operand.vmem [shape: bf16[56,28], index: 4, kind: input, shape index: {}]
  %s5 = inlined_call_operand.vmem [shape: bf16[16,150], index: 5, kind: input, shape index: {}]
  %s6 = inlined_call_operand.vmem [shape: f32[16,1], index: 6, kind: input, shape index: {}]
  %s7 = inlined_call_operand.vmem [shape: bf16[20,10], index: 7, kind: input, shape index: {}]
  %s8 = inlined_call_operand.vmem [shape: bf16[20,10], index: 8, kind: input, shape index: {}]
  %s9 = inlined_call_operand.vmem [shape: bf16[5,120,80], index: 9, kind: input, shape index: {}]
  %s10 = inlined_call_operand.vmem [shape: f32[120,1], index: 10, kind: input, shape index: {}]
  %s11 = inlined_call_operand.vmem [shape: bf16[120,84], index: 11, kind: input, shape index: {}]
  %s12 = inlined_call_operand.vmem [shape: f32[1,84], index: 12, kind: input, shape index: {}]
  %s13 = inlined_call_operand.vmem [shape: bf16[84,128], index: 13, kind: input, shape index: {}]
  %s14 = inlined_call_operand.vmem [shape: f32[1,128], index: 14, kind: input, shape index: {}]
  %s15 = inlined_call_operand.hbm [shape: f32[1,2,128], index: 15, kind: output, shape index: {}]
  %s16 = sld [smem:[#allocation0]]
  $region70: #{lenet5_forward.1} parent=0
    _
  %s18 = ssub.s32 1, %s16
  %s19 = scalar_select 0, %s18, %s16
  $region1: #{lenet5_forward.1} parent=0
    #allocation4 [shape = 'u8[1024]{0}', space=vmem, size = 0x400, scoped, tag = 'output window, operand 0, single buffered']
    #allocation5 [shape = 's32[1]{0}', space=sflag, size = 0x4, scoped, tag = 'scoped memory for lenet5_forward.1']
    %20 = vsyncpa [#allocation5], 0
    // Predicated region
    $region2: #{lenet5_forward.1} parent=1 // pred_check
      _
    $region3: #{lenet5_forward.1} parent=1 // pred_check_branch
      %22 = sbr.rel (0) target = $region5
    $region4: #{lenet5_forward.1} parent=1 // pred_region
      _
    $region5: #{lenet5_forward.1} parent=1 // pred_fallthru
      _
    // Predicated region
    $region6: #{lenet5_forward.1} parent=1 // pred_check
      _
    $region7: #{lenet5_forward.1} parent=1 // pred_check_branch
      %24 = sbr.rel (0) target = $region9
    $region8: #{lenet5_forward.1} parent=1 // pred_region
      _
    $region9: #{lenet5_forward.1} parent=1 // pred_fallthru
      _
    // Predicated region
    $region10: #{lenet5_forward.1} parent=1 // pred_check
      _
    $region11: #{lenet5_forward.1} parent=1 // pred_check_branch
      %26 = sbr.rel (0) target = $region13
    $region12: #{lenet5_forward.1} parent=1 // pred_region
      _
    $region13: #{lenet5_forward.1} parent=1 // pred_fallthru
      _
    // Predicated region
    $region14: #{lenet5_forward.1} parent=1 // pred_check
      _
    $region15: #{lenet5_forward.1} parent=1 // pred_check_branch
      %28 = sbr.rel (0) target = $region17
    $region16: #{lenet5_forward.1} parent=1 // pred_region
      _
    $region17: #{lenet5_forward.1} parent=1 // pred_fallthru
      _
    // Predicated region
    $region18: #{lenet5_forward.1} parent=1 // pred_check
      _
    $region19: #{lenet5_forward.1} parent=1 // pred_check_branch
      %30 = sbr.rel (0) target = $region21
    $region20: #{lenet5_forward.1} parent=1 // pred_region
      _
    $region21: #{lenet5_forward.1} parent=1 // pred_fallthru
      _
    // Predicated region
    $region22: #{lenet5_forward.1} parent=1 // pred_check
      _
    $region23: #{lenet5_forward.1} parent=1 // pred_check_branch
      %32 = sbr.rel (0) target = $region25
    $region24: #{lenet5_forward.1} parent=1 // pred_region
      _
    $region25: #{lenet5_forward.1} parent=1 // pred_fallthru
      _
    // Predicated region
    $region26: #{lenet5_forward.1} parent=1 // pred_check
      _
    $region27: #{lenet5_forward.1} parent=1 // pred_check_branch
      %34 = sbr.rel (0) target = $region29
    $region28: #{lenet5_forward.1} parent=1 // pred_region
      _
    $region29: #{lenet5_forward.1} parent=1 // pred_fallthru
      _
    // Predicated region
    $region30: #{lenet5_forward.1} parent=1 // pred_check
      _
    $region31: #{lenet5_forward.1} parent=1 // pred_check_branch
      %36 = sbr.rel (0) target = $region33
    $region32: #{lenet5_forward.1} parent=1 // pred_region
      _
    $region33: #{lenet5_forward.1} parent=1 // pred_fallthru
      _
    // Predicated region
    $region34: #{lenet5_forward.1} parent=1 // pred_check
      _
    $region35: #{lenet5_forward.1} parent=1 // pred_check_branch
      %38 = sbr.rel (0) target = $region37
    $region36: #{lenet5_forward.1} parent=1 // pred_region
      _
    $region37: #{lenet5_forward.1} parent=1 // pred_fallthru
      _
    // Predicated region
    $region38: #{lenet5_forward.1} parent=1 // pred_check
      _
    $region39: #{lenet5_forward.1} parent=1 // pred_check_branch
      %40 = sbr.rel (0) target = $region41
    $region40: #{lenet5_forward.1} parent=1 // pred_region
      _
    $region41: #{lenet5_forward.1} parent=1 // pred_fallthru
      _
    // Predicated region
    $region42: #{lenet5_forward.1} parent=1 // pred_check
      _
    $region43: #{lenet5_forward.1} parent=1 // pred_check_branch
      %42 = sbr.rel (0) target = $region45
    $region44: #{lenet5_forward.1} parent=1 // pred_region
      _
    $region45: #{lenet5_forward.1} parent=1 // pred_fallthru
      _
    // Predicated region
    $region46: #{lenet5_forward.1} parent=1 // pred_check
      _
    $region47: #{lenet5_forward.1} parent=1 // pred_check_branch
      %44 = sbr.rel (0) target = $region49
    $region48: #{lenet5_forward.1} parent=1 // pred_region
      _
    $region49: #{lenet5_forward.1} parent=1 // pred_fallthru
      _
    // Predicated region
    $region50: #{lenet5_forward.1} parent=1 // pred_check
      _
    $region51: #{lenet5_forward.1} parent=1 // pred_check_branch
      %46 = sbr.rel (0) target = $region53
    $region52: #{lenet5_forward.1} parent=1 // pred_region
      _
    $region53: #{lenet5_forward.1} parent=1 // pred_fallthru
      _
    // Predicated region
    $region54: #{lenet5_forward.1} parent=1 // pred_check
      _
    $region55: #{lenet5_forward.1} parent=1 // pred_check_branch
      %48 = sbr.rel (0) target = $region57
    $region56: #{lenet5_forward.1} parent=1 // pred_region
      _
    $region57: #{lenet5_forward.1} parent=1 // pred_fallthru
      _
    // Predicated region
    $region58: #{lenet5_forward.1} parent=1 // pred_check
      _
    $region59: #{lenet5_forward.1} parent=1 // pred_check_branch
      %50 = sbr.rel (0) target = $region61
    $region60: #{lenet5_forward.1} parent=1 // pred_region
      _
    $region61: #{lenet5_forward.1} parent=1 // pred_fallthru
      _
    %v52 = vld [vmem:[%s1] sm:$0x7]
    %v53 = vld [vmem:[%s5] sm:$0xff]
    %v54 = vld [vmem:[%s5 + $0x8] sm:$0xff]
    %v55 = vld [vmem:[%s3] sm:$0xf]
    %v56 = vld [vmem:[%s3 + $0x4] sm:$0xf]
    %v57 = vld [vmem:[%s3 + $0x8] sm:$0xf]
    %v58 = vld [vmem:[%s3 + $0xc] sm:$0xf]
    %v59 = vld [vmem:[%s3 + $0x10] sm:$0xf]
    %v60 = vld [vmem:[%s3 + $0x14] sm:$0xf]
    %v61 = vld [vmem:[%s3 + $0x18] sm:$0xf]
    %v62 = vld [vmem:[%s4] sm:$0xf]
    %v63 = vld [vmem:[%s4 + $0x4] sm:$0xf]
    %v64 = vld [vmem:[%s4 + $0x8] sm:$0xf]
    %v65 = vld [vmem:[%s4 + $0xc] sm:$0xf]
    %v66 = vld [vmem:[%s4 + $0x10] sm:$0xf]
    %v67 = vld [vmem:[%s4 + $0x14] sm:$0xf]
    %v68 = vld [vmem:[%s4 + $0x18] sm:$0xf]
    %v69 = vld [vmem:[%s7] sm:$0xf]
    %v70 = vld [vmem:[%s7 + $0x4] sm:$0xf]
    %v71 = vld [vmem:[%s7 + $0x8] sm:$0x3]
    %v72 = vld [vmem:[%s8] sm:$0xf]
    %v73 = vld [vmem:[%s8 + $0x4] sm:$0xf]
    %v74 = vld [vmem:[%s8 + $0x8] sm:$0x3]
    %v75 = vld [vmem:[%s2] sm:$0x3f]
    %77 = vset.pattern.permute.xlu0 0
    %78 = vperm.xlu0 %77, %v75
    %v79 = vpop.permute.xlu0 %78
    %v81 = vld [vmem:[%s6] sm:$0xff]
    %v82 = vld [vmem:[%s6 + $0x8] sm:$0xff]
    %84 = vset.pattern.permute.xlu0 0
    %85 = vperm.xlu0 %84, %v81
    %v86 = vpop.permute.xlu0 %85
    %89 = vset.pattern.permute.xlu0 0
    %90 = vperm.xlu0 %89, %v82
    %v91 = vpop.permute.xlu0 %90
    %v93 = vld [vmem:[%s0] sm:$0x7]
    %s94 = scalar_lea.vmem %s0, 16
    %v95 = vld [vmem:[%s94] sm:$0x7]
    %v97 = vunpack.c.l.b16 %v95
    %v98 = vpack.c.b16 %v97, %v97
    %99 = vrot.lane.b32.xlu0 %v98, 28
    %v100 = vpop.permute.xlu0 %99
    %v102 = vunpack.c.l.b16 %v93
    %v103 = vpack.c.b16 %v102, %v102
    %v105 = vshrl.u32 %v103, 16
    %v107 = vshll.u32 %v103, 16
    %v109 = vrot.slane %v107, 1
    %v110 = vor.u32 %v105, %v109
    %111 = vrot.lane.b32.xlu0 %v110, 56
    %v112 = vpop.permute.xlu0 %111
    %v114 = vshrl.u32 %v98, 16
    %v116 = vshll.u32 %v98, 16
    %v118 = vrot.slane %v116, 1
    %v119 = vor.u32 %v114, %v118
    %120 = vrot.lane.b32.xlu0 %v119, 84
    %v121 = vpop.permute.xlu0 %120
    %vm122 = vcmask 228352
    %v125 = vsel %vm122, %v93, %v100
    %vm126 = vcmask 457728
    %v128 = vsel %vm126, %v125, %v112
    %vm129 = vcmask 687104
    %v131 = vsel %vm129, %v128, %v121
    %133 = vrot.lane.b32.xlu0 %v103, 127
    %v134 = vpop.permute.xlu0 %133
    %135 = vrot.lane.b32.xlu0 %v98, 27
    %v136 = vpop.permute.xlu0 %135
    %137 = vrot.lane.b32.xlu0 %v110, 55
    %v138 = vpop.permute.xlu0 %137
    %139 = vrot.lane.b32.xlu0 %v119, 83
    %v140 = vpop.permute.xlu0 %139
    %v143 = vsel %vm122, %v134, %v136
    %v145 = vsel %vm126, %v143, %v138
    %v147 = vsel %vm129, %v145, %v140
    %148 = vrot.lane.b32.xlu0 %v103, 126
    %v149 = vpop.permute.xlu0 %148
    %150 = vrot.lane.b32.xlu0 %v98, 26
    %v151 = vpop.permute.xlu0 %150
    %152 = vrot.lane.b32.xlu0 %v110, 54
    %v153 = vpop.permute.xlu0 %152
    %154 = vrot.lane.b32.xlu0 %v119, 82
    %v155 = vpop.permute.xlu0 %154
    %v158 = vsel %vm122, %v149, %v151
    %v160 = vsel %vm126, %v158, %v153
    %v162 = vsel %vm129, %v160, %v155
    %163 = vrot.lane.b32.xlu0 %v103, 125
    %v164 = vpop.permute.xlu0 %163
    %165 = vrot.lane.b32.xlu0 %v98, 25
    %v166 = vpop.permute.xlu0 %165
    %167 = vrot.lane.b32.xlu0 %v110, 53
    %v168 = vpop.permute.xlu0 %167
    %169 = vrot.lane.b32.xlu0 %v119, 81
    %v170 = vpop.permute.xlu0 %169
    %v173 = vsel %vm122, %v164, %v166
    %v175 = vsel %vm126, %v173, %v168
    %v177 = vsel %vm129, %v175, %v170
    %178 = vrot.lane.b32.xlu0 %v103, 124
    %v179 = vpop.permute.xlu0 %178
    %180 = vrot.lane.b32.xlu0 %v98, 24
    %v181 = vpop.permute.xlu0 %180
    %182 = vrot.lane.b32.xlu0 %v110, 52
    %v183 = vpop.permute.xlu0 %182
    %184 = vrot.lane.b32.xlu0 %v119, 80
    %v185 = vpop.permute.xlu0 %184
    %v188 = vsel %vm122, %v179, %v181
    %v190 = vsel %vm126, %v188, %v183
    %v192 = vsel %vm129, %v190, %v185
    %v193 = vshrl.u32 %v147, 16
    %v195 = vrot.slane %v193, 5
    %v196 = vshll.u32 %v147, 16
    %v198 = vrot.slane %v196, 6
    %v199 = vor.u32 %v195, %v198
    %v202 = vrot.slane %v162, 3
    %v203 = vshll.u32 %v177, 16
    %v205 = vrot.slane %v203, 1
    %v206 = vshrl.u32 %v177, 16
    %v208 = vor.u32 %v206, %v205
    %v211 = vrot.slane %v192, 6
    %vm212 = vcmask 1042432
    %vm213 = vsmask.f32 2304
    %vm214 = vmand %vm212, %vm213
    %v215 = vsel %vm214, %v131, %v199
    %vm216 = vcmask 1044480
    %v219 = vsel %vm216, %v215, %v202
    %vm221 = vcmask 1047552
    %vm222 = vsmask.f32 7424
    %vm223 = vmand %vm221, %vm222
    %v224 = vsel %vm223, %v219, %v205
    %vm225 = vcmask 1041408
    %v228 = vsel %vm225, %v208, %v211
    %vm229 = vcmask 203776
    %v231 = vsel %vm229, %v52, 0
    %vm233 = vcmask 1043456
    %v234 = vsel %vm233, 4294967295, 65535
    %v235 = vsel %vm216, %v234, 0
    %v236 = vand.u32 %v228, %v235
    %238 = vmatpush.bf16.msra.mxu0 0
    %239 = vmatpush.bf16.msra.mxu0 0
    %240 = vmatpush.bf16.msra.mxu0 0
    %241 = vmatpush.bf16.msra.mxu0 0
    %242 = vmatpush.bf16.msra.mxu0 0
    %243 = vmatpush.bf16.msra.mxu0 0
    %244 = vmatpush.bf16.msra.mxu0 %v236
    %245 = vmatpush.bf16.msra.mxu0 %v224
    %246 = vmatmul.bf16.gmra.mxu0 %v231
    %v247 = vpop.f32.mrf.mxu0
    %v248 = vadd.f32 0.0, %v247
    %v249 = vpop.f32.mrf.mxu0
    %250 = vdwg.mxu0
    %252 = vrot.lane.b32.xlu0 %v248, 72
    %v253 = vpop.permute.xlu0 %252
    %v255 = vmax.f32 %v248, %v253
    %v256 = vpack.c.bf16 %v255, %v255
    %v264 = vunpack.c.l.b16 %v55
    %v265 = vunpack.c.l.b16 %v56
    %v266 = vunpack.c.l.b16 %v57
    %v267 = vunpack.c.l.b16 %v58
    %v268 = vunpack.c.l.b16 %v59
    %v269 = vunpack.c.l.b16 %v60
    %v270 = vunpack.c.l.b16 %v61
    %v271 = vpack.c.b16 %v265, %v264
    %v272 = vpack.c.b16 %v267, %v266
    %v273 = vpack.c.b16 %v269, %v268
    %v274 = vpack.c.b16 %v270, %v270
    %v279 = vsel %vm126, %v256, 0
    %v282 = vsel %vm233, %v274, 0
    %284 = vmatpush.bf16.msra.mxu0 0
    %285 = vmatpush.bf16.msra.mxu0 0
    %286 = vmatpush.bf16.msra.mxu0 0
    %287 = vmatpush.bf16.msra.mxu0 0
    %288 = vmatpush.bf16.msra.mxu0 %v282
    %289 = vmatpush.bf16.msra.mxu0 %v273
    %290 = vmatpush.bf16.msra.mxu0 %v272
    %291 = vmatpush.bf16.msra.mxu0 %v271
    %292 = vmatmul.bf16.gmra.mxu0 %v279
    %v293 = vpop.f32.mrf.mxu0
    %v294 = vadd.f32 0.0, %v293
    %v295 = vpop.f32.mrf.mxu0
    %296 = vdwg.mxu0
    %v304 = vunpack.c.l.b16 %v62
    %v305 = vunpack.c.l.b16 %v63
    %v306 = vunpack.c.l.b16 %v64
    %v307 = vunpack.c.l.b16 %v65
    %v308 = vunpack.c.l.b16 %v66
    %v309 = vunpack.c.l.b16 %v67
    %v310 = vunpack.c.l.b16 %v68
    %v311 = vpack.c.b16 %v305, %v304
    %v312 = vpack.c.b16 %v307, %v306
    %v313 = vpack.c.b16 %v309, %v308
    %v314 = vpack.c.b16 %v310, %v310
    %v319 = vsel %vm233, %v314, 0
    %321 = vmatpush.bf16.msra.mxu0 0
    %322 = vmatpush.bf16.msra.mxu0 0
    %323 = vmatpush.bf16.msra.mxu0 0
    %324 = vmatpush.bf16.msra.mxu0 0
    %325 = vmatpush.bf16.msra.mxu0 %v319
    %326 = vmatpush.bf16.msra.mxu0 %v313
    %327 = vmatpush.bf16.msra.mxu0 %v312
    %328 = vmatpush.bf16.msra.mxu0 %v311
    %329 = vmatmul.bf16.gmra.mxu0 %v279
    %v330 = vpop.f32.mrf.mxu0
    %v331 = vadd.f32 0.0, %v330
    %v332 = vpop.f32.mrf.mxu0
    %333 = vdwg.mxu0
    %v334 = vmax.f32 %v294, %v331
    %v335 = vadd.f32 %v334, %v79
    %v336 = vmax.f32 %v335, 0.0
    %v337 = vpack.c.bf16 %v336, %v336
    %vm338 = vcmask 223232
    %339 = vst.msk [vmem:[#allocation2] sm:$0x7] %vm338, %v337
    %v340 = vld [vmem:[%s0] sm:$0xe]
    %v341 = vld [vmem:[%s94] sm:$0xe]
    %v343 = vunpack.c.l.b16 %v341
    %v344 = vpack.c.b16 %v343, %v343
    %345 = vrot.lane.b32.xlu0 %v344, 28
    %v346 = vpop.permute.xlu0 %345
    %v348 = vunpack.c.l.b16 %v340
    %v349 = vpack.c.b16 %v348, %v348
    %v351 = vshrl.u32 %v349, 16
    %v353 = vshll.u32 %v349, 16
    %v355 = vrot.slane %v353, 1
    %v356 = vor.u32 %v351, %v355
    %357 = vrot.lane.b32.xlu0 %v356, 56
    %v358 = vpop.permute.xlu0 %357
    %v360 = vshrl.u32 %v344, 16
    %v362 = vshll.u32 %v344, 16
    %v364 = vrot.slane %v362, 1
    %v365 = vor.u32 %v360, %v364
    %366 = vrot.lane.b32.xlu0 %v365, 84
    %v367 = vpop.permute.xlu0 %366
    %v370 = vsel %vm122, %v340, %v346
    %v372 = vsel %vm126, %v370, %v358
    %v374 = vsel %vm129, %v372, %v367
    %375 = vrot.lane.b32.xlu0 %v349, 127
    %v376 = vpop.permute.xlu0 %375
    %377 = vrot.lane.b32.xlu0 %v344, 27
    %v378 = vpop.permute.xlu0 %377
    %379 = vrot.lane.b32.xlu0 %v356, 55
    %v380 = vpop.permute.xlu0 %379
    %381 = vrot.lane.b32.xlu0 %v365, 83
    %v382 = vpop.permute.xlu0 %381
    %v385 = vsel %vm122, %v376, %v378
    %v387 = vsel %vm126, %v385, %v380
    %v389 = vsel %vm129, %v387, %v382
    %390 = vrot.lane.b32.xlu0 %v349, 126
    %v391 = vpop.permute.xlu0 %390
    %392 = vrot.lane.b32.xlu0 %v344, 26
    %v393 = vpop.permute.xlu0 %392
    %394 = vrot.lane.b32.xlu0 %v356, 54
    %v395 = vpop.permute.xlu0 %394
    %396 = vrot.lane.b32.xlu0 %v365, 82
    %v397 = vpop.permute.xlu0 %396
    %v400 = vsel %vm122, %v391, %v393
    %v402 = vsel %vm126, %v400, %v395
    %v404 = vsel %vm129, %v402, %v397
    %405 = vrot.lane.b32.xlu0 %v349, 125
    %v406 = vpop.permute.xlu0 %405
    %407 = vrot.lane.b32.xlu0 %v344, 25
    %v408 = vpop.permute.xlu0 %407
    %409 = vrot.lane.b32.xlu0 %v356, 53
    %v410 = vpop.permute.xlu0 %409
    %411 = vrot.lane.b32.xlu0 %v365, 81
    %v412 = vpop.permute.xlu0 %411
    %v415 = vsel %vm122, %v406, %v408
    %v417 = vsel %vm126, %v415, %v410
    %v419 = vsel %vm129, %v417, %v412
    %420 = vrot.lane.b32.xlu0 %v349, 124
    %v421 = vpop.permute.xlu0 %420
    %422 = vrot.lane.b32.xlu0 %v344, 24
    %v423 = vpop.permute.xlu0 %422
    %424 = vrot.lane.b32.xlu0 %v356, 52
    %v425 = vpop.permute.xlu0 %424
    %426 = vrot.lane.b32.xlu0 %v365, 80
    %v427 = vpop.permute.xlu0 %426
    %v430 = vsel %vm122, %v421, %v423
    %v432 = vsel %vm126, %v430, %v425
    %v434 = vsel %vm129, %v432, %v427
    %v436 = vrot.slane %v374, 1
    %v438 = vshrl.u32 %v389, 16
    %v440 = vrot.slane %v438, 6
    %v441 = vshll.u32 %v389, 16
    %v443 = vrot.slane %v441, 7
    %v444 = vor.u32 %v440, %v443
    %v447 = vrot.slane %v404, 4
    %v448 = vshll.u32 %v419, 16
    %v450 = vrot.slane %v448, 2
    %v451 = vshrl.u32 %v419, 16
    %v453 = vrot.slane %v451, 1
    %v454 = vor.u32 %v453, %v450
    %v457 = vrot.slane %v434, 7
    %v458 = vsel %vm214, %v436, %v444
    %v461 = vsel %vm216, %v458, %v447
    %v463 = vsel %vm223, %v461, %v450
    %v466 = vsel %vm225, %v454, %v457
    %v467 = vand.u32 %v466, %v235
    %469 = vmatpush.bf16.msra.mxu0 0
    %470 = vmatpush.bf16.msra.mxu0 0
    %471 = vmatpush.bf16.msra.mxu0 0
    %472 = vmatpush.bf16.msra.mxu0 0
    %473 = vmatpush.bf16.msra.mxu0 0
    %474 = vmatpush.bf16.msra.mxu0 0
    %475 = vmatpush.bf16.msra.mxu0 %v467
    %476 = vmatpush.bf16.msra.mxu0 %v463
    %477 = vmatmul.bf16.gmra.mxu0 %v231
    %v478 = vpop.f32.mrf.mxu0
    %v479 = vadd.f32 0.0, %v478
    %v480 = vpop.f32.mrf.mxu0
    %481 = vdwg.mxu0
    %483 = vrot.lane.b32.xlu0 %v479, 72
    %v484 = vpop.permute.xlu0 %483
    %v486 = vmax.f32 %v479, %v484
    %v487 = vpack.c.bf16 %v486, %v486
    %v489 = vsel %vm126, %v487, 0
    %491 = vmatpush.bf16.msra.mxu0 0
    %492 = vmatpush.bf16.msra.mxu0 0
    %493 = vmatpush.bf16.msra.mxu0 0
    %494 = vmatpush.bf16.msra.mxu0 0
    %495 = vmatpush.bf16.msra.mxu0 %v282
    %496 = vmatpush.bf16.msra.mxu0 %v273
    %497 = vmatpush.bf16.msra.mxu0 %v272
    %498 = vmatpush.bf16.msra.mxu0 %v271
    %499 = vmatmul.bf16.gmra.mxu0 %v489
    %v500 = vpop.f32.mrf.mxu0
    %v501 = vadd.f32 0.0, %v500
    %v502 = vpop.f32.mrf.mxu0
    %503 = vdwg.mxu0
    %504 = vmatpush.bf16.msra.mxu0 0
    %505 = vmatpush.bf16.msra.mxu0 0
    %506 = vmatpush.bf16.msra.mxu0 0
    %507 = vmatpush.bf16.msra.mxu0 0
    %508 = vmatpush.bf16.msra.mxu0 %v319
    %509 = vmatpush.bf16.msra.mxu0 %v313
    %510 = vmatpush.bf16.msra.mxu0 %v312
    %511 = vmatpush.bf16.msra.mxu0 %v311
    %512 = vmatmul.bf16.gmra.mxu0 %v489
    %v513 = vpop.f32.mrf.mxu0
    %v514 = vadd.f32 0.0, %v513
    %v515 = vpop.f32.mrf.mxu0
    %516 = vdwg.mxu0
    %v517 = vmax.f32 %v501, %v514
    %v518 = vadd.f32 %v517, %v79
    %v519 = vmax.f32 %v518, 0.0
    %v520 = vpack.c.bf16 %v519, %v519
    %v522 = vrot.slane %v520, 5
    %v523 = vrot.slane %v522, 4
    %vm526 = vcmask 224259
    %527 = vst.msk [vmem:[#allocation2] sm:$0x8] %vm526, %v522
    %vm528 = vcmask 222208
    %529 = vst.msk [vmem:[#allocation2 + $0x4] sm:$0x3] %vm528, %v523
    %v530 = vld [vmem:[%s0] sm:$0xc]
    %v531 = vld [vmem:[%s0 + $0x4] sm:$0x1]
    %v532 = vld [vmem:[%s94] sm:$0xc]
    %v533 = vld [vmem:[%s94 + $0x4] sm:$0x1]
    %v536 = vunpack.c.l.b16 %v530
    %v537 = vunpack.c.l.b16 %v531
    %v538 = vpack.c.b16 %v537, %v536
    %v541 = vunpack.c.l.b16 %v532
    %v542 = vunpack.c.l.b16 %v533
    %v543 = vpack.c.b16 %v542, %v541
    %544 = vrot.lane.b32.xlu0 %v543, 28
    %v545 = vpop.permute.xlu0 %544
    %v547 = vshrl.u32 %v538, 16
    %v549 = vshll.u32 %v538, 16
    %v551 = vrot.slane %v549, 1
    %v552 = vor.u32 %v547, %v551
    %553 = vrot.lane.b32.xlu0 %v552, 56
    %v554 = vpop.permute.xlu0 %553
    %v556 = vshrl.u32 %v543, 16
    %v558 = vshll.u32 %v543, 16
    %v560 = vrot.slane %v558, 1
    %v561 = vor.u32 %v556, %v560
    %562 = vrot.lane.b32.xlu0 %v561, 84
    %v563 = vpop.permute.xlu0 %562
    %v565 = vsel %vm122, %v538, %v545
    %v567 = vsel %vm126, %v565, %v554
    %v569 = vsel %vm129, %v567, %v563
    %570 = vrot.lane.b32.xlu0 %v538, 127
    %v571 = vpop.permute.xlu0 %570
    %572 = vrot.lane.b32.xlu0 %v543, 27
    %v573 = vpop.permute.xlu0 %572
    %574 = vrot.lane.b32.xlu0 %v552, 55
    %v575 = vpop.permute.xlu0 %574
    %576 = vrot.lane.b32.xlu0 %v561, 83
    %v577 = vpop.permute.xlu0 %576
    %v580 = vsel %vm122, %v571, %v573
    %v582 = vsel %vm126, %v580, %v575
    %v584 = vsel %vm129, %v582, %v577
    %585 = vrot.lane.b32.xlu0 %v538, 126
    %v586 = vpop.permute.xlu0 %585
    %587 = vrot.lane.b32.xlu0 %v543, 26
    %v588 = vpop.permute.xlu0 %587
    %589 = vrot.lane.b32.xlu0 %v552, 54
    %v590 = vpop.permute.xlu0 %589
    %591 = vrot.lane.b32.xlu0 %v561, 82
    %v592 = vpop.permute.xlu0 %591
    %v595 = vsel %vm122, %v586, %v588
    %v597 = vsel %vm126, %v595, %v590
    %v599 = vsel %vm129, %v597, %v592
    %600 = vrot.lane.b32.xlu0 %v538, 125
    %v601 = vpop.permute.xlu0 %600
    %602 = vrot.lane.b32.xlu0 %v543, 25
    %v603 = vpop.permute.xlu0 %602
    %604 = vrot.lane.b32.xlu0 %v552, 53
    %v605 = vpop.permute.xlu0 %604
    %606 = vrot.lane.b32.xlu0 %v561, 81
    %v607 = vpop.permute.xlu0 %606
    %v610 = vsel %vm122, %v601, %v603
    %v612 = vsel %vm126, %v610, %v605
    %v614 = vsel %vm129, %v612, %v607
    %615 = vrot.lane.b32.xlu0 %v538, 124
    %v616 = vpop.permute.xlu0 %615
    %617 = vrot.lane.b32.xlu0 %v543, 24
    %v618 = vpop.permute.xlu0 %617
    %619 = vrot.lane.b32.xlu0 %v552, 52
    %v620 = vpop.permute.xlu0 %619
    %621 = vrot.lane.b32.xlu0 %v561, 80
    %v622 = vpop.permute.xlu0 %621
    %v625 = vsel %vm122, %v616, %v618
    %v627 = vsel %vm126, %v625, %v620
    %v629 = vsel %vm129, %v627, %v622
    %v631 = vrot.slane %v569, 2
    %v633 = vshrl.u32 %v584, 16
    %v635 = vrot.slane %v633, 7
    %v636 = vshll.u32 %v584, 16
    %v638 = vor.u32 %v635, %v636
    %v641 = vrot.slane %v599, 5
    %v642 = vshll.u32 %v614, 16
    %v644 = vrot.slane %v642, 3
    %v645 = vshrl.u32 %v614, 16
    %v647 = vrot.slane %v645, 2
    %v648 = vor.u32 %v647, %v644
    %v650 = vsel %vm214, %v631, %v638
    %v653 = vsel %vm216, %v650, %v641
    %v655 = vsel %vm223, %v653, %v644
    %v657 = vsel %vm225, %v648, %v629
    %v658 = vand.u32 %v657, %v235
    %660 = vmatpush.bf16.msra.mxu0 0
    %661 = vmatpush.bf16.msra.mxu0 0
    %662 = vmatpush.bf16.msra.mxu0 0
    %663 = vmatpush.bf16.msra.mxu0 0
    %664 = vmatpush.bf16.msra.mxu0 0
    %665 = vmatpush.bf16.msra.mxu0 0
    %666 = vmatpush.bf16.msra.mxu0 %v658
    %667 = vmatpush.bf16.msra.mxu0 %v655
    %668 = vmatmul.bf16.gmra.mxu0 %v231
    %v669 = vpop.f32.mrf.mxu0
    %v670 = vadd.f32 0.0, %v669
    %v671 = vpop.f32.mrf.mxu0
    %672 = vdwg.mxu0
    %674 = vrot.lane.b32.xlu0 %v670, 72
    %v675 = vpop.permute.xlu0 %674
    %v677 = vmax.f32 %v670, %v675
    %v678 = vpack.c.bf16 %v677, %v677
    %v680 = vsel %vm126, %v678, 0
    %682 = vmatpush.bf16.msra.mxu0 0
    %683 = vmatpush.bf16.msra.mxu0 0
    %684 = vmatpush.bf16.msra.mxu0 0
    %685 = vmatpush.bf16.msra.mxu0 0
    %686 = vmatpush.bf16.msra.mxu0 %v282
    %687 = vmatpush.bf16.msra.mxu0 %v273
    %688 = vmatpush.bf16.msra.mxu0 %v272
    %689 = vmatpush.bf16.msra.mxu0 %v271
    %690 = vmatmul.bf16.gmra.mxu0 %v680
    %v691 = vpop.f32.mrf.mxu0
    %v692 = vadd.f32 0.0, %v691
    %v693 = vpop.f32.mrf.mxu0
    %694 = vdwg.mxu0
    %695 = vmatpush.bf16.msra.mxu0 0
    %696 = vmatpush.bf16.msra.mxu0 0
    %697 = vmatpush.bf16.msra.mxu0 0
    %698 = vmatpush.bf16.msra.mxu0 0
    %699 = vmatpush.bf16.msra.mxu0 %v319
    %700 = vmatpush.bf16.msra.mxu0 %v313
    %701 = vmatpush.bf16.msra.mxu0 %v312
    %702 = vmatpush.bf16.msra.mxu0 %v311
    %703 = vmatmul.bf16.gmra.mxu0 %v680
    %v704 = vpop.f32.mrf.mxu0
    %v705 = vadd.f32 0.0, %v704
    %v706 = vpop.f32.mrf.mxu0
    %707 = vdwg.mxu0
    %v708 = vmax.f32 %v692, %v705
    %v709 = vadd.f32 %v708, %v79
    %v710 = vmax.f32 %v709, 0.0
    %v711 = vpack.c.bf16 %v710, %v710
    %v713 = vrot.slane %v711, 6
    %v714 = vrot.slane %v713, 4
    %vm717 = vcmask 224258
    %718 = vst.msk [vmem:[#allocation2 + $0x4] sm:$0xc] %vm717, %v713
    %vm719 = vcmask 221184
    %720 = vst.msk [vmem:[#allocation2 + $0x8] sm:$0x1] %vm719, %v714
    %v721 = vld [vmem:[%s0] sm:$0x8]
    %v722 = vld [vmem:[%s0 + $0x4] sm:$0x3]
    %v723 = vld [vmem:[%s94] sm:$0x8]
    %v724 = vld [vmem:[%s94 + $0x4] sm:$0x3]
    %v727 = vunpack.c.l.b16 %v721
    %v728 = vunpack.c.l.b16 %v722
    %v729 = vpack.c.b16 %v728, %v727
    %v732 = vunpack.c.l.b16 %v723
    %v733 = vunpack.c.l.b16 %v724
    %v734 = vpack.c.b16 %v733, %v732
    %735 = vrot.lane.b32.xlu0 %v734, 28
    %v736 = vpop.permute.xlu0 %735
    %v738 = vshrl.u32 %v729, 16
    %v740 = vshll.u32 %v729, 16
    %v742 = vrot.slane %v740, 1
    %v743 = vor.u32 %v738, %v742
    %744 = vrot.lane.b32.xlu0 %v743, 56
    %v745 = vpop.permute.xlu0 %744
    %v747 = vshrl.u32 %v734, 16
    %v749 = vshll.u32 %v734, 16
    %v751 = vrot.slane %v749, 1
    %v752 = vor.u32 %v747, %v751
    %753 = vrot.lane.b32.xlu0 %v752, 84
    %v754 = vpop.permute.xlu0 %753
    %v756 = vsel %vm122, %v729, %v736
    %v758 = vsel %vm126, %v756, %v745
    %v760 = vsel %vm129, %v758, %v754
    %761 = vrot.lane.b32.xlu0 %v729, 127
    %v762 = vpop.permute.xlu0 %761
    %763 = vrot.lane.b32.xlu0 %v734, 27
    %v764 = vpop.permute.xlu0 %763
    %765 = vrot.lane.b32.xlu0 %v743, 55
    %v766 = vpop.permute.xlu0 %765
    %767 = vrot.lane.b32.xlu0 %v752, 83
    %v768 = vpop.permute.xlu0 %767
    %v771 = vsel %vm122, %v762, %v764
    %v773 = vsel %vm126, %v771, %v766
    %v775 = vsel %vm129, %v773, %v768
    %776 = vrot.lane.b32.xlu0 %v729, 126
    %v777 = vpop.permute.xlu0 %776
    %778 = vrot.lane.b32.xlu0 %v734, 26
    %v779 = vpop.permute.xlu0 %778
    %780 = vrot.lane.b32.xlu0 %v743, 54
    %v781 = vpop.permute.xlu0 %780
    %782 = vrot.lane.b32.xlu0 %v752, 82
    %v783 = vpop.permute.xlu0 %782
    %v786 = vsel %vm122, %v777, %v779
    %v788 = vsel %vm126, %v786, %v781
    %v790 = vsel %vm129, %v788, %v783
    %791 = vrot.lane.b32.xlu0 %v729, 125
    %v792 = vpop.permute.xlu0 %791
    %793 = vrot.lane.b32.xlu0 %v734, 25
    %v794 = vpop.permute.xlu0 %793
    %795 = vrot.lane.b32.xlu0 %v743, 53
    %v796 = vpop.permute.xlu0 %795
    %797 = vrot.lane.b32.xlu0 %v752, 81
    %v798 = vpop.permute.xlu0 %797
    %v801 = vsel %vm122, %v792, %v794
    %v803 = vsel %vm126, %v801, %v796
    %v805 = vsel %vm129, %v803, %v798
    %806 = vrot.lane.b32.xlu0 %v729, 124
    %v807 = vpop.permute.xlu0 %806
    %808 = vrot.lane.b32.xlu0 %v734, 24
    %v809 = vpop.permute.xlu0 %808
    %810 = vrot.lane.b32.xlu0 %v743, 52
    %v811 = vpop.permute.xlu0 %810
    %812 = vrot.lane.b32.xlu0 %v752, 80
    %v813 = vpop.permute.xlu0 %812
    %v816 = vsel %vm122, %v807, %v809
    %v818 = vsel %vm126, %v816, %v811
    %v820 = vsel %vm129, %v818, %v813
    %v822 = vrot.slane %v760, 3
    %v824 = vshrl.u32 %v775, 16
    %v826 = vshll.u32 %v775, 16
    %v828 = vrot.slane %v826, 1
    %v829 = vor.u32 %v824, %v828
    %v832 = vrot.slane %v790, 6
    %v833 = vshll.u32 %v805, 16
    %v835 = vrot.slane %v833, 4
    %v836 = vshrl.u32 %v805, 16
    %v838 = vrot.slane %v836, 3
    %v839 = vor.u32 %v838, %v835
    %v842 = vrot.slane %v820, 1
    %v843 = vsel %vm214, %v822, %v829
    %v846 = vsel %vm216, %v843, %v832
    %v848 = vsel %vm223, %v846, %v835
    %v851 = vsel %vm225, %v839, %v842
    %v852 = vand.u32 %v851, %v235
    %854 = vmatpush.bf16.msra.mxu0 0
    %855 = vmatpush.bf16.msra.mxu0 0
    %856 = vmatpush.bf16.msra.mxu0 0
    %857 = vmatpush.bf16.msra.mxu0 0
    %858 = vmatpush.bf16.msra.mxu0 0
    %859 = vmatpush.bf16.msra.mxu0 0
    %860 = vmatpush.bf16.msra.mxu0 %v852
    %861 = vmatpush.bf16.msra.mxu0 %v848
    %862 = vmatmul.bf16.gmra.mxu0 %v231
    %v863 = vpop.f32.mrf.mxu0
    %v864 = vadd.f32 0.0, %v863
    %v865 = vpop.f32.mrf.mxu0
    %866 = vdwg.mxu0
    %868 = vrot.lane.b32.xlu0 %v864, 72
    %v869 = vpop.permute.xlu0 %868
    %v871 = vmax.f32 %v864, %v869
    %v872 = vpack.c.bf16 %v871, %v871
    %v874 = vsel %vm126, %v872, 0
    %876 = vmatpush.bf16.msra.mxu0 0
    %877 = vmatpush.bf16.msra.mxu0 0
    %878 = vmatpush.bf16.msra.mxu0 0
    %879 = vmatpush.bf16.msra.mxu0 0
    %880 = vmatpush.bf16.msra.mxu0 %v282
    %881 = vmatpush.bf16.msra.mxu0 %v273
    %882 = vmatpush.bf16.msra.mxu0 %v272
    %883 = vmatpush.bf16.msra.mxu0 %v271
    %884 = vmatmul.bf16.gmra.mxu0 %v874
    %v885 = vpop.f32.mrf.mxu0
    %v886 = vadd.f32 0.0, %v885
    %v887 = vpop.f32.mrf.mxu0
    %888 = vdwg.mxu0
    %889 = vmatpush.bf16.msra.mxu0 0
    %890 = vmatpush.bf16.msra.mxu0 0
    %891 = vmatpush.bf16.msra.mxu0 0
    %892 = vmatpush.bf16.msra.mxu0 0
    %893 = vmatpush.bf16.msra.mxu0 %v319
    %894 = vmatpush.bf16.msra.mxu0 %v313
    %895 = vmatpush.bf16.msra.mxu0 %v312
    %896 = vmatpush.bf16.msra.mxu0 %v311
    %897 = vmatmul.bf16.gmra.mxu0 %v874
    %v898 = vpop.f32.mrf.mxu0
    %v899 = vadd.f32 0.0, %v898
    %v900 = vpop.f32.mrf.mxu0
    %901 = vdwg.mxu0
    %v902 = vmax.f32 %v886, %v899
    %v903 = vadd.f32 %v902, %v79
    %v904 = vmax.f32 %v903, 0.0
    %v905 = vpack.c.bf16 %v904, %v904
    %v907 = vrot.slane %v905, 7
    %vm909 = vcmask 224257
    %910 = vst.msk [vmem:[#allocation2 + $0x8] sm:$0xe] %vm909, %v907
    %v911 = vld [vmem:[%s0 + $0x4] sm:$0x7]
    %v912 = vld [vmem:[%s94 + $0x4] sm:$0x7]
    %v914 = vunpack.c.l.b16 %v912
    %v915 = vpack.c.b16 %v914, %v914
    %916 = vrot.lane.b32.xlu0 %v915, 28
    %v917 = vpop.permute.xlu0 %916
    %v919 = vunpack.c.l.b16 %v911
    %v920 = vpack.c.b16 %v919, %v919
    %v922 = vshrl.u32 %v920, 16
    %v924 = vshll.u32 %v920, 16
    %v926 = vrot.slane %v924, 1
    %v927 = vor.u32 %v922, %v926
    %928 = vrot.lane.b32.xlu0 %v927, 56
    %v929 = vpop.permute.xlu0 %928
    %v931 = vshrl.u32 %v915, 16
    %v933 = vshll.u32 %v915, 16
    %v935 = vrot.slane %v933, 1
    %v936 = vor.u32 %v931, %v935
    %937 = vrot.lane.b32.xlu0 %v936, 84
    %v938 = vpop.permute.xlu0 %937
    %v941 = vsel %vm122, %v911, %v917
    %v943 = vsel %vm126, %v941, %v929
    %v945 = vsel %vm129, %v943, %v938
    %947 = vrot.lane.b32.xlu0 %v920, 127
    %v948 = vpop.permute.xlu0 %947
    %949 = vrot.lane.b32.xlu0 %v915, 27
    %v950 = vpop.permute.xlu0 %949
    %951 = vrot.lane.b32.xlu0 %v927, 55
    %v952 = vpop.permute.xlu0 %951
    %953 = vrot.lane.b32.xlu0 %v936, 83
    %v954 = vpop.permute.xlu0 %953
    %v957 = vsel %vm122, %v948, %v950
    %v959 = vsel %vm126, %v957, %v952
    %v961 = vsel %vm129, %v959, %v954
    %962 = vrot.lane.b32.xlu0 %v920, 126
    %v963 = vpop.permute.xlu0 %962
    %964 = vrot.lane.b32.xlu0 %v915, 26
    %v965 = vpop.permute.xlu0 %964
    %966 = vrot.lane.b32.xlu0 %v927, 54
    %v967 = vpop.permute.xlu0 %966
    %968 = vrot.lane.b32.xlu0 %v936, 82
    %v969 = vpop.permute.xlu0 %968
    %v972 = vsel %vm122, %v963, %v965
    %v974 = vsel %vm126, %v972, %v967
    %v976 = vsel %vm129, %v974, %v969
    %977 = vrot.lane.b32.xlu0 %v920, 125
    %v978 = vpop.permute.xlu0 %977
    %979 = vrot.lane.b32.xlu0 %v915, 25
    %v980 = vpop.permute.xlu0 %979
    %981 = vrot.lane.b32.xlu0 %v927, 53
    %v982 = vpop.permute.xlu0 %981
    %983 = vrot.lane.b32.xlu0 %v936, 81
    %v984 = vpop.permute.xlu0 %983
    %v987 = vsel %vm122, %v978, %v980
    %v989 = vsel %vm126, %v987, %v982
    %v991 = vsel %vm129, %v989, %v984
    %992 = vrot.lane.b32.xlu0 %v920, 124
    %v993 = vpop.permute.xlu0 %992
    %994 = vrot.lane.b32.xlu0 %v915, 24
    %v995 = vpop.permute.xlu0 %994
    %996 = vrot.lane.b32.xlu0 %v927, 52
    %v997 = vpop.permute.xlu0 %996
    %998 = vrot.lane.b32.xlu0 %v936, 80
    %v999 = vpop.permute.xlu0 %998
    %v1002 = vsel %vm122, %v993, %v995
    %v1004 = vsel %vm126, %v1002, %v997
    %v1006 = vsel %vm129, %v1004, %v999
    %v1007 = vshrl.u32 %v961, 16
    %v1009 = vrot.slane %v1007, 5
    %v1010 = vshll.u32 %v961, 16
    %v1012 = vrot.slane %v1010, 6
    %v1013 = vor.u32 %v1009, %v1012
    %v1016 = vrot.slane %v976, 3
    %v1017 = vshll.u32 %v991, 16
    %v1019 = vrot.slane %v1017, 1
    %v1020 = vshrl.u32 %v991, 16
    %v1022 = vor.u32 %v1020, %v1019
    %v1025 = vrot.slane %v1006, 6
    %v1026 = vsel %vm214, %v945, %v1013
    %v1029 = vsel %vm216, %v1026, %v1016
    %v1031 = vsel %vm223, %v1029, %v1019
    %v1034 = vsel %vm225, %v1022, %v1025
    %v1035 = vand.u32 %v1034, %v235
    %1037 = vmatpush.bf16.msra.mxu0 0
    %1038 = vmatpush.bf16.msra.mxu0 0
    %1039 = vmatpush.bf16.msra.mxu0 0
    %1040 = vmatpush.bf16.msra.mxu0 0
    %1041 = vmatpush.bf16.msra.mxu0 0
    %1042 = vmatpush.bf16.msra.mxu0 0
    %1043 = vmatpush.bf16.msra.mxu0 %v1035
    %1044 = vmatpush.bf16.msra.mxu0 %v1031
    %1045 = vmatmul.bf16.gmra.mxu0 %v231
    %v1046 = vpop.f32.mrf.mxu0
    %v1047 = vadd.f32 0.0, %v1046
    %v1048 = vpop.f32.mrf.mxu0
    %1049 = vdwg.mxu0
    %1051 = vrot.lane.b32.xlu0 %v1047, 72
    %v1052 = vpop.permute.xlu0 %1051
    %v1054 = vmax.f32 %v1047, %v1052
    %v1055 = vpack.c.bf16 %v1054, %v1054
    %v1057 = vsel %vm126, %v1055, 0
    %1059 = vmatpush.bf16.msra.mxu0 0
    %1060 = vmatpush.bf16.msra.mxu0 0
    %1061 = vmatpush.bf16.msra.mxu0 0
    %1062 = vmatpush.bf16.msra.mxu0 0
    %1063 = vmatpush.bf16.msra.mxu0 %v282
    %1064 = vmatpush.bf16.msra.mxu0 %v273
    %1065 = vmatpush.bf16.msra.mxu0 %v272
    %1066 = vmatpush.bf16.msra.mxu0 %v271
    %1067 = vmatmul.bf16.gmra.mxu0 %v1057
    %v1068 = vpop.f32.mrf.mxu0
    %v1069 = vadd.f32 0.0, %v1068
    %v1070 = vpop.f32.mrf.mxu0
    %1071 = vdwg.mxu0
    %1072 = vmatpush.bf16.msra.mxu0 0
    %1073 = vmatpush.bf16.msra.mxu0 0
    %1074 = vmatpush.bf16.msra.mxu0 0
    %1075 = vmatpush.bf16.msra.mxu0 0
    %1076 = vmatpush.bf16.msra.mxu0 %v319
    %1077 = vmatpush.bf16.msra.mxu0 %v313
    %1078 = vmatpush.bf16.msra.mxu0 %v312
    %1079 = vmatpush.bf16.msra.mxu0 %v311
    %1080 = vmatmul.bf16.gmra.mxu0 %v1057
    %v1081 = vpop.f32.mrf.mxu0
    %v1082 = vadd.f32 0.0, %v1081
    %v1083 = vpop.f32.mrf.mxu0
    %1084 = vdwg.mxu0
    %v1085 = vmax.f32 %v1069, %v1082
    %v1086 = vadd.f32 %v1085, %v79
    %v1087 = vmax.f32 %v1086, 0.0
    %v1088 = vpack.c.bf16 %v1087, %v1087
    %1089 = vst.msk [vmem:[#allocation2 + $0xc] sm:$0x7] %vm338, %v1088
    %v1090 = vld [vmem:[%s0 + $0x4] sm:$0xe]
    %v1091 = vld [vmem:[%s94 + $0x4] sm:$0xe]
    %v1093 = vunpack.c.l.b16 %v1091
    %v1094 = vpack.c.b16 %v1093, %v1093
    %1095 = vrot.lane.b32.xlu0 %v1094, 28
    %v1096 = vpop.permute.xlu0 %1095
    %v1098 = vunpack.c.l.b16 %v1090
    %v1099 = vpack.c.b16 %v1098, %v1098
    %v1101 = vshrl.u32 %v1099, 16
    %v1103 = vshll.u32 %v1099, 16
    %v1105 = vrot.slane %v1103, 1
    %v1106 = vor.u32 %v1101, %v1105
    %1107 = vrot.lane.b32.xlu0 %v1106, 56
    %v1108 = vpop.permute.xlu0 %1107
    %v1110 = vshrl.u32 %v1094, 16
    %v1112 = vshll.u32 %v1094, 16
    %v1114 = vrot.slane %v1112, 1
    %v1115 = vor.u32 %v1110, %v1114
    %1116 = vrot.lane.b32.xlu0 %v1115, 84
    %v1117 = vpop.permute.xlu0 %1116
    %v1120 = vsel %vm122, %v1090, %v1096
    %v1122 = vsel %vm126, %v1120, %v1108
    %v1124 = vsel %vm129, %v1122, %v1117
    %1125 = vrot.lane.b32.xlu0 %v1099, 127
    %v1126 = vpop.permute.xlu0 %1125
    %1127 = vrot.lane.b32.xlu0 %v1094, 27
    %v1128 = vpop.permute.xlu0 %1127
    %1129 = vrot.lane.b32.xlu0 %v1106, 55
    %v1130 = vpop.permute.xlu0 %1129
    %1131 = vrot.lane.b32.xlu0 %v1115, 83
    %v1132 = vpop.permute.xlu0 %1131
    %v1135 = vsel %vm122, %v1126, %v1128
    %v1137 = vsel %vm126, %v1135, %v1130
    %v1139 = vsel %vm129, %v1137, %v1132
    %1140 = vrot.lane.b32.xlu0 %v1099, 126
    %v1141 = vpop.permute.xlu0 %1140
    %1142 = vrot.lane.b32.xlu0 %v1094, 26
    %v1143 = vpop.permute.xlu0 %1142
    %1144 = vrot.lane.b32.xlu0 %v1106, 54
    %v1145 = vpop.permute.xlu0 %1144
    %1146 = vrot.lane.b32.xlu0 %v1115, 82
    %v1147 = vpop.permute.xlu0 %1146
    %v1150 = vsel %vm122, %v1141, %v1143
    %v1152 = vsel %vm126, %v1150, %v1145
    %v1154 = vsel %vm129, %v1152, %v1147
    %1155 = vrot.lane.b32.xlu0 %v1099, 125
    %v1156 = vpop.permute.xlu0 %1155
    %1157 = vrot.lane.b32.xlu0 %v1094, 25
    %v1158 = vpop.permute.xlu0 %1157
    %1159 = vrot.lane.b32.xlu0 %v1106, 53
    %v1160 = vpop.permute.xlu0 %1159
    %1161 = vrot.lane.b32.xlu0 %v1115, 81
    %v1162 = vpop.permute.xlu0 %1161
    %v1165 = vsel %vm122, %v1156, %v1158
    %v1167 = vsel %vm126, %v1165, %v1160
    %v1169 = vsel %vm129, %v1167, %v1162
    %1170 = vrot.lane.b32.xlu0 %v1099, 124
    %v1171 = vpop.permute.xlu0 %1170
    %1172 = vrot.lane.b32.xlu0 %v1094, 24
    %v1173 = vpop.permute.xlu0 %1172
    %1174 = vrot.lane.b32.xlu0 %v1106, 52
    %v1175 = vpop.permute.xlu0 %1174
    %1176 = vrot.lane.b32.xlu0 %v1115, 80
    %v1177 = vpop.permute.xlu0 %1176
    %v1180 = vsel %vm122, %v1171, %v1173
    %v1182 = vsel %vm126, %v1180, %v1175
    %v1184 = vsel %vm129, %v1182, %v1177
    %v1186 = vrot.slane %v1124, 1
    %v1188 = vshrl.u32 %v1139, 16
    %v1190 = vrot.slane %v1188, 6
    %v1191 = vshll.u32 %v1139, 16
    %v1193 = vrot.slane %v1191, 7
    %v1194 = vor.u32 %v1190, %v1193
    %v1197 = vrot.slane %v1154, 4
    %v1198 = vshll.u32 %v1169, 16
    %v1200 = vrot.slane %v1198, 2
    %v1201 = vshrl.u32 %v1169, 16
    %v1203 = vrot.slane %v1201, 1
    %v1204 = vor.u32 %v1203, %v1200
    %v1207 = vrot.slane %v1184, 7
    %v1208 = vsel %vm214, %v1186, %v1194
    %v1211 = vsel %vm216, %v1208, %v1197
    %v1213 = vsel %vm223, %v1211, %v1200
    %v1216 = vsel %vm225, %v1204, %v1207
    %v1217 = vand.u32 %v1216, %v235
    %1219 = vmatpush.bf16.msra.mxu0 0
    %1220 = vmatpush.bf16.msra.mxu0 0
    %1221 = vmatpush.bf16.msra.mxu0 0
    %1222 = vmatpush.bf16.msra.mxu0 0
    %1223 = vmatpush.bf16.msra.mxu0 0
    %1224 = vmatpush.bf16.msra.mxu0 0
    %1225 = vmatpush.bf16.msra.mxu0 %v1217
    %1226 = vmatpush.bf16.msra.mxu0 %v1213
    %1227 = vmatmul.bf16.gmra.mxu0 %v231
    %v1228 = vpop.f32.mrf.mxu0
    %v1229 = vadd.f32 0.0, %v1228
    %v1230 = vpop.f32.mrf.mxu0
    %1231 = vdwg.mxu0
    %1233 = vrot.lane.b32.xlu0 %v1229, 72
    %v1234 = vpop.permute.xlu0 %1233
    %v1236 = vmax.f32 %v1229, %v1234
    %v1237 = vpack.c.bf16 %v1236, %v1236
    %v1239 = vsel %vm126, %v1237, 0
    %1241 = vmatpush.bf16.msra.mxu0 0
    %1242 = vmatpush.bf16.msra.mxu0 0
    %1243 = vmatpush.bf16.msra.mxu0 0
    %1244 = vmatpush.bf16.msra.mxu0 0
    %1245 = vmatpush.bf16.msra.mxu0 %v282
    %1246 = vmatpush.bf16.msra.mxu0 %v273
    %1247 = vmatpush.bf16.msra.mxu0 %v272
    %1248 = vmatpush.bf16.msra.mxu0 %v271
    %1249 = vmatmul.bf16.gmra.mxu0 %v1239
    %v1250 = vpop.f32.mrf.mxu0
    %v1251 = vadd.f32 0.0, %v1250
    %v1252 = vpop.f32.mrf.mxu0
    %1253 = vdwg.mxu0
    %1254 = vmatpush.bf16.msra.mxu0 0
    %1255 = vmatpush.bf16.msra.mxu0 0
    %1256 = vmatpush.bf16.msra.mxu0 0
    %1257 = vmatpush.bf16.msra.mxu0 0
    %1258 = vmatpush.bf16.msra.mxu0 %v319
    %1259 = vmatpush.bf16.msra.mxu0 %v313
    %1260 = vmatpush.bf16.msra.mxu0 %v312
    %1261 = vmatpush.bf16.msra.mxu0 %v311
    %1262 = vmatmul.bf16.gmra.mxu0 %v1239
    %v1263 = vpop.f32.mrf.mxu0
    %v1264 = vadd.f32 0.0, %v1263
    %v1265 = vpop.f32.mrf.mxu0
    %1266 = vdwg.mxu0
    %v1267 = vmax.f32 %v1251, %v1264
    %v1268 = vadd.f32 %v1267, %v79
    %v1269 = vmax.f32 %v1268, 0.0
    %v1270 = vpack.c.bf16 %v1269, %v1269
    %v1272 = vrot.slane %v1270, 5
    %v1273 = vrot.slane %v1272, 4
    %1276 = vst.msk [vmem:[#allocation2 + $0xc] sm:$0x8] %vm526, %v1272
    %1277 = vst.msk [vmem:[#allocation2 + $0x10] sm:$0x3] %vm528, %v1273
    %v1278 = vld [vmem:[%s0 + $0x4] sm:$0xc]
    %v1279 = vld [vmem:[%s0 + $0x8] sm:$0x1]
    %v1280 = vld [vmem:[%s94 + $0x4] sm:$0xc]
    %v1281 = vld [vmem:[%s94 + $0x8] sm:$0x1]
    %v1284 = vunpack.c.l.b16 %v1278
    %v1285 = vunpack.c.l.b16 %v1279
    %v1286 = vpack.c.b16 %v1285, %v1284
    %v1289 = vunpack.c.l.b16 %v1280
    %v1290 = vunpack.c.l.b16 %v1281
    %v1291 = vpack.c.b16 %v1290, %v1289
    %1292 = vrot.lane.b32.xlu0 %v1291, 28
    %v1293 = vpop.permute.xlu0 %1292
    %v1295 = vshrl.u32 %v1286, 16
    %v1297 = vshll.u32 %v1286, 16
    %v1299 = vrot.slane %v1297, 1
    %v1300 = vor.u32 %v1295, %v1299
    %1301 = vrot.lane.b32.xlu0 %v1300, 56
    %v1302 = vpop.permute.xlu0 %1301
    %v1304 = vshrl.u32 %v1291, 16
    %v1306 = vshll.u32 %v1291, 16
    %v1308 = vrot.slane %v1306, 1
    %v1309 = vor.u32 %v1304, %v1308
    %1310 = vrot.lane.b32.xlu0 %v1309, 84
    %v1311 = vpop.permute.xlu0 %1310
    %v1313 = vsel %vm122, %v1286, %v1293
    %v1315 = vsel %vm126, %v1313, %v1302
    %v1317 = vsel %vm129, %v1315, %v1311
    %1318 = vrot.lane.b32.xlu0 %v1286, 127
    %v1319 = vpop.permute.xlu0 %1318
    %1320 = vrot.lane.b32.xlu0 %v1291, 27
    %v1321 = vpop.permute.xlu0 %1320
    %1322 = vrot.lane.b32.xlu0 %v1300, 55
    %v1323 = vpop.permute.xlu0 %1322
    %1324 = vrot.lane.b32.xlu0 %v1309, 83
    %v1325 = vpop.permute.xlu0 %1324
    %v1328 = vsel %vm122, %v1319, %v1321
    %v1330 = vsel %vm126, %v1328, %v1323
    %v1332 = vsel %vm129, %v1330, %v1325
    %1333 = vrot.lane.b32.xlu0 %v1286, 126
    %v1334 = vpop.permute.xlu0 %1333
    %1335 = vrot.lane.b32.xlu0 %v1291, 26
    %v1336 = vpop.permute.xlu0 %1335
    %1337 = vrot.lane.b32.xlu0 %v1300, 54
    %v1338 = vpop.permute.xlu0 %1337
    %1339 = vrot.lane.b32.xlu0 %v1309, 82
    %v1340 = vpop.permute.xlu0 %1339
    %v1343 = vsel %vm122, %v1334, %v1336
    %v1345 = vsel %vm126, %v1343, %v1338
    %v1347 = vsel %vm129, %v1345, %v1340
    %1348 = vrot.lane.b32.xlu0 %v1286, 125
    %v1349 = vpop.permute.xlu0 %1348
    %1350 = vrot.lane.b32.xlu0 %v1291, 25
    %v1351 = vpop.permute.xlu0 %1350
    %1352 = vrot.lane.b32.xlu0 %v1300, 53
    %v1353 = vpop.permute.xlu0 %1352
    %1354 = vrot.lane.b32.xlu0 %v1309, 81
    %v1355 = vpop.permute.xlu0 %1354
    %v1358 = vsel %vm122, %v1349, %v1351
    %v1360 = vsel %vm126, %v1358, %v1353
    %v1362 = vsel %vm129, %v1360, %v1355
    %1363 = vrot.lane.b32.xlu0 %v1286, 124
    %v1364 = vpop.permute.xlu0 %1363
    %1365 = vrot.lane.b32.xlu0 %v1291, 24
    %v1366 = vpop.permute.xlu0 %1365
    %1367 = vrot.lane.b32.xlu0 %v1300, 52
    %v1368 = vpop.permute.xlu0 %1367
    %1369 = vrot.lane.b32.xlu0 %v1309, 80
    %v1370 = vpop.permute.xlu0 %1369
    %v1373 = vsel %vm122, %v1364, %v1366
    %v1375 = vsel %vm126, %v1373, %v1368
    %v1377 = vsel %vm129, %v1375, %v1370
    %v1379 = vrot.slane %v1317, 2
    %v1381 = vshrl.u32 %v1332, 16
    %v1383 = vrot.slane %v1381, 7
    %v1384 = vshll.u32 %v1332, 16
    %v1386 = vor.u32 %v1383, %v1384
    %v1389 = vrot.slane %v1347, 5
    %v1390 = vshll.u32 %v1362, 16
    %v1392 = vrot.slane %v1390, 3
    %v1393 = vshrl.u32 %v1362, 16
    %v1395 = vrot.slane %v1393, 2
    %v1396 = vor.u32 %v1395, %v1392
    %v1398 = vsel %vm214, %v1379, %v1386
    %v1401 = vsel %vm216, %v1398, %v1389
    %v1403 = vsel %vm223, %v1401, %v1392
    %v1405 = vsel %vm225, %v1396, %v1377
    %v1406 = vand.u32 %v1405, %v235
    %1408 = vmatpush.bf16.msra.mxu0 0
    %1409 = vmatpush.bf16.msra.mxu0 0
    %1410 = vmatpush.bf16.msra.mxu0 0
    %1411 = vmatpush.bf16.msra.mxu0 0
    %1412 = vmatpush.bf16.msra.mxu0 0
    %1413 = vmatpush.bf16.msra.mxu0 0
    %1414 = vmatpush.bf16.msra.mxu0 %v1406
    %1415 = vmatpush.bf16.msra.mxu0 %v1403
    %1416 = vmatmul.bf16.gmra.mxu0 %v231
    %v1417 = vpop.f32.mrf.mxu0
    %v1418 = vadd.f32 0.0, %v1417
    %v1419 = vpop.f32.mrf.mxu0
    %1420 = vdwg.mxu0
    %1422 = vrot.lane.b32.xlu0 %v1418, 72
    %v1423 = vpop.permute.xlu0 %1422
    %v1425 = vmax.f32 %v1418, %v1423
    %v1426 = vpack.c.bf16 %v1425, %v1425
    %v1428 = vsel %vm126, %v1426, 0
    %1430 = vmatpush.bf16.msra.mxu0 0
    %1431 = vmatpush.bf16.msra.mxu0 0
    %1432 = vmatpush.bf16.msra.mxu0 0
    %1433 = vmatpush.bf16.msra.mxu0 0
    %1434 = vmatpush.bf16.msra.mxu0 %v282
    %1435 = vmatpush.bf16.msra.mxu0 %v273
    %1436 = vmatpush.bf16.msra.mxu0 %v272
    %1437 = vmatpush.bf16.msra.mxu0 %v271
    %1438 = vmatmul.bf16.gmra.mxu0 %v1428
    %v1439 = vpop.f32.mrf.mxu0
    %v1440 = vadd.f32 0.0, %v1439
    %v1441 = vpop.f32.mrf.mxu0
    %1442 = vdwg.mxu0
    %1443 = vmatpush.bf16.msra.mxu0 0
    %1444 = vmatpush.bf16.msra.mxu0 0
    %1445 = vmatpush.bf16.msra.mxu0 0
    %1446 = vmatpush.bf16.msra.mxu0 0
    %1447 = vmatpush.bf16.msra.mxu0 %v319
    %1448 = vmatpush.bf16.msra.mxu0 %v313
    %1449 = vmatpush.bf16.msra.mxu0 %v312
    %1450 = vmatpush.bf16.msra.mxu0 %v311
    %1451 = vmatmul.bf16.gmra.mxu0 %v1428
    %v1452 = vpop.f32.mrf.mxu0
    %v1453 = vadd.f32 0.0, %v1452
    %v1454 = vpop.f32.mrf.mxu0
    %1455 = vdwg.mxu0
    %v1456 = vmax.f32 %v1440, %v1453
    %v1457 = vadd.f32 %v1456, %v79
    %v1458 = vmax.f32 %v1457, 0.0
    %v1459 = vpack.c.bf16 %v1458, %v1458
    %v1461 = vrot.slane %v1459, 6
    %v1462 = vrot.slane %v1461, 4
    %1465 = vst.msk [vmem:[#allocation2 + $0x10] sm:$0xc] %vm717, %v1461
    %1466 = vst.msk [vmem:[#allocation2 + $0x14] sm:$0x1] %vm719, %v1462
    %v1467 = vld [vmem:[%s0 + $0x4] sm:$0x8]
    %v1468 = vld [vmem:[%s0 + $0x8] sm:$0x3]
    %v1469 = vld [vmem:[%s94 + $0x4] sm:$0x8]
    %v1470 = vld [vmem:[%s94 + $0x8] sm:$0x3]
    %v1473 = vunpack.c.l.b16 %v1467
    %v1474 = vunpack.c.l.b16 %v1468
    %v1475 = vpack.c.b16 %v1474, %v1473
    %v1478 = vunpack.c.l.b16 %v1469
    %v1479 = vunpack.c.l.b16 %v1470
    %v1480 = vpack.c.b16 %v1479, %v1478
    %1481 = vrot.lane.b32.xlu0 %v1480, 28
    %v1482 = vpop.permute.xlu0 %1481
    %v1484 = vshrl.u32 %v1475, 16
    %v1486 = vshll.u32 %v1475, 16
    %v1488 = vrot.slane %v1486, 1
    %v1489 = vor.u32 %v1484, %v1488
    %1490 = vrot.lane.b32.xlu0 %v1489, 56
    %v1491 = vpop.permute.xlu0 %1490
    %v1493 = vshrl.u32 %v1480, 16
    %v1495 = vshll.u32 %v1480, 16
    %v1497 = vrot.slane %v1495, 1
    %v1498 = vor.u32 %v1493, %v1497
    %1499 = vrot.lane.b32.xlu0 %v1498, 84
    %v1500 = vpop.permute.xlu0 %1499
    %v1502 = vsel %vm122, %v1475, %v1482
    %v1504 = vsel %vm126, %v1502, %v1491
    %v1506 = vsel %vm129, %v1504, %v1500
    %1507 = vrot.lane.b32.xlu0 %v1475, 127
    %v1508 = vpop.permute.xlu0 %1507
    %1509 = vrot.lane.b32.xlu0 %v1480, 27
    %v1510 = vpop.permute.xlu0 %1509
    %1511 = vrot.lane.b32.xlu0 %v1489, 55
    %v1512 = vpop.permute.xlu0 %1511
    %1513 = vrot.lane.b32.xlu0 %v1498, 83
    %v1514 = vpop.permute.xlu0 %1513
    %v1517 = vsel %vm122, %v1508, %v1510
    %v1519 = vsel %vm126, %v1517, %v1512
    %v1521 = vsel %vm129, %v1519, %v1514
    %1522 = vrot.lane.b32.xlu0 %v1475, 126
    %v1523 = vpop.permute.xlu0 %1522
    %1524 = vrot.lane.b32.xlu0 %v1480, 26
    %v1525 = vpop.permute.xlu0 %1524
    %1526 = vrot.lane.b32.xlu0 %v1489, 54
    %v1527 = vpop.permute.xlu0 %1526
    %1528 = vrot.lane.b32.xlu0 %v1498, 82
    %v1529 = vpop.permute.xlu0 %1528
    %v1532 = vsel %vm122, %v1523, %v1525
    %v1534 = vsel %vm126, %v1532, %v1527
    %v1536 = vsel %vm129, %v1534, %v1529
    %1537 = vrot.lane.b32.xlu0 %v1475, 125
    %v1538 = vpop.permute.xlu0 %1537
    %1539 = vrot.lane.b32.xlu0 %v1480, 25
    %v1540 = vpop.permute.xlu0 %1539
    %1541 = vrot.lane.b32.xlu0 %v1489, 53
    %v1542 = vpop.permute.xlu0 %1541
    %1543 = vrot.lane.b32.xlu0 %v1498, 81
    %v1544 = vpop.permute.xlu0 %1543
    %v1547 = vsel %vm122, %v1538, %v1540
    %v1549 = vsel %vm126, %v1547, %v1542
    %v1551 = vsel %vm129, %v1549, %v1544
    %1552 = vrot.lane.b32.xlu0 %v1475, 124
    %v1553 = vpop.permute.xlu0 %1552
    %1554 = vrot.lane.b32.xlu0 %v1480, 24
    %v1555 = vpop.permute.xlu0 %1554
    %1556 = vrot.lane.b32.xlu0 %v1489, 52
    %v1557 = vpop.permute.xlu0 %1556
    %1558 = vrot.lane.b32.xlu0 %v1498, 80
    %v1559 = vpop.permute.xlu0 %1558
    %v1562 = vsel %vm122, %v1553, %v1555
    %v1564 = vsel %vm126, %v1562, %v1557
    %v1566 = vsel %vm129, %v1564, %v1559
    %v1568 = vrot.slane %v1506, 3
    %v1570 = vshrl.u32 %v1521, 16
    %v1572 = vshll.u32 %v1521, 16
    %v1574 = vrot.slane %v1572, 1
    %v1575 = vor.u32 %v1570, %v1574
    %v1578 = vrot.slane %v1536, 6
    %v1579 = vshll.u32 %v1551, 16
    %v1581 = vrot.slane %v1579, 4
    %v1582 = vshrl.u32 %v1551, 16
    %v1584 = vrot.slane %v1582, 3
    %v1585 = vor.u32 %v1584, %v1581
    %v1588 = vrot.slane %v1566, 1
    %v1589 = vsel %vm214, %v1568, %v1575
    %v1592 = vsel %vm216, %v1589, %v1578
    %v1594 = vsel %vm223, %v1592, %v1581
    %v1597 = vsel %vm225, %v1585, %v1588
    %v1598 = vand.u32 %v1597, %v235
    %1600 = vmatpush.bf16.msra.mxu0 0
    %1601 = vmatpush.bf16.msra.mxu0 0
    %1602 = vmatpush.bf16.msra.mxu0 0
    %1603 = vmatpush.bf16.msra.mxu0 0
    %1604 = vmatpush.bf16.msra.mxu0 0
    %1605 = vmatpush.bf16.msra.mxu0 0
    %1606 = vmatpush.bf16.msra.mxu0 %v1598
    %1607 = vmatpush.bf16.msra.mxu0 %v1594
    %1608 = vmatmul.bf16.gmra.mxu0 %v231
    %v1609 = vpop.f32.mrf.mxu0
    %v1610 = vadd.f32 0.0, %v1609
    %v1611 = vpop.f32.mrf.mxu0
    %1612 = vdwg.mxu0
    %1614 = vrot.lane.b32.xlu0 %v1610, 72
    %v1615 = vpop.permute.xlu0 %1614
    %v1617 = vmax.f32 %v1610, %v1615
    %v1618 = vpack.c.bf16 %v1617, %v1617
    %v1620 = vsel %vm126, %v1618, 0
    %1622 = vmatpush.bf16.msra.mxu0 0
    %1623 = vmatpush.bf16.msra.mxu0 0
    %1624 = vmatpush.bf16.msra.mxu0 0
    %1625 = vmatpush.bf16.msra.mxu0 0
    %1626 = vmatpush.bf16.msra.mxu0 %v282
    %1627 = vmatpush.bf16.msra.mxu0 %v273
    %1628 = vmatpush.bf16.msra.mxu0 %v272
    %1629 = vmatpush.bf16.msra.mxu0 %v271
    %1630 = vmatmul.bf16.gmra.mxu0 %v1620
    %v1631 = vpop.f32.mrf.mxu0
    %v1632 = vadd.f32 0.0, %v1631
    %v1633 = vpop.f32.mrf.mxu0
    %1634 = vdwg.mxu0
    %1635 = vmatpush.bf16.msra.mxu0 0
    %1636 = vmatpush.bf16.msra.mxu0 0
    %1637 = vmatpush.bf16.msra.mxu0 0
    %1638 = vmatpush.bf16.msra.mxu0 0
    %1639 = vmatpush.bf16.msra.mxu0 %v319
    %1640 = vmatpush.bf16.msra.mxu0 %v313
    %1641 = vmatpush.bf16.msra.mxu0 %v312
    %1642 = vmatpush.bf16.msra.mxu0 %v311
    %1643 = vmatmul.bf16.gmra.mxu0 %v1620
    %v1644 = vpop.f32.mrf.mxu0
    %v1645 = vadd.f32 0.0, %v1644
    %v1646 = vpop.f32.mrf.mxu0
    %1647 = vdwg.mxu0
    %v1648 = vmax.f32 %v1632, %v1645
    %v1649 = vadd.f32 %v1648, %v79
    %v1650 = vmax.f32 %v1649, 0.0
    %v1651 = vpack.c.bf16 %v1650, %v1650
    %v1653 = vrot.slane %v1651, 7
    %1655 = vst.msk [vmem:[#allocation2 + $0x14] sm:$0xe] %vm909, %v1653
    %v1656 = vld [vmem:[%s0 + $0x8] sm:$0x7]
    %v1657 = vld [vmem:[%s94 + $0x8] sm:$0x7]
    %v1659 = vunpack.c.l.b16 %v1657
    %v1660 = vpack.c.b16 %v1659, %v1659
    %1661 = vrot.lane.b32.xlu0 %v1660, 28
    %v1662 = vpop.permute.xlu0 %1661
    %v1664 = vunpack.c.l.b16 %v1656
    %v1665 = vpack.c.b16 %v1664, %v1664
    %v1667 = vshrl.u32 %v1665, 16
    %v1669 = vshll.u32 %v1665, 16
    %v1671 = vrot.slane %v1669, 1
    %v1672 = vor.u32 %v1667, %v1671
    %1673 = vrot.lane.b32.xlu0 %v1672, 56
    %v1674 = vpop.permute.xlu0 %1673
    %v1676 = vshrl.u32 %v1660, 16
    %v1678 = vshll.u32 %v1660, 16
    %v1680 = vrot.slane %v1678, 1
    %v1681 = vor.u32 %v1676, %v1680
    %1682 = vrot.lane.b32.xlu0 %v1681, 84
    %v1683 = vpop.permute.xlu0 %1682
    %v1686 = vsel %vm122, %v1656, %v1662
    %v1688 = vsel %vm126, %v1686, %v1674
    %v1690 = vsel %vm129, %v1688, %v1683
    %1692 = vrot.lane.b32.xlu0 %v1665, 127
    %v1693 = vpop.permute.xlu0 %1692
    %1694 = vrot.lane.b32.xlu0 %v1660, 27
    %v1695 = vpop.permute.xlu0 %1694
    %1696 = vrot.lane.b32.xlu0 %v1672, 55
    %v1697 = vpop.permute.xlu0 %1696
    %1698 = vrot.lane.b32.xlu0 %v1681, 83
    %v1699 = vpop.permute.xlu0 %1698
    %v1702 = vsel %vm122, %v1693, %v1695
    %v1704 = vsel %vm126, %v1702, %v1697
    %v1706 = vsel %vm129, %v1704, %v1699
    %1707 = vrot.lane.b32.xlu0 %v1665, 126
    %v1708 = vpop.permute.xlu0 %1707
    %1709 = vrot.lane.b32.xlu0 %v1660, 26
    %v1710 = vpop.permute.xlu0 %1709
    %1711 = vrot.lane.b32.xlu0 %v1672, 54
    %v1712 = vpop.permute.xlu0 %1711
    %1713 = vrot.lane.b32.xlu0 %v1681, 82
    %v1714 = vpop.permute.xlu0 %1713
    %v1717 = vsel %vm122, %v1708, %v1710
    %v1719 = vsel %vm126, %v1717, %v1712
    %v1721 = vsel %vm129, %v1719, %v1714
    %1722 = vrot.lane.b32.xlu0 %v1665, 125
    %v1723 = vpop.permute.xlu0 %1722
    %1724 = vrot.lane.b32.xlu0 %v1660, 25
    %v1725 = vpop.permute.xlu0 %1724
    %1726 = vrot.lane.b32.xlu0 %v1672, 53
    %v1727 = vpop.permute.xlu0 %1726
    %1728 = vrot.lane.b32.xlu0 %v1681, 81
    %v1729 = vpop.permute.xlu0 %1728
    %v1732 = vsel %vm122, %v1723, %v1725
    %v1734 = vsel %vm126, %v1732, %v1727
    %v1736 = vsel %vm129, %v1734, %v1729
    %1737 = vrot.lane.b32.xlu0 %v1665, 124
    %v1738 = vpop.permute.xlu0 %1737
    %1739 = vrot.lane.b32.xlu0 %v1660, 24
    %v1740 = vpop.permute.xlu0 %1739
    %1741 = vrot.lane.b32.xlu0 %v1672, 52
    %v1742 = vpop.permute.xlu0 %1741
    %1743 = vrot.lane.b32.xlu0 %v1681, 80
    %v1744 = vpop.permute.xlu0 %1743
    %v1747 = vsel %vm122, %v1738, %v1740
    %v1749 = vsel %vm126, %v1747, %v1742
    %v1751 = vsel %vm129, %v1749, %v1744
    %v1752 = vshrl.u32 %v1706, 16
    %v1754 = vrot.slane %v1752, 5
    %v1755 = vshll.u32 %v1706, 16
    %v1757 = vrot.slane %v1755, 6
    %v1758 = vor.u32 %v1754, %v1757
    %v1761 = vrot.slane %v1721, 3
    %v1762 = vshll.u32 %v1736, 16
    %v1764 = vrot.slane %v1762, 1
    %v1765 = vshrl.u32 %v1736, 16
    %v1767 = vor.u32 %v1765, %v1764
    %v1770 = vrot.slane %v1751, 6
    %v1771 = vsel %vm214, %v1690, %v1758
    %v1774 = vsel %vm216, %v1771, %v1761
    %v1776 = vsel %vm223, %v1774, %v1764
    %v1779 = vsel %vm225, %v1767, %v1770
    %v1780 = vand.u32 %v1779, %v235
    %1782 = vmatpush.bf16.msra.mxu0 0
    %1783 = vmatpush.bf16.msra.mxu0 0
    %1784 = vmatpush.bf16.msra.mxu0 0
    %1785 = vmatpush.bf16.msra.mxu0 0
    %1786 = vmatpush.bf16.msra.mxu0 0
    %1787 = vmatpush.bf16.msra.mxu0 0
    %1788 = vmatpush.bf16.msra.mxu0 %v1780
    %1789 = vmatpush.bf16.msra.mxu0 %v1776
    %1790 = vmatmul.bf16.gmra.mxu0 %v231
    %v1791 = vpop.f32.mrf.mxu0
    %v1792 = vadd.f32 0.0, %v1791
    %v1793 = vpop.f32.mrf.mxu0
    %1794 = vdwg.mxu0
    %1796 = vrot.lane.b32.xlu0 %v1792, 72
    %v1797 = vpop.permute.xlu0 %1796
    %v1799 = vmax.f32 %v1792, %v1797
    %v1800 = vpack.c.bf16 %v1799, %v1799
    %v1802 = vsel %vm126, %v1800, 0
    %1804 = vmatpush.bf16.msra.mxu0 0
    %1805 = vmatpush.bf16.msra.mxu0 0
    %1806 = vmatpush.bf16.msra.mxu0 0
    %1807 = vmatpush.bf16.msra.mxu0 0
    %1808 = vmatpush.bf16.msra.mxu0 %v282
    %1809 = vmatpush.bf16.msra.mxu0 %v273
    %1810 = vmatpush.bf16.msra.mxu0 %v272
    %1811 = vmatpush.bf16.msra.mxu0 %v271
    %1812 = vmatmul.bf16.gmra.mxu0 %v1802
    %v1813 = vpop.f32.mrf.mxu0
    %v1814 = vadd.f32 0.0, %v1813
    %v1815 = vpop.f32.mrf.mxu0
    %1816 = vdwg.mxu0
    %1817 = vmatpush.bf16.msra.mxu0 0
    %1818 = vmatpush.bf16.msra.mxu0 0
    %1819 = vmatpush.bf16.msra.mxu0 0
    %1820 = vmatpush.bf16.msra.mxu0 0
    %1821 = vmatpush.bf16.msra.mxu0 %v319
    %1822 = vmatpush.bf16.msra.mxu0 %v313
    %1823 = vmatpush.bf16.msra.mxu0 %v312
    %1824 = vmatpush.bf16.msra.mxu0 %v311
    %1825 = vmatmul.bf16.gmra.mxu0 %v1802
    %v1826 = vpop.f32.mrf.mxu0
    %v1827 = vadd.f32 0.0, %v1826
    %v1828 = vpop.f32.mrf.mxu0
    %1829 = vdwg.mxu0
    %v1830 = vmax.f32 %v1814, %v1827
    %v1831 = vadd.f32 %v1830, %v79
    %v1832 = vmax.f32 %v1831, 0.0
    %v1833 = vpack.c.bf16 %v1832, %v1832
    %1834 = vst.msk [vmem:[#allocation2 + $0x18] sm:$0x7] %vm338, %v1833
    %v1835 = vld [vmem:[%s0 + $0x8] sm:$0xe]
    %v1836 = vld [vmem:[%s94 + $0x8] sm:$0xe]
    %v1838 = vunpack.c.l.b16 %v1836
    %v1839 = vpack.c.b16 %v1838, %v1838
    %1840 = vrot.lane.b32.xlu0 %v1839, 28
    %v1841 = vpop.permute.xlu0 %1840
    %v1843 = vunpack.c.l.b16 %v1835
    %v1844 = vpack.c.b16 %v1843, %v1843
    %v1846 = vshrl.u32 %v1844, 16
    %v1848 = vshll.u32 %v1844, 16
    %v1850 = vrot.slane %v1848, 1
    %v1851 = vor.u32 %v1846, %v1850
    %1852 = vrot.lane.b32.xlu0 %v1851, 56
    %v1853 = vpop.permute.xlu0 %1852
    %v1855 = vshrl.u32 %v1839, 16
    %v1857 = vshll.u32 %v1839, 16
    %v1859 = vrot.slane %v1857, 1
    %v1860 = vor.u32 %v1855, %v1859
    %1861 = vrot.lane.b32.xlu0 %v1860, 84
    %v1862 = vpop.permute.xlu0 %1861
    %v1865 = vsel %vm122, %v1835, %v1841
    %v1867 = vsel %vm126, %v1865, %v1853
    %v1869 = vsel %vm129, %v1867, %v1862
    %1870 = vrot.lane.b32.xlu0 %v1844, 127
    %v1871 = vpop.permute.xlu0 %1870
    %1872 = vrot.lane.b32.xlu0 %v1839, 27
    %v1873 = vpop.permute.xlu0 %1872
    %1874 = vrot.lane.b32.xlu0 %v1851, 55
    %v1875 = vpop.permute.xlu0 %1874
    %1876 = vrot.lane.b32.xlu0 %v1860, 83
    %v1877 = vpop.permute.xlu0 %1876
    %v1880 = vsel %vm122, %v1871, %v1873
    %v1882 = vsel %vm126, %v1880, %v1875
    %v1884 = vsel %vm129, %v1882, %v1877
    %1885 = vrot.lane.b32.xlu0 %v1844, 126
    %v1886 = vpop.permute.xlu0 %1885
    %1887 = vrot.lane.b32.xlu0 %v1839, 26
    %v1888 = vpop.permute.xlu0 %1887
    %1889 = vrot.lane.b32.xlu0 %v1851, 54
    %v1890 = vpop.permute.xlu0 %1889
    %1891 = vrot.lane.b32.xlu0 %v1860, 82
    %v1892 = vpop.permute.xlu0 %1891
    %v1895 = vsel %vm122, %v1886, %v1888
    %v1897 = vsel %vm126, %v1895, %v1890
    %v1899 = vsel %vm129, %v1897, %v1892
    %1900 = vrot.lane.b32.xlu0 %v1844, 125
    %v1901 = vpop.permute.xlu0 %1900
    %1902 = vrot.lane.b32.xlu0 %v1839, 25
    %v1903 = vpop.permute.xlu0 %1902
    %1904 = vrot.lane.b32.xlu0 %v1851, 53
    %v1905 = vpop.permute.xlu0 %1904
    %1906 = vrot.lane.b32.xlu0 %v1860, 81
    %v1907 = vpop.permute.xlu0 %1906
    %v1910 = vsel %vm122, %v1901, %v1903
    %v1912 = vsel %vm126, %v1910, %v1905
    %v1914 = vsel %vm129, %v1912, %v1907
    %1915 = vrot.lane.b32.xlu0 %v1844, 124
    %v1916 = vpop.permute.xlu0 %1915
    %1917 = vrot.lane.b32.xlu0 %v1839, 24
    %v1918 = vpop.permute.xlu0 %1917
    %1919 = vrot.lane.b32.xlu0 %v1851, 52
    %v1920 = vpop.permute.xlu0 %1919
    %1921 = vrot.lane.b32.xlu0 %v1860, 80
    %v1922 = vpop.permute.xlu0 %1921
    %v1925 = vsel %vm122, %v1916, %v1918
    %v1927 = vsel %vm126, %v1925, %v1920
    %v1929 = vsel %vm129, %v1927, %v1922
    %v1931 = vrot.slane %v1869, 1
    %v1933 = vshrl.u32 %v1884, 16
    %v1935 = vrot.slane %v1933, 6
    %v1936 = vshll.u32 %v1884, 16
    %v1938 = vrot.slane %v1936, 7
    %v1939 = vor.u32 %v1935, %v1938
    %v1942 = vrot.slane %v1899, 4
    %v1943 = vshll.u32 %v1914, 16
    %v1945 = vrot.slane %v1943, 2
    %v1946 = vshrl.u32 %v1914, 16
    %v1948 = vrot.slane %v1946, 1
    %v1949 = vor.u32 %v1948, %v1945
    %v1952 = vrot.slane %v1929, 7
    %v1953 = vsel %vm214, %v1931, %v1939
    %v1956 = vsel %vm216, %v1953, %v1942
    %v1958 = vsel %vm223, %v1956, %v1945
    %v1961 = vsel %vm225, %v1949, %v1952
    %v1962 = vand.u32 %v1961, %v235
    %1964 = vmatpush.bf16.msra.mxu0 0
    %1965 = vmatpush.bf16.msra.mxu0 0
    %1966 = vmatpush.bf16.msra.mxu0 0
    %1967 = vmatpush.bf16.msra.mxu0 0
    %1968 = vmatpush.bf16.msra.mxu0 0
    %1969 = vmatpush.bf16.msra.mxu0 0
    %1970 = vmatpush.bf16.msra.mxu0 %v1962
    %1971 = vmatpush.bf16.msra.mxu0 %v1958
    %1972 = vmatmul.bf16.gmra.mxu0 %v231
    %v1973 = vpop.f32.mrf.mxu0
    %v1974 = vadd.f32 0.0, %v1973
    %v1975 = vpop.f32.mrf.mxu0
    %1976 = vdwg.mxu0
    %1978 = vrot.lane.b32.xlu0 %v1974, 72
    %v1979 = vpop.permute.xlu0 %1978
    %v1981 = vmax.f32 %v1974, %v1979
    %v1982 = vpack.c.bf16 %v1981, %v1981
    %v1984 = vsel %vm126, %v1982, 0
    %1986 = vmatpush.bf16.msra.mxu0 0
    %1987 = vmatpush.bf16.msra.mxu0 0
    %1988 = vmatpush.bf16.msra.mxu0 0
    %1989 = vmatpush.bf16.msra.mxu0 0
    %1990 = vmatpush.bf16.msra.mxu0 %v282
    %1991 = vmatpush.bf16.msra.mxu0 %v273
    %1992 = vmatpush.bf16.msra.mxu0 %v272
    %1993 = vmatpush.bf16.msra.mxu0 %v271
    %1994 = vmatmul.bf16.gmra.mxu0 %v1984
    %v1995 = vpop.f32.mrf.mxu0
    %v1996 = vadd.f32 0.0, %v1995
    %v1997 = vpop.f32.mrf.mxu0
    %1998 = vdwg.mxu0
    %1999 = vmatpush.bf16.msra.mxu0 0
    %2000 = vmatpush.bf16.msra.mxu0 0
    %2001 = vmatpush.bf16.msra.mxu0 0
    %2002 = vmatpush.bf16.msra.mxu0 0
    %2003 = vmatpush.bf16.msra.mxu0 %v319
    %2004 = vmatpush.bf16.msra.mxu0 %v313
    %2005 = vmatpush.bf16.msra.mxu0 %v312
    %2006 = vmatpush.bf16.msra.mxu0 %v311
    %2007 = vmatmul.bf16.gmra.mxu0 %v1984
    %v2008 = vpop.f32.mrf.mxu0
    %v2009 = vadd.f32 0.0, %v2008
    %v2010 = vpop.f32.mrf.mxu0
    %2011 = vdwg.mxu0
    %v2012 = vmax.f32 %v1996, %v2009
    %v2013 = vadd.f32 %v2012, %v79
    %v2014 = vmax.f32 %v2013, 0.0
    %v2015 = vpack.c.bf16 %v2014, %v2014
    %v2017 = vrot.slane %v2015, 5
    %v2018 = vrot.slane %v2017, 4
    %2021 = vst.msk [vmem:[#allocation2 + $0x18] sm:$0x8] %vm526, %v2017
    %2022 = vst.msk [vmem:[#allocation2 + $0x1c] sm:$0x3] %vm528, %v2018
    %v2023 = vld [vmem:[%s0 + $0x8] sm:$0xc]
    %v2024 = vld [vmem:[%s0 + $0xc] sm:$0x1]
    %v2025 = vld [vmem:[%s94 + $0x8] sm:$0xc]
    %v2026 = vld [vmem:[%s94 + $0xc] sm:$0x1]
    %v2029 = vunpack.c.l.b16 %v2023
    %v2030 = vunpack.c.l.b16 %v2024
    %v2031 = vpack.c.b16 %v2030, %v2029
    %v2034 = vunpack.c.l.b16 %v2025
    %v2035 = vunpack.c.l.b16 %v2026
    %v2036 = vpack.c.b16 %v2035, %v2034
    %2037 = vrot.lane.b32.xlu0 %v2036, 28
    %v2038 = vpop.permute.xlu0 %2037
    %v2040 = vshrl.u32 %v2031, 16
    %v2042 = vshll.u32 %v2031, 16
    %v2044 = vrot.slane %v2042, 1
    %v2045 = vor.u32 %v2040, %v2044
    %2046 = vrot.lane.b32.xlu0 %v2045, 56
    %v2047 = vpop.permute.xlu0 %2046
    %v2049 = vshrl.u32 %v2036, 16
    %v2051 = vshll.u32 %v2036, 16
    %v2053 = vrot.slane %v2051, 1
    %v2054 = vor.u32 %v2049, %v2053
    %2055 = vrot.lane.b32.xlu0 %v2054, 84
    %v2056 = vpop.permute.xlu0 %2055
    %v2058 = vsel %vm122, %v2031, %v2038
    %v2060 = vsel %vm126, %v2058, %v2047
    %v2062 = vsel %vm129, %v2060, %v2056
    %2063 = vrot.lane.b32.xlu0 %v2031, 127
    %v2064 = vpop.permute.xlu0 %2063
    %2065 = vrot.lane.b32.xlu0 %v2036, 27
    %v2066 = vpop.permute.xlu0 %2065
    %2067 = vrot.lane.b32.xlu0 %v2045, 55
    %v2068 = vpop.permute.xlu0 %2067
    %2069 = vrot.lane.b32.xlu0 %v2054, 83
    %v2070 = vpop.permute.xlu0 %2069
    %v2073 = vsel %vm122, %v2064, %v2066
    %v2075 = vsel %vm126, %v2073, %v2068
    %v2077 = vsel %vm129, %v2075, %v2070
    %2078 = vrot.lane.b32.xlu0 %v2031, 126
    %v2079 = vpop.permute.xlu0 %2078
    %2080 = vrot.lane.b32.xlu0 %v2036, 26
    %v2081 = vpop.permute.xlu0 %2080
    %2082 = vrot.lane.b32.xlu0 %v2045, 54
    %v2083 = vpop.permute.xlu0 %2082
    %2084 = vrot.lane.b32.xlu0 %v2054, 82
    %v2085 = vpop.permute.xlu0 %2084
    %v2088 = vsel %vm122, %v2079, %v2081
    %v2090 = vsel %vm126, %v2088, %v2083
    %v2092 = vsel %vm129, %v2090, %v2085
    %2093 = vrot.lane.b32.xlu0 %v2031, 125
    %v2094 = vpop.permute.xlu0 %2093
    %2095 = vrot.lane.b32.xlu0 %v2036, 25
    %v2096 = vpop.permute.xlu0 %2095
    %2097 = vrot.lane.b32.xlu0 %v2045, 53
    %v2098 = vpop.permute.xlu0 %2097
    %2099 = vrot.lane.b32.xlu0 %v2054, 81
    %v2100 = vpop.permute.xlu0 %2099
    %v2103 = vsel %vm122, %v2094, %v2096
    %v2105 = vsel %vm126, %v2103, %v2098
    %v2107 = vsel %vm129, %v2105, %v2100
    %2108 = vrot.lane.b32.xlu0 %v2031, 124
    %v2109 = vpop.permute.xlu0 %2108
    %2110 = vrot.lane.b32.xlu0 %v2036, 24
    %v2111 = vpop.permute.xlu0 %2110
    %2112 = vrot.lane.b32.xlu0 %v2045, 52
    %v2113 = vpop.permute.xlu0 %2112
    %2114 = vrot.lane.b32.xlu0 %v2054, 80
    %v2115 = vpop.permute.xlu0 %2114
    %v2118 = vsel %vm122, %v2109, %v2111
    %v2120 = vsel %vm126, %v2118, %v2113
    %v2122 = vsel %vm129, %v2120, %v2115
    %v2124 = vrot.slane %v2062, 2
    %v2126 = vshrl.u32 %v2077, 16
    %v2128 = vrot.slane %v2126, 7
    %v2129 = vshll.u32 %v2077, 16
    %v2131 = vor.u32 %v2128, %v2129
    %v2134 = vrot.slane %v2092, 5
    %v2135 = vshll.u32 %v2107, 16
    %v2137 = vrot.slane %v2135, 3
    %v2138 = vshrl.u32 %v2107, 16
    %v2140 = vrot.slane %v2138, 2
    %v2141 = vor.u32 %v2140, %v2137
    %v2143 = vsel %vm214, %v2124, %v2131
    %v2146 = vsel %vm216, %v2143, %v2134
    %v2148 = vsel %vm223, %v2146, %v2137
    %v2150 = vsel %vm225, %v2141, %v2122
    %v2151 = vand.u32 %v2150, %v235
    %2153 = vmatpush.bf16.msra.mxu0 0
    %2154 = vmatpush.bf16.msra.mxu0 0
    %2155 = vmatpush.bf16.msra.mxu0 0
    %2156 = vmatpush.bf16.msra.mxu0 0
    %2157 = vmatpush.bf16.msra.mxu0 0
    %2158 = vmatpush.bf16.msra.mxu0 0
    %2159 = vmatpush.bf16.msra.mxu0 %v2151
    %2160 = vmatpush.bf16.msra.mxu0 %v2148
    %2161 = vmatmul.bf16.gmra.mxu0 %v231
    %v2162 = vpop.f32.mrf.mxu0
    %v2163 = vadd.f32 0.0, %v2162
    %v2164 = vpop.f32.mrf.mxu0
    %2165 = vdwg.mxu0
    %2167 = vrot.lane.b32.xlu0 %v2163, 72
    %v2168 = vpop.permute.xlu0 %2167
    %v2170 = vmax.f32 %v2163, %v2168
    %v2171 = vpack.c.bf16 %v2170, %v2170
    %v2173 = vsel %vm126, %v2171, 0
    %2175 = vmatpush.bf16.msra.mxu0 0
    %2176 = vmatpush.bf16.msra.mxu0 0
    %2177 = vmatpush.bf16.msra.mxu0 0
    %2178 = vmatpush.bf16.msra.mxu0 0
    %2179 = vmatpush.bf16.msra.mxu0 %v282
    %2180 = vmatpush.bf16.msra.mxu0 %v273
    %2181 = vmatpush.bf16.msra.mxu0 %v272
    %2182 = vmatpush.bf16.msra.mxu0 %v271
    %2183 = vmatmul.bf16.gmra.mxu0 %v2173
    %v2184 = vpop.f32.mrf.mxu0
    %v2185 = vadd.f32 0.0, %v2184
    %v2186 = vpop.f32.mrf.mxu0
    %2187 = vdwg.mxu0
    %2188 = vmatpush.bf16.msra.mxu0 0
    %2189 = vmatpush.bf16.msra.mxu0 0
    %2190 = vmatpush.bf16.msra.mxu0 0
    %2191 = vmatpush.bf16.msra.mxu0 0
    %2192 = vmatpush.bf16.msra.mxu0 %v319
    %2193 = vmatpush.bf16.msra.mxu0 %v313
    %2194 = vmatpush.bf16.msra.mxu0 %v312
    %2195 = vmatpush.bf16.msra.mxu0 %v311
    %2196 = vmatmul.bf16.gmra.mxu0 %v2173
    %v2197 = vpop.f32.mrf.mxu0
    %v2198 = vadd.f32 0.0, %v2197
    %v2199 = vpop.f32.mrf.mxu0
    %2200 = vdwg.mxu0
    %v2201 = vmax.f32 %v2185, %v2198
    %v2202 = vadd.f32 %v2201, %v79
    %v2203 = vmax.f32 %v2202, 0.0
    %v2204 = vpack.c.bf16 %v2203, %v2203
    %v2206 = vrot.slane %v2204, 6
    %v2207 = vrot.slane %v2206, 4
    %2210 = vst.msk [vmem:[#allocation2 + $0x1c] sm:$0xc] %vm717, %v2206
    %2211 = vst.msk [vmem:[#allocation2 + $0x20] sm:$0x1] %vm719, %v2207
    %v2212 = vld [vmem:[%s0 + $0x8] sm:$0x8]
    %v2213 = vld [vmem:[%s0 + $0xc] sm:$0x3]
    %v2214 = vld [vmem:[%s94 + $0x8] sm:$0x8]
    %v2215 = vld [vmem:[%s94 + $0xc] sm:$0x3]
    %v2218 = vunpack.c.l.b16 %v2212
    %v2219 = vunpack.c.l.b16 %v2213
    %v2220 = vpack.c.b16 %v2219, %v2218
    %v2223 = vunpack.c.l.b16 %v2214
    %v2224 = vunpack.c.l.b16 %v2215
    %v2225 = vpack.c.b16 %v2224, %v2223
    %2226 = vrot.lane.b32.xlu0 %v2225, 28
    %v2227 = vpop.permute.xlu0 %2226
    %v2229 = vshrl.u32 %v2220, 16
    %v2231 = vshll.u32 %v2220, 16
    %v2233 = vrot.slane %v2231, 1
    %v2234 = vor.u32 %v2229, %v2233
    %2235 = vrot.lane.b32.xlu0 %v2234, 56
    %v2236 = vpop.permute.xlu0 %2235
    %v2238 = vshrl.u32 %v2225, 16
    %v2240 = vshll.u32 %v2225, 16
    %v2242 = vrot.slane %v2240, 1
    %v2243 = vor.u32 %v2238, %v2242
    %2244 = vrot.lane.b32.xlu0 %v2243, 84
    %v2245 = vpop.permute.xlu0 %2244
    %v2247 = vsel %vm122, %v2220, %v2227
    %v2249 = vsel %vm126, %v2247, %v2236
    %v2251 = vsel %vm129, %v2249, %v2245
    %2252 = vrot.lane.b32.xlu0 %v2220, 127
    %v2253 = vpop.permute.xlu0 %2252
    %2254 = vrot.lane.b32.xlu0 %v2225, 27
    %v2255 = vpop.permute.xlu0 %2254
    %2256 = vrot.lane.b32.xlu0 %v2234, 55
    %v2257 = vpop.permute.xlu0 %2256
    %2258 = vrot.lane.b32.xlu0 %v2243, 83
    %v2259 = vpop.permute.xlu0 %2258
    %v2262 = vsel %vm122, %v2253, %v2255
    %v2264 = vsel %vm126, %v2262, %v2257
    %v2266 = vsel %vm129, %v2264, %v2259
    %2267 = vrot.lane.b32.xlu0 %v2220, 126
    %v2268 = vpop.permute.xlu0 %2267
    %2269 = vrot.lane.b32.xlu0 %v2225, 26
    %v2270 = vpop.permute.xlu0 %2269
    %2271 = vrot.lane.b32.xlu0 %v2234, 54
    %v2272 = vpop.permute.xlu0 %2271
    %2273 = vrot.lane.b32.xlu0 %v2243, 82
    %v2274 = vpop.permute.xlu0 %2273
    %v2277 = vsel %vm122, %v2268, %v2270
    %v2279 = vsel %vm126, %v2277, %v2272
    %v2281 = vsel %vm129, %v2279, %v2274
    %2282 = vrot.lane.b32.xlu0 %v2220, 125
    %v2283 = vpop.permute.xlu0 %2282
    %2284 = vrot.lane.b32.xlu0 %v2225, 25
    %v2285 = vpop.permute.xlu0 %2284
    %2286 = vrot.lane.b32.xlu0 %v2234, 53
    %v2287 = vpop.permute.xlu0 %2286
    %2288 = vrot.lane.b32.xlu0 %v2243, 81
    %v2289 = vpop.permute.xlu0 %2288
    %v2292 = vsel %vm122, %v2283, %v2285
    %v2294 = vsel %vm126, %v2292, %v2287
    %v2296 = vsel %vm129, %v2294, %v2289
    %2297 = vrot.lane.b32.xlu0 %v2220, 124
    %v2298 = vpop.permute.xlu0 %2297
    %2299 = vrot.lane.b32.xlu0 %v2225, 24
    %v2300 = vpop.permute.xlu0 %2299
    %2301 = vrot.lane.b32.xlu0 %v2234, 52
    %v2302 = vpop.permute.xlu0 %2301
    %2303 = vrot.lane.b32.xlu0 %v2243, 80
    %v2304 = vpop.permute.xlu0 %2303
    %v2307 = vsel %vm122, %v2298, %v2300
    %v2309 = vsel %vm126, %v2307, %v2302
    %v2311 = vsel %vm129, %v2309, %v2304
    %v2313 = vrot.slane %v2251, 3
    %v2315 = vshrl.u32 %v2266, 16
    %v2317 = vshll.u32 %v2266, 16
    %v2319 = vrot.slane %v2317, 1
    %v2320 = vor.u32 %v2315, %v2319
    %v2323 = vrot.slane %v2281, 6
    %v2324 = vshll.u32 %v2296, 16
    %v2326 = vrot.slane %v2324, 4
    %v2327 = vshrl.u32 %v2296, 16
    %v2329 = vrot.slane %v2327, 3
    %v2330 = vor.u32 %v2329, %v2326
    %v2333 = vrot.slane %v2311, 1
    %v2334 = vsel %vm214, %v2313, %v2320
    %v2337 = vsel %vm216, %v2334, %v2323
    %v2339 = vsel %vm223, %v2337, %v2326
    %v2342 = vsel %vm225, %v2330, %v2333
    %v2343 = vand.u32 %v2342, %v235
    %2345 = vmatpush.bf16.msra.mxu0 0
    %2346 = vmatpush.bf16.msra.mxu0 0
    %2347 = vmatpush.bf16.msra.mxu0 0
    %2348 = vmatpush.bf16.msra.mxu0 0
    %2349 = vmatpush.bf16.msra.mxu0 0
    %2350 = vmatpush.bf16.msra.mxu0 0
    %2351 = vmatpush.bf16.msra.mxu0 %v2343
    %2352 = vmatpush.bf16.msra.mxu0 %v2339
    %2353 = vmatmul.bf16.gmra.mxu0 %v231
    %v2354 = vpop.f32.mrf.mxu0
    %v2355 = vadd.f32 0.0, %v2354
    %v2356 = vpop.f32.mrf.mxu0
    %2357 = vdwg.mxu0
    %2359 = vrot.lane.b32.xlu0 %v2355, 72
    %v2360 = vpop.permute.xlu0 %2359
    %v2362 = vmax.f32 %v2355, %v2360
    %v2363 = vpack.c.bf16 %v2362, %v2362
    %v2365 = vsel %vm126, %v2363, 0
    %2367 = vmatpush.bf16.msra.mxu0 0
    %2368 = vmatpush.bf16.msra.mxu0 0
    %2369 = vmatpush.bf16.msra.mxu0 0
    %2370 = vmatpush.bf16.msra.mxu0 0
    %2371 = vmatpush.bf16.msra.mxu0 %v282
    %2372 = vmatpush.bf16.msra.mxu0 %v273
    %2373 = vmatpush.bf16.msra.mxu0 %v272
    %2374 = vmatpush.bf16.msra.mxu0 %v271
    %2375 = vmatmul.bf16.gmra.mxu0 %v2365
    %v2376 = vpop.f32.mrf.mxu0
    %v2377 = vadd.f32 0.0, %v2376
    %v2378 = vpop.f32.mrf.mxu0
    %2379 = vdwg.mxu0
    %2380 = vmatpush.bf16.msra.mxu0 0
    %2381 = vmatpush.bf16.msra.mxu0 0
    %2382 = vmatpush.bf16.msra.mxu0 0
    %2383 = vmatpush.bf16.msra.mxu0 0
    %2384 = vmatpush.bf16.msra.mxu0 %v319
    %2385 = vmatpush.bf16.msra.mxu0 %v313
    %2386 = vmatpush.bf16.msra.mxu0 %v312
    %2387 = vmatpush.bf16.msra.mxu0 %v311
    %2388 = vmatmul.bf16.gmra.mxu0 %v2365
    %v2389 = vpop.f32.mrf.mxu0
    %v2390 = vadd.f32 0.0, %v2389
    %v2391 = vpop.f32.mrf.mxu0
    %2392 = vdwg.mxu0
    %v2393 = vmax.f32 %v2377, %v2390
    %v2394 = vadd.f32 %v2393, %v79
    %v2395 = vmax.f32 %v2394, 0.0
    %v2396 = vpack.c.bf16 %v2395, %v2395
    %v2398 = vrot.slane %v2396, 7
    %2400 = vst.msk [vmem:[#allocation2 + $0x20] sm:$0xe] %vm909, %v2398
    %v2401 = vld [vmem:[%s0 + $0xc] sm:$0x7]
    %v2402 = vld [vmem:[%s94 + $0xc] sm:$0x7]
    %v2404 = vunpack.c.l.b16 %v2402
    %v2405 = vpack.c.b16 %v2404, %v2404
    %2406 = vrot.lane.b32.xlu0 %v2405, 28
    %v2407 = vpop.permute.xlu0 %2406
    %v2409 = vunpack.c.l.b16 %v2401
    %v2410 = vpack.c.b16 %v2409, %v2409
    %v2412 = vshrl.u32 %v2410, 16
    %v2414 = vshll.u32 %v2410, 16
    %v2416 = vrot.slane %v2414, 1
    %v2417 = vor.u32 %v2412, %v2416
    %2418 = vrot.lane.b32.xlu0 %v2417, 56
    %v2419 = vpop.permute.xlu0 %2418
    %v2421 = vshrl.u32 %v2405, 16
    %v2423 = vshll.u32 %v2405, 16
    %v2425 = vrot.slane %v2423, 1
    %v2426 = vor.u32 %v2421, %v2425
    %2427 = vrot.lane.b32.xlu0 %v2426, 84
    %v2428 = vpop.permute.xlu0 %2427
    %v2431 = vsel %vm122, %v2401, %v2407
    %v2433 = vsel %vm126, %v2431, %v2419
    %v2435 = vsel %vm129, %v2433, %v2428
    %2437 = vrot.lane.b32.xlu0 %v2410, 127
    %v2438 = vpop.permute.xlu0 %2437
    %2439 = vrot.lane.b32.xlu0 %v2405, 27
    %v2440 = vpop.permute.xlu0 %2439
    %2441 = vrot.lane.b32.xlu0 %v2417, 55
    %v2442 = vpop.permute.xlu0 %2441
    %2443 = vrot.lane.b32.xlu0 %v2426, 83
    %v2444 = vpop.permute.xlu0 %2443
    %v2447 = vsel %vm122, %v2438, %v2440
    %v2449 = vsel %vm126, %v2447, %v2442
    %v2451 = vsel %vm129, %v2449, %v2444
    %2452 = vrot.lane.b32.xlu0 %v2410, 126
    %v2453 = vpop.permute.xlu0 %2452
    %2454 = vrot.lane.b32.xlu0 %v2405, 26
    %v2455 = vpop.permute.xlu0 %2454
    %2456 = vrot.lane.b32.xlu0 %v2417, 54
    %v2457 = vpop.permute.xlu0 %2456
    %2458 = vrot.lane.b32.xlu0 %v2426, 82
    %v2459 = vpop.permute.xlu0 %2458
    %v2462 = vsel %vm122, %v2453, %v2455
    %v2464 = vsel %vm126, %v2462, %v2457
    %v2466 = vsel %vm129, %v2464, %v2459
    %2467 = vrot.lane.b32.xlu0 %v2410, 125
    %v2468 = vpop.permute.xlu0 %2467
    %2469 = vrot.lane.b32.xlu0 %v2405, 25
    %v2470 = vpop.permute.xlu0 %2469
    %2471 = vrot.lane.b32.xlu0 %v2417, 53
    %v2472 = vpop.permute.xlu0 %2471
    %2473 = vrot.lane.b32.xlu0 %v2426, 81
    %v2474 = vpop.permute.xlu0 %2473
    %v2477 = vsel %vm122, %v2468, %v2470
    %v2479 = vsel %vm126, %v2477, %v2472
    %v2481 = vsel %vm129, %v2479, %v2474
    %2482 = vrot.lane.b32.xlu0 %v2410, 124
    %v2483 = vpop.permute.xlu0 %2482
    %2484 = vrot.lane.b32.xlu0 %v2405, 24
    %v2485 = vpop.permute.xlu0 %2484
    %2486 = vrot.lane.b32.xlu0 %v2417, 52
    %v2487 = vpop.permute.xlu0 %2486
    %2488 = vrot.lane.b32.xlu0 %v2426, 80
    %v2489 = vpop.permute.xlu0 %2488
    %v2492 = vsel %vm122, %v2483, %v2485
    %v2494 = vsel %vm126, %v2492, %v2487
    %v2496 = vsel %vm129, %v2494, %v2489
    %v2497 = vshrl.u32 %v2451, 16
    %v2499 = vrot.slane %v2497, 5
    %v2500 = vshll.u32 %v2451, 16
    %v2502 = vrot.slane %v2500, 6
    %v2503 = vor.u32 %v2499, %v2502
    %v2506 = vrot.slane %v2466, 3
    %v2507 = vshll.u32 %v2481, 16
    %v2509 = vrot.slane %v2507, 1
    %v2510 = vshrl.u32 %v2481, 16
    %v2512 = vor.u32 %v2510, %v2509
    %v2515 = vrot.slane %v2496, 6
    %v2516 = vsel %vm214, %v2435, %v2503
    %v2519 = vsel %vm216, %v2516, %v2506
    %v2521 = vsel %vm223, %v2519, %v2509
    %v2524 = vsel %vm225, %v2512, %v2515
    %v2525 = vand.u32 %v2524, %v235
    %2527 = vmatpush.bf16.msra.mxu0 0
    %2528 = vmatpush.bf16.msra.mxu0 0
    %2529 = vmatpush.bf16.msra.mxu0 0
    %2530 = vmatpush.bf16.msra.mxu0 0
    %2531 = vmatpush.bf16.msra.mxu0 0
    %2532 = vmatpush.bf16.msra.mxu0 0
    %2533 = vmatpush.bf16.msra.mxu0 %v2525
    %2534 = vmatpush.bf16.msra.mxu0 %v2521
    %2535 = vmatmul.bf16.gmra.mxu0 %v231
    %v2536 = vpop.f32.mrf.mxu0
    %v2537 = vadd.f32 0.0, %v2536
    %v2538 = vpop.f32.mrf.mxu0
    %2539 = vdwg.mxu0
    %2541 = vrot.lane.b32.xlu0 %v2537, 72
    %v2542 = vpop.permute.xlu0 %2541
    %v2544 = vmax.f32 %v2537, %v2542
    %v2545 = vpack.c.bf16 %v2544, %v2544
    %v2547 = vsel %vm126, %v2545, 0
    %2549 = vmatpush.bf16.msra.mxu0 0
    %2550 = vmatpush.bf16.msra.mxu0 0
    %2551 = vmatpush.bf16.msra.mxu0 0
    %2552 = vmatpush.bf16.msra.mxu0 0
    %2553 = vmatpush.bf16.msra.mxu0 %v282
    %2554 = vmatpush.bf16.msra.mxu0 %v273
    %2555 = vmatpush.bf16.msra.mxu0 %v272
    %2556 = vmatpush.bf16.msra.mxu0 %v271
    %2557 = vmatmul.bf16.gmra.mxu0 %v2547
    %v2558 = vpop.f32.mrf.mxu0
    %v2559 = vadd.f32 0.0, %v2558
    %v2560 = vpop.f32.mrf.mxu0
    %2561 = vdwg.mxu0
    %2562 = vmatpush.bf16.msra.mxu0 0
    %2563 = vmatpush.bf16.msra.mxu0 0
    %2564 = vmatpush.bf16.msra.mxu0 0
    %2565 = vmatpush.bf16.msra.mxu0 0
    %2566 = vmatpush.bf16.msra.mxu0 %v319
    %2567 = vmatpush.bf16.msra.mxu0 %v313
    %2568 = vmatpush.bf16.msra.mxu0 %v312
    %2569 = vmatpush.bf16.msra.mxu0 %v311
    %2570 = vmatmul.bf16.gmra.mxu0 %v2547
    %v2571 = vpop.f32.mrf.mxu0
    %v2572 = vadd.f32 0.0, %v2571
    %v2573 = vpop.f32.mrf.mxu0
    %2574 = vdwg.mxu0
    %v2575 = vmax.f32 %v2559, %v2572
    %v2576 = vadd.f32 %v2575, %v79
    %v2577 = vmax.f32 %v2576, 0.0
    %v2578 = vpack.c.bf16 %v2577, %v2577
    %2579 = vst.msk [vmem:[#allocation2 + $0x24] sm:$0x7] %vm338, %v2578
    %v2580 = vld [vmem:[%s0 + $0xc] sm:$0xe]
    %v2581 = vld [vmem:[%s94 + $0xc] sm:$0xe]
    %v2583 = vunpack.c.l.b16 %v2581
    %v2584 = vpack.c.b16 %v2583, %v2583
    %2585 = vrot.lane.b32.xlu0 %v2584, 28
    %v2586 = vpop.permute.xlu0 %2585
    %v2588 = vunpack.c.l.b16 %v2580
    %v2589 = vpack.c.b16 %v2588, %v2588
    %v2591 = vshrl.u32 %v2589, 16
    %v2593 = vshll.u32 %v2589, 16
    %v2595 = vrot.slane %v2593, 1
    %v2596 = vor.u32 %v2591, %v2595
    %2597 = vrot.lane.b32.xlu0 %v2596, 56
    %v2598 = vpop.permute.xlu0 %2597
    %v2600 = vshrl.u32 %v2584, 16
    %v2602 = vshll.u32 %v2584, 16
    %v2604 = vrot.slane %v2602, 1
    %v2605 = vor.u32 %v2600, %v2604
    %2606 = vrot.lane.b32.xlu0 %v2605, 84
    %v2607 = vpop.permute.xlu0 %2606
    %v2610 = vsel %vm122, %v2580, %v2586
    %v2612 = vsel %vm126, %v2610, %v2598
    %v2614 = vsel %vm129, %v2612, %v2607
    %2615 = vrot.lane.b32.xlu0 %v2589, 127
    %v2616 = vpop.permute.xlu0 %2615
    %2617 = vrot.lane.b32.xlu0 %v2584, 27
    %v2618 = vpop.permute.xlu0 %2617
    %2619 = vrot.lane.b32.xlu0 %v2596, 55
    %v2620 = vpop.permute.xlu0 %2619
    %2621 = vrot.lane.b32.xlu0 %v2605, 83
    %v2622 = vpop.permute.xlu0 %2621
    %v2625 = vsel %vm122, %v2616, %v2618
    %v2627 = vsel %vm126, %v2625, %v2620
    %v2629 = vsel %vm129, %v2627, %v2622
    %2630 = vrot.lane.b32.xlu0 %v2589, 126
    %v2631 = vpop.permute.xlu0 %2630
    %2632 = vrot.lane.b32.xlu0 %v2584, 26
    %v2633 = vpop.permute.xlu0 %2632
    %2634 = vrot.lane.b32.xlu0 %v2596, 54
    %v2635 = vpop.permute.xlu0 %2634
    %2636 = vrot.lane.b32.xlu0 %v2605, 82
    %v2637 = vpop.permute.xlu0 %2636
    %v2640 = vsel %vm122, %v2631, %v2633
    %v2642 = vsel %vm126, %v2640, %v2635
    %v2644 = vsel %vm129, %v2642, %v2637
    %2645 = vrot.lane.b32.xlu0 %v2589, 125
    %v2646 = vpop.permute.xlu0 %2645
    %2647 = vrot.lane.b32.xlu0 %v2584, 25
    %v2648 = vpop.permute.xlu0 %2647
    %2649 = vrot.lane.b32.xlu0 %v2596, 53
    %v2650 = vpop.permute.xlu0 %2649
    %2651 = vrot.lane.b32.xlu0 %v2605, 81
    %v2652 = vpop.permute.xlu0 %2651
    %v2655 = vsel %vm122, %v2646, %v2648
    %v2657 = vsel %vm126, %v2655, %v2650
    %v2659 = vsel %vm129, %v2657, %v2652
    %2660 = vrot.lane.b32.xlu0 %v2589, 124
    %v2661 = vpop.permute.xlu0 %2660
    %2662 = vrot.lane.b32.xlu0 %v2584, 24
    %v2663 = vpop.permute.xlu0 %2662
    %2664 = vrot.lane.b32.xlu0 %v2596, 52
    %v2665 = vpop.permute.xlu0 %2664
    %2666 = vrot.lane.b32.xlu0 %v2605, 80
    %v2667 = vpop.permute.xlu0 %2666
    %v2670 = vsel %vm122, %v2661, %v2663
    %v2672 = vsel %vm126, %v2670, %v2665
    %v2674 = vsel %vm129, %v2672, %v2667
    %v2676 = vrot.slane %v2614, 1
    %v2678 = vshrl.u32 %v2629, 16
    %v2680 = vrot.slane %v2678, 6
    %v2681 = vshll.u32 %v2629, 16
    %v2683 = vrot.slane %v2681, 7
    %v2684 = vor.u32 %v2680, %v2683
    %v2687 = vrot.slane %v2644, 4
    %v2688 = vshll.u32 %v2659, 16
    %v2690 = vrot.slane %v2688, 2
    %v2691 = vshrl.u32 %v2659, 16
    %v2693 = vrot.slane %v2691, 1
    %v2694 = vor.u32 %v2693, %v2690
    %v2697 = vrot.slane %v2674, 7
    %v2698 = vsel %vm214, %v2676, %v2684
    %v2701 = vsel %vm216, %v2698, %v2687
    %v2703 = vsel %vm223, %v2701, %v2690
    %v2706 = vsel %vm225, %v2694, %v2697
    %v2707 = vand.u32 %v2706, %v235
    %2709 = vmatpush.bf16.msra.mxu0 0
    %2710 = vmatpush.bf16.msra.mxu0 0
    %2711 = vmatpush.bf16.msra.mxu0 0
    %2712 = vmatpush.bf16.msra.mxu0 0
    %2713 = vmatpush.bf16.msra.mxu0 0
    %2714 = vmatpush.bf16.msra.mxu0 0
    %2715 = vmatpush.bf16.msra.mxu0 %v2707
    %2716 = vmatpush.bf16.msra.mxu0 %v2703
    %2717 = vmatmul.bf16.gmra.mxu0 %v231
    %v2718 = vpop.f32.mrf.mxu0
    %v2719 = vadd.f32 0.0, %v2718
    %v2720 = vpop.f32.mrf.mxu0
    %2721 = vdwg.mxu0
    %2723 = vrot.lane.b32.xlu0 %v2719, 72
    %v2724 = vpop.permute.xlu0 %2723
    %v2726 = vmax.f32 %v2719, %v2724
    %v2727 = vpack.c.bf16 %v2726, %v2726
    %v2729 = vsel %vm126, %v2727, 0
    %2731 = vmatpush.bf16.msra.mxu0 0
    %2732 = vmatpush.bf16.msra.mxu0 0
    %2733 = vmatpush.bf16.msra.mxu0 0
    %2734 = vmatpush.bf16.msra.mxu0 0
    %2735 = vmatpush.bf16.msra.mxu0 %v282
    %2736 = vmatpush.bf16.msra.mxu0 %v273
    %2737 = vmatpush.bf16.msra.mxu0 %v272
    %2738 = vmatpush.bf16.msra.mxu0 %v271
    %2739 = vmatmul.bf16.gmra.mxu0 %v2729
    %v2740 = vpop.f32.mrf.mxu0
    %v2741 = vadd.f32 0.0, %v2740
    %v2742 = vpop.f32.mrf.mxu0
    %2743 = vdwg.mxu0
    %2744 = vmatpush.bf16.msra.mxu0 0
    %2745 = vmatpush.bf16.msra.mxu0 0
    %2746 = vmatpush.bf16.msra.mxu0 0
    %2747 = vmatpush.bf16.msra.mxu0 0
    %2748 = vmatpush.bf16.msra.mxu0 %v319
    %2749 = vmatpush.bf16.msra.mxu0 %v313
    %2750 = vmatpush.bf16.msra.mxu0 %v312
    %2751 = vmatpush.bf16.msra.mxu0 %v311
    %2752 = vmatmul.bf16.gmra.mxu0 %v2729
    %v2753 = vpop.f32.mrf.mxu0
    %v2754 = vadd.f32 0.0, %v2753
    %v2755 = vpop.f32.mrf.mxu0
    %2756 = vdwg.mxu0
    %v2757 = vmax.f32 %v2741, %v2754
    %v2758 = vadd.f32 %v2757, %v79
    %v2759 = vmax.f32 %v2758, 0.0
    %v2760 = vpack.c.bf16 %v2759, %v2759
    %v2762 = vrot.slane %v2760, 5
    %v2763 = vrot.slane %v2762, 4
    %2766 = vst.msk [vmem:[#allocation2 + $0x24] sm:$0x8] %vm526, %v2762
    %2767 = vst.msk [vmem:[#allocation2 + $0x28] sm:$0x3] %vm528, %v2763
    %v2768 = vld [vmem:[#allocation2] sm:$0xf]
    %v2769 = vld [vmem:[#allocation2 + $0x4] sm:$0xf]
    %v2770 = vld [vmem:[#allocation2 + $0x8] sm:$0xf]
    %v2771 = vld [vmem:[#allocation2 + $0xc] sm:$0x7]
    %v2772 = vld [vmem:[#allocation2] sm:$0x8]
    %v2773 = vld [vmem:[#allocation2 + $0xc] sm:$0xf]
    %v2774 = vld [vmem:[#allocation2 + $0x10] sm:$0x3]
    %v2779 = vunpack.c.l.b16 %v2768
    %v2780 = vunpack.c.l.b16 %v2769
    %v2781 = vunpack.c.l.b16 %v2770
    %v2782 = vunpack.c.l.b16 %v2771
    %v2783 = vpack.c.b16 %v2780, %v2779
    %v2784 = vpack.c.b16 %v2782, %v2781
    %2785 = vrot.lane.b32.xlu0 %v2783, 124
    %v2786 = vpop.permute.xlu0 %2785
    %2787 = vrot.lane.b32.xlu0 %v2784, 124
    %v2788 = vpop.permute.xlu0 %2787
    %v2792 = vunpack.c.l.b16 %v2772
    %v2793 = vunpack.c.l.b16 %v2773
    %v2794 = vunpack.c.l.b16 %v2774
    %v2795 = vpack.c.b16 %v2780, %v2792
    %v2796 = vpack.c.b16 %v2793, %v2781
    %v2797 = vpack.c.b16 %v2794, %v2794
    %vm2798 = vcmask 1044480
    %v2799 = vrot.slane %v2795, 3
    %v2800 = vrot.slane %v2796, 3
    %v2801 = vsel %vm2798, %v2799, %v2800
    %v2802 = vrot.slane %v2797, 3
    %v2803 = vsel %vm2798, %v2800, %v2802
    %2804 = vrot.lane.b32.xlu0 %v2801, 20
    %v2805 = vpop.permute.xlu0 %2804
    %2806 = vrot.lane.b32.xlu0 %v2803, 20
    %v2807 = vpop.permute.xlu0 %2806
    %2808 = vrot.lane.b32.xlu0 %v2801, 16
    %v2809 = vpop.permute.xlu0 %2808
    %2810 = vrot.lane.b32.xlu0 %v2803, 16
    %v2811 = vpop.permute.xlu0 %2810
    %vm2812 = vcmask 80896
    %v2815 = vsel %vm2812, %v2783, %v2786
    %v2818 = vsel %vm2812, %v2784, %v2788
    %vm2819 = vcmask 162816
    %v2821 = vsel %vm2819, %v2815, %v2805
    %v2823 = vsel %vm2819, %v2818, %v2807
    %vm2824 = vcmask 244736
    %v2826 = vsel %vm2824, %v2821, %v2809
    %v2829 = vsel %vm2824, %v2823, %v2811
    %2830 = vrot.lane.b32.xlu0 %v2783, 127
    %v2831 = vpop.permute.xlu0 %2830
    %2832 = vrot.lane.b32.xlu0 %v2784, 127
    %v2833 = vpop.permute.xlu0 %2832
    %2834 = vrot.lane.b32.xlu0 %v2783, 123
    %v2835 = vpop.permute.xlu0 %2834
    %2836 = vrot.lane.b32.xlu0 %v2784, 123
    %v2837 = vpop.permute.xlu0 %2836
    %2838 = vrot.lane.b32.xlu0 %v2801, 19
    %v2839 = vpop.permute.xlu0 %2838
    %2840 = vrot.lane.b32.xlu0 %v2803, 19
    %v2841 = vpop.permute.xlu0 %2840
    %2842 = vrot.lane.b32.xlu0 %v2801, 15
    %v2843 = vpop.permute.xlu0 %2842
    %2844 = vrot.lane.b32.xlu0 %v2803, 15
    %v2845 = vpop.permute.xlu0 %2844
    %v2848 = vsel %vm2812, %v2831, %v2835
    %v2851 = vsel %vm2812, %v2833, %v2837
    %v2853 = vsel %vm2819, %v2848, %v2839
    %v2855 = vsel %vm2819, %v2851, %v2841
    %v2857 = vsel %vm2824, %v2853, %v2843
    %v2859 = vsel %vm2824, %v2855, %v2845
    %2860 = vrot.lane.b32.xlu0 %v2783, 126
    %v2861 = vpop.permute.xlu0 %2860
    %2862 = vrot.lane.b32.xlu0 %v2784, 126
    %v2863 = vpop.permute.xlu0 %2862
    %2864 = vrot.lane.b32.xlu0 %v2783, 122
    %v2865 = vpop.permute.xlu0 %2864
    %2866 = vrot.lane.b32.xlu0 %v2784, 122
    %v2867 = vpop.permute.xlu0 %2866
    %2868 = vrot.lane.b32.xlu0 %v2801, 18
    %v2869 = vpop.permute.xlu0 %2868
    %2870 = vrot.lane.b32.xlu0 %v2803, 18
    %v2871 = vpop.permute.xlu0 %2870
    %2872 = vrot.lane.b32.xlu0 %v2801, 14
    %v2873 = vpop.permute.xlu0 %2872
    %2874 = vrot.lane.b32.xlu0 %v2803, 14
    %v2875 = vpop.permute.xlu0 %2874
    %v2878 = vsel %vm2812, %v2861, %v2865
    %v2881 = vsel %vm2812, %v2863, %v2867
    %v2883 = vsel %vm2819, %v2878, %v2869
    %v2885 = vsel %vm2819, %v2881, %v2871
    %v2887 = vsel %vm2824, %v2883, %v2873
    %v2889 = vsel %vm2824, %v2885, %v2875
    %2890 = vrot.lane.b32.xlu0 %v2783, 125
    %v2891 = vpop.permute.xlu0 %2890
    %2892 = vrot.lane.b32.xlu0 %v2784, 125
    %v2893 = vpop.permute.xlu0 %2892
    %2894 = vrot.lane.b32.xlu0 %v2783, 121
    %v2895 = vpop.permute.xlu0 %2894
    %2896 = vrot.lane.b32.xlu0 %v2784, 121
    %v2897 = vpop.permute.xlu0 %2896
    %2898 = vrot.lane.b32.xlu0 %v2801, 17
    %v2899 = vpop.permute.xlu0 %2898
    %2900 = vrot.lane.b32.xlu0 %v2803, 17
    %v2901 = vpop.permute.xlu0 %2900
    %2902 = vrot.lane.b32.xlu0 %v2801, 13
    %v2903 = vpop.permute.xlu0 %2902
    %2904 = vrot.lane.b32.xlu0 %v2803, 13
    %v2905 = vpop.permute.xlu0 %2904
    %v2908 = vsel %vm2812, %v2891, %v2895
    %v2911 = vsel %vm2812, %v2893, %v2897
    %v2913 = vsel %vm2819, %v2908, %v2899
    %v2915 = vsel %vm2819, %v2911, %v2901
    %v2917 = vsel %vm2824, %v2913, %v2903
    %v2919 = vsel %vm2824, %v2915, %v2905
    %2920 = vrot.lane.b32.xlu0 %v2783, 120
    %v2921 = vpop.permute.xlu0 %2920
    %2922 = vrot.lane.b32.xlu0 %v2784, 120
    %v2923 = vpop.permute.xlu0 %2922
    %2924 = vrot.lane.b32.xlu0 %v2801, 12
    %v2925 = vpop.permute.xlu0 %2924
    %2926 = vrot.lane.b32.xlu0 %v2803, 12
    %v2927 = vpop.permute.xlu0 %2926
    %v2929 = vsel %vm2812, %v2786, %v2921
    %v2931 = vsel %vm2812, %v2788, %v2923
    %v2932 = vsel %vm2819, %v2929, %v2809
    %v2933 = vsel %vm2819, %v2931, %v2811
    %v2935 = vsel %vm2824, %v2932, %v2925
    %v2937 = vsel %vm2824, %v2933, %v2927
    %vm2940 = vcmask 1046528
    %v2941 = vrot.slane %v2857, 1
    %v2942 = vrot.slane %v2859, 1
    %v2943 = vsel %vm2940, %v2941, %v2942
    %vm2947 = vcmask 1045504
    %v2948 = vrot.slane %v2887, 2
    %v2949 = vrot.slane %v2889, 2
    %v2950 = vsel %vm2947, %v2948, %v2949
    %v2954 = vrot.slane %v2917, 3
    %v2955 = vrot.slane %v2919, 3
    %v2956 = vsel %vm2798, %v2954, %v2955
    %vm2960 = vcmask 1043456
    %v2961 = vrot.slane %v2935, 4
    %v2962 = vrot.slane %v2937, 4
    %v2963 = vsel %vm2960, %v2961, %v2962
    %vm2965 = vcmask 1046528
    %v2967 = vsel %vm2965, %v2829, %v2941
    %vm2969 = vcmask 1045504
    %v2972 = vsel %vm2969, %v2942, %v2948
    %v2976 = vsel %vm216, %v2949, %v2954
    %v2980 = vsel %vm233, %v2955, %v2961
    %v2984 = vunpack.c.l.b16 %v53
    %v2985 = vunpack.c.h.b16 %v53
    %v2986 = vunpack.c.l.b16 %v54
    %v2987 = vunpack.c.h.b16 %v54
    %v2988 = vpack.c.b16 %v2986, %v2984
    %v2989 = vpack.c.b16 %v2987, %v2985
    %vm2991 = vcmask 179200
    %v2993 = vsel %vm2991, %v2989, 0
    %vm2995 = vcmask 1042432
    %v2997 = vsel %vm2995, %v2962, 0
    %2999 = vmatpush.bf16.msra.mxu0 %v2980
    %3000 = vmatpush.bf16.msra.mxu0 %v2956
    %3001 = vmatpush.bf16.msra.mxu0 %v2976
    %3002 = vmatpush.bf16.msra.mxu0 %v2950
    %3003 = vmatpush.bf16.msra.mxu0 %v2972
    %3004 = vmatpush.bf16.msra.mxu0 %v2943
    %3005 = vmatpush.bf16.msra.mxu0 %v2967
    %3006 = vmatpush.bf16.msra.mxu0 %v2826
    %3007 = vmatmul.bf16.gmra.mxu0 %v2988
    %v3008 = vpop.f32.mrf.mxu0
    %v3009 = vadd.f32 0.0, %v3008
    %v3010 = vpop.f32.mrf.mxu0
    %v3011 = vadd.f32 0.0, %v3010
    %3012 = vdwg.mxu0
    %3013 = vmatpush.bf16.msra.mxu0 0
    %3014 = vmatpush.bf16.msra.mxu0 0
    %3015 = vmatpush.bf16.msra.mxu0 0
    %3016 = vmatpush.bf16.msra.mxu0 0
    %3017 = vmatpush.bf16.msra.mxu0 0
    %3018 = vmatpush.bf16.msra.mxu0 0
    %3019 = vmatpush.bf16.msra.mxu0 %v2997
    %3020 = vmatpush.bf16.msra.mxu0 %v2963
    %3021 = vmatmul.bf16.gmra.mxu0 %v2993
    %v3022 = vpop.f32.mrf.mxu0
    %v3023 = vadd.f32 %v3009, %v3022
    %v3024 = vpop.f32.mrf.mxu0
    %v3025 = vadd.f32 %v3011, %v3024
    %3026 = vdwg.mxu0
    %3029 = vrot.lane.b32.xlu0 %v3023, 108
    %v3030 = vpop.permute.xlu0 %3029
    %3031 = vrot.lane.b32.xlu0 %v3025, 108
    %v3032 = vpop.permute.xlu0 %3031
    %v3035 = vmax.f32 %v3023, %v3030
    %v3036 = vmax.f32 %v3025, %v3032
    %v3037 = vpack.c.bf16 %v3036, %v3035
    %v3041 = vunpack.c.l.b16 %v69
    %v3042 = vunpack.c.l.b16 %v70
    %v3043 = vunpack.c.l.b16 %v71
    %v3044 = vpack.c.b16 %v3042, %v3041
    %v3045 = vpack.c.b16 %v3043, %v3043
    %v3048 = vsel %vm2819, %v3037, 0
    %v3051 = vsel %vm225, %v3045, 0
    %3053 = vmatpush.bf16.msra.mxu0 0
    %3054 = vmatpush.bf16.msra.mxu0 0
    %3055 = vmatpush.bf16.msra.mxu0 0
    %3056 = vmatpush.bf16.msra.mxu0 0
    %3057 = vmatpush.bf16.msra.mxu0 0
    %3058 = vmatpush.bf16.msra.mxu0 0
    %3059 = vmatpush.bf16.msra.mxu0 %v3051
    %3060 = vmatpush.bf16.msra.mxu0 %v3044
    %3061 = vmatmul.bf16.gmra.mxu0 %v3048
    %v3062 = vpop.f32.mrf.mxu0
    %v3063 = vadd.f32 0.0, %v3062
    %v3064 = vpop.f32.mrf.mxu0
    %v3065 = vadd.f32 0.0, %v3064
    %3066 = vdwg.mxu0
    %v3070 = vunpack.c.l.b16 %v72
    %v3071 = vunpack.c.l.b16 %v73
    %v3072 = vunpack.c.l.b16 %v74
    %v3073 = vpack.c.b16 %v3071, %v3070
    %v3074 = vpack.c.b16 %v3072, %v3072
    %v3077 = vsel %vm225, %v3074, 0
    %3079 = vmatpush.bf16.msra.mxu0 0
    %3080 = vmatpush.bf16.msra.mxu0 0
    %3081 = vmatpush.bf16.msra.mxu0 0
    %3082 = vmatpush.bf16.msra.mxu0 0
    %3083 = vmatpush.bf16.msra.mxu0 0
    %3084 = vmatpush.bf16.msra.mxu0 0
    %3085 = vmatpush.bf16.msra.mxu0 %v3077
    %3086 = vmatpush.bf16.msra.mxu0 %v3073
    %3087 = vmatmul.bf16.gmra.mxu0 %v3048
    %v3088 = vpop.f32.mrf.mxu0
    %v3089 = vadd.f32 0.0, %v3088
    %v3090 = vpop.f32.mrf.mxu0
    %v3091 = vadd.f32 0.0, %v3090
    %3092 = vdwg.mxu0
    %v3093 = vmax.f32 %v3063, %v3089
    %v3094 = vmax.f32 %v3065, %v3091
    %v3095 = vadd.f32 %v3093, %v86
    %v3096 = vadd.f32 %v3094, %v91
    %v3097 = vmax.f32 %v3095, 0.0
    %v3098 = vmax.f32 %v3096, 0.0
    %v3099 = vpack.c.bf16 %v3097, %v3097
    %v3100 = vpack.c.bf16 %v3098, %v3098
    %vm3101 = vcmask 76800
    %3102 = vst.msk [vmem:[#allocation3] sm:$0xf] %vm3101, %v3099
    %3103 = vst.msk [vmem:[#allocation3 + $0x4] sm:$0xf] %vm3101, %v3100
    %v3104 = vld [vmem:[#allocation2 + $0x4] sm:$0xc]
    %v3105 = vld [vmem:[#allocation2 + $0x8] sm:$0xf]
    %v3106 = vld [vmem:[#allocation2 + $0xc] sm:$0xf]
    %v3107 = vld [vmem:[#allocation2 + $0x10] sm:$0xf]
    %v3108 = vld [vmem:[#allocation2 + $0x14] sm:$0x1]
    %v3109 = vld [vmem:[#allocation2 + $0x8] sm:$0xe]
    %v3110 = vld [vmem:[#allocation2 + $0x14] sm:$0xf]
    %v3116 = vunpack.c.l.b16 %v3104
    %v3117 = vunpack.c.l.b16 %v3105
    %v3118 = vunpack.c.l.b16 %v3106
    %v3119 = vunpack.c.l.b16 %v3107
    %v3120 = vunpack.c.l.b16 %v3108
    %v3121 = vpack.c.b16 %v3117, %v3116
    %v3122 = vpack.c.b16 %v3119, %v3118
    %v3123 = vpack.c.b16 %v3120, %v3120
    %3124 = vrot.lane.b32.xlu0 %v3121, 124
    %v3125 = vpop.permute.xlu0 %3124
    %3126 = vrot.lane.b32.xlu0 %v3122, 124
    %v3127 = vpop.permute.xlu0 %3126
    %3128 = vrot.lane.b32.xlu0 %v3123, 124
    %v3129 = vpop.permute.xlu0 %3128
    %v3132 = vunpack.c.l.b16 %v3109
    %v3133 = vunpack.c.l.b16 %v3110
    %v3134 = vpack.c.b16 %v3118, %v3132
    %v3135 = vpack.c.b16 %v3133, %v3119
    %vm3136 = vcmask 1040384
    %v3137 = vrot.slane %v3134, 7
    %v3138 = vrot.slane %v3135, 7
    %v3139 = vsel %vm3136, %v3137, %v3138
    %3140 = vrot.lane.b32.xlu0 %v3137, 20
    %v3141 = vpop.permute.xlu0 %3140
    %3142 = vrot.lane.b32.xlu0 %v3139, 20
    %v3143 = vpop.permute.xlu0 %3142
    %3144 = vrot.lane.b32.xlu0 %v3138, 20
    %v3145 = vpop.permute.xlu0 %3144
    %3146 = vrot.lane.b32.xlu0 %v3137, 16
    %v3147 = vpop.permute.xlu0 %3146
    %3148 = vrot.lane.b32.xlu0 %v3139, 16
    %v3149 = vpop.permute.xlu0 %3148
    %3150 = vrot.lane.b32.xlu0 %v3138, 16
    %v3151 = vpop.permute.xlu0 %3150
    %v3154 = vsel %vm2812, %v3121, %v3125
    %v3157 = vsel %vm2812, %v3122, %v3127
    %v3160 = vsel %vm2812, %v3123, %v3129
    %v3162 = vsel %vm2819, %v3154, %v3141
    %v3164 = vsel %vm2819, %v3157, %v3143
    %v3166 = vsel %vm2819, %v3160, %v3145
    %v3168 = vsel %vm2824, %v3162, %v3147
    %v3170 = vsel %vm2824, %v3164, %v3149
    %v3172 = vsel %vm2824, %v3166, %v3151
    %3173 = vrot.lane.b32.xlu0 %v3121, 127
    %v3174 = vpop.permute.xlu0 %3173
    %3175 = vrot.lane.b32.xlu0 %v3122, 127
    %v3176 = vpop.permute.xlu0 %3175
    %3177 = vrot.lane.b32.xlu0 %v3123, 127
    %v3178 = vpop.permute.xlu0 %3177
    %3179 = vrot.lane.b32.xlu0 %v3121, 123
    %v3180 = vpop.permute.xlu0 %3179
    %3181 = vrot.lane.b32.xlu0 %v3122, 123
    %v3182 = vpop.permute.xlu0 %3181
    %3183 = vrot.lane.b32.xlu0 %v3123, 123
    %v3184 = vpop.permute.xlu0 %3183
    %3185 = vrot.lane.b32.xlu0 %v3137, 19
    %v3186 = vpop.permute.xlu0 %3185
    %3187 = vrot.lane.b32.xlu0 %v3139, 19
    %v3188 = vpop.permute.xlu0 %3187
    %3189 = vrot.lane.b32.xlu0 %v3138, 19
    %v3190 = vpop.permute.xlu0 %3189
    %3191 = vrot.lane.b32.xlu0 %v3137, 15
    %v3192 = vpop.permute.xlu0 %3191
    %3193 = vrot.lane.b32.xlu0 %v3139, 15
    %v3194 = vpop.permute.xlu0 %3193
    %3195 = vrot.lane.b32.xlu0 %v3138, 15
    %v3196 = vpop.permute.xlu0 %3195
    %v3199 = vsel %vm2812, %v3174, %v3180
    %v3202 = vsel %vm2812, %v3176, %v3182
    %v3205 = vsel %vm2812, %v3178, %v3184
    %v3207 = vsel %vm2819, %v3199, %v3186
    %v3209 = vsel %vm2819, %v3202, %v3188
    %v3211 = vsel %vm2819, %v3205, %v3190
    %v3213 = vsel %vm2824, %v3207, %v3192
    %v3215 = vsel %vm2824, %v3209, %v3194
    %v3217 = vsel %vm2824, %v3211, %v3196
    %3218 = vrot.lane.b32.xlu0 %v3121, 126
    %v3219 = vpop.permute.xlu0 %3218
    %3220 = vrot.lane.b32.xlu0 %v3122, 126
    %v3221 = vpop.permute.xlu0 %3220
    %3222 = vrot.lane.b32.xlu0 %v3123, 126
    %v3223 = vpop.permute.xlu0 %3222
    %3224 = vrot.lane.b32.xlu0 %v3121, 122
    %v3225 = vpop.permute.xlu0 %3224
    %3226 = vrot.lane.b32.xlu0 %v3122, 122
    %v3227 = vpop.permute.xlu0 %3226
    %3228 = vrot.lane.b32.xlu0 %v3123, 122
    %v3229 = vpop.permute.xlu0 %3228
    %3230 = vrot.lane.b32.xlu0 %v3137, 18
    %v3231 = vpop.permute.xlu0 %3230
    %3232 = vrot.lane.b32.xlu0 %v3139, 18
    %v3233 = vpop.permute.xlu0 %3232
    %3234 = vrot.lane.b32.xlu0 %v3138, 18
    %v3235 = vpop.permute.xlu0 %3234
    %3236 = vrot.lane.b32.xlu0 %v3137, 14
    %v3237 = vpop.permute.xlu0 %3236
    %3238 = vrot.lane.b32.xlu0 %v3139, 14
    %v3239 = vpop.permute.xlu0 %3238
    %3240 = vrot.lane.b32.xlu0 %v3138, 14
    %v3241 = vpop.permute.xlu0 %3240
    %v3244 = vsel %vm2812, %v3219, %v3225
    %v3247 = vsel %vm2812, %v3221, %v3227
    %v3250 = vsel %vm2812, %v3223, %v3229
    %v3252 = vsel %vm2819, %v3244, %v3231
    %v3254 = vsel %vm2819, %v3247, %v3233
    %v3256 = vsel %vm2819, %v3250, %v3235
    %v3258 = vsel %vm2824, %v3252, %v3237
    %v3260 = vsel %vm2824, %v3254, %v3239
    %v3262 = vsel %vm2824, %v3256, %v3241
    %3263 = vrot.lane.b32.xlu0 %v3121, 125
    %v3264 = vpop.permute.xlu0 %3263
    %3265 = vrot.lane.b32.xlu0 %v3122, 125
    %v3266 = vpop.permute.xlu0 %3265
    %3267 = vrot.lane.b32.xlu0 %v3123, 125
    %v3268 = vpop.permute.xlu0 %3267
    %3269 = vrot.lane.b32.xlu0 %v3121, 121
    %v3270 = vpop.permute.xlu0 %3269
    %3271 = vrot.lane.b32.xlu0 %v3122, 121
    %v3272 = vpop.permute.xlu0 %3271
    %3273 = vrot.lane.b32.xlu0 %v3123, 121
    %v3274 = vpop.permute.xlu0 %3273
    %3275 = vrot.lane.b32.xlu0 %v3137, 17
    %v3276 = vpop.permute.xlu0 %3275
    %3277 = vrot.lane.b32.xlu0 %v3139, 17
    %v3278 = vpop.permute.xlu0 %3277
    %3279 = vrot.lane.b32.xlu0 %v3138, 17
    %v3280 = vpop.permute.xlu0 %3279
    %3281 = vrot.lane.b32.xlu0 %v3137, 13
    %v3282 = vpop.permute.xlu0 %3281
    %3283 = vrot.lane.b32.xlu0 %v3139, 13
    %v3284 = vpop.permute.xlu0 %3283
    %3285 = vrot.lane.b32.xlu0 %v3138, 13
    %v3286 = vpop.permute.xlu0 %3285
    %v3289 = vsel %vm2812, %v3264, %v3270
    %v3292 = vsel %vm2812, %v3266, %v3272
    %v3295 = vsel %vm2812, %v3268, %v3274
    %v3297 = vsel %vm2819, %v3289, %v3276
    %v3299 = vsel %vm2819, %v3292, %v3278
    %v3301 = vsel %vm2819, %v3295, %v3280
    %v3303 = vsel %vm2824, %v3297, %v3282
    %v3305 = vsel %vm2824, %v3299, %v3284
    %v3307 = vsel %vm2824, %v3301, %v3286
    %3308 = vrot.lane.b32.xlu0 %v3121, 120
    %v3309 = vpop.permute.xlu0 %3308
    %3310 = vrot.lane.b32.xlu0 %v3122, 120
    %v3311 = vpop.permute.xlu0 %3310
    %3312 = vrot.lane.b32.xlu0 %v3123, 120
    %v3313 = vpop.permute.xlu0 %3312
    %3314 = vrot.lane.b32.xlu0 %v3137, 12
    %v3315 = vpop.permute.xlu0 %3314
    %3316 = vrot.lane.b32.xlu0 %v3139, 12
    %v3317 = vpop.permute.xlu0 %3316
    %3318 = vrot.lane.b32.xlu0 %v3138, 12
    %v3319 = vpop.permute.xlu0 %3318
    %v3321 = vsel %vm2812, %v3125, %v3309
    %v3323 = vsel %vm2812, %v3127, %v3311
    %v3325 = vsel %vm2812, %v3129, %v3313
    %v3326 = vsel %vm2819, %v3321, %v3147
    %v3327 = vsel %vm2819, %v3323, %v3149
    %v3328 = vsel %vm2819, %v3325, %v3151
    %v3330 = vsel %vm2824, %v3326, %v3315
    %v3332 = vsel %vm2824, %v3327, %v3317
    %v3334 = vsel %vm2824, %v3328, %v3319
    %v3338 = vrot.slane %v3168, 2
    %v3339 = vrot.slane %v3170, 2
    %v3340 = vsel %vm2947, %v3338, %v3339
    %v3341 = vrot.slane %v3172, 2
    %v3342 = vsel %vm2947, %v3339, %v3341
    %v3347 = vrot.slane %v3213, 3
    %v3348 = vrot.slane %v3215, 3
    %v3349 = vsel %vm2798, %v3347, %v3348
    %v3350 = vrot.slane %v3217, 3
    %v3351 = vsel %vm2798, %v3348, %v3350
    %v3356 = vrot.slane %v3258, 4
    %v3357 = vrot.slane %v3260, 4
    %v3358 = vsel %vm2960, %v3356, %v3357
    %v3359 = vrot.slane %v3262, 4
    %v3360 = vsel %vm2960, %v3357, %v3359
    %v3365 = vrot.slane %v3303, 5
    %v3366 = vrot.slane %v3305, 5
    %v3367 = vsel %vm212, %v3365, %v3366
    %v3368 = vrot.slane %v3307, 5
    %v3369 = vsel %vm212, %v3366, %v3368
    %vm3374 = vcmask 1041408
    %v3375 = vrot.slane %v3330, 6
    %v3376 = vrot.slane %v3332, 6
    %v3377 = vsel %vm3374, %v3375, %v3376
    %v3378 = vrot.slane %v3334, 6
    %v3379 = vsel %vm3374, %v3376, %v3378
    %v3383 = vsel %vm2965, %v3342, %v3347
    %v3387 = vsel %vm2969, %v3351, %v3356
    %v3391 = vsel %vm216, %v3360, %v3365
    %v3395 = vsel %vm233, %v3369, %v3375
    %v3398 = vsel %vm2995, %v3379, 0
    %3400 = vmatpush.bf16.msra.mxu0 %v3395
    %3401 = vmatpush.bf16.msra.mxu0 %v3367
    %3402 = vmatpush.bf16.msra.mxu0 %v3391
    %3403 = vmatpush.bf16.msra.mxu0 %v3358
    %3404 = vmatpush.bf16.msra.mxu0 %v3387
    %3405 = vmatpush.bf16.msra.mxu0 %v3349
    %3406 = vmatpush.bf16.msra.mxu0 %v3383
    %3407 = vmatpush.bf16.msra.mxu0 %v3340
    %3408 = vmatmul.bf16.gmra.mxu0 %v2988
    %v3409 = vpop.f32.mrf.mxu0
    %v3410 = vadd.f32 0.0, %v3409
    %v3411 = vpop.f32.mrf.mxu0
    %v3412 = vadd.f32 0.0, %v3411
    %3413 = vdwg.mxu0
    %3414 = vmatpush.bf16.msra.mxu0 0
    %3415 = vmatpush.bf16.msra.mxu0 0
    %3416 = vmatpush.bf16.msra.mxu0 0
    %3417 = vmatpush.bf16.msra.mxu0 0
    %3418 = vmatpush.bf16.msra.mxu0 0
    %3419 = vmatpush.bf16.msra.mxu0 0
    %3420 = vmatpush.bf16.msra.mxu0 %v3398
    %3421 = vmatpush.bf16.msra.mxu0 %v3377
    %3422 = vmatmul.bf16.gmra.mxu0 %v2993
    %v3423 = vpop.f32.mrf.mxu0
    %v3424 = vadd.f32 %v3410, %v3423
    %v3425 = vpop.f32.mrf.mxu0
    %v3426 = vadd.f32 %v3412, %v3425
    %3427 = vdwg.mxu0
    %3430 = vrot.lane.b32.xlu0 %v3424, 108
    %v3431 = vpop.permute.xlu0 %3430
    %3432 = vrot.lane.b32.xlu0 %v3426, 108
    %v3433 = vpop.permute.xlu0 %3432
    %v3436 = vmax.f32 %v3424, %v3431
    %v3437 = vmax.f32 %v3426, %v3433
    %v3438 = vpack.c.bf16 %v3437, %v3436
    %v3440 = vsel %vm2819, %v3438, 0
    %3442 = vmatpush.bf16.msra.mxu0 0
    %3443 = vmatpush.bf16.msra.mxu0 0
    %3444 = vmatpush.bf16.msra.mxu0 0
    %3445 = vmatpush.bf16.msra.mxu0 0
    %3446 = vmatpush.bf16.msra.mxu0 0
    %3447 = vmatpush.bf16.msra.mxu0 0
    %3448 = vmatpush.bf16.msra.mxu0 %v3051
    %3449 = vmatpush.bf16.msra.mxu0 %v3044
    %3450 = vmatmul.bf16.gmra.mxu0 %v3440
    %v3451 = vpop.f32.mrf.mxu0
    %v3452 = vadd.f32 0.0, %v3451
    %v3453 = vpop.f32.mrf.mxu0
    %v3454 = vadd.f32 0.0, %v3453
    %3455 = vdwg.mxu0
    %3456 = vmatpush.bf16.msra.mxu0 0
    %3457 = vmatpush.bf16.msra.mxu0 0
    %3458 = vmatpush.bf16.msra.mxu0 0
    %3459 = vmatpush.bf16.msra.mxu0 0
    %3460 = vmatpush.bf16.msra.mxu0 0
    %3461 = vmatpush.bf16.msra.mxu0 0
    %3462 = vmatpush.bf16.msra.mxu0 %v3077
    %3463 = vmatpush.bf16.msra.mxu0 %v3073
    %3464 = vmatmul.bf16.gmra.mxu0 %v3440
    %v3465 = vpop.f32.mrf.mxu0
    %v3466 = vadd.f32 0.0, %v3465
    %v3467 = vpop.f32.mrf.mxu0
    %v3468 = vadd.f32 0.0, %v3467
    %3469 = vdwg.mxu0
    %v3470 = vmax.f32 %v3452, %v3466
    %v3471 = vmax.f32 %v3454, %v3468
    %v3472 = vadd.f32 %v3470, %v86
    %v3473 = vadd.f32 %v3471, %v91
    %v3474 = vmax.f32 %v3472, 0.0
    %v3475 = vmax.f32 %v3473, 0.0
    %v3476 = vpack.c.bf16 %v3474, %v3474
    %v3477 = vpack.c.bf16 %v3475, %v3475
    %3478 = vst.msk [vmem:[#allocation3 + $0x8] sm:$0xf] %vm3101, %v3476
    %3479 = vst.msk [vmem:[#allocation3 + $0xc] sm:$0xf] %vm3101, %v3477
    %v3480 = vld [vmem:[#allocation2 + $0xc] sm:$0xf]
    %v3481 = vld [vmem:[#allocation2 + $0x10] sm:$0xf]
    %v3482 = vld [vmem:[#allocation2 + $0x14] sm:$0xf]
    %v3483 = vld [vmem:[#allocation2 + $0x18] sm:$0x7]
    %v3484 = vld [vmem:[#allocation2 + $0xc] sm:$0x8]
    %v3485 = vld [vmem:[#allocation2 + $0x18] sm:$0xf]
    %v3486 = vld [vmem:[#allocation2 + $0x1c] sm:$0x3]
    %v3491 = vunpack.c.l.b16 %v3480
    %v3492 = vunpack.c.l.b16 %v3481
    %v3493 = vunpack.c.l.b16 %v3482
    %v3494 = vunpack.c.l.b16 %v3483
    %v3495 = vpack.c.b16 %v3492, %v3491
    %v3496 = vpack.c.b16 %v3494, %v3493
    %3497 = vrot.lane.b32.xlu0 %v3495, 124
    %v3498 = vpop.permute.xlu0 %3497
    %3499 = vrot.lane.b32.xlu0 %v3496, 124
    %v3500 = vpop.permute.xlu0 %3499
    %v3504 = vunpack.c.l.b16 %v3484
    %v3505 = vunpack.c.l.b16 %v3485
    %v3506 = vunpack.c.l.b16 %v3486
    %v3507 = vpack.c.b16 %v3492, %v3504
    %v3508 = vpack.c.b16 %v3505, %v3493
    %v3509 = vpack.c.b16 %v3506, %v3506
    %v3510 = vrot.slane %v3507, 3
    %v3511 = vrot.slane %v3508, 3
    %v3512 = vsel %vm2798, %v3510, %v3511
    %v3513 = vrot.slane %v3509, 3
    %v3514 = vsel %vm2798, %v3511, %v3513
    %3515 = vrot.lane.b32.xlu0 %v3512, 20
    %v3516 = vpop.permute.xlu0 %3515
    %3517 = vrot.lane.b32.xlu0 %v3514, 20
    %v3518 = vpop.permute.xlu0 %3517
    %3519 = vrot.lane.b32.xlu0 %v3512, 16
    %v3520 = vpop.permute.xlu0 %3519
    %3521 = vrot.lane.b32.xlu0 %v3514, 16
    %v3522 = vpop.permute.xlu0 %3521
    %v3525 = vsel %vm2812, %v3495, %v3498
    %v3528 = vsel %vm2812, %v3496, %v3500
    %v3530 = vsel %vm2819, %v3525, %v3516
    %v3532 = vsel %vm2819, %v3528, %v3518
    %v3534 = vsel %vm2824, %v3530, %v3520
    %v3537 = vsel %vm2824, %v3532, %v3522
    %3538 = vrot.lane.b32.xlu0 %v3495, 127
    %v3539 = vpop.permute.xlu0 %3538
    %3540 = vrot.lane.b32.xlu0 %v3496, 127
    %v3541 = vpop.permute.xlu0 %3540
    %3542 = vrot.lane.b32.xlu0 %v3495, 123
    %v3543 = vpop.permute.xlu0 %3542
    %3544 = vrot.lane.b32.xlu0 %v3496, 123
    %v3545 = vpop.permute.xlu0 %3544
    %3546 = vrot.lane.b32.xlu0 %v3512, 19
    %v3547 = vpop.permute.xlu0 %3546
    %3548 = vrot.lane.b32.xlu0 %v3514, 19
    %v3549 = vpop.permute.xlu0 %3548
    %3550 = vrot.lane.b32.xlu0 %v3512, 15
    %v3551 = vpop.permute.xlu0 %3550
    %3552 = vrot.lane.b32.xlu0 %v3514, 15
    %v3553 = vpop.permute.xlu0 %3552
    %v3556 = vsel %vm2812, %v3539, %v3543
    %v3559 = vsel %vm2812, %v3541, %v3545
    %v3561 = vsel %vm2819, %v3556, %v3547
    %v3563 = vsel %vm2819, %v3559, %v3549
    %v3565 = vsel %vm2824, %v3561, %v3551
    %v3567 = vsel %vm2824, %v3563, %v3553
    %3568 = vrot.lane.b32.xlu0 %v3495, 126
    %v3569 = vpop.permute.xlu0 %3568
    %3570 = vrot.lane.b32.xlu0 %v3496, 126
    %v3571 = vpop.permute.xlu0 %3570
    %3572 = vrot.lane.b32.xlu0 %v3495, 122
    %v3573 = vpop.permute.xlu0 %3572
    %3574 = vrot.lane.b32.xlu0 %v3496, 122
    %v3575 = vpop.permute.xlu0 %3574
    %3576 = vrot.lane.b32.xlu0 %v3512, 18
    %v3577 = vpop.permute.xlu0 %3576
    %3578 = vrot.lane.b32.xlu0 %v3514, 18
    %v3579 = vpop.permute.xlu0 %3578
    %3580 = vrot.lane.b32.xlu0 %v3512, 14
    %v3581 = vpop.permute.xlu0 %3580
    %3582 = vrot.lane.b32.xlu0 %v3514, 14
    %v3583 = vpop.permute.xlu0 %3582
    %v3586 = vsel %vm2812, %v3569, %v3573
    %v3589 = vsel %vm2812, %v3571, %v3575
    %v3591 = vsel %vm2819, %v3586, %v3577
    %v3593 = vsel %vm2819, %v3589, %v3579
    %v3595 = vsel %vm2824, %v3591, %v3581
    %v3597 = vsel %vm2824, %v3593, %v3583
    %3598 = vrot.lane.b32.xlu0 %v3495, 125
    %v3599 = vpop.permute.xlu0 %3598
    %3600 = vrot.lane.b32.xlu0 %v3496, 125
    %v3601 = vpop.permute.xlu0 %3600
    %3602 = vrot.lane.b32.xlu0 %v3495, 121
    %v3603 = vpop.permute.xlu0 %3602
    %3604 = vrot.lane.b32.xlu0 %v3496, 121
    %v3605 = vpop.permute.xlu0 %3604
    %3606 = vrot.lane.b32.xlu0 %v3512, 17
    %v3607 = vpop.permute.xlu0 %3606
    %3608 = vrot.lane.b32.xlu0 %v3514, 17
    %v3609 = vpop.permute.xlu0 %3608
    %3610 = vrot.lane.b32.xlu0 %v3512, 13
    %v3611 = vpop.permute.xlu0 %3610
    %3612 = vrot.lane.b32.xlu0 %v3514, 13
    %v3613 = vpop.permute.xlu0 %3612
    %v3616 = vsel %vm2812, %v3599, %v3603
    %v3619 = vsel %vm2812, %v3601, %v3605
    %v3621 = vsel %vm2819, %v3616, %v3607
    %v3623 = vsel %vm2819, %v3619, %v3609
    %v3625 = vsel %vm2824, %v3621, %v3611
    %v3627 = vsel %vm2824, %v3623, %v3613
    %3628 = vrot.lane.b32.xlu0 %v3495, 120
    %v3629 = vpop.permute.xlu0 %3628
    %3630 = vrot.lane.b32.xlu0 %v3496, 120
    %v3631 = vpop.permute.xlu0 %3630
    %3632 = vrot.lane.b32.xlu0 %v3512, 12
    %v3633 = vpop.permute.xlu0 %3632
    %3634 = vrot.lane.b32.xlu0 %v3514, 12
    %v3635 = vpop.permute.xlu0 %3634
    %v3637 = vsel %vm2812, %v3498, %v3629
    %v3639 = vsel %vm2812, %v3500, %v3631
    %v3640 = vsel %vm2819, %v3637, %v3520
    %v3641 = vsel %vm2819, %v3639, %v3522
    %v3643 = vsel %vm2824, %v3640, %v3633
    %v3645 = vsel %vm2824, %v3641, %v3635
    %v3648 = vrot.slane %v3565, 1
    %v3649 = vrot.slane %v3567, 1
    %v3650 = vsel %vm2940, %v3648, %v3649
    %v3654 = vrot.slane %v3595, 2
    %v3655 = vrot.slane %v3597, 2
    %v3656 = vsel %vm2947, %v3654, %v3655
    %v3660 = vrot.slane %v3625, 3
    %v3661 = vrot.slane %v3627, 3
    %v3662 = vsel %vm2798, %v3660, %v3661
    %v3666 = vrot.slane %v3643, 4
    %v3667 = vrot.slane %v3645, 4
    %v3668 = vsel %vm2960, %v3666, %v3667
    %v3671 = vsel %vm2965, %v3537, %v3648
    %v3675 = vsel %vm2969, %v3649, %v3654
    %v3679 = vsel %vm216, %v3655, %v3660
    %v3683 = vsel %vm233, %v3661, %v3666
    %v3686 = vsel %vm2995, %v3667, 0
    %3688 = vmatpush.bf16.msra.mxu0 %v3683
    %3689 = vmatpush.bf16.msra.mxu0 %v3662
    %3690 = vmatpush.bf16.msra.mxu0 %v3679
    %3691 = vmatpush.bf16.msra.mxu0 %v3656
    %3692 = vmatpush.bf16.msra.mxu0 %v3675
    %3693 = vmatpush.bf16.msra.mxu0 %v3650
    %3694 = vmatpush.bf16.msra.mxu0 %v3671
    %3695 = vmatpush.bf16.msra.mxu0 %v3534
    %3696 = vmatmul.bf16.gmra.mxu0 %v2988
    %v3697 = vpop.f32.mrf.mxu0
    %v3698 = vadd.f32 0.0, %v3697
    %v3699 = vpop.f32.mrf.mxu0
    %v3700 = vadd.f32 0.0, %v3699
    %3701 = vdwg.mxu0
    %3702 = vmatpush.bf16.msra.mxu0 0
    %3703 = vmatpush.bf16.msra.mxu0 0
    %3704 = vmatpush.bf16.msra.mxu0 0
    %3705 = vmatpush.bf16.msra.mxu0 0
    %3706 = vmatpush.bf16.msra.mxu0 0
    %3707 = vmatpush.bf16.msra.mxu0 0
    %3708 = vmatpush.bf16.msra.mxu0 %v3686
    %3709 = vmatpush.bf16.msra.mxu0 %v3668
    %3710 = vmatmul.bf16.gmra.mxu0 %v2993
    %v3711 = vpop.f32.mrf.mxu0
    %v3712 = vadd.f32 %v3698, %v3711
    %v3713 = vpop.f32.mrf.mxu0
    %v3714 = vadd.f32 %v3700, %v3713
    %3715 = vdwg.mxu0
    %3718 = vrot.lane.b32.xlu0 %v3712, 108
    %v3719 = vpop.permute.xlu0 %3718
    %3720 = vrot.lane.b32.xlu0 %v3714, 108
    %v3721 = vpop.permute.xlu0 %3720
    %v3724 = vmax.f32 %v3712, %v3719
    %v3725 = vmax.f32 %v3714, %v3721
    %v3726 = vpack.c.bf16 %v3725, %v3724
    %v3728 = vsel %vm2819, %v3726, 0
    %3730 = vmatpush.bf16.msra.mxu0 0
    %3731 = vmatpush.bf16.msra.mxu0 0
    %3732 = vmatpush.bf16.msra.mxu0 0
    %3733 = vmatpush.bf16.msra.mxu0 0
    %3734 = vmatpush.bf16.msra.mxu0 0
    %3735 = vmatpush.bf16.msra.mxu0 0
    %3736 = vmatpush.bf16.msra.mxu0 %v3051
    %3737 = vmatpush.bf16.msra.mxu0 %v3044
    %3738 = vmatmul.bf16.gmra.mxu0 %v3728
    %v3739 = vpop.f32.mrf.mxu0
    %v3740 = vadd.f32 0.0, %v3739
    %v3741 = vpop.f32.mrf.mxu0
    %v3742 = vadd.f32 0.0, %v3741
    %3743 = vdwg.mxu0
    %3744 = vmatpush.bf16.msra.mxu0 0
    %3745 = vmatpush.bf16.msra.mxu0 0
    %3746 = vmatpush.bf16.msra.mxu0 0
    %3747 = vmatpush.bf16.msra.mxu0 0
    %3748 = vmatpush.bf16.msra.mxu0 0
    %3749 = vmatpush.bf16.msra.mxu0 0
    %3750 = vmatpush.bf16.msra.mxu0 %v3077
    %3751 = vmatpush.bf16.msra.mxu0 %v3073
    %3752 = vmatmul.bf16.gmra.mxu0 %v3728
    %v3753 = vpop.f32.mrf.mxu0
    %v3754 = vadd.f32 0.0, %v3753
    %v3755 = vpop.f32.mrf.mxu0
    %v3756 = vadd.f32 0.0, %v3755
    %3757 = vdwg.mxu0
    %v3758 = vmax.f32 %v3740, %v3754
    %v3759 = vmax.f32 %v3742, %v3756
    %v3760 = vadd.f32 %v3758, %v86
    %v3761 = vadd.f32 %v3759, %v91
    %v3762 = vmax.f32 %v3760, 0.0
    %v3763 = vmax.f32 %v3761, 0.0
    %v3764 = vpack.c.bf16 %v3762, %v3762
    %v3765 = vpack.c.bf16 %v3763, %v3763
    %3766 = vst.msk [vmem:[#allocation3 + $0x10] sm:$0xf] %vm3101, %v3764
    %3767 = vst.msk [vmem:[#allocation3 + $0x14] sm:$0xf] %vm3101, %v3765
    %v3768 = vld [vmem:[#allocation2 + $0x10] sm:$0xc]
    %v3769 = vld [vmem:[#allocation2 + $0x14] sm:$0xf]
    %v3770 = vld [vmem:[#allocation2 + $0x18] sm:$0xf]
    %v3771 = vld [vmem:[#allocation2 + $0x1c] sm:$0xf]
    %v3772 = vld [vmem:[#allocation2 + $0x20] sm:$0x1]
    %v3773 = vld [vmem:[#allocation2 + $0x14] sm:$0xe]
    %v3774 = vld [vmem:[#allocation2 + $0x20] sm:$0xf]
    %v3780 = vunpack.c.l.b16 %v3768
    %v3781 = vunpack.c.l.b16 %v3769
    %v3782 = vunpack.c.l.b16 %v3770
    %v3783 = vunpack.c.l.b16 %v3771
    %v3784 = vunpack.c.l.b16 %v3772
    %v3785 = vpack.c.b16 %v3781, %v3780
    %v3786 = vpack.c.b16 %v3783, %v3782
    %v3787 = vpack.c.b16 %v3784, %v3784
    %3788 = vrot.lane.b32.xlu0 %v3785, 124
    %v3789 = vpop.permute.xlu0 %3788
    %3790 = vrot.lane.b32.xlu0 %v3786, 124
    %v3791 = vpop.permute.xlu0 %3790
    %3792 = vrot.lane.b32.xlu0 %v3787, 124
    %v3793 = vpop.permute.xlu0 %3792
    %v3796 = vunpack.c.l.b16 %v3773
    %v3797 = vunpack.c.l.b16 %v3774
    %v3798 = vpack.c.b16 %v3782, %v3796
    %v3799 = vpack.c.b16 %v3797, %v3783
    %v3800 = vrot.slane %v3798, 7
    %v3801 = vrot.slane %v3799, 7
    %v3802 = vsel %vm3136, %v3800, %v3801
    %3803 = vrot.lane.b32.xlu0 %v3800, 20
    %v3804 = vpop.permute.xlu0 %3803
    %3805 = vrot.lane.b32.xlu0 %v3802, 20
    %v3806 = vpop.permute.xlu0 %3805
    %3807 = vrot.lane.b32.xlu0 %v3801, 20
    %v3808 = vpop.permute.xlu0 %3807
    %3809 = vrot.lane.b32.xlu0 %v3800, 16
    %v3810 = vpop.permute.xlu0 %3809
    %3811 = vrot.lane.b32.xlu0 %v3802, 16
    %v3812 = vpop.permute.xlu0 %3811
    %3813 = vrot.lane.b32.xlu0 %v3801, 16
    %v3814 = vpop.permute.xlu0 %3813
    %v3817 = vsel %vm2812, %v3785, %v3789
    %v3820 = vsel %vm2812, %v3786, %v3791
    %v3823 = vsel %vm2812, %v3787, %v3793
    %v3825 = vsel %vm2819, %v3817, %v3804
    %v3827 = vsel %vm2819, %v3820, %v3806
    %v3829 = vsel %vm2819, %v3823, %v3808
    %v3831 = vsel %vm2824, %v3825, %v3810
    %v3833 = vsel %vm2824, %v3827, %v3812
    %v3835 = vsel %vm2824, %v3829, %v3814
    %3836 = vrot.lane.b32.xlu0 %v3785, 127
    %v3837 = vpop.permute.xlu0 %3836
    %3838 = vrot.lane.b32.xlu0 %v3786, 127
    %v3839 = vpop.permute.xlu0 %3838
    %3840 = vrot.lane.b32.xlu0 %v3787, 127
    %v3841 = vpop.permute.xlu0 %3840
    %3842 = vrot.lane.b32.xlu0 %v3785, 123
    %v3843 = vpop.permute.xlu0 %3842
    %3844 = vrot.lane.b32.xlu0 %v3786, 123
    %v3845 = vpop.permute.xlu0 %3844
    %3846 = vrot.lane.b32.xlu0 %v3787, 123
    %v3847 = vpop.permute.xlu0 %3846
    %3848 = vrot.lane.b32.xlu0 %v3800, 19
    %v3849 = vpop.permute.xlu0 %3848
    %3850 = vrot.lane.b32.xlu0 %v3802, 19
    %v3851 = vpop.permute.xlu0 %3850
    %3852 = vrot.lane.b32.xlu0 %v3801, 19
    %v3853 = vpop.permute.xlu0 %3852
    %3854 = vrot.lane.b32.xlu0 %v3800, 15
    %v3855 = vpop.permute.xlu0 %3854
    %3856 = vrot.lane.b32.xlu0 %v3802, 15
    %v3857 = vpop.permute.xlu0 %3856
    %3858 = vrot.lane.b32.xlu0 %v3801, 15
    %v3859 = vpop.permute.xlu0 %3858
    %v3862 = vsel %vm2812, %v3837, %v3843
    %v3865 = vsel %vm2812, %v3839, %v3845
    %v3868 = vsel %vm2812, %v3841, %v3847
    %v3870 = vsel %vm2819, %v3862, %v3849
    %v3872 = vsel %vm2819, %v3865, %v3851
    %v3874 = vsel %vm2819, %v3868, %v3853
    %v3876 = vsel %vm2824, %v3870, %v3855
    %v3878 = vsel %vm2824, %v3872, %v3857
    %v3880 = vsel %vm2824, %v3874, %v3859
    %3881 = vrot.lane.b32.xlu0 %v3785, 126
    %v3882 = vpop.permute.xlu0 %3881
    %3883 = vrot.lane.b32.xlu0 %v3786, 126
    %v3884 = vpop.permute.xlu0 %3883
    %3885 = vrot.lane.b32.xlu0 %v3787, 126
    %v3886 = vpop.permute.xlu0 %3885
    %3887 = vrot.lane.b32.xlu0 %v3785, 122
    %v3888 = vpop.permute.xlu0 %3887
    %3889 = vrot.lane.b32.xlu0 %v3786, 122
    %v3890 = vpop.permute.xlu0 %3889
    %3891 = vrot.lane.b32.xlu0 %v3787, 122
    %v3892 = vpop.permute.xlu0 %3891
    %3893 = vrot.lane.b32.xlu0 %v3800, 18
    %v3894 = vpop.permute.xlu0 %3893
    %3895 = vrot.lane.b32.xlu0 %v3802, 18
    %v3896 = vpop.permute.xlu0 %3895
    %3897 = vrot.lane.b32.xlu0 %v3801, 18
    %v3898 = vpop.permute.xlu0 %3897
    %3899 = vrot.lane.b32.xlu0 %v3800, 14
    %v3900 = vpop.permute.xlu0 %3899
    %3901 = vrot.lane.b32.xlu0 %v3802, 14
    %v3902 = vpop.permute.xlu0 %3901
    %3903 = vrot.lane.b32.xlu0 %v3801, 14
    %v3904 = vpop.permute.xlu0 %3903
    %v3907 = vsel %vm2812, %v3882, %v3888
    %v3910 = vsel %vm2812, %v3884, %v3890
    %v3913 = vsel %vm2812, %v3886, %v3892
    %v3915 = vsel %vm2819, %v3907, %v3894
    %v3917 = vsel %vm2819, %v3910, %v3896
    %v3919 = vsel %vm2819, %v3913, %v3898
    %v3921 = vsel %vm2824, %v3915, %v3900
    %v3923 = vsel %vm2824, %v3917, %v3902
    %v3925 = vsel %vm2824, %v3919, %v3904
    %3926 = vrot.lane.b32.xlu0 %v3785, 125
    %v3927 = vpop.permute.xlu0 %3926
    %3928 = vrot.lane.b32.xlu0 %v3786, 125
    %v3929 = vpop.permute.xlu0 %3928
    %3930 = vrot.lane.b32.xlu0 %v3787, 125
    %v3931 = vpop.permute.xlu0 %3930
    %3932 = vrot.lane.b32.xlu0 %v3785, 121
    %v3933 = vpop.permute.xlu0 %3932
    %3934 = vrot.lane.b32.xlu0 %v3786, 121
    %v3935 = vpop.permute.xlu0 %3934
    %3936 = vrot.lane.b32.xlu0 %v3787, 121
    %v3937 = vpop.permute.xlu0 %3936
    %3938 = vrot.lane.b32.xlu0 %v3800, 17
    %v3939 = vpop.permute.xlu0 %3938
    %3940 = vrot.lane.b32.xlu0 %v3802, 17
    %v3941 = vpop.permute.xlu0 %3940
    %3942 = vrot.lane.b32.xlu0 %v3801, 17
    %v3943 = vpop.permute.xlu0 %3942
    %3944 = vrot.lane.b32.xlu0 %v3800, 13
    %v3945 = vpop.permute.xlu0 %3944
    %3946 = vrot.lane.b32.xlu0 %v3802, 13
    %v3947 = vpop.permute.xlu0 %3946
    %3948 = vrot.lane.b32.xlu0 %v3801, 13
    %v3949 = vpop.permute.xlu0 %3948
    %v3952 = vsel %vm2812, %v3927, %v3933
    %v3955 = vsel %vm2812, %v3929, %v3935
    %v3958 = vsel %vm2812, %v3931, %v3937
    %v3960 = vsel %vm2819, %v3952, %v3939
    %v3962 = vsel %vm2819, %v3955, %v3941
    %v3964 = vsel %vm2819, %v3958, %v3943
    %v3966 = vsel %vm2824, %v3960, %v3945
    %v3968 = vsel %vm2824, %v3962, %v3947
    %v3970 = vsel %vm2824, %v3964, %v3949
    %3971 = vrot.lane.b32.xlu0 %v3785, 120
    %v3972 = vpop.permute.xlu0 %3971
    %3973 = vrot.lane.b32.xlu0 %v3786, 120
    %v3974 = vpop.permute.xlu0 %3973
    %3975 = vrot.lane.b32.xlu0 %v3787, 120
    %v3976 = vpop.permute.xlu0 %3975
    %3977 = vrot.lane.b32.xlu0 %v3800, 12
    %v3978 = vpop.permute.xlu0 %3977
    %3979 = vrot.lane.b32.xlu0 %v3802, 12
    %v3980 = vpop.permute.xlu0 %3979
    %3981 = vrot.lane.b32.xlu0 %v3801, 12
    %v3982 = vpop.permute.xlu0 %3981
    %v3984 = vsel %vm2812, %v3789, %v3972
    %v3986 = vsel %vm2812, %v3791, %v3974
    %v3988 = vsel %vm2812, %v3793, %v3976
    %v3989 = vsel %vm2819, %v3984, %v3810
    %v3990 = vsel %vm2819, %v3986, %v3812
    %v3991 = vsel %vm2819, %v3988, %v3814
    %v3993 = vsel %vm2824, %v3989, %v3978
    %v3995 = vsel %vm2824, %v3990, %v3980
    %v3997 = vsel %vm2824, %v3991, %v3982
    %v4001 = vrot.slane %v3831, 2
    %v4002 = vrot.slane %v3833, 2
    %v4003 = vsel %vm2947, %v4001, %v4002
    %v4004 = vrot.slane %v3835, 2
    %v4005 = vsel %vm2947, %v4002, %v4004
    %v4010 = vrot.slane %v3876, 3
    %v4011 = vrot.slane %v3878, 3
    %v4012 = vsel %vm2798, %v4010, %v4011
    %v4013 = vrot.slane %v3880, 3
    %v4014 = vsel %vm2798, %v4011, %v4013
    %v4019 = vrot.slane %v3921, 4
    %v4020 = vrot.slane %v3923, 4
    %v4021 = vsel %vm2960, %v4019, %v4020
    %v4022 = vrot.slane %v3925, 4
    %v4023 = vsel %vm2960, %v4020, %v4022
    %v4028 = vrot.slane %v3966, 5
    %v4029 = vrot.slane %v3968, 5
    %v4030 = vsel %vm212, %v4028, %v4029
    %v4031 = vrot.slane %v3970, 5
    %v4032 = vsel %vm212, %v4029, %v4031
    %v4037 = vrot.slane %v3993, 6
    %v4038 = vrot.slane %v3995, 6
    %v4039 = vsel %vm3374, %v4037, %v4038
    %v4040 = vrot.slane %v3997, 6
    %v4041 = vsel %vm3374, %v4038, %v4040
    %v4045 = vsel %vm2965, %v4005, %v4010
    %v4049 = vsel %vm2969, %v4014, %v4019
    %v4053 = vsel %vm216, %v4023, %v4028
    %v4057 = vsel %vm233, %v4032, %v4037
    %v4060 = vsel %vm2995, %v4041, 0
    %4062 = vmatpush.bf16.msra.mxu0 %v4057
    %4063 = vmatpush.bf16.msra.mxu0 %v4030
    %4064 = vmatpush.bf16.msra.mxu0 %v4053
    %4065 = vmatpush.bf16.msra.mxu0 %v4021
    %4066 = vmatpush.bf16.msra.mxu0 %v4049
    %4067 = vmatpush.bf16.msra.mxu0 %v4012
    %4068 = vmatpush.bf16.msra.mxu0 %v4045
    %4069 = vmatpush.bf16.msra.mxu0 %v4003
    %4070 = vmatmul.bf16.gmra.mxu0 %v2988
    %v4071 = vpop.f32.mrf.mxu0
    %v4072 = vadd.f32 0.0, %v4071
    %v4073 = vpop.f32.mrf.mxu0
    %v4074 = vadd.f32 0.0, %v4073
    %4075 = vdwg.mxu0
    %4076 = vmatpush.bf16.msra.mxu0 0
    %4077 = vmatpush.bf16.msra.mxu0 0
    %4078 = vmatpush.bf16.msra.mxu0 0
    %4079 = vmatpush.bf16.msra.mxu0 0
    %4080 = vmatpush.bf16.msra.mxu0 0
    %4081 = vmatpush.bf16.msra.mxu0 0
    %4082 = vmatpush.bf16.msra.mxu0 %v4060
    %4083 = vmatpush.bf16.msra.mxu0 %v4039
    %4084 = vmatmul.bf16.gmra.mxu0 %v2993
    %v4085 = vpop.f32.mrf.mxu0
    %v4086 = vadd.f32 %v4072, %v4085
    %v4087 = vpop.f32.mrf.mxu0
    %v4088 = vadd.f32 %v4074, %v4087
    %4089 = vdwg.mxu0
    %4092 = vrot.lane.b32.xlu0 %v4086, 108
    %v4093 = vpop.permute.xlu0 %4092
    %4094 = vrot.lane.b32.xlu0 %v4088, 108
    %v4095 = vpop.permute.xlu0 %4094
    %v4098 = vmax.f32 %v4086, %v4093
    %v4099 = vmax.f32 %v4088, %v4095
    %v4100 = vpack.c.bf16 %v4099, %v4098
    %v4102 = vsel %vm2819, %v4100, 0
    %4104 = vmatpush.bf16.msra.mxu0 0
    %4105 = vmatpush.bf16.msra.mxu0 0
    %4106 = vmatpush.bf16.msra.mxu0 0
    %4107 = vmatpush.bf16.msra.mxu0 0
    %4108 = vmatpush.bf16.msra.mxu0 0
    %4109 = vmatpush.bf16.msra.mxu0 0
    %4110 = vmatpush.bf16.msra.mxu0 %v3051
    %4111 = vmatpush.bf16.msra.mxu0 %v3044
    %4112 = vmatmul.bf16.gmra.mxu0 %v4102
    %v4113 = vpop.f32.mrf.mxu0
    %v4114 = vadd.f32 0.0, %v4113
    %v4115 = vpop.f32.mrf.mxu0
    %v4116 = vadd.f32 0.0, %v4115
    %4117 = vdwg.mxu0
    %4118 = vmatpush.bf16.msra.mxu0 0
    %4119 = vmatpush.bf16.msra.mxu0 0
    %4120 = vmatpush.bf16.msra.mxu0 0
    %4121 = vmatpush.bf16.msra.mxu0 0
    %4122 = vmatpush.bf16.msra.mxu0 0
    %4123 = vmatpush.bf16.msra.mxu0 0
    %4124 = vmatpush.bf16.msra.mxu0 %v3077
    %4125 = vmatpush.bf16.msra.mxu0 %v3073
    %4126 = vmatmul.bf16.gmra.mxu0 %v4102
    %v4127 = vpop.f32.mrf.mxu0
    %v4128 = vadd.f32 0.0, %v4127
    %v4129 = vpop.f32.mrf.mxu0
    %v4130 = vadd.f32 0.0, %v4129
    %4131 = vdwg.mxu0
    %v4132 = vmax.f32 %v4114, %v4128
    %v4133 = vmax.f32 %v4116, %v4130
    %v4134 = vadd.f32 %v4132, %v86
    %v4135 = vadd.f32 %v4133, %v91
    %v4136 = vmax.f32 %v4134, 0.0
    %v4137 = vmax.f32 %v4135, 0.0
    %v4138 = vpack.c.bf16 %v4136, %v4136
    %v4139 = vpack.c.bf16 %v4137, %v4137
    %4140 = vst.msk [vmem:[#allocation3 + $0x18] sm:$0xf] %vm3101, %v4138
    %4141 = vst.msk [vmem:[#allocation3 + $0x1c] sm:$0xf] %vm3101, %v4139
    %v4142 = vld [vmem:[#allocation2 + $0x18] sm:$0xf]
    %v4143 = vld [vmem:[#allocation2 + $0x1c] sm:$0xf]
    %v4144 = vld [vmem:[#allocation2 + $0x20] sm:$0xf]
    %v4145 = vld [vmem:[#allocation2 + $0x24] sm:$0x7]
    %v4146 = vld [vmem:[#allocation2 + $0x18] sm:$0x8]
    %v4147 = vld [vmem:[#allocation2 + $0x24] sm:$0xf]
    %v4148 = vld [vmem:[#allocation2 + $0x28] sm:$0x3]
    %v4153 = vunpack.c.l.b16 %v4142
    %v4154 = vunpack.c.l.b16 %v4143
    %v4155 = vunpack.c.l.b16 %v4144
    %v4156 = vunpack.c.l.b16 %v4145
    %v4157 = vpack.c.b16 %v4154, %v4153
    %v4158 = vpack.c.b16 %v4156, %v4155
    %4159 = vrot.lane.b32.xlu0 %v4157, 124
    %v4160 = vpop.permute.xlu0 %4159
    %4161 = vrot.lane.b32.xlu0 %v4158, 124
    %v4162 = vpop.permute.xlu0 %4161
    %v4166 = vunpack.c.l.b16 %v4146
    %v4167 = vunpack.c.l.b16 %v4147
    %v4168 = vunpack.c.l.b16 %v4148
    %v4169 = vpack.c.b16 %v4154, %v4166
    %v4170 = vpack.c.b16 %v4167, %v4155
    %v4171 = vpack.c.b16 %v4168, %v4168
    %v4172 = vrot.slane %v4169, 3
    %v4173 = vrot.slane %v4170, 3
    %v4174 = vsel %vm2798, %v4172, %v4173
    %v4175 = vrot.slane %v4171, 3
    %v4176 = vsel %vm2798, %v4173, %v4175
    %4177 = vrot.lane.b32.xlu0 %v4174, 20
    %v4178 = vpop.permute.xlu0 %4177
    %4179 = vrot.lane.b32.xlu0 %v4176, 20
    %v4180 = vpop.permute.xlu0 %4179
    %4181 = vrot.lane.b32.xlu0 %v4174, 16
    %v4182 = vpop.permute.xlu0 %4181
    %4183 = vrot.lane.b32.xlu0 %v4176, 16
    %v4184 = vpop.permute.xlu0 %4183
    %v4187 = vsel %vm2812, %v4157, %v4160
    %v4190 = vsel %vm2812, %v4158, %v4162
    %v4192 = vsel %vm2819, %v4187, %v4178
    %v4194 = vsel %vm2819, %v4190, %v4180
    %v4196 = vsel %vm2824, %v4192, %v4182
    %v4199 = vsel %vm2824, %v4194, %v4184
    %4200 = vrot.lane.b32.xlu0 %v4157, 127
    %v4201 = vpop.permute.xlu0 %4200
    %4202 = vrot.lane.b32.xlu0 %v4158, 127
    %v4203 = vpop.permute.xlu0 %4202
    %4204 = vrot.lane.b32.xlu0 %v4157, 123
    %v4205 = vpop.permute.xlu0 %4204
    %4206 = vrot.lane.b32.xlu0 %v4158, 123
    %v4207 = vpop.permute.xlu0 %4206
    %4208 = vrot.lane.b32.xlu0 %v4174, 19
    %v4209 = vpop.permute.xlu0 %4208
    %4210 = vrot.lane.b32.xlu0 %v4176, 19
    %v4211 = vpop.permute.xlu0 %4210
    %4212 = vrot.lane.b32.xlu0 %v4174, 15
    %v4213 = vpop.permute.xlu0 %4212
    %4214 = vrot.lane.b32.xlu0 %v4176, 15
    %v4215 = vpop.permute.xlu0 %4214
    %v4218 = vsel %vm2812, %v4201, %v4205
    %v4221 = vsel %vm2812, %v4203, %v4207
    %v4223 = vsel %vm2819, %v4218, %v4209
    %v4225 = vsel %vm2819, %v4221, %v4211
    %v4227 = vsel %vm2824, %v4223, %v4213
    %v4229 = vsel %vm2824, %v4225, %v4215
    %4230 = vrot.lane.b32.xlu0 %v4157, 126
    %v4231 = vpop.permute.xlu0 %4230
    %4232 = vrot.lane.b32.xlu0 %v4158, 126
    %v4233 = vpop.permute.xlu0 %4232
    %4234 = vrot.lane.b32.xlu0 %v4157, 122
    %v4235 = vpop.permute.xlu0 %4234
    %4236 = vrot.lane.b32.xlu0 %v4158, 122
    %v4237 = vpop.permute.xlu0 %4236
    %4238 = vrot.lane.b32.xlu0 %v4174, 18
    %v4239 = vpop.permute.xlu0 %4238
    %4240 = vrot.lane.b32.xlu0 %v4176, 18
    %v4241 = vpop.permute.xlu0 %4240
    %4242 = vrot.lane.b32.xlu0 %v4174, 14
    %v4243 = vpop.permute.xlu0 %4242
    %4244 = vrot.lane.b32.xlu0 %v4176, 14
    %v4245 = vpop.permute.xlu0 %4244
    %v4248 = vsel %vm2812, %v4231, %v4235
    %v4251 = vsel %vm2812, %v4233, %v4237
    %v4253 = vsel %vm2819, %v4248, %v4239
    %v4255 = vsel %vm2819, %v4251, %v4241
    %v4257 = vsel %vm2824, %v4253, %v4243
    %v4259 = vsel %vm2824, %v4255, %v4245
    %4260 = vrot.lane.b32.xlu0 %v4157, 125
    %v4261 = vpop.permute.xlu0 %4260
    %4262 = vrot.lane.b32.xlu0 %v4158, 125
    %v4263 = vpop.permute.xlu0 %4262
    %4264 = vrot.lane.b32.xlu0 %v4157, 121
    %v4265 = vpop.permute.xlu0 %4264
    %4266 = vrot.lane.b32.xlu0 %v4158, 121
    %v4267 = vpop.permute.xlu0 %4266
    %4268 = vrot.lane.b32.xlu0 %v4174, 17
    %v4269 = vpop.permute.xlu0 %4268
    %4270 = vrot.lane.b32.xlu0 %v4176, 17
    %v4271 = vpop.permute.xlu0 %4270
    %4272 = vrot.lane.b32.xlu0 %v4174, 13
    %v4273 = vpop.permute.xlu0 %4272
    %4274 = vrot.lane.b32.xlu0 %v4176, 13
    %v4275 = vpop.permute.xlu0 %4274
    %v4278 = vsel %vm2812, %v4261, %v4265
    %v4281 = vsel %vm2812, %v4263, %v4267
    %v4283 = vsel %vm2819, %v4278, %v4269
    %v4285 = vsel %vm2819, %v4281, %v4271
    %v4287 = vsel %vm2824, %v4283, %v4273
    %v4289 = vsel %vm2824, %v4285, %v4275
    %4290 = vrot.lane.b32.xlu0 %v4157, 120
    %v4291 = vpop.permute.xlu0 %4290
    %4292 = vrot.lane.b32.xlu0 %v4158, 120
    %v4293 = vpop.permute.xlu0 %4292
    %4294 = vrot.lane.b32.xlu0 %v4174, 12
    %v4295 = vpop.permute.xlu0 %4294
    %4296 = vrot.lane.b32.xlu0 %v4176, 12
    %v4297 = vpop.permute.xlu0 %4296
    %v4299 = vsel %vm2812, %v4160, %v4291
    %v4301 = vsel %vm2812, %v4162, %v4293
    %v4302 = vsel %vm2819, %v4299, %v4182
    %v4303 = vsel %vm2819, %v4301, %v4184
    %v4305 = vsel %vm2824, %v4302, %v4295
    %v4307 = vsel %vm2824, %v4303, %v4297
    %v4310 = vrot.slane %v4227, 1
    %v4311 = vrot.slane %v4229, 1
    %v4312 = vsel %vm2940, %v4310, %v4311
    %v4316 = vrot.slane %v4257, 2
    %v4317 = vrot.slane %v4259, 2
    %v4318 = vsel %vm2947, %v4316, %v4317
    %v4322 = vrot.slane %v4287, 3
    %v4323 = vrot.slane %v4289, 3
    %v4324 = vsel %vm2798, %v4322, %v4323
    %v4328 = vrot.slane %v4305, 4
    %v4329 = vrot.slane %v4307, 4
    %v4330 = vsel %vm2960, %v4328, %v4329
    %v4333 = vsel %vm2965, %v4199, %v4310
    %v4337 = vsel %vm2969, %v4311, %v4316
    %v4341 = vsel %vm216, %v4317, %v4322
    %v4345 = vsel %vm233, %v4323, %v4328
    %v4348 = vsel %vm2995, %v4329, 0
    %4350 = vmatpush.bf16.msra.mxu0 %v4345
    %4351 = vmatpush.bf16.msra.mxu0 %v4324
    %4352 = vmatpush.bf16.msra.mxu0 %v4341
    %4353 = vmatpush.bf16.msra.mxu0 %v4318
    %4354 = vmatpush.bf16.msra.mxu0 %v4337
    %4355 = vmatpush.bf16.msra.mxu0 %v4312
    %4356 = vmatpush.bf16.msra.mxu0 %v4333
    %4357 = vmatpush.bf16.msra.mxu0 %v4196
    %4358 = vmatmul.bf16.gmra.mxu0 %v2988
    %v4359 = vpop.f32.mrf.mxu0
    %v4360 = vadd.f32 0.0, %v4359
    %v4361 = vpop.f32.mrf.mxu0
    %v4362 = vadd.f32 0.0, %v4361
    %4363 = vdwg.mxu0
    %4364 = vmatpush.bf16.msra.mxu0 0
    %4365 = vmatpush.bf16.msra.mxu0 0
    %4366 = vmatpush.bf16.msra.mxu0 0
    %4367 = vmatpush.bf16.msra.mxu0 0
    %4368 = vmatpush.bf16.msra.mxu0 0
    %4369 = vmatpush.bf16.msra.mxu0 0
    %4370 = vmatpush.bf16.msra.mxu0 %v4348
    %4371 = vmatpush.bf16.msra.mxu0 %v4330
    %4372 = vmatmul.bf16.gmra.mxu0 %v2993
    %v4373 = vpop.f32.mrf.mxu0
    %v4374 = vadd.f32 %v4360, %v4373
    %v4375 = vpop.f32.mrf.mxu0
    %v4376 = vadd.f32 %v4362, %v4375
    %4377 = vdwg.mxu0
    %4380 = vrot.lane.b32.xlu0 %v4374, 108
    %v4381 = vpop.permute.xlu0 %4380
    %4382 = vrot.lane.b32.xlu0 %v4376, 108
    %v4383 = vpop.permute.xlu0 %4382
    %v4386 = vmax.f32 %v4374, %v4381
    %v4387 = vmax.f32 %v4376, %v4383
    %v4388 = vpack.c.bf16 %v4387, %v4386
    %v4390 = vsel %vm2819, %v4388, 0
    %4392 = vmatpush.bf16.msra.mxu0 0
    %4393 = vmatpush.bf16.msra.mxu0 0
    %4394 = vmatpush.bf16.msra.mxu0 0
    %4395 = vmatpush.bf16.msra.mxu0 0
    %4396 = vmatpush.bf16.msra.mxu0 0
    %4397 = vmatpush.bf16.msra.mxu0 0
    %4398 = vmatpush.bf16.msra.mxu0 %v3051
    %4399 = vmatpush.bf16.msra.mxu0 %v3044
    %4400 = vmatmul.bf16.gmra.mxu0 %v4390
    %v4401 = vpop.f32.mrf.mxu0
    %v4402 = vadd.f32 0.0, %v4401
    %v4403 = vpop.f32.mrf.mxu0
    %v4404 = vadd.f32 0.0, %v4403
    %4405 = vdwg.mxu0
    %4406 = vmatpush.bf16.msra.mxu0 0
    %4407 = vmatpush.bf16.msra.mxu0 0
    %4408 = vmatpush.bf16.msra.mxu0 0
    %4409 = vmatpush.bf16.msra.mxu0 0
    %4410 = vmatpush.bf16.msra.mxu0 0
    %4411 = vmatpush.bf16.msra.mxu0 0
    %4412 = vmatpush.bf16.msra.mxu0 %v3077
    %4413 = vmatpush.bf16.msra.mxu0 %v3073
    %4414 = vmatmul.bf16.gmra.mxu0 %v4390
    %v4415 = vpop.f32.mrf.mxu0
    %v4416 = vadd.f32 0.0, %v4415
    %v4417 = vpop.f32.mrf.mxu0
    %v4418 = vadd.f32 0.0, %v4417
    %4419 = vdwg.mxu0
    %v4420 = vmax.f32 %v4402, %v4416
    %v4421 = vmax.f32 %v4404, %v4418
    %v4422 = vadd.f32 %v4420, %v86
    %v4423 = vadd.f32 %v4421, %v91
    %v4424 = vmax.f32 %v4422, 0.0
    %v4425 = vmax.f32 %v4423, 0.0
    %v4426 = vpack.c.bf16 %v4424, %v4424
    %v4427 = vpack.c.bf16 %v4425, %v4425
    %4428 = vst.msk [vmem:[#allocation3 + $0x20] sm:$0xf] %vm3101, %v4426
    %4429 = vst.msk [vmem:[#allocation3 + $0x24] sm:$0xf] %vm3101, %v4427
    %v4430 = vld [vmem:[%s9] sm:$0xf]
    %v4431 = vld [vmem:[%s9 + $0x4] sm:$0xf]
    %v4432 = vld [vmem:[%s9 + $0x8] sm:$0xf]
    %v4433 = vld [vmem:[%s9 + $0xc] sm:$0xf]
    %v4434 = vld [vmem:[%s9 + $0x10] sm:$0xf]
    %v4435 = vld [vmem:[%s9 + $0x14] sm:$0xf]
    %v4436 = vld [vmem:[%s9 + $0x18] sm:$0xf]
    %v4437 = vld [vmem:[%s9 + $0x1c] sm:$0xf]
    %v4438 = vld [vmem:[%s9 + $0x20] sm:$0xf]
    %v4439 = vld [vmem:[%s9 + $0x24] sm:$0xf]
    %v4440 = vld [vmem:[%s9 + $0x28] sm:$0xf]
    %v4441 = vld [vmem:[%s9 + $0x2c] sm:$0xf]
    %v4442 = vld [vmem:[%s9 + $0x30] sm:$0xf]
    %v4443 = vld [vmem:[%s9 + $0x34] sm:$0xf]
    %v4444 = vld [vmem:[%s9 + $0x38] sm:$0xf]
    %v4445 = vld [vmem:[#allocation3] sm:$0xf]
    %v4446 = vld [vmem:[#allocation3 + $0x4] sm:$0xf]
    %v4447 = vld [vmem:[#allocation3 + $0x8] sm:$0xf]
    %v4448 = vld [vmem:[#allocation3 + $0xc] sm:$0xf]
    %v4449 = vld [vmem:[#allocation3 + $0x10] sm:$0xf]
    %v4450 = vld [vmem:[#allocation3 + $0x14] sm:$0xf]
    %v4451 = vld [vmem:[#allocation3 + $0x18] sm:$0xf]
    %v4452 = vld [vmem:[#allocation3 + $0x1c] sm:$0xf]
    %v4453 = vld [vmem:[#allocation3 + $0x20] sm:$0xf]
    %v4454 = vld [vmem:[#allocation3 + $0x24] sm:$0xf]
    %s4455 = scalar_lea.vmem %s9, 60
    %v4456 = vld [vmem:[%s4455] sm:$0xf]
    %v4457 = vld [vmem:[%s4455 + $0x4] sm:$0xf]
    %v4458 = vld [vmem:[%s4455 + $0x8] sm:$0xf]
    %v4459 = vld [vmem:[%s4455 + $0xc] sm:$0xf]
    %v4460 = vld [vmem:[%s4455 + $0x10] sm:$0xf]
    %v4461 = vld [vmem:[%s4455 + $0x14] sm:$0xf]
    %v4462 = vld [vmem:[%s4455 + $0x18] sm:$0xf]
    %v4463 = vld [vmem:[%s4455 + $0x1c] sm:$0xf]
    %v4464 = vld [vmem:[%s4455 + $0x20] sm:$0xf]
    %v4465 = vld [vmem:[%s4455 + $0x24] sm:$0xf]
    %v4466 = vld [vmem:[%s4455 + $0x28] sm:$0xf]
    %v4467 = vld [vmem:[%s4455 + $0x2c] sm:$0xf]
    %v4468 = vld [vmem:[%s4455 + $0x30] sm:$0xf]
    %v4469 = vld [vmem:[%s4455 + $0x34] sm:$0xf]
    %v4470 = vld [vmem:[%s4455 + $0x38] sm:$0xf]
    %v4486 = vunpack.c.l.b16 %v4456
    %v4487 = vunpack.c.l.b16 %v4457
    %v4488 = vunpack.c.l.b16 %v4458
    %v4489 = vunpack.c.l.b16 %v4459
    %v4490 = vunpack.c.l.b16 %v4460
    %v4491 = vunpack.c.l.b16 %v4461
    %v4492 = vunpack.c.l.b16 %v4462
    %v4493 = vunpack.c.l.b16 %v4463
    %v4494 = vunpack.c.l.b16 %v4464
    %v4495 = vunpack.c.l.b16 %v4465
    %v4496 = vunpack.c.l.b16 %v4466
    %v4497 = vunpack.c.l.b16 %v4467
    %v4498 = vunpack.c.l.b16 %v4468
    %v4499 = vunpack.c.l.b16 %v4469
    %v4500 = vunpack.c.l.b16 %v4470
    %v4501 = vpack.c.b16 %v4487, %v4486
    %v4502 = vpack.c.b16 %v4489, %v4488
    %v4503 = vpack.c.b16 %v4491, %v4490
    %v4504 = vpack.c.b16 %v4493, %v4492
    %v4505 = vpack.c.b16 %v4495, %v4494
    %v4506 = vpack.c.b16 %v4497, %v4496
    %v4507 = vpack.c.b16 %v4499, %v4498
    %v4508 = vpack.c.b16 %v4500, %v4500
    %v4519 = vunpack.c.l.b16 %v4445
    %v4520 = vunpack.c.l.b16 %v4446
    %v4521 = vunpack.c.l.b16 %v4447
    %v4522 = vunpack.c.l.b16 %v4448
    %v4523 = vunpack.c.l.b16 %v4449
    %v4524 = vunpack.c.l.b16 %v4450
    %v4525 = vunpack.c.l.b16 %v4451
    %v4526 = vunpack.c.l.b16 %v4452
    %v4527 = vunpack.c.l.b16 %v4453
    %v4528 = vunpack.c.l.b16 %v4454
    %v4529 = vpack.c.b16 %v4520, %v4519
    %v4530 = vpack.c.b16 %v4522, %v4521
    %v4531 = vpack.c.b16 %v4524, %v4523
    %v4532 = vpack.c.b16 %v4526, %v4525
    %v4533 = vpack.c.b16 %v4528, %v4527
    %4534 = vrot.lane.b32.xlu0 %v4529, 126
    %v4535 = vpop.permute.xlu0 %4534
    %4536 = vrot.lane.b32.xlu0 %v4530, 126
    %v4537 = vpop.permute.xlu0 %4536
    %4538 = vrot.lane.b32.xlu0 %v4531, 126
    %v4539 = vpop.permute.xlu0 %4538
    %4540 = vrot.lane.b32.xlu0 %v4532, 126
    %v4541 = vpop.permute.xlu0 %4540
    %4542 = vrot.lane.b32.xlu0 %v4533, 126
    %v4543 = vpop.permute.xlu0 %4542
    %vm4549 = vcmask 654336
    %v4551 = vsel %vm4549, %v4501, 0
    %v4554 = vsel %vm4549, %v4502, 0
    %v4557 = vsel %vm4549, %v4503, 0
    %v4560 = vsel %vm4549, %v4504, 0
    %v4563 = vsel %vm4549, %v4505, 0
    %v4566 = vsel %vm4549, %v4506, 0
    %v4569 = vsel %vm4549, %v4507, 0
    %v4572 = vsel %vm4549, %v4508, 0
    %4574 = vmatpush.bf16.msra.mxu0 0
    %4575 = vmatpush.bf16.msra.mxu0 0
    %4576 = vmatpush.bf16.msra.mxu0 0
    %4577 = vmatpush.bf16.msra.mxu0 %v4543
    %4578 = vmatpush.bf16.msra.mxu0 %v4541
    %4579 = vmatpush.bf16.msra.mxu0 %v4539
    %4580 = vmatpush.bf16.msra.mxu0 %v4537
    %4581 = vmatpush.bf16.msra.mxu0 %v4535
    %4582 = vmatmul.bf16.gmra.mxu0 %v4551
    %v4583 = vpop.f32.mrf.mxu0
    %v4584 = vadd.f32 0.0, %v4583
    %v4585 = vpop.f32.mrf.mxu0
    %v4586 = vadd.f32 0.0, %v4585
    %4587 = vmatmul.bf16.gmra.mxu0 %v4554
    %v4588 = vpop.f32.mrf.mxu0
    %v4589 = vadd.f32 0.0, %v4588
    %v4590 = vpop.f32.mrf.mxu0
    %v4591 = vadd.f32 0.0, %v4590
    %4592 = vmatmul.bf16.gmra.mxu0 %v4557
    %v4593 = vpop.f32.mrf.mxu0
    %v4594 = vadd.f32 0.0, %v4593
    %v4595 = vpop.f32.mrf.mxu0
    %v4596 = vadd.f32 0.0, %v4595
    %4597 = vmatmul.bf16.gmra.mxu0 %v4560
    %v4598 = vpop.f32.mrf.mxu0
    %v4599 = vadd.f32 0.0, %v4598
    %v4600 = vpop.f32.mrf.mxu0
    %v4601 = vadd.f32 0.0, %v4600
    %4602 = vmatmul.bf16.gmra.mxu0 %v4563
    %v4603 = vpop.f32.mrf.mxu0
    %v4604 = vadd.f32 0.0, %v4603
    %v4605 = vpop.f32.mrf.mxu0
    %v4606 = vadd.f32 0.0, %v4605
    %4607 = vmatmul.bf16.gmra.mxu0 %v4566
    %v4608 = vpop.f32.mrf.mxu0
    %v4609 = vadd.f32 0.0, %v4608
    %v4610 = vpop.f32.mrf.mxu0
    %v4611 = vadd.f32 0.0, %v4610
    %4612 = vmatmul.bf16.gmra.mxu0 %v4569
    %v4613 = vpop.f32.mrf.mxu0
    %v4614 = vadd.f32 0.0, %v4613
    %v4615 = vpop.f32.mrf.mxu0
    %v4616 = vadd.f32 0.0, %v4615
    %4617 = vmatmul.bf16.gmra.mxu0 %v4572
    %v4618 = vpop.f32.mrf.mxu0
    %v4619 = vadd.f32 0.0, %v4618
    %v4620 = vpop.f32.mrf.mxu0
    %4621 = vdwg.mxu0
    %v4637 = vunpack.c.l.b16 %v4430
    %v4638 = vunpack.c.l.b16 %v4431
    %v4639 = vunpack.c.l.b16 %v4432
    %v4640 = vunpack.c.l.b16 %v4433
    %v4641 = vunpack.c.l.b16 %v4434
    %v4642 = vunpack.c.l.b16 %v4435
    %v4643 = vunpack.c.l.b16 %v4436
    %v4644 = vunpack.c.l.b16 %v4437
    %v4645 = vunpack.c.l.b16 %v4438
    %v4646 = vunpack.c.l.b16 %v4439
    %v4647 = vunpack.c.l.b16 %v4440
    %v4648 = vunpack.c.l.b16 %v4441
    %v4649 = vunpack.c.l.b16 %v4442
    %v4650 = vunpack.c.l.b16 %v4443
    %v4651 = vunpack.c.l.b16 %v4444
    %v4652 = vpack.c.b16 %v4638, %v4637
    %v4653 = vpack.c.b16 %v4640, %v4639
    %v4654 = vpack.c.b16 %v4642, %v4641
    %v4655 = vpack.c.b16 %v4644, %v4643
    %v4656 = vpack.c.b16 %v4646, %v4645
    %v4657 = vpack.c.b16 %v4648, %v4647
    %v4658 = vpack.c.b16 %v4650, %v4649
    %v4659 = vpack.c.b16 %v4651, %v4651
    %v4666 = vsel %vm4549, %v4652, 0
    %v4669 = vsel %vm4549, %v4653, 0
    %v4672 = vsel %vm4549, %v4654, 0
    %v4675 = vsel %vm4549, %v4655, 0
    %v4678 = vsel %vm4549, %v4656, 0
    %v4681 = vsel %vm4549, %v4657, 0
    %v4684 = vsel %vm4549, %v4658, 0
    %v4687 = vsel %vm4549, %v4659, 0
    %4689 = vmatpush.bf16.msra.mxu0 0
    %4690 = vmatpush.bf16.msra.mxu0 0
    %4691 = vmatpush.bf16.msra.mxu0 0
    %4692 = vmatpush.bf16.msra.mxu0 %v4533
    %4693 = vmatpush.bf16.msra.mxu0 %v4532
    %4694 = vmatpush.bf16.msra.mxu0 %v4531
    %4695 = vmatpush.bf16.msra.mxu0 %v4530
    %4696 = vmatpush.bf16.msra.mxu0 %v4529
    %4697 = vmatmul.bf16.gmra.mxu0 %v4666
    %v4698 = vpop.f32.mrf.mxu0
    %v4699 = vadd.f32 %v4584, %v4698
    %v4700 = vpop.f32.mrf.mxu0
    %v4701 = vadd.f32 %v4586, %v4700
    %4702 = vmatmul.bf16.gmra.mxu0 %v4669
    %v4703 = vpop.f32.mrf.mxu0
    %v4704 = vadd.f32 %v4589, %v4703
    %v4705 = vpop.f32.mrf.mxu0
    %v4706 = vadd.f32 %v4591, %v4705
    %4707 = vmatmul.bf16.gmra.mxu0 %v4672
    %v4708 = vpop.f32.mrf.mxu0
    %v4709 = vadd.f32 %v4594, %v4708
    %v4710 = vpop.f32.mrf.mxu0
    %v4711 = vadd.f32 %v4596, %v4710
    %4712 = vmatmul.bf16.gmra.mxu0 %v4675
    %v4713 = vpop.f32.mrf.mxu0
    %v4714 = vadd.f32 %v4599, %v4713
    %v4715 = vpop.f32.mrf.mxu0
    %v4716 = vadd.f32 %v4601, %v4715
    %4717 = vmatmul.bf16.gmra.mxu0 %v4678
    %v4718 = vpop.f32.mrf.mxu0
    %v4719 = vadd.f32 %v4604, %v4718
    %v4720 = vpop.f32.mrf.mxu0
    %v4721 = vadd.f32 %v4606, %v4720
    %4722 = vmatmul.bf16.gmra.mxu0 %v4681
    %v4723 = vpop.f32.mrf.mxu0
    %v4724 = vadd.f32 %v4609, %v4723
    %v4725 = vpop.f32.mrf.mxu0
    %v4726 = vadd.f32 %v4611, %v4725
    %4727 = vmatmul.bf16.gmra.mxu0 %v4684
    %v4728 = vpop.f32.mrf.mxu0
    %v4729 = vadd.f32 %v4614, %v4728
    %v4730 = vpop.f32.mrf.mxu0
    %v4731 = vadd.f32 %v4616, %v4730
    %4732 = vmatmul.bf16.gmra.mxu0 %v4687
    %v4733 = vpop.f32.mrf.mxu0
    %v4734 = vadd.f32 %v4619, %v4733
    %v4735 = vpop.f32.mrf.mxu0
    %4736 = vdwg.mxu0
    %s4737 = scalar_lea.vmem %s9, 120
    %v4738 = vld [vmem:[%s4737] sm:$0xf]
    %v4739 = vld [vmem:[%s4737 + $0x4] sm:$0xf]
    %v4740 = vld [vmem:[%s4737 + $0x8] sm:$0xf]
    %v4741 = vld [vmem:[%s4737 + $0xc] sm:$0xf]
    %v4742 = vld [vmem:[%s4737 + $0x10] sm:$0xf]
    %v4743 = vld [vmem:[%s4737 + $0x14] sm:$0xf]
    %v4744 = vld [vmem:[%s4737 + $0x18] sm:$0xf]
    %v4745 = vld [vmem:[%s4737 + $0x1c] sm:$0xf]
    %v4746 = vld [vmem:[%s4737 + $0x20] sm:$0xf]
    %v4747 = vld [vmem:[%s4737 + $0x24] sm:$0xf]
    %v4748 = vld [vmem:[%s4737 + $0x28] sm:$0xf]
    %v4749 = vld [vmem:[%s4737 + $0x2c] sm:$0xf]
    %v4750 = vld [vmem:[%s4737 + $0x30] sm:$0xf]
    %v4751 = vld [vmem:[%s4737 + $0x34] sm:$0xf]
    %v4752 = vld [vmem:[%s4737 + $0x38] sm:$0xf]
    %v4768 = vunpack.c.l.b16 %v4738
    %v4769 = vunpack.c.l.b16 %v4739
    %v4770 = vunpack.c.l.b16 %v4740
    %v4771 = vunpack.c.l.b16 %v4741
    %v4772 = vunpack.c.l.b16 %v4742
    %v4773 = vunpack.c.l.b16 %v4743
    %v4774 = vunpack.c.l.b16 %v4744
    %v4775 = vunpack.c.l.b16 %v4745
    %v4776 = vunpack.c.l.b16 %v4746
    %v4777 = vunpack.c.l.b16 %v4747
    %v4778 = vunpack.c.l.b16 %v4748
    %v4779 = vunpack.c.l.b16 %v4749
    %v4780 = vunpack.c.l.b16 %v4750
    %v4781 = vunpack.c.l.b16 %v4751
    %v4782 = vunpack.c.l.b16 %v4752
    %v4783 = vpack.c.b16 %v4769, %v4768
    %v4784 = vpack.c.b16 %v4771, %v4770
    %v4785 = vpack.c.b16 %v4773, %v4772
    %v4786 = vpack.c.b16 %v4775, %v4774
    %v4787 = vpack.c.b16 %v4777, %v4776
    %v4788 = vpack.c.b16 %v4779, %v4778
    %v4789 = vpack.c.b16 %v4781, %v4780
    %v4790 = vpack.c.b16 %v4782, %v4782
    %4791 = vrot.lane.b32.xlu0 %v4529, 124
    %v4792 = vpop.permute.xlu0 %4791
    %4793 = vrot.lane.b32.xlu0 %v4530, 124
    %v4794 = vpop.permute.xlu0 %4793
    %4795 = vrot.lane.b32.xlu0 %v4531, 124
    %v4796 = vpop.permute.xlu0 %4795
    %4797 = vrot.lane.b32.xlu0 %v4532, 124
    %v4798 = vpop.permute.xlu0 %4797
    %4799 = vrot.lane.b32.xlu0 %v4533, 124
    %v4800 = vpop.permute.xlu0 %4799
    %v4807 = vsel %vm4549, %v4783, 0
    %v4810 = vsel %vm4549, %v4784, 0
    %v4813 = vsel %vm4549, %v4785, 0
    %v4816 = vsel %vm4549, %v4786, 0
    %v4819 = vsel %vm4549, %v4787, 0
    %v4822 = vsel %vm4549, %v4788, 0
    %v4825 = vsel %vm4549, %v4789, 0
    %v4828 = vsel %vm4549, %v4790, 0
    %4830 = vmatpush.bf16.msra.mxu0 0
    %4831 = vmatpush.bf16.msra.mxu0 0
    %4832 = vmatpush.bf16.msra.mxu0 0
    %4833 = vmatpush.bf16.msra.mxu0 %v4800
    %4834 = vmatpush.bf16.msra.mxu0 %v4798
    %4835 = vmatpush.bf16.msra.mxu0 %v4796
    %4836 = vmatpush.bf16.msra.mxu0 %v4794
    %4837 = vmatpush.bf16.msra.mxu0 %v4792
    %4838 = vmatmul.bf16.gmra.mxu0 %v4807
    %v4839 = vpop.f32.mrf.mxu0
    %v4840 = vadd.f32 0.0, %v4839
    %v4841 = vpop.f32.mrf.mxu0
    %v4842 = vadd.f32 0.0, %v4841
    %4843 = vmatmul.bf16.gmra.mxu0 %v4810
    %v4844 = vpop.f32.mrf.mxu0
    %v4845 = vadd.f32 0.0, %v4844
    %v4846 = vpop.f32.mrf.mxu0
    %v4847 = vadd.f32 0.0, %v4846
    %4848 = vmatmul.bf16.gmra.mxu0 %v4813
    %v4849 = vpop.f32.mrf.mxu0
    %v4850 = vadd.f32 0.0, %v4849
    %v4851 = vpop.f32.mrf.mxu0
    %v4852 = vadd.f32 0.0, %v4851
    %4853 = vmatmul.bf16.gmra.mxu0 %v4816
    %v4854 = vpop.f32.mrf.mxu0
    %v4855 = vadd.f32 0.0, %v4854
    %v4856 = vpop.f32.mrf.mxu0
    %v4857 = vadd.f32 0.0, %v4856
    %4858 = vmatmul.bf16.gmra.mxu0 %v4819
    %v4859 = vpop.f32.mrf.mxu0
    %v4860 = vadd.f32 0.0, %v4859
    %v4861 = vpop.f32.mrf.mxu0
    %v4862 = vadd.f32 0.0, %v4861
    %4863 = vmatmul.bf16.gmra.mxu0 %v4822
    %v4864 = vpop.f32.mrf.mxu0
    %v4865 = vadd.f32 0.0, %v4864
    %v4866 = vpop.f32.mrf.mxu0
    %v4867 = vadd.f32 0.0, %v4866
    %4868 = vmatmul.bf16.gmra.mxu0 %v4825
    %v4869 = vpop.f32.mrf.mxu0
    %v4870 = vadd.f32 0.0, %v4869
    %v4871 = vpop.f32.mrf.mxu0
    %v4872 = vadd.f32 0.0, %v4871
    %4873 = vmatmul.bf16.gmra.mxu0 %v4828
    %v4874 = vpop.f32.mrf.mxu0
    %v4875 = vadd.f32 0.0, %v4874
    %v4876 = vpop.f32.mrf.mxu0
    %4877 = vdwg.mxu0
    %v4878 = vadd.f32 %v4699, %v4840
    %v4879 = vadd.f32 %v4701, %v4842
    %v4880 = vadd.f32 %v4704, %v4845
    %v4881 = vadd.f32 %v4706, %v4847
    %v4882 = vadd.f32 %v4709, %v4850
    %v4883 = vadd.f32 %v4711, %v4852
    %v4884 = vadd.f32 %v4714, %v4855
    %v4885 = vadd.f32 %v4716, %v4857
    %v4886 = vadd.f32 %v4719, %v4860
    %v4887 = vadd.f32 %v4721, %v4862
    %v4888 = vadd.f32 %v4724, %v4865
    %v4889 = vadd.f32 %v4726, %v4867
    %v4890 = vadd.f32 %v4729, %v4870
    %v4891 = vadd.f32 %v4731, %v4872
    %v4892 = vadd.f32 %v4734, %v4875
    %s4893 = scalar_lea.vmem %s9, 180
    %v4894 = vld [vmem:[%s4893] sm:$0xf]
    %v4895 = vld [vmem:[%s4893 + $0x4] sm:$0xf]
    %v4896 = vld [vmem:[%s4893 + $0x8] sm:$0xf]
    %v4897 = vld [vmem:[%s4893 + $0xc] sm:$0xf]
    %v4898 = vld [vmem:[%s4893 + $0x10] sm:$0xf]
    %v4899 = vld [vmem:[%s4893 + $0x14] sm:$0xf]
    %v4900 = vld [vmem:[%s4893 + $0x18] sm:$0xf]
    %v4901 = vld [vmem:[%s4893 + $0x1c] sm:$0xf]
    %v4902 = vld [vmem:[%s4893 + $0x20] sm:$0xf]
    %v4903 = vld [vmem:[%s4893 + $0x24] sm:$0xf]
    %v4904 = vld [vmem:[%s4893 + $0x28] sm:$0xf]
    %v4905 = vld [vmem:[%s4893 + $0x2c] sm:$0xf]
    %v4906 = vld [vmem:[%s4893 + $0x30] sm:$0xf]
    %v4907 = vld [vmem:[%s4893 + $0x34] sm:$0xf]
    %v4908 = vld [vmem:[%s4893 + $0x38] sm:$0xf]
    %v4924 = vunpack.c.l.b16 %v4894
    %v4925 = vunpack.c.l.b16 %v4895
    %v4926 = vunpack.c.l.b16 %v4896
    %v4927 = vunpack.c.l.b16 %v4897
    %v4928 = vunpack.c.l.b16 %v4898
    %v4929 = vunpack.c.l.b16 %v4899
    %v4930 = vunpack.c.l.b16 %v4900
    %v4931 = vunpack.c.l.b16 %v4901
    %v4932 = vunpack.c.l.b16 %v4902
    %v4933 = vunpack.c.l.b16 %v4903
    %v4934 = vunpack.c.l.b16 %v4904
    %v4935 = vunpack.c.l.b16 %v4905
    %v4936 = vunpack.c.l.b16 %v4906
    %v4937 = vunpack.c.l.b16 %v4907
    %v4938 = vunpack.c.l.b16 %v4908
    %v4939 = vpack.c.b16 %v4925, %v4924
    %v4940 = vpack.c.b16 %v4927, %v4926
    %v4941 = vpack.c.b16 %v4929, %v4928
    %v4942 = vpack.c.b16 %v4931, %v4930
    %v4943 = vpack.c.b16 %v4933, %v4932
    %v4944 = vpack.c.b16 %v4935, %v4934
    %v4945 = vpack.c.b16 %v4937, %v4936
    %v4946 = vpack.c.b16 %v4938, %v4938
    %4947 = vrot.lane.b32.xlu0 %v4529, 122
    %v4948 = vpop.permute.xlu0 %4947
    %4949 = vrot.lane.b32.xlu0 %v4530, 122
    %v4950 = vpop.permute.xlu0 %4949
    %4951 = vrot.lane.b32.xlu0 %v4531, 122
    %v4952 = vpop.permute.xlu0 %4951
    %4953 = vrot.lane.b32.xlu0 %v4532, 122
    %v4954 = vpop.permute.xlu0 %4953
    %4955 = vrot.lane.b32.xlu0 %v4533, 122
    %v4956 = vpop.permute.xlu0 %4955
    %v4963 = vsel %vm4549, %v4939, 0
    %v4966 = vsel %vm4549, %v4940, 0
    %v4969 = vsel %vm4549, %v4941, 0
    %v4972 = vsel %vm4549, %v4942, 0
    %v4975 = vsel %vm4549, %v4943, 0
    %v4978 = vsel %vm4549, %v4944, 0
    %v4981 = vsel %vm4549, %v4945, 0
    %v4984 = vsel %vm4549, %v4946, 0
    %4986 = vmatpush.bf16.msra.mxu0 0
    %4987 = vmatpush.bf16.msra.mxu0 0
    %4988 = vmatpush.bf16.msra.mxu0 0
    %4989 = vmatpush.bf16.msra.mxu0 %v4956
    %4990 = vmatpush.bf16.msra.mxu0 %v4954
    %4991 = vmatpush.bf16.msra.mxu0 %v4952
    %4992 = vmatpush.bf16.msra.mxu0 %v4950
    %4993 = vmatpush.bf16.msra.mxu0 %v4948
    %4994 = vmatmul.bf16.gmra.mxu0 %v4963
    %v4995 = vpop.f32.mrf.mxu0
    %v4996 = vadd.f32 0.0, %v4995
    %v4997 = vpop.f32.mrf.mxu0
    %v4998 = vadd.f32 0.0, %v4997
    %4999 = vmatmul.bf16.gmra.mxu0 %v4966
    %v5000 = vpop.f32.mrf.mxu0
    %v5001 = vadd.f32 0.0, %v5000
    %v5002 = vpop.f32.mrf.mxu0
    %v5003 = vadd.f32 0.0, %v5002
    %5004 = vmatmul.bf16.gmra.mxu0 %v4969
    %v5005 = vpop.f32.mrf.mxu0
    %v5006 = vadd.f32 0.0, %v5005
    %v5007 = vpop.f32.mrf.mxu0
    %v5008 = vadd.f32 0.0, %v5007
    %5009 = vmatmul.bf16.gmra.mxu0 %v4972
    %v5010 = vpop.f32.mrf.mxu0
    %v5011 = vadd.f32 0.0, %v5010
    %v5012 = vpop.f32.mrf.mxu0
    %v5013 = vadd.f32 0.0, %v5012
    %5014 = vmatmul.bf16.gmra.mxu0 %v4975
    %v5015 = vpop.f32.mrf.mxu0
    %v5016 = vadd.f32 0.0, %v5015
    %v5017 = vpop.f32.mrf.mxu0
    %v5018 = vadd.f32 0.0, %v5017
    %5019 = vmatmul.bf16.gmra.mxu0 %v4978
    %v5020 = vpop.f32.mrf.mxu0
    %v5021 = vadd.f32 0.0, %v5020
    %v5022 = vpop.f32.mrf.mxu0
    %v5023 = vadd.f32 0.0, %v5022
    %5024 = vmatmul.bf16.gmra.mxu0 %v4981
    %v5025 = vpop.f32.mrf.mxu0
    %v5026 = vadd.f32 0.0, %v5025
    %v5027 = vpop.f32.mrf.mxu0
    %v5028 = vadd.f32 0.0, %v5027
    %5029 = vmatmul.bf16.gmra.mxu0 %v4984
    %v5030 = vpop.f32.mrf.mxu0
    %v5031 = vadd.f32 0.0, %v5030
    %v5032 = vpop.f32.mrf.mxu0
    %5033 = vdwg.mxu0
    %v5034 = vadd.f32 %v4878, %v4996
    %v5035 = vadd.f32 %v4879, %v4998
    %v5036 = vadd.f32 %v4880, %v5001
    %v5037 = vadd.f32 %v4881, %v5003
    %v5038 = vadd.f32 %v4882, %v5006
    %v5039 = vadd.f32 %v4883, %v5008
    %v5040 = vadd.f32 %v4884, %v5011
    %v5041 = vadd.f32 %v4885, %v5013
    %v5042 = vadd.f32 %v4886, %v5016
    %v5043 = vadd.f32 %v4887, %v5018
    %v5044 = vadd.f32 %v4888, %v5021
    %v5045 = vadd.f32 %v4889, %v5023
    %v5046 = vadd.f32 %v4890, %v5026
    %v5047 = vadd.f32 %v4891, %v5028
    %v5048 = vadd.f32 %v4892, %v5031
    %s5049 = scalar_lea.vmem %s9, 240
    %v5050 = vld [vmem:[%s5049] sm:$0xf]
    %v5051 = vld [vmem:[%s5049 + $0x4] sm:$0xf]
    %v5052 = vld [vmem:[%s5049 + $0x8] sm:$0xf]
    %v5053 = vld [vmem:[%s5049 + $0xc] sm:$0xf]
    %v5054 = vld [vmem:[%s5049 + $0x10] sm:$0xf]
    %v5055 = vld [vmem:[%s5049 + $0x14] sm:$0xf]
    %v5056 = vld [vmem:[%s5049 + $0x18] sm:$0xf]
    %v5057 = vld [vmem:[%s5049 + $0x1c] sm:$0xf]
    %v5058 = vld [vmem:[%s5049 + $0x20] sm:$0xf]
    %v5059 = vld [vmem:[%s5049 + $0x24] sm:$0xf]
    %v5060 = vld [vmem:[%s5049 + $0x28] sm:$0xf]
    %v5061 = vld [vmem:[%s5049 + $0x2c] sm:$0xf]
    %v5062 = vld [vmem:[%s5049 + $0x30] sm:$0xf]
    %v5063 = vld [vmem:[%s5049 + $0x34] sm:$0xf]
    %v5064 = vld [vmem:[%s5049 + $0x38] sm:$0xf]
    %v5080 = vunpack.c.l.b16 %v5050
    %v5081 = vunpack.c.l.b16 %v5051
    %v5082 = vunpack.c.l.b16 %v5052
    %v5083 = vunpack.c.l.b16 %v5053
    %v5084 = vunpack.c.l.b16 %v5054
    %v5085 = vunpack.c.l.b16 %v5055
    %v5086 = vunpack.c.l.b16 %v5056
    %v5087 = vunpack.c.l.b16 %v5057
    %v5088 = vunpack.c.l.b16 %v5058
    %v5089 = vunpack.c.l.b16 %v5059
    %v5090 = vunpack.c.l.b16 %v5060
    %v5091 = vunpack.c.l.b16 %v5061
    %v5092 = vunpack.c.l.b16 %v5062
    %v5093 = vunpack.c.l.b16 %v5063
    %v5094 = vunpack.c.l.b16 %v5064
    %v5095 = vpack.c.b16 %v5081, %v5080
    %v5096 = vpack.c.b16 %v5083, %v5082
    %v5097 = vpack.c.b16 %v5085, %v5084
    %v5098 = vpack.c.b16 %v5087, %v5086
    %v5099 = vpack.c.b16 %v5089, %v5088
    %v5100 = vpack.c.b16 %v5091, %v5090
    %v5101 = vpack.c.b16 %v5093, %v5092
    %v5102 = vpack.c.b16 %v5094, %v5094
    %5103 = vrot.lane.b32.xlu0 %v4529, 120
    %v5104 = vpop.permute.xlu0 %5103
    %5105 = vrot.lane.b32.xlu0 %v4530, 120
    %v5106 = vpop.permute.xlu0 %5105
    %5107 = vrot.lane.b32.xlu0 %v4531, 120
    %v5108 = vpop.permute.xlu0 %5107
    %5109 = vrot.lane.b32.xlu0 %v4532, 120
    %v5110 = vpop.permute.xlu0 %5109
    %5111 = vrot.lane.b32.xlu0 %v4533, 120
    %v5112 = vpop.permute.xlu0 %5111
    %v5119 = vsel %vm4549, %v5095, 0
    %v5122 = vsel %vm4549, %v5096, 0
    %v5125 = vsel %vm4549, %v5097, 0
    %v5128 = vsel %vm4549, %v5098, 0
    %v5131 = vsel %vm4549, %v5099, 0
    %v5134 = vsel %vm4549, %v5100, 0
    %v5137 = vsel %vm4549, %v5101, 0
    %v5140 = vsel %vm4549, %v5102, 0
    %5142 = vmatpush.bf16.msra.mxu0 0
    %5143 = vmatpush.bf16.msra.mxu0 0
    %5144 = vmatpush.bf16.msra.mxu0 0
    %5145 = vmatpush.bf16.msra.mxu0 %v5112
    %5146 = vmatpush.bf16.msra.mxu0 %v5110
    %5147 = vmatpush.bf16.msra.mxu0 %v5108
    %5148 = vmatpush.bf16.msra.mxu0 %v5106
    %5149 = vmatpush.bf16.msra.mxu0 %v5104
    %5150 = vmatmul.bf16.gmra.mxu0 %v5119
    %v5151 = vpop.f32.mrf.mxu0
    %v5152 = vadd.f32 0.0, %v5151
    %v5153 = vpop.f32.mrf.mxu0
    %v5154 = vadd.f32 0.0, %v5153
    %5155 = vmatmul.bf16.gmra.mxu0 %v5122
    %v5156 = vpop.f32.mrf.mxu0
    %v5157 = vadd.f32 0.0, %v5156
    %v5158 = vpop.f32.mrf.mxu0
    %v5159 = vadd.f32 0.0, %v5158
    %5160 = vmatmul.bf16.gmra.mxu0 %v5125
    %v5161 = vpop.f32.mrf.mxu0
    %v5162 = vadd.f32 0.0, %v5161
    %v5163 = vpop.f32.mrf.mxu0
    %v5164 = vadd.f32 0.0, %v5163
    %5165 = vmatmul.bf16.gmra.mxu0 %v5128
    %v5166 = vpop.f32.mrf.mxu0
    %v5167 = vadd.f32 0.0, %v5166
    %v5168 = vpop.f32.mrf.mxu0
    %v5169 = vadd.f32 0.0, %v5168
    %5170 = vmatmul.bf16.gmra.mxu0 %v5131
    %v5171 = vpop.f32.mrf.mxu0
    %v5172 = vadd.f32 0.0, %v5171
    %v5173 = vpop.f32.mrf.mxu0
    %v5174 = vadd.f32 0.0, %v5173
    %5175 = vmatmul.bf16.gmra.mxu0 %v5134
    %v5176 = vpop.f32.mrf.mxu0
    %v5177 = vadd.f32 0.0, %v5176
    %v5178 = vpop.f32.mrf.mxu0
    %v5179 = vadd.f32 0.0, %v5178
    %5180 = vmatmul.bf16.gmra.mxu0 %v5137
    %v5181 = vpop.f32.mrf.mxu0
    %v5182 = vadd.f32 0.0, %v5181
    %v5183 = vpop.f32.mrf.mxu0
    %v5184 = vadd.f32 0.0, %v5183
    %5185 = vmatmul.bf16.gmra.mxu0 %v5140
    %v5186 = vpop.f32.mrf.mxu0
    %v5187 = vadd.f32 0.0, %v5186
    %v5188 = vpop.f32.mrf.mxu0
    %5189 = vdwg.mxu0
    %v5190 = vadd.f32 %v5034, %v5152
    %v5191 = vadd.f32 %v5035, %v5154
    %v5192 = vadd.f32 %v5036, %v5157
    %v5193 = vadd.f32 %v5037, %v5159
    %v5194 = vadd.f32 %v5038, %v5162
    %v5195 = vadd.f32 %v5039, %v5164
    %v5196 = vadd.f32 %v5040, %v5167
    %v5197 = vadd.f32 %v5041, %v5169
    %v5198 = vadd.f32 %v5042, %v5172
    %v5199 = vadd.f32 %v5043, %v5174
    %v5200 = vadd.f32 %v5044, %v5177
    %v5201 = vadd.f32 %v5045, %v5179
    %v5202 = vadd.f32 %v5046, %v5182
    %v5203 = vadd.f32 %v5047, %v5184
    %v5204 = vadd.f32 %v5048, %v5187
    %v5205 = vld [vmem:[%s10] sm:$0xff]
    %v5206 = vld [vmem:[%s10 + $0x8] sm:$0xff]
    %v5207 = vld [vmem:[%s10 + $0x10] sm:$0xff]
    %v5208 = vld [vmem:[%s10 + $0x18] sm:$0xff]
    %v5209 = vld [vmem:[%s10 + $0x20] sm:$0xff]
    %v5210 = vld [vmem:[%s10 + $0x28] sm:$0xff]
    %v5211 = vld [vmem:[%s10 + $0x30] sm:$0xff]
    %v5212 = vld [vmem:[%s10 + $0x38] sm:$0xff]
    %v5213 = vld [vmem:[%s10 + $0x40] sm:$0xff]
    %v5214 = vld [vmem:[%s10 + $0x48] sm:$0xff]
    %v5215 = vld [vmem:[%s10 + $0x50] sm:$0xff]
    %v5216 = vld [vmem:[%s10 + $0x58] sm:$0xff]
    %v5217 = vld [vmem:[%s10 + $0x60] sm:$0xff]
    %v5218 = vld [vmem:[%s10 + $0x68] sm:$0xff]
    %v5219 = vld [vmem:[%s10 + $0x70] sm:$0xff]
    %5221 = vset.pattern.permute.xlu0 0
    %5222 = vperm.xlu0 %5221, %v5205
    %v5223 = vpop.permute.xlu0 %5222
    %5226 = vset.pattern.permute.xlu0 0
    %5227 = vperm.xlu0 %5226, %v5206
    %v5228 = vpop.permute.xlu0 %5227
    %5231 = vset.pattern.permute.xlu0 0
    %5232 = vperm.xlu0 %5231, %v5207
    %v5233 = vpop.permute.xlu0 %5232
    %5236 = vset.pattern.permute.xlu0 0
    %5237 = vperm.xlu0 %5236, %v5208
    %v5238 = vpop.permute.xlu0 %5237
    %5241 = vset.pattern.permute.xlu0 0
    %5242 = vperm.xlu0 %5241, %v5209
    %v5243 = vpop.permute.xlu0 %5242
    %5246 = vset.pattern.permute.xlu0 0
    %5247 = vperm.xlu0 %5246, %v5210
    %v5248 = vpop.permute.xlu0 %5247
    %5251 = vset.pattern.permute.xlu0 0
    %5252 = vperm.xlu0 %5251, %v5211
    %v5253 = vpop.permute.xlu0 %5252
    %5256 = vset.pattern.permute.xlu0 0
    %5257 = vperm.xlu0 %5256, %v5212
    %v5258 = vpop.permute.xlu0 %5257
    %5261 = vset.pattern.permute.xlu0 0
    %5262 = vperm.xlu0 %5261, %v5213
    %v5263 = vpop.permute.xlu0 %5262
    %5266 = vset.pattern.permute.xlu0 0
    %5267 = vperm.xlu0 %5266, %v5214
    %v5268 = vpop.permute.xlu0 %5267
    %5271 = vset.pattern.permute.xlu0 0
    %5272 = vperm.xlu0 %5271, %v5215
    %v5273 = vpop.permute.xlu0 %5272
    %5276 = vset.pattern.permute.xlu0 0
    %5277 = vperm.xlu0 %5276, %v5216
    %v5278 = vpop.permute.xlu0 %5277
    %5281 = vset.pattern.permute.xlu0 0
    %5282 = vperm.xlu0 %5281, %v5217
    %v5283 = vpop.permute.xlu0 %5282
    %5286 = vset.pattern.permute.xlu0 0
    %5287 = vperm.xlu0 %5286, %v5218
    %v5288 = vpop.permute.xlu0 %5287
    %5291 = vset.pattern.permute.xlu0 0
    %5292 = vperm.xlu0 %5291, %v5219
    %v5293 = vpop.permute.xlu0 %5292
    %v5295 = vadd.f32 %v5190, %v5223
    %v5296 = vadd.f32 %v5191, %v5228
    %v5297 = vadd.f32 %v5192, %v5233
    %v5298 = vadd.f32 %v5193, %v5238
    %v5299 = vadd.f32 %v5194, %v5243
    %v5300 = vadd.f32 %v5195, %v5248
    %v5301 = vadd.f32 %v5196, %v5253
    %v5302 = vadd.f32 %v5197, %v5258
    %v5303 = vadd.f32 %v5198, %v5263
    %v5304 = vadd.f32 %v5199, %v5268
    %v5305 = vadd.f32 %v5200, %v5273
    %v5306 = vadd.f32 %v5201, %v5278
    %v5307 = vadd.f32 %v5202, %v5283
    %v5308 = vadd.f32 %v5203, %v5288
    %v5309 = vadd.f32 %v5204, %v5293
    %v5310 = vmax.f32 %v5295, 0.0
    %v5311 = vmax.f32 %v5296, 0.0
    %v5312 = vmax.f32 %v5297, 0.0
    %v5313 = vmax.f32 %v5298, 0.0
    %v5314 = vmax.f32 %v5299, 0.0
    %v5315 = vmax.f32 %v5300, 0.0
    %v5316 = vmax.f32 %v5301, 0.0
    %v5317 = vmax.f32 %v5302, 0.0
    %v5318 = vmax.f32 %v5303, 0.0
    %v5319 = vmax.f32 %v5304, 0.0
    %v5320 = vmax.f32 %v5305, 0.0
    %v5321 = vmax.f32 %v5306, 0.0
    %v5322 = vmax.f32 %v5307, 0.0
    %v5323 = vmax.f32 %v5308, 0.0
    %v5324 = vmax.f32 %v5309, 0.0
    %5325 = vxpose.xlu0.b32.start [1/16] %v5310, 128
    %5326 = vxpose.xlu0.b32.cont [2/16] %v5311, 128
    %5327 = vxpose.xlu0.b32.cont [3/16] %v5312, 128
    %5328 = vxpose.xlu0.b32.cont [4/16] %v5313, 128
    %5329 = vxpose.xlu0.b32.cont [5/16] %v5314, 128
    %5330 = vxpose.xlu0.b32.cont [6/16] %v5315, 128
    %5331 = vxpose.xlu0.b32.cont [7/16] %v5316, 128
    %5332 = vxpose.xlu0.b32.cont [8/16] %v5317, 128
    %5333 = vxpose.xlu0.b32.cont [9/16] %v5318, 128
    %5334 = vxpose.xlu0.b32.cont [10/16] %v5319, 128
    %5335 = vxpose.xlu0.b32.cont [11/16] %v5320, 128
    %5336 = vxpose.xlu0.b32.cont [12/16] %v5321, 128
    %5337 = vxpose.xlu0.b32.cont [13/16] %v5322, 128
    %5338 = vxpose.xlu0.b32.cont [14/16] %v5323, 128
    %5339 = vxpose.xlu0.b32.cont [15/16] %v5324, 128
    %5340 = vxpose.xlu0.b32.end [16/16] 0.0, 128
    %v5341 = vpop.trf.xlu0
    %v5342 = vpop.trf.xlu0
    %v5343 = vpop.trf.xlu0
    %v5344 = vpop.trf.xlu0
    %v5345 = vpop.trf.xlu0
    %v5346 = vpop.trf.xlu0
    %v5347 = vpop.trf.xlu0
    %v5348 = vpop.trf.xlu0
    %v5349 = vpop.trf.xlu0
    %v5350 = vpop.trf.xlu0
    %v5351 = vpop.trf.xlu0
    %v5352 = vpop.trf.xlu0
    %v5353 = vpop.trf.xlu0
    %v5354 = vpop.trf.xlu0
    %v5355 = vpop.trf.xlu0
    %v5356 = vpop.trf.xlu0
    %v5357 = vpack.c.bf16 %v5341, %v5341
    %v5358 = vld [vmem:[%s11] sm:$0xf]
    %v5359 = vld [vmem:[%s11 + $0x4] sm:$0xf]
    %v5360 = vld [vmem:[%s11 + $0x8] sm:$0xf]
    %v5361 = vld [vmem:[%s11 + $0xc] sm:$0xf]
    %v5362 = vld [vmem:[%s11 + $0x10] sm:$0xf]
    %v5363 = vld [vmem:[%s11 + $0x14] sm:$0xf]
    %v5364 = vld [vmem:[%s11 + $0x18] sm:$0xf]
    %v5365 = vld [vmem:[%s11 + $0x1c] sm:$0xf]
    %v5366 = vld [vmem:[%s11 + $0x20] sm:$0xf]
    %v5367 = vld [vmem:[%s11 + $0x24] sm:$0xf]
    %v5368 = vld [vmem:[%s11 + $0x28] sm:$0xf]
    %v5369 = vld [vmem:[%s11 + $0x2c] sm:$0xf]
    %v5370 = vld [vmem:[%s11 + $0x30] sm:$0xf]
    %v5371 = vld [vmem:[%s11 + $0x34] sm:$0xf]
    %v5372 = vld [vmem:[%s11 + $0x38] sm:$0xf]
    %v5373 = vld [vmem:[%s12] sm:$0x1]
    %v5375 = vperm.slane %v5373, 0
    %v5392 = vunpack.c.l.b16 %v5358
    %v5393 = vunpack.c.l.b16 %v5359
    %v5394 = vunpack.c.l.b16 %v5360
    %v5395 = vunpack.c.l.b16 %v5361
    %v5396 = vunpack.c.l.b16 %v5362
    %v5397 = vunpack.c.l.b16 %v5363
    %v5398 = vunpack.c.l.b16 %v5364
    %v5399 = vunpack.c.l.b16 %v5365
    %v5400 = vunpack.c.l.b16 %v5366
    %v5401 = vunpack.c.l.b16 %v5367
    %v5402 = vunpack.c.l.b16 %v5368
    %v5403 = vunpack.c.l.b16 %v5369
    %v5404 = vunpack.c.l.b16 %v5370
    %v5405 = vunpack.c.l.b16 %v5371
    %v5406 = vunpack.c.l.b16 %v5372
    %v5407 = vpack.c.b16 %v5393, %v5392
    %v5408 = vpack.c.b16 %v5395, %v5394
    %v5409 = vpack.c.b16 %v5397, %v5396
    %v5410 = vpack.c.b16 %v5399, %v5398
    %v5411 = vpack.c.b16 %v5401, %v5400
    %v5412 = vpack.c.b16 %v5403, %v5402
    %v5413 = vpack.c.b16 %v5405, %v5404
    %v5414 = vpack.c.b16 %v5406, %v5406
    %vm5422 = vcmask 982016
    %v5424 = vsel %vm5422, %v5357, 0
    %v5427 = vsel %vm233, %v5414, 0
    %5429 = vmatpush.bf16.msra.mxu0 %v5427
    %5430 = vmatpush.bf16.msra.mxu0 %v5413
    %5431 = vmatpush.bf16.msra.mxu0 %v5412
    %5432 = vmatpush.bf16.msra.mxu0 %v5411
    %5433 = vmatpush.bf16.msra.mxu0 %v5410
    %5434 = vmatpush.bf16.msra.mxu0 %v5409
    %5435 = vmatpush.bf16.msra.mxu0 %v5408
    %5436 = vmatpush.bf16.msra.mxu0 %v5407
    %5437 = vmatmul.bf16.gmra.mxu0 %v5424
    %v5438 = vpop.f32.mrf.mxu0
    %v5439 = vadd.f32 %v5375, %v5438
    %v5440 = vpop.f32.mrf.mxu0
    %5441 = vdwg.mxu0
    %v5442 = vmax.f32 %v5439, 0.0
    %v5443 = vpack.c.bf16 %v5442, %v5442
    %v5444 = vld [vmem:[%s13] sm:$0xf]
    %v5445 = vld [vmem:[%s13 + $0x4] sm:$0xf]
    %v5446 = vld [vmem:[%s13 + $0x8] sm:$0xf]
    %v5447 = vld [vmem:[%s13 + $0xc] sm:$0xf]
    %v5448 = vld [vmem:[%s13 + $0x10] sm:$0xf]
    %v5449 = vld [vmem:[%s13 + $0x14] sm:$0xf]
    %v5450 = vld [vmem:[%s13 + $0x18] sm:$0xf]
    %v5451 = vld [vmem:[%s13 + $0x1c] sm:$0xf]
    %v5452 = vld [vmem:[%s13 + $0x20] sm:$0xf]
    %v5453 = vld [vmem:[%s13 + $0x24] sm:$0xf]
    %v5454 = vld [vmem:[%s13 + $0x28] sm:$0x3]
    %v5455 = vld [vmem:[%s14] sm:$0x1]
    %v5457 = vperm.slane %v5455, 0
    %v5470 = vunpack.c.l.b16 %v5444
    %v5471 = vunpack.c.l.b16 %v5445
    %v5472 = vunpack.c.l.b16 %v5446
    %v5473 = vunpack.c.l.b16 %v5447
    %v5474 = vunpack.c.l.b16 %v5448
    %v5475 = vunpack.c.l.b16 %v5449
    %v5476 = vunpack.c.l.b16 %v5450
    %v5477 = vunpack.c.l.b16 %v5451
    %v5478 = vunpack.c.l.b16 %v5452
    %v5479 = vunpack.c.l.b16 %v5453
    %v5480 = vunpack.c.l.b16 %v5454
    %v5481 = vpack.c.b16 %v5471, %v5470
    %v5482 = vpack.c.b16 %v5473, %v5472
    %v5483 = vpack.c.b16 %v5475, %v5474
    %v5484 = vpack.c.b16 %v5477, %v5476
    %v5485 = vpack.c.b16 %v5479, %v5478
    %v5486 = vpack.c.b16 %v5480, %v5480
    %v5493 = vsel %vm129, %v5443, 0
    %v5496 = vsel %vm225, %v5486, 0
    %5498 = vmatpush.bf16.msra.mxu0 0
    %5499 = vmatpush.bf16.msra.mxu0 0
    %5500 = vmatpush.bf16.msra.mxu0 %v5496
    %5501 = vmatpush.bf16.msra.mxu0 %v5485
    %5502 = vmatpush.bf16.msra.mxu0 %v5484
    %5503 = vmatpush.bf16.msra.mxu0 %v5483
    %5504 = vmatpush.bf16.msra.mxu0 %v5482
    %5505 = vmatpush.bf16.msra.mxu0 %v5481
    %5506 = vmatmul.bf16.gmra.mxu0 %v5493
    %v5507 = vpop.f32.mrf.mxu0
    %v5508 = vadd.f32 %v5457, %v5507
    %v5509 = vpop.f32.mrf.mxu0
    %5510 = vdwg.mxu0
    %5511 = vst [vmem:[#allocation4] sm:$0x3] %v5508
    // Predicated region
    $region62: #{lenet5_forward.1} parent=1 // pred_check
      _
    $region63: #{lenet5_forward.1} parent=1 // pred_check_branch
      %5513 = sbr.rel (0) target = $region65
    $region64: #{lenet5_forward.1} parent=1 // pred_region
      %5515 = vsyncadd [#allocation5], 0
      %s5517 = sshll.u32 [#allocation4], 4
      %s5518 = int_to_ptr.vmem [resolvable:$true] %s5517
      %s5519 = sshll.u32 %s15, 4
      %s5520 = int_to_ptr.hbm [resolvable:$true] %s5519
      %5522 = dma.vmem_to_hbm [thread:$0]  %s5518, 32, %s5520, [#allocation5]
    $region65: #{lenet5_forward.1} parent=1 // pred_fallthru
      _
    // Predicated region
    $region66: #{lenet5_forward.1} parent=1 // pred_check
      _
    $region67: #{lenet5_forward.1} parent=1 // pred_check_branch
      %5524 = sbr.rel (0) target = $region69
    $region68: #{lenet5_forward.1} parent=1 // pred_region
      %5526 = dma.done [#allocation5], 32
    $region69: #{lenet5_forward.1} parent=1 // pred_fallthru
      _
    %5527 = vsyncpa [#allocation5], 1

</llo_original>
